<compile_context>
chip_gen: v5e
topology: v5e:2x2
jax: 0.10.0
libtpu: 0.0.40
codegen_flags: <defaults>
</compile_context>

<pallas_src>
import jax
import jax.numpy as jnp
import numpy as np
from jax import lax
from jax.experimental import pallas as pl
from jax.experimental.pallas import tpu as pltpu

H_IN = 28                 # MNIST spatial size (forced by fc in_features = 3*8*8)
K = 3                     # conv kernel size
H_CONV = H_IN - K + 1     # 26
POOL = 3
H_POOL = H_CONV // POOL   # 8
C_OUT = 3
FEAT = C_OUT * H_POOL * H_POOL          # 192  (PyTorch flatten size)
W_SPAN = H_POOL * POOL                  # 24   (W positions kept per (c, h_out))
FEAT_EXT = C_OUT * H_POOL * W_SPAN      # 576  (extended feature rows in-kernel)
N_CLASS = 10


def _round_up(n, m):
    return ((n + m - 1) // m) * m


def fused_convnet_kernel(x_ref, cw_ref, cb_ref, fcw_ref, fcb_ref,
                         out_ref, feats_ref):
    """Fused conv3x3 + maxpool3/3 + relu + fc + log_softmax for one batch tile.

    x_ref    : (28, 28, Bt) VMEM   -- H leading, W sublane, batch on lanes
    cw_ref   : (27,)        SMEM   -- conv weights, index [c*9 + kh*3 + kw]
    cb_ref   : (3,)         SMEM   -- conv bias
    fcw_ref  : (10, 576)    VMEM   -- permuted / zero-padded fc weight
    fcb_ref  : (10, 1)      VMEM
    out_ref  : (10, Bt)     VMEM   -- log-probabilities (classes on sublanes)
    feats_ref: (576, Bt)    VMEM scratch -- relu'd sliding 3x3-max features
    """
    x = x_ref[...]                                            # (28, 28, Bt)

    # Hoist the nine shifted conv views; reused by all three output channels.
    shifted = [[x[di:di + H_CONV, dj:dj + H_CONV, :] for dj in range(K)]
               for di in range(K)]

    for c in range(C_OUT):
        # Shift-and-accumulate convolution; weights are SMEM scalars broadcast
        # over the (26, 26, Bt) block (full-lane VPU work).
        acc = shifted[0][0] * cw_ref[c * 9]
        for di in range(K):
            for dj in range(K):
                if di == 0 and dj == 0:
                    continue
                acc = acc + shifted[di][dj] * cw_ref[c * 9 + di * K + dj]
        acc = acc + cb_ref[c]                                  # (26, 26, Bt)

        for i in range(H_POOL):
            # H-pool: elementwise max of three leading-dim tiles (free slices).
            hm = jnp.maximum(jnp.maximum(acc[3 * i], acc[3 * i + 1]),
                             acc[3 * i + 2])                   # (26, Bt)
            # W sliding max (window 3) via sublane-shifted slices; the stride-3
            # column selection is folded into fcw on the host.
            wm = jnp.maximum(jnp.maximum(hm[0:W_SPAN, :], hm[1:W_SPAN + 1, :]),
                             hm[2:W_SPAN + 2, :])              # (24, Bt)
            r0 = (c * H_POOL + i) * W_SPAN                     # multiple of 8
            feats_ref[r0:r0 + W_SPAN, :] = jnp.maximum(wm, 0.0)   # ReLU after pool

    # fc: (10, 576) @ (576, Bt) -> logits (10, Bt); batch stays on lanes.
    logits = jnp.dot(fcw_ref[...], feats_ref[...],
                     preferred_element_type=jnp.float32) + fcb_ref[...]

    # log_softmax over the 10 classes (sublane axis).
    m = jnp.max(logits, axis=0, keepdims=True)
    sh = logits - m
    lse = jnp.log(jnp.sum(jnp.exp(sh), axis=0, keepdims=True))
    out_ref[...] = sh - lse


def _build_extended_fc_weight(fc_w):
    """(192, 10) PyTorch-order fc weight -> (10, 576) kernel weight.

    Kernel feature row e = (c*8 + h_out)*24 + w holds the 3x3 window max at
    (h_out, w_start=w); only w = 3*w_out corresponds to a real pooled output,
    so those columns get fc_w[c*64 + h_out*8 + w_out] and the rest are zero.
    """
    w4 = fc_w.reshape(C_OUT, H_POOL, H_POOL, N_CLASS)          # (c, h, w, n)
    wpad = jnp.zeros((C_OUT, H_POOL, H_POOL, POOL, N_CLASS), fc_w.dtype)
    wpad = wpad.at[:, :, :, 0, :].set(w4)                      # phase-0 only
    return wpad.reshape(FEAT_EXT, N_CLASS).T                   # (10, 576)


def convnet_forward(x, conv_w, conv_b, fc_w, fc_b, *, batch_tile=256):
    """x: (B, 1, 28, 28) float32 (NCHW). Returns (B, 10) log-probabilities.

    batch_tile: lane-tile for the batch grid (multiple of 128).  256 is safe
    for v7x's 64 MiB VMEM; on v5e/v6e it can be raised (with vmem_limit_bytes)
    to amortize per-grid-step overhead further.
    """
    B = x.shape[0]
    bt = min(_round_up(batch_tile, 128), _round_up(B, 128))
    Bp = _round_up(B, bt)
    nb = Bp // bt

    # Batch onto lanes: (B, 1, 28, 28) -> (28, 28, Bp), zero-padded batch.
    xT = jnp.transpose(x[:, 0, :, :], (1, 2, 0))
    xT = jnp.pad(xT, ((0, 0), (0, 0), (0, Bp - B)))

    fc_wT = _build_extended_fc_weight(fc_w)                    # (10, 576)
    fc_b2 = fc_b.reshape(N_CLASS, 1)

    grid_spec = pltpu.PrefetchScalarGridSpec(
        num_scalar_prefetch=0,
        grid=(nb,),
        in_specs=[
            pl.BlockSpec((H_IN, H_IN, bt), lambda i: (0, 0, i)),          # x tile
            pl.BlockSpec(memory_space=pltpu.MemorySpace.SMEM),            # conv w
            pl.BlockSpec(memory_space=pltpu.MemorySpace.SMEM),            # conv b
            pl.BlockSpec((N_CLASS, FEAT_EXT), lambda i: (0, 0)),          # fc w
            pl.BlockSpec((N_CLASS, 1), lambda i: (0, 0)),                 # fc b
        ],
        out_specs=pl.BlockSpec((N_CLASS, bt), lambda i: (0, i)),
        scratch_shapes=[pltpu.VMEM((FEAT_EXT, bt), jnp.float32)],
    )

    logp = pl.pallas_call(
        fused_convnet_kernel,
        out_shape=jax.ShapeDtypeStruct((N_CLASS, Bp), jnp.float32),
        grid_spec=grid_spec,
        compiler_params=pltpu.CompilerParams(
            dimension_semantics=("parallel",),     # batch tiles shard over TCs (v7x)
            vmem_limit_bytes=48 * 1024 * 1024),
    )(xT, conv_w.reshape(C_OUT * K * K), conv_b, fc_wT, fc_b2)

    return logp[:, :B].T                                       # (B, 10)


def convnet_reference(x, conv_w, conv_b, fc_w, fc_b):
    """Pure-JAX reference with identical semantics to the PyTorch module."""
    conv = lax.conv_general_dilated(
        x, conv_w.reshape(C_OUT, 1, K, K), window_strides=(1, 1),
        padding="VALID", dimension_numbers=("NCHW", "OIHW", "NCHW"))
    conv = conv + conv_b.reshape(1, C_OUT, 1, 1)
    pooled = lax.reduce_window(conv, -jnp.inf, lax.max,
                               window_dimensions=(1, 1, POOL, POOL),
                               window_strides=(1, 1, POOL, POOL),
                               padding="VALID")
    act = jnp.maximum(pooled, 0.0)
    feats = act.reshape(act.shape[0], FEAT)
    logits = feats @ fc_w + fc_b
    return jax.nn.log_softmax(logits, axis=1)


if __name__ == "__main__":
    key = jax.random.PRNGKey(0)
    kx, kw1, kb1, kw2, kb2 = jax.random.split(key, 5)

    B = 2
    x = jax.random.normal(kx, (B, 1, H_IN, H_IN), jnp.float32)

    # deterministic synthetic parameters (shapes from the module's __init__)
    conv_w = jax.random.normal(kw1, (C_OUT, K, K), jnp.float32) * 0.3   # (3,3,3)
    conv_b = jax.random.normal(kb1, (C_OUT,), jnp.float32) * 0.1        # (3,)
    fc_w = jax.random.normal(kw2, (FEAT, N_CLASS), jnp.float32) * 0.05  # (192,10)
    fc_b = jax.random.normal(kb2, (N_CLASS,), jnp.float32) * 0.1        # (10,)

    fwd = jax.jit(convnet_forward)
    out = jax.block_until_ready(fwd(x, conv_w, conv_b, fc_w, fc_b))
    ref = jax.block_until_ready(convnet_reference(x, conv_w, conv_b, fc_w, fc_b))
    np.testing.assert_allclose(np.asarray(out), np.asarray(ref),
                               atol=1e-4, rtol=1e-4)
    print("KERNEL_OK")
</pallas_src>

<mosaic_0001>
module attributes {stable_mosaic.version = 11 : i64} {
  func.func @fused_convnet_kernel(%arg0: i32, %arg1: memref<28x28x128xf32, #tpu.memory_space<vmem>>, %arg2: memref<27xf32, #tpu.memory_space<smem>>, %arg3: memref<3xf32, #tpu.memory_space<smem>>, %arg4: memref<10x576xf32, #tpu.memory_space<vmem>>, %arg5: memref<10x1xf32, #tpu.memory_space<vmem>>, %arg6: memref<10x128xf32, #tpu.memory_space<vmem>>, %arg7: memref<576x128xf32, #tpu.memory_space<vmem>>) attributes {dimension_semantics = [#tpu.dimension_semantics<parallel>], iteration_bounds = array<i64: 1>, scalar_prefetch = 0 : i64, scratch_operands = 1 : i64, tpu.core_type = #tpu.core_type<tc>, window_params = [{transform_indices = @transform_0, window_bounds = array<i64: 28, 28, 128>}, {transform_indices = @transform_1, window_bounds = array<i64: 27>}, {transform_indices = @transform_2, window_bounds = array<i64: 3>}, {pipeline_mode = #tpu.pipeline_mode<synchronous>, transform_indices = @transform_3, window_bounds = array<i64: 10, 576>}, {pipeline_mode = #tpu.pipeline_mode<synchronous>, transform_indices = @transform_4, window_bounds = array<i64: 10, 1>}, {transform_indices = @transform_5, window_bounds = array<i64: 10, 128>}]} {
    %c0 = arith.constant 0 : index
    %c0_0 = arith.constant 0 : index
    %c0_1 = arith.constant 0 : index
    %0 = vector.load %arg1[%c0, %c0_0, %c0_1] : memref<28x28x128xf32, #tpu.memory_space<vmem>>, vector<28x28x128xf32>
    %1 = vector.extract_strided_slice %0 {offsets = [0, 0, 0], sizes = [26, 26, 128], strides = [1, 1, 1]} : vector<28x28x128xf32> to vector<26x26x128xf32>
    %2 = vector.extract_strided_slice %0 {offsets = [0, 1, 0], sizes = [26, 26, 128], strides = [1, 1, 1]} : vector<28x28x128xf32> to vector<26x26x128xf32>
    %3 = vector.extract_strided_slice %0 {offsets = [0, 2, 0], sizes = [26, 26, 128], strides = [1, 1, 1]} : vector<28x28x128xf32> to vector<26x26x128xf32>
    %4 = vector.extract_strided_slice %0 {offsets = [1, 0, 0], sizes = [26, 26, 128], strides = [1, 1, 1]} : vector<28x28x128xf32> to vector<26x26x128xf32>
    %5 = vector.extract_strided_slice %0 {offsets = [1, 1, 0], sizes = [26, 26, 128], strides = [1, 1, 1]} : vector<28x28x128xf32> to vector<26x26x128xf32>
    %6 = vector.extract_strided_slice %0 {offsets = [1, 2, 0], sizes = [26, 26, 128], strides = [1, 1, 1]} : vector<28x28x128xf32> to vector<26x26x128xf32>
    %7 = vector.extract_strided_slice %0 {offsets = [2, 0, 0], sizes = [26, 26, 128], strides = [1, 1, 1]} : vector<28x28x128xf32> to vector<26x26x128xf32>
    %8 = vector.extract_strided_slice %0 {offsets = [2, 1, 0], sizes = [26, 26, 128], strides = [1, 1, 1]} : vector<28x28x128xf32> to vector<26x26x128xf32>
    %9 = vector.extract_strided_slice %0 {offsets = [2, 2, 0], sizes = [26, 26, 128], strides = [1, 1, 1]} : vector<28x28x128xf32> to vector<26x26x128xf32>
    %c0_2 = arith.constant 0 : index
    %10 = memref.load %arg2[%c0_2] : memref<27xf32, #tpu.memory_space<smem>>
    %11 = vector.broadcast %10 : f32 to vector<26x26x128xf32>
    %12 = arith.mulf %1, %11 : vector<26x26x128xf32>
    %c1 = arith.constant 1 : index
    %13 = memref.load %arg2[%c1] : memref<27xf32, #tpu.memory_space<smem>>
    %14 = vector.broadcast %13 : f32 to vector<26x26x128xf32>
    %15 = arith.mulf %2, %14 : vector<26x26x128xf32>
    %16 = arith.addf %12, %15 : vector<26x26x128xf32>
    %c2 = arith.constant 2 : index
    %17 = memref.load %arg2[%c2] : memref<27xf32, #tpu.memory_space<smem>>
    %18 = vector.broadcast %17 : f32 to vector<26x26x128xf32>
    %19 = arith.mulf %3, %18 : vector<26x26x128xf32>
    %20 = arith.addf %16, %19 : vector<26x26x128xf32>
    %c3 = arith.constant 3 : index
    %21 = memref.load %arg2[%c3] : memref<27xf32, #tpu.memory_space<smem>>
    %22 = vector.broadcast %21 : f32 to vector<26x26x128xf32>
    %23 = arith.mulf %4, %22 : vector<26x26x128xf32>
    %24 = arith.addf %20, %23 : vector<26x26x128xf32>
    %c4 = arith.constant 4 : index
    %25 = memref.load %arg2[%c4] : memref<27xf32, #tpu.memory_space<smem>>
    %26 = vector.broadcast %25 : f32 to vector<26x26x128xf32>
    %27 = arith.mulf %5, %26 : vector<26x26x128xf32>
    %28 = arith.addf %24, %27 : vector<26x26x128xf32>
    %c5 = arith.constant 5 : index
    %29 = memref.load %arg2[%c5] : memref<27xf32, #tpu.memory_space<smem>>
    %30 = vector.broadcast %29 : f32 to vector<26x26x128xf32>
    %31 = arith.mulf %6, %30 : vector<26x26x128xf32>
    %32 = arith.addf %28, %31 : vector<26x26x128xf32>
    %c6 = arith.constant 6 : index
    %33 = memref.load %arg2[%c6] : memref<27xf32, #tpu.memory_space<smem>>
    %34 = vector.broadcast %33 : f32 to vector<26x26x128xf32>
    %35 = arith.mulf %7, %34 : vector<26x26x128xf32>
    %36 = arith.addf %32, %35 : vector<26x26x128xf32>
    %c7 = arith.constant 7 : index
    %37 = memref.load %arg2[%c7] : memref<27xf32, #tpu.memory_space<smem>>
    %38 = vector.broadcast %37 : f32 to vector<26x26x128xf32>
    %39 = arith.mulf %8, %38 : vector<26x26x128xf32>
    %40 = arith.addf %36, %39 : vector<26x26x128xf32>
    %c8 = arith.constant 8 : index
    %41 = memref.load %arg2[%c8] : memref<27xf32, #tpu.memory_space<smem>>
    %42 = vector.broadcast %41 : f32 to vector<26x26x128xf32>
    %43 = arith.mulf %9, %42 : vector<26x26x128xf32>
    %44 = arith.addf %40, %43 : vector<26x26x128xf32>
    %c0_3 = arith.constant 0 : index
    %45 = memref.load %arg3[%c0_3] : memref<3xf32, #tpu.memory_space<smem>>
    %46 = vector.broadcast %45 : f32 to vector<26x26x128xf32>
    %47 = arith.addf %44, %46 : vector<26x26x128xf32>
    %48 = vector.extract_strided_slice %47 {offsets = [0, 0, 0], sizes = [1, 26, 128], strides = [1, 1, 1]} : vector<26x26x128xf32> to vector<1x26x128xf32>
    %49 = vector.shape_cast %48 : vector<1x26x128xf32> to vector<26x128xf32>
    %50 = vector.extract_strided_slice %47 {offsets = [1, 0, 0], sizes = [1, 26, 128], strides = [1, 1, 1]} : vector<26x26x128xf32> to vector<1x26x128xf32>
    %51 = vector.shape_cast %50 : vector<1x26x128xf32> to vector<26x128xf32>
    %52 = arith.maximumf %49, %51 : vector<26x128xf32>
    %53 = vector.extract_strided_slice %47 {offsets = [2, 0, 0], sizes = [1, 26, 128], strides = [1, 1, 1]} : vector<26x26x128xf32> to vector<1x26x128xf32>
    %54 = vector.shape_cast %53 : vector<1x26x128xf32> to vector<26x128xf32>
    %55 = arith.maximumf %52, %54 : vector<26x128xf32>
    %56 = vector.extract_strided_slice %55 {offsets = [0, 0], sizes = [24, 128], strides = [1, 1]} : vector<26x128xf32> to vector<24x128xf32>
    %57 = vector.extract_strided_slice %55 {offsets = [1, 0], sizes = [24, 128], strides = [1, 1]} : vector<26x128xf32> to vector<24x128xf32>
    %58 = arith.maximumf %56, %57 : vector<24x128xf32>
    %59 = vector.extract_strided_slice %55 {offsets = [2, 0], sizes = [24, 128], strides = [1, 1]} : vector<26x128xf32> to vector<24x128xf32>
    %60 = arith.maximumf %58, %59 : vector<24x128xf32>
    %cst = arith.constant 0.000000e+00 : f32
    %61 = vector.broadcast %cst : f32 to vector<24x128xf32>
    %62 = arith.maximumf %60, %61 : vector<24x128xf32>
    %c0_4 = arith.constant 0 : index
    %c0_5 = arith.constant 0 : index
    %63 = vector.load %arg7[%c0_4, %c0_5] : memref<576x128xf32, #tpu.memory_space<vmem>>, vector<24x128xf32>
    tpu.vector_store %arg7[%c0_4, %c0_5], %62 {strides = array<i32>} : memref<576x128xf32, #tpu.memory_space<vmem>>, vector<24x128xf32>,
    %64 = vector.extract_strided_slice %47 {offsets = [3, 0, 0], sizes = [1, 26, 128], strides = [1, 1, 1]} : vector<26x26x128xf32> to vector<1x26x128xf32>
    %65 = vector.shape_cast %64 : vector<1x26x128xf32> to vector<26x128xf32>
    %66 = vector.extract_strided_slice %47 {offsets = [4, 0, 0], sizes = [1, 26, 128], strides = [1, 1, 1]} : vector<26x26x128xf32> to vector<1x26x128xf32>
    %67 = vector.shape_cast %66 : vector<1x26x128xf32> to vector<26x128xf32>
    %68 = arith.maximumf %65, %67 : vector<26x128xf32>
    %69 = vector.extract_strided_slice %47 {offsets = [5, 0, 0], sizes = [1, 26, 128], strides = [1, 1, 1]} : vector<26x26x128xf32> to vector<1x26x128xf32>
    %70 = vector.shape_cast %69 : vector<1x26x128xf32> to vector<26x128xf32>
    %71 = arith.maximumf %68, %70 : vector<26x128xf32>
    %72 = vector.extract_strided_slice %71 {offsets = [0, 0], sizes = [24, 128], strides = [1, 1]} : vector<26x128xf32> to vector<24x128xf32>
    %73 = vector.extract_strided_slice %71 {offsets = [1, 0], sizes = [24, 128], strides = [1, 1]} : vector<26x128xf32> to vector<24x128xf32>
    %74 = arith.maximumf %72, %73 : vector<24x128xf32>
    %75 = vector.extract_strided_slice %71 {offsets = [2, 0], sizes = [24, 128], strides = [1, 1]} : vector<26x128xf32> to vector<24x128xf32>
    %76 = arith.maximumf %74, %75 : vector<24x128xf32>
    %cst_6 = arith.constant 0.000000e+00 : f32
    %77 = vector.broadcast %cst_6 : f32 to vector<24x128xf32>
    %78 = arith.maximumf %76, %77 : vector<24x128xf32>
    %c24 = arith.constant 24 : index
    %c0_7 = arith.constant 0 : index
    %79 = vector.load %arg7[%c24, %c0_7] : memref<576x128xf32, #tpu.memory_space<vmem>>, vector<24x128xf32>
    tpu.vector_store %arg7[%c24, %c0_7], %78 {strides = array<i32>} : memref<576x128xf32, #tpu.memory_space<vmem>>, vector<24x128xf32>,
    %80 = vector.extract_strided_slice %47 {offsets = [6, 0, 0], sizes = [1, 26, 128], strides = [1, 1, 1]} : vector<26x26x128xf32> to vector<1x26x128xf32>
    %81 = vector.shape_cast %80 : vector<1x26x128xf32> to vector<26x128xf32>
    %82 = vector.extract_strided_slice %47 {offsets = [7, 0, 0], sizes = [1, 26, 128], strides = [1, 1, 1]} : vector<26x26x128xf32> to vector<1x26x128xf32>
    %83 = vector.shape_cast %82 : vector<1x26x128xf32> to vector<26x128xf32>
    %84 = arith.maximumf %81, %83 : vector<26x128xf32>
    %85 = vector.extract_strided_slice %47 {offsets = [8, 0, 0], sizes = [1, 26, 128], strides = [1, 1, 1]} : vector<26x26x128xf32> to vector<1x26x128xf32>
    %86 = vector.shape_cast %85 : vector<1x26x128xf32> to vector<26x128xf32>
    %87 = arith.maximumf %84, %86 : vector<26x128xf32>
    %88 = vector.extract_strided_slice %87 {offsets = [0, 0], sizes = [24, 128], strides = [1, 1]} : vector<26x128xf32> to vector<24x128xf32>
    %89 = vector.extract_strided_slice %87 {offsets = [1, 0], sizes = [24, 128], strides = [1, 1]} : vector<26x128xf32> to vector<24x128xf32>
    %90 = arith.maximumf %88, %89 : vector<24x128xf32>
    %91 = vector.extract_strided_slice %87 {offsets = [2, 0], sizes = [24, 128], strides = [1, 1]} : vector<26x128xf32> to vector<24x128xf32>
    %92 = arith.maximumf %90, %91 : vector<24x128xf32>
    %cst_8 = arith.constant 0.000000e+00 : f32
    %93 = vector.broadcast %cst_8 : f32 to vector<24x128xf32>
    %94 = arith.maximumf %92, %93 : vector<24x128xf32>
    %c48 = arith.constant 48 : index
    %c0_9 = arith.constant 0 : index
    %95 = vector.load %arg7[%c48, %c0_9] : memref<576x128xf32, #tpu.memory_space<vmem>>, vector<24x128xf32>
    tpu.vector_store %arg7[%c48, %c0_9], %94 {strides = array<i32>} : memref<576x128xf32, #tpu.memory_space<vmem>>, vector<24x128xf32>,
    %96 = vector.extract_strided_slice %47 {offsets = [9, 0, 0], sizes = [1, 26, 128], strides = [1, 1, 1]} : vector<26x26x128xf32> to vector<1x26x128xf32>
    %97 = vector.shape_cast %96 : vector<1x26x128xf32> to vector<26x128xf32>
    %98 = vector.extract_strided_slice %47 {offsets = [10, 0, 0], sizes = [1, 26, 128], strides = [1, 1, 1]} : vector<26x26x128xf32> to vector<1x26x128xf32>
    %99 = vector.shape_cast %98 : vector<1x26x128xf32> to vector<26x128xf32>
    %100 = arith.maximumf %97, %99 : vector<26x128xf32>
    %101 = vector.extract_strided_slice %47 {offsets = [11, 0, 0], sizes = [1, 26, 128], strides = [1, 1, 1]} : vector<26x26x128xf32> to vector<1x26x128xf32>
    %102 = vector.shape_cast %101 : vector<1x26x128xf32> to vector<26x128xf32>
    %103 = arith.maximumf %100, %102 : vector<26x128xf32>
    %104 = vector.extract_strided_slice %103 {offsets = [0, 0], sizes = [24, 128], strides = [1, 1]} : vector<26x128xf32> to vector<24x128xf32>
    %105 = vector.extract_strided_slice %103 {offsets = [1, 0], sizes = [24, 128], strides = [1, 1]} : vector<26x128xf32> to vector<24x128xf32>
    %106 = arith.maximumf %104, %105 : vector<24x128xf32>
    %107 = vector.extract_strided_slice %103 {offsets = [2, 0], sizes = [24, 128], strides = [1, 1]} : vector<26x128xf32> to vector<24x128xf32>
    %108 = arith.maximumf %106, %107 : vector<24x128xf32>
    %cst_10 = arith.constant 0.000000e+00 : f32
    %109 = vector.broadcast %cst_10 : f32 to vector<24x128xf32>
    %110 = arith.maximumf %108, %109 : vector<24x128xf32>
    %c72 = arith.constant 72 : index
    %c0_11 = arith.constant 0 : index
    %111 = vector.load %arg7[%c72, %c0_11] : memref<576x128xf32, #tpu.memory_space<vmem>>, vector<24x128xf32>
    tpu.vector_store %arg7[%c72, %c0_11], %110 {strides = array<i32>} : memref<576x128xf32, #tpu.memory_space<vmem>>, vector<24x128xf32>,
    %112 = vector.extract_strided_slice %47 {offsets = [12, 0, 0], sizes = [1, 26, 128], strides = [1, 1, 1]} : vector<26x26x128xf32> to vector<1x26x128xf32>
    %113 = vector.shape_cast %112 : vector<1x26x128xf32> to vector<26x128xf32>
    %114 = vector.extract_strided_slice %47 {offsets = [13, 0, 0], sizes = [1, 26, 128], strides = [1, 1, 1]} : vector<26x26x128xf32> to vector<1x26x128xf32>
    %115 = vector.shape_cast %114 : vector<1x26x128xf32> to vector<26x128xf32>
    %116 = arith.maximumf %113, %115 : vector<26x128xf32>
    %117 = vector.extract_strided_slice %47 {offsets = [14, 0, 0], sizes = [1, 26, 128], strides = [1, 1, 1]} : vector<26x26x128xf32> to vector<1x26x128xf32>
    %118 = vector.shape_cast %117 : vector<1x26x128xf32> to vector<26x128xf32>
    %119 = arith.maximumf %116, %118 : vector<26x128xf32>
    %120 = vector.extract_strided_slice %119 {offsets = [0, 0], sizes = [24, 128], strides = [1, 1]} : vector<26x128xf32> to vector<24x128xf32>
    %121 = vector.extract_strided_slice %119 {offsets = [1, 0], sizes = [24, 128], strides = [1, 1]} : vector<26x128xf32> to vector<24x128xf32>
    %122 = arith.maximumf %120, %121 : vector<24x128xf32>
    %123 = vector.extract_strided_slice %119 {offsets = [2, 0], sizes = [24, 128], strides = [1, 1]} : vector<26x128xf32> to vector<24x128xf32>
    %124 = arith.maximumf %122, %123 : vector<24x128xf32>
    %cst_12 = arith.constant 0.000000e+00 : f32
    %125 = vector.broadcast %cst_12 : f32 to vector<24x128xf32>
    %126 = arith.maximumf %124, %125 : vector<24x128xf32>
    %c96 = arith.constant 96 : index
    %c0_13 = arith.constant 0 : index
    %127 = vector.load %arg7[%c96, %c0_13] : memref<576x128xf32, #tpu.memory_space<vmem>>, vector<24x128xf32>
    tpu.vector_store %arg7[%c96, %c0_13], %126 {strides = array<i32>} : memref<576x128xf32, #tpu.memory_space<vmem>>, vector<24x128xf32>,
    %128 = vector.extract_strided_slice %47 {offsets = [15, 0, 0], sizes = [1, 26, 128], strides = [1, 1, 1]} : vector<26x26x128xf32> to vector<1x26x128xf32>
    %129 = vector.shape_cast %128 : vector<1x26x128xf32> to vector<26x128xf32>
    %130 = vector.extract_strided_slice %47 {offsets = [16, 0, 0], sizes = [1, 26, 128], strides = [1, 1, 1]} : vector<26x26x128xf32> to vector<1x26x128xf32>
    %131 = vector.shape_cast %130 : vector<1x26x128xf32> to vector<26x128xf32>
    %132 = arith.maximumf %129, %131 : vector<26x128xf32>
    %133 = vector.extract_strided_slice %47 {offsets = [17, 0, 0], sizes = [1, 26, 128], strides = [1, 1, 1]} : vector<26x26x128xf32> to vector<1x26x128xf32>
    %134 = vector.shape_cast %133 : vector<1x26x128xf32> to vector<26x128xf32>
    %135 = arith.maximumf %132, %134 : vector<26x128xf32>
    %136 = vector.extract_strided_slice %135 {offsets = [0, 0], sizes = [24, 128], strides = [1, 1]} : vector<26x128xf32> to vector<24x128xf32>
    %137 = vector.extract_strided_slice %135 {offsets = [1, 0], sizes = [24, 128], strides = [1, 1]} : vector<26x128xf32> to vector<24x128xf32>
    %138 = arith.maximumf %136, %137 : vector<24x128xf32>
    %139 = vector.extract_strided_slice %135 {offsets = [2, 0], sizes = [24, 128], strides = [1, 1]} : vector<26x128xf32> to vector<24x128xf32>
    %140 = arith.maximumf %138, %139 : vector<24x128xf32>
    %cst_14 = arith.constant 0.000000e+00 : f32
    %141 = vector.broadcast %cst_14 : f32 to vector<24x128xf32>
    %142 = arith.maximumf %140, %141 : vector<24x128xf32>
    %c120 = arith.constant 120 : index
    %c0_15 = arith.constant 0 : index
    %143 = vector.load %arg7[%c120, %c0_15] : memref<576x128xf32, #tpu.memory_space<vmem>>, vector<24x128xf32>
    tpu.vector_store %arg7[%c120, %c0_15], %142 {strides = array<i32>} : memref<576x128xf32, #tpu.memory_space<vmem>>, vector<24x128xf32>,
    %144 = vector.extract_strided_slice %47 {offsets = [18, 0, 0], sizes = [1, 26, 128], strides = [1, 1, 1]} : vector<26x26x128xf32> to vector<1x26x128xf32>
    %145 = vector.shape_cast %144 : vector<1x26x128xf32> to vector<26x128xf32>
    %146 = vector.extract_strided_slice %47 {offsets = [19, 0, 0], sizes = [1, 26, 128], strides = [1, 1, 1]} : vector<26x26x128xf32> to vector<1x26x128xf32>
    %147 = vector.shape_cast %146 : vector<1x26x128xf32> to vector<26x128xf32>
    %148 = arith.maximumf %145, %147 : vector<26x128xf32>
    %149 = vector.extract_strided_slice %47 {offsets = [20, 0, 0], sizes = [1, 26, 128], strides = [1, 1, 1]} : vector<26x26x128xf32> to vector<1x26x128xf32>
    %150 = vector.shape_cast %149 : vector<1x26x128xf32> to vector<26x128xf32>
    %151 = arith.maximumf %148, %150 : vector<26x128xf32>
    %152 = vector.extract_strided_slice %151 {offsets = [0, 0], sizes = [24, 128], strides = [1, 1]} : vector<26x128xf32> to vector<24x128xf32>
    %153 = vector.extract_strided_slice %151 {offsets = [1, 0], sizes = [24, 128], strides = [1, 1]} : vector<26x128xf32> to vector<24x128xf32>
    %154 = arith.maximumf %152, %153 : vector<24x128xf32>
    %155 = vector.extract_strided_slice %151 {offsets = [2, 0], sizes = [24, 128], strides = [1, 1]} : vector<26x128xf32> to vector<24x128xf32>
    %156 = arith.maximumf %154, %155 : vector<24x128xf32>
    %cst_16 = arith.constant 0.000000e+00 : f32
    %157 = vector.broadcast %cst_16 : f32 to vector<24x128xf32>
    %158 = arith.maximumf %156, %157 : vector<24x128xf32>
    %c144 = arith.constant 144 : index
    %c0_17 = arith.constant 0 : index
    %159 = vector.load %arg7[%c144, %c0_17] : memref<576x128xf32, #tpu.memory_space<vmem>>, vector<24x128xf32>
    tpu.vector_store %arg7[%c144, %c0_17], %158 {strides = array<i32>} : memref<576x128xf32, #tpu.memory_space<vmem>>, vector<24x128xf32>,
    %160 = vector.extract_strided_slice %47 {offsets = [21, 0, 0], sizes = [1, 26, 128], strides = [1, 1, 1]} : vector<26x26x128xf32> to vector<1x26x128xf32>
    %161 = vector.shape_cast %160 : vector<1x26x128xf32> to vector<26x128xf32>
    %162 = vector.extract_strided_slice %47 {offsets = [22, 0, 0], sizes = [1, 26, 128], strides = [1, 1, 1]} : vector<26x26x128xf32> to vector<1x26x128xf32>
    %163 = vector.shape_cast %162 : vector<1x26x128xf32> to vector<26x128xf32>
    %164 = arith.maximumf %161, %163 : vector<26x128xf32>
    %165 = vector.extract_strided_slice %47 {offsets = [23, 0, 0], sizes = [1, 26, 128], strides = [1, 1, 1]} : vector<26x26x128xf32> to vector<1x26x128xf32>
    %166 = vector.shape_cast %165 : vector<1x26x128xf32> to vector<26x128xf32>
    %167 = arith.maximumf %164, %166 : vector<26x128xf32>
    %168 = vector.extract_strided_slice %167 {offsets = [0, 0], sizes = [24, 128], strides = [1, 1]} : vector<26x128xf32> to vector<24x128xf32>
    %169 = vector.extract_strided_slice %167 {offsets = [1, 0], sizes = [24, 128], strides = [1, 1]} : vector<26x128xf32> to vector<24x128xf32>
    %170 = arith.maximumf %168, %169 : vector<24x128xf32>
    %171 = vector.extract_strided_slice %167 {offsets = [2, 0], sizes = [24, 128], strides = [1, 1]} : vector<26x128xf32> to vector<24x128xf32>
    %172 = arith.maximumf %170, %171 : vector<24x128xf32>
    %cst_18 = arith.constant 0.000000e+00 : f32
    %173 = vector.broadcast %cst_18 : f32 to vector<24x128xf32>
    %174 = arith.maximumf %172, %173 : vector<24x128xf32>
    %c168 = arith.constant 168 : index
    %c0_19 = arith.constant 0 : index
    %175 = vector.load %arg7[%c168, %c0_19] : memref<576x128xf32, #tpu.memory_space<vmem>>, vector<24x128xf32>
    tpu.vector_store %arg7[%c168, %c0_19], %174 {strides = array<i32>} : memref<576x128xf32, #tpu.memory_space<vmem>>, vector<24x128xf32>,
    %c9 = arith.constant 9 : index
    %176 = memref.load %arg2[%c9] : memref<27xf32, #tpu.memory_space<smem>>
    %177 = vector.broadcast %176 : f32 to vector<26x26x128xf32>
    %178 = arith.mulf %1, %177 : vector<26x26x128xf32>
    %c10 = arith.constant 10 : index
    %179 = memref.load %arg2[%c10] : memref<27xf32, #tpu.memory_space<smem>>
    %180 = vector.broadcast %179 : f32 to vector<26x26x128xf32>
    %181 = arith.mulf %2, %180 : vector<26x26x128xf32>
    %182 = arith.addf %178, %181 : vector<26x26x128xf32>
    %c11 = arith.constant 11 : index
    %183 = memref.load %arg2[%c11] : memref<27xf32, #tpu.memory_space<smem>>
    %184 = vector.broadcast %183 : f32 to vector<26x26x128xf32>
    %185 = arith.mulf %3, %184 : vector<26x26x128xf32>
    %186 = arith.addf %182, %185 : vector<26x26x128xf32>
    %c12 = arith.constant 12 : index
    %187 = memref.load %arg2[%c12] : memref<27xf32, #tpu.memory_space<smem>>
    %188 = vector.broadcast %187 : f32 to vector<26x26x128xf32>
    %189 = arith.mulf %4, %188 : vector<26x26x128xf32>
    %190 = arith.addf %186, %189 : vector<26x26x128xf32>
    %c13 = arith.constant 13 : index
    %191 = memref.load %arg2[%c13] : memref<27xf32, #tpu.memory_space<smem>>
    %192 = vector.broadcast %191 : f32 to vector<26x26x128xf32>
    %193 = arith.mulf %5, %192 : vector<26x26x128xf32>
    %194 = arith.addf %190, %193 : vector<26x26x128xf32>
    %c14 = arith.constant 14 : index
    %195 = memref.load %arg2[%c14] : memref<27xf32, #tpu.memory_space<smem>>
    %196 = vector.broadcast %195 : f32 to vector<26x26x128xf32>
    %197 = arith.mulf %6, %196 : vector<26x26x128xf32>
    %198 = arith.addf %194, %197 : vector<26x26x128xf32>
    %c15 = arith.constant 15 : index
    %199 = memref.load %arg2[%c15] : memref<27xf32, #tpu.memory_space<smem>>
    %200 = vector.broadcast %199 : f32 to vector<26x26x128xf32>
    %201 = arith.mulf %7, %200 : vector<26x26x128xf32>
    %202 = arith.addf %198, %201 : vector<26x26x128xf32>
    %c16 = arith.constant 16 : index
    %203 = memref.load %arg2[%c16] : memref<27xf32, #tpu.memory_space<smem>>
    %204 = vector.broadcast %203 : f32 to vector<26x26x128xf32>
    %205 = arith.mulf %8, %204 : vector<26x26x128xf32>
    %206 = arith.addf %202, %205 : vector<26x26x128xf32>
    %c17 = arith.constant 17 : index
    %207 = memref.load %arg2[%c17] : memref<27xf32, #tpu.memory_space<smem>>
    %208 = vector.broadcast %207 : f32 to vector<26x26x128xf32>
    %209 = arith.mulf %9, %208 : vector<26x26x128xf32>
    %210 = arith.addf %206, %209 : vector<26x26x128xf32>
    %c1_20 = arith.constant 1 : index
    %211 = memref.load %arg3[%c1_20] : memref<3xf32, #tpu.memory_space<smem>>
    %212 = vector.broadcast %211 : f32 to vector<26x26x128xf32>
    %213 = arith.addf %210, %212 : vector<26x26x128xf32>
    %214 = vector.extract_strided_slice %213 {offsets = [0, 0, 0], sizes = [1, 26, 128], strides = [1, 1, 1]} : vector<26x26x128xf32> to vector<1x26x128xf32>
    %215 = vector.shape_cast %214 : vector<1x26x128xf32> to vector<26x128xf32>
    %216 = vector.extract_strided_slice %213 {offsets = [1, 0, 0], sizes = [1, 26, 128], strides = [1, 1, 1]} : vector<26x26x128xf32> to vector<1x26x128xf32>
    %217 = vector.shape_cast %216 : vector<1x26x128xf32> to vector<26x128xf32>
    %218 = arith.maximumf %215, %217 : vector<26x128xf32>
    %219 = vector.extract_strided_slice %213 {offsets = [2, 0, 0], sizes = [1, 26, 128], strides = [1, 1, 1]} : vector<26x26x128xf32> to vector<1x26x128xf32>
    %220 = vector.shape_cast %219 : vector<1x26x128xf32> to vector<26x128xf32>
    %221 = arith.maximumf %218, %220 : vector<26x128xf32>
    %222 = vector.extract_strided_slice %221 {offsets = [0, 0], sizes = [24, 128], strides = [1, 1]} : vector<26x128xf32> to vector<24x128xf32>
    %223 = vector.extract_strided_slice %221 {offsets = [1, 0], sizes = [24, 128], strides = [1, 1]} : vector<26x128xf32> to vector<24x128xf32>
    %224 = arith.maximumf %222, %223 : vector<24x128xf32>
    %225 = vector.extract_strided_slice %221 {offsets = [2, 0], sizes = [24, 128], strides = [1, 1]} : vector<26x128xf32> to vector<24x128xf32>
    %226 = arith.maximumf %224, %225 : vector<24x128xf32>
    %cst_21 = arith.constant 0.000000e+00 : f32
    %227 = vector.broadcast %cst_21 : f32 to vector<24x128xf32>
    %228 = arith.maximumf %226, %227 : vector<24x128xf32>
    %c192 = arith.constant 192 : index
    %c0_22 = arith.constant 0 : index
    %229 = vector.load %arg7[%c192, %c0_22] : memref<576x128xf32, #tpu.memory_space<vmem>>, vector<24x128xf32>
    tpu.vector_store %arg7[%c192, %c0_22], %228 {strides = array<i32>} : memref<576x128xf32, #tpu.memory_space<vmem>>, vector<24x128xf32>,
    %230 = vector.extract_strided_slice %213 {offsets = [3, 0, 0], sizes = [1, 26, 128], strides = [1, 1, 1]} : vector<26x26x128xf32> to vector<1x26x128xf32>
    %231 = vector.shape_cast %230 : vector<1x26x128xf32> to vector<26x128xf32>
    %232 = vector.extract_strided_slice %213 {offsets = [4, 0, 0], sizes = [1, 26, 128], strides = [1, 1, 1]} : vector<26x26x128xf32> to vector<1x26x128xf32>
    %233 = vector.shape_cast %232 : vector<1x26x128xf32> to vector<26x128xf32>
    %234 = arith.maximumf %231, %233 : vector<26x128xf32>
    %235 = vector.extract_strided_slice %213 {offsets = [5, 0, 0], sizes = [1, 26, 128], strides = [1, 1, 1]} : vector<26x26x128xf32> to vector<1x26x128xf32>
    %236 = vector.shape_cast %235 : vector<1x26x128xf32> to vector<26x128xf32>
    %237 = arith.maximumf %234, %236 : vector<26x128xf32>
    %238 = vector.extract_strided_slice %237 {offsets = [0, 0], sizes = [24, 128], strides = [1, 1]} : vector<26x128xf32> to vector<24x128xf32>
    %239 = vector.extract_strided_slice %237 {offsets = [1, 0], sizes = [24, 128], strides = [1, 1]} : vector<26x128xf32> to vector<24x128xf32>
    %240 = arith.maximumf %238, %239 : vector<24x128xf32>
    %241 = vector.extract_strided_slice %237 {offsets = [2, 0], sizes = [24, 128], strides = [1, 1]} : vector<26x128xf32> to vector<24x128xf32>
    %242 = arith.maximumf %240, %241 : vector<24x128xf32>
    %cst_23 = arith.constant 0.000000e+00 : f32
    %243 = vector.broadcast %cst_23 : f32 to vector<24x128xf32>
    %244 = arith.maximumf %242, %243 : vector<24x128xf32>
    %c216 = arith.constant 216 : index
    %c0_24 = arith.constant 0 : index
    %245 = vector.load %arg7[%c216, %c0_24] : memref<576x128xf32, #tpu.memory_space<vmem>>, vector<24x128xf32>
    tpu.vector_store %arg7[%c216, %c0_24], %244 {strides = array<i32>} : memref<576x128xf32, #tpu.memory_space<vmem>>, vector<24x128xf32>,
    %246 = vector.extract_strided_slice %213 {offsets = [6, 0, 0], sizes = [1, 26, 128], strides = [1, 1, 1]} : vector<26x26x128xf32> to vector<1x26x128xf32>
    %247 = vector.shape_cast %246 : vector<1x26x128xf32> to vector<26x128xf32>
    %248 = vector.extract_strided_slice %213 {offsets = [7, 0, 0], sizes = [1, 26, 128], strides = [1, 1, 1]} : vector<26x26x128xf32> to vector<1x26x128xf32>
    %249 = vector.shape_cast %248 : vector<1x26x128xf32> to vector<26x128xf32>
    %250 = arith.maximumf %247, %249 : vector<26x128xf32>
    %251 = vector.extract_strided_slice %213 {offsets = [8, 0, 0], sizes = [1, 26, 128], strides = [1, 1, 1]} : vector<26x26x128xf32> to vector<1x26x128xf32>
    %252 = vector.shape_cast %251 : vector<1x26x128xf32> to vector<26x128xf32>
    %253 = arith.maximumf %250, %252 : vector<26x128xf32>
    %254 = vector.extract_strided_slice %253 {offsets = [0, 0], sizes = [24, 128], strides = [1, 1]} : vector<26x128xf32> to vector<24x128xf32>
    %255 = vector.extract_strided_slice %253 {offsets = [1, 0], sizes = [24, 128], strides = [1, 1]} : vector<26x128xf32> to vector<24x128xf32>
    %256 = arith.maximumf %254, %255 : vector<24x128xf32>
    %257 = vector.extract_strided_slice %253 {offsets = [2, 0], sizes = [24, 128], strides = [1, 1]} : vector<26x128xf32> to vector<24x128xf32>
    %258 = arith.maximumf %256, %257 : vector<24x128xf32>
    %cst_25 = arith.constant 0.000000e+00 : f32
    %259 = vector.broadcast %cst_25 : f32 to vector<24x128xf32>
    %260 = arith.maximumf %258, %259 : vector<24x128xf32>
    %c240 = arith.constant 240 : index
    %c0_26 = arith.constant 0 : index
    %261 = vector.load %arg7[%c240, %c0_26] : memref<576x128xf32, #tpu.memory_space<vmem>>, vector<24x128xf32>
    tpu.vector_store %arg7[%c240, %c0_26], %260 {strides = array<i32>} : memref<576x128xf32, #tpu.memory_space<vmem>>, vector<24x128xf32>,
    %262 = vector.extract_strided_slice %213 {offsets = [9, 0, 0], sizes = [1, 26, 128], strides = [1, 1, 1]} : vector<26x26x128xf32> to vector<1x26x128xf32>
    %263 = vector.shape_cast %262 : vector<1x26x128xf32> to vector<26x128xf32>
    %264 = vector.extract_strided_slice %213 {offsets = [10, 0, 0], sizes = [1, 26, 128], strides = [1, 1, 1]} : vector<26x26x128xf32> to vector<1x26x128xf32>
    %265 = vector.shape_cast %264 : vector<1x26x128xf32> to vector<26x128xf32>
    %266 = arith.maximumf %263, %265 : vector<26x128xf32>
    %267 = vector.extract_strided_slice %213 {offsets = [11, 0, 0], sizes = [1, 26, 128], strides = [1, 1, 1]} : vector<26x26x128xf32> to vector<1x26x128xf32>
    %268 = vector.shape_cast %267 : vector<1x26x128xf32> to vector<26x128xf32>
    %269 = arith.maximumf %266, %268 : vector<26x128xf32>
    %270 = vector.extract_strided_slice %269 {offsets = [0, 0], sizes = [24, 128], strides = [1, 1]} : vector<26x128xf32> to vector<24x128xf32>
    %271 = vector.extract_strided_slice %269 {offsets = [1, 0], sizes = [24, 128], strides = [1, 1]} : vector<26x128xf32> to vector<24x128xf32>
    %272 = arith.maximumf %270, %271 : vector<24x128xf32>
    %273 = vector.extract_strided_slice %269 {offsets = [2, 0], sizes = [24, 128], strides = [1, 1]} : vector<26x128xf32> to vector<24x128xf32>
    %274 = arith.maximumf %272, %273 : vector<24x128xf32>
    %cst_27 = arith.constant 0.000000e+00 : f32
    %275 = vector.broadcast %cst_27 : f32 to vector<24x128xf32>
    %276 = arith.maximumf %274, %275 : vector<24x128xf32>
    %c264 = arith.constant 264 : index
    %c0_28 = arith.constant 0 : index
    %277 = vector.load %arg7[%c264, %c0_28] : memref<576x128xf32, #tpu.memory_space<vmem>>, vector<24x128xf32>
    tpu.vector_store %arg7[%c264, %c0_28], %276 {strides = array<i32>} : memref<576x128xf32, #tpu.memory_space<vmem>>, vector<24x128xf32>,
    %278 = vector.extract_strided_slice %213 {offsets = [12, 0, 0], sizes = [1, 26, 128], strides = [1, 1, 1]} : vector<26x26x128xf32> to vector<1x26x128xf32>
    %279 = vector.shape_cast %278 : vector<1x26x128xf32> to vector<26x128xf32>
    %280 = vector.extract_strided_slice %213 {offsets = [13, 0, 0], sizes = [1, 26, 128], strides = [1, 1, 1]} : vector<26x26x128xf32> to vector<1x26x128xf32>
    %281 = vector.shape_cast %280 : vector<1x26x128xf32> to vector<26x128xf32>
    %282 = arith.maximumf %279, %281 : vector<26x128xf32>
    %283 = vector.extract_strided_slice %213 {offsets = [14, 0, 0], sizes = [1, 26, 128], strides = [1, 1, 1]} : vector<26x26x128xf32> to vector<1x26x128xf32>
    %284 = vector.shape_cast %283 : vector<1x26x128xf32> to vector<26x128xf32>
    %285 = arith.maximumf %282, %284 : vector<26x128xf32>
    %286 = vector.extract_strided_slice %285 {offsets = [0, 0], sizes = [24, 128], strides = [1, 1]} : vector<26x128xf32> to vector<24x128xf32>
    %287 = vector.extract_strided_slice %285 {offsets = [1, 0], sizes = [24, 128], strides = [1, 1]} : vector<26x128xf32> to vector<24x128xf32>
    %288 = arith.maximumf %286, %287 : vector<24x128xf32>
    %289 = vector.extract_strided_slice %285 {offsets = [2, 0], sizes = [24, 128], strides = [1, 1]} : vector<26x128xf32> to vector<24x128xf32>
    %290 = arith.maximumf %288, %289 : vector<24x128xf32>
    %cst_29 = arith.constant 0.000000e+00 : f32
    %291 = vector.broadcast %cst_29 : f32 to vector<24x128xf32>
    %292 = arith.maximumf %290, %291 : vector<24x128xf32>
    %c288 = arith.constant 288 : index
    %c0_30 = arith.constant 0 : index
    %293 = vector.load %arg7[%c288, %c0_30] : memref<576x128xf32, #tpu.memory_space<vmem>>, vector<24x128xf32>
    tpu.vector_store %arg7[%c288, %c0_30], %292 {strides = array<i32>} : memref<576x128xf32, #tpu.memory_space<vmem>>, vector<24x128xf32>,
    %294 = vector.extract_strided_slice %213 {offsets = [15, 0, 0], sizes = [1, 26, 128], strides = [1, 1, 1]} : vector<26x26x128xf32> to vector<1x26x128xf32>
    %295 = vector.shape_cast %294 : vector<1x26x128xf32> to vector<26x128xf32>
    %296 = vector.extract_strided_slice %213 {offsets = [16, 0, 0], sizes = [1, 26, 128], strides = [1, 1, 1]} : vector<26x26x128xf32> to vector<1x26x128xf32>
    %297 = vector.shape_cast %296 : vector<1x26x128xf32> to vector<26x128xf32>
    %298 = arith.maximumf %295, %297 : vector<26x128xf32>
    %299 = vector.extract_strided_slice %213 {offsets = [17, 0, 0], sizes = [1, 26, 128], strides = [1, 1, 1]} : vector<26x26x128xf32> to vector<1x26x128xf32>
    %300 = vector.shape_cast %299 : vector<1x26x128xf32> to vector<26x128xf32>
    %301 = arith.maximumf %298, %300 : vector<26x128xf32>
    %302 = vector.extract_strided_slice %301 {offsets = [0, 0], sizes = [24, 128], strides = [1, 1]} : vector<26x128xf32> to vector<24x128xf32>
    %303 = vector.extract_strided_slice %301 {offsets = [1, 0], sizes = [24, 128], strides = [1, 1]} : vector<26x128xf32> to vector<24x128xf32>
    %304 = arith.maximumf %302, %303 : vector<24x128xf32>
    %305 = vector.extract_strided_slice %301 {offsets = [2, 0], sizes = [24, 128], strides = [1, 1]} : vector<26x128xf32> to vector<24x128xf32>
    %306 = arith.maximumf %304, %305 : vector<24x128xf32>
    %cst_31 = arith.constant 0.000000e+00 : f32
    %307 = vector.broadcast %cst_31 : f32 to vector<24x128xf32>
    %308 = arith.maximumf %306, %307 : vector<24x128xf32>
    %c312 = arith.constant 312 : index
    %c0_32 = arith.constant 0 : index
    %309 = vector.load %arg7[%c312, %c0_32] : memref<576x128xf32, #tpu.memory_space<vmem>>, vector<24x128xf32>
    tpu.vector_store %arg7[%c312, %c0_32], %308 {strides = array<i32>} : memref<576x128xf32, #tpu.memory_space<vmem>>, vector<24x128xf32>,
    %310 = vector.extract_strided_slice %213 {offsets = [18, 0, 0], sizes = [1, 26, 128], strides = [1, 1, 1]} : vector<26x26x128xf32> to vector<1x26x128xf32>
    %311 = vector.shape_cast %310 : vector<1x26x128xf32> to vector<26x128xf32>
    %312 = vector.extract_strided_slice %213 {offsets = [19, 0, 0], sizes = [1, 26, 128], strides = [1, 1, 1]} : vector<26x26x128xf32> to vector<1x26x128xf32>
    %313 = vector.shape_cast %312 : vector<1x26x128xf32> to vector<26x128xf32>
    %314 = arith.maximumf %311, %313 : vector<26x128xf32>
    %315 = vector.extract_strided_slice %213 {offsets = [20, 0, 0], sizes = [1, 26, 128], strides = [1, 1, 1]} : vector<26x26x128xf32> to vector<1x26x128xf32>
    %316 = vector.shape_cast %315 : vector<1x26x128xf32> to vector<26x128xf32>
    %317 = arith.maximumf %314, %316 : vector<26x128xf32>
    %318 = vector.extract_strided_slice %317 {offsets = [0, 0], sizes = [24, 128], strides = [1, 1]} : vector<26x128xf32> to vector<24x128xf32>
    %319 = vector.extract_strided_slice %317 {offsets = [1, 0], sizes = [24, 128], strides = [1, 1]} : vector<26x128xf32> to vector<24x128xf32>
    %320 = arith.maximumf %318, %319 : vector<24x128xf32>
    %321 = vector.extract_strided_slice %317 {offsets = [2, 0], sizes = [24, 128], strides = [1, 1]} : vector<26x128xf32> to vector<24x128xf32>
    %322 = arith.maximumf %320, %321 : vector<24x128xf32>
    %cst_33 = arith.constant 0.000000e+00 : f32
    %323 = vector.broadcast %cst_33 : f32 to vector<24x128xf32>
    %324 = arith.maximumf %322, %323 : vector<24x128xf32>
    %c336 = arith.constant 336 : index
    %c0_34 = arith.constant 0 : index
    %325 = vector.load %arg7[%c336, %c0_34] : memref<576x128xf32, #tpu.memory_space<vmem>>, vector<24x128xf32>
    tpu.vector_store %arg7[%c336, %c0_34], %324 {strides = array<i32>} : memref<576x128xf32, #tpu.memory_space<vmem>>, vector<24x128xf32>,
    %326 = vector.extract_strided_slice %213 {offsets = [21, 0, 0], sizes = [1, 26, 128], strides = [1, 1, 1]} : vector<26x26x128xf32> to vector<1x26x128xf32>
    %327 = vector.shape_cast %326 : vector<1x26x128xf32> to vector<26x128xf32>
    %328 = vector.extract_strided_slice %213 {offsets = [22, 0, 0], sizes = [1, 26, 128], strides = [1, 1, 1]} : vector<26x26x128xf32> to vector<1x26x128xf32>
    %329 = vector.shape_cast %328 : vector<1x26x128xf32> to vector<26x128xf32>
    %330 = arith.maximumf %327, %329 : vector<26x128xf32>
    %331 = vector.extract_strided_slice %213 {offsets = [23, 0, 0], sizes = [1, 26, 128], strides = [1, 1, 1]} : vector<26x26x128xf32> to vector<1x26x128xf32>
    %332 = vector.shape_cast %331 : vector<1x26x128xf32> to vector<26x128xf32>
    %333 = arith.maximumf %330, %332 : vector<26x128xf32>
    %334 = vector.extract_strided_slice %333 {offsets = [0, 0], sizes = [24, 128], strides = [1, 1]} : vector<26x128xf32> to vector<24x128xf32>
    %335 = vector.extract_strided_slice %333 {offsets = [1, 0], sizes = [24, 128], strides = [1, 1]} : vector<26x128xf32> to vector<24x128xf32>
    %336 = arith.maximumf %334, %335 : vector<24x128xf32>
    %337 = vector.extract_strided_slice %333 {offsets = [2, 0], sizes = [24, 128], strides = [1, 1]} : vector<26x128xf32> to vector<24x128xf32>
    %338 = arith.maximumf %336, %337 : vector<24x128xf32>
    %cst_35 = arith.constant 0.000000e+00 : f32
    %339 = vector.broadcast %cst_35 : f32 to vector<24x128xf32>
    %340 = arith.maximumf %338, %339 : vector<24x128xf32>
    %c360 = arith.constant 360 : index
    %c0_36 = arith.constant 0 : index
    %341 = vector.load %arg7[%c360, %c0_36] : memref<576x128xf32, #tpu.memory_space<vmem>>, vector<24x128xf32>
    tpu.vector_store %arg7[%c360, %c0_36], %340 {strides = array<i32>} : memref<576x128xf32, #tpu.memory_space<vmem>>, vector<24x128xf32>,
    %c18 = arith.constant 18 : index
    %342 = memref.load %arg2[%c18] : memref<27xf32, #tpu.memory_space<smem>>
    %343 = vector.broadcast %342 : f32 to vector<26x26x128xf32>
    %344 = arith.mulf %1, %343 : vector<26x26x128xf32>
    %c19 = arith.constant 19 : index
    %345 = memref.load %arg2[%c19] : memref<27xf32, #tpu.memory_space<smem>>
    %346 = vector.broadcast %345 : f32 to vector<26x26x128xf32>
    %347 = arith.mulf %2, %346 : vector<26x26x128xf32>
    %348 = arith.addf %344, %347 : vector<26x26x128xf32>
    %c20 = arith.constant 20 : index
    %349 = memref.load %arg2[%c20] : memref<27xf32, #tpu.memory_space<smem>>
    %350 = vector.broadcast %349 : f32 to vector<26x26x128xf32>
    %351 = arith.mulf %3, %350 : vector<26x26x128xf32>
    %352 = arith.addf %348, %351 : vector<26x26x128xf32>
    %c21 = arith.constant 21 : index
    %353 = memref.load %arg2[%c21] : memref<27xf32, #tpu.memory_space<smem>>
    %354 = vector.broadcast %353 : f32 to vector<26x26x128xf32>
    %355 = arith.mulf %4, %354 : vector<26x26x128xf32>
    %356 = arith.addf %352, %355 : vector<26x26x128xf32>
    %c22 = arith.constant 22 : index
    %357 = memref.load %arg2[%c22] : memref<27xf32, #tpu.memory_space<smem>>
    %358 = vector.broadcast %357 : f32 to vector<26x26x128xf32>
    %359 = arith.mulf %5, %358 : vector<26x26x128xf32>
    %360 = arith.addf %356, %359 : vector<26x26x128xf32>
    %c23 = arith.constant 23 : index
    %361 = memref.load %arg2[%c23] : memref<27xf32, #tpu.memory_space<smem>>
    %362 = vector.broadcast %361 : f32 to vector<26x26x128xf32>
    %363 = arith.mulf %6, %362 : vector<26x26x128xf32>
    %364 = arith.addf %360, %363 : vector<26x26x128xf32>
    %c24_37 = arith.constant 24 : index
    %365 = memref.load %arg2[%c24_37] : memref<27xf32, #tpu.memory_space<smem>>
    %366 = vector.broadcast %365 : f32 to vector<26x26x128xf32>
    %367 = arith.mulf %7, %366 : vector<26x26x128xf32>
    %368 = arith.addf %364, %367 : vector<26x26x128xf32>
    %c25 = arith.constant 25 : index
    %369 = memref.load %arg2[%c25] : memref<27xf32, #tpu.memory_space<smem>>
    %370 = vector.broadcast %369 : f32 to vector<26x26x128xf32>
    %371 = arith.mulf %8, %370 : vector<26x26x128xf32>
    %372 = arith.addf %368, %371 : vector<26x26x128xf32>
    %c26 = arith.constant 26 : index
    %373 = memref.load %arg2[%c26] : memref<27xf32, #tpu.memory_space<smem>>
    %374 = vector.broadcast %373 : f32 to vector<26x26x128xf32>
    %375 = arith.mulf %9, %374 : vector<26x26x128xf32>
    %376 = arith.addf %372, %375 : vector<26x26x128xf32>
    %c2_38 = arith.constant 2 : index
    %377 = memref.load %arg3[%c2_38] : memref<3xf32, #tpu.memory_space<smem>>
    %378 = vector.broadcast %377 : f32 to vector<26x26x128xf32>
    %379 = arith.addf %376, %378 : vector<26x26x128xf32>
    %380 = vector.extract_strided_slice %379 {offsets = [0, 0, 0], sizes = [1, 26, 128], strides = [1, 1, 1]} : vector<26x26x128xf32> to vector<1x26x128xf32>
    %381 = vector.shape_cast %380 : vector<1x26x128xf32> to vector<26x128xf32>
    %382 = vector.extract_strided_slice %379 {offsets = [1, 0, 0], sizes = [1, 26, 128], strides = [1, 1, 1]} : vector<26x26x128xf32> to vector<1x26x128xf32>
    %383 = vector.shape_cast %382 : vector<1x26x128xf32> to vector<26x128xf32>
    %384 = arith.maximumf %381, %383 : vector<26x128xf32>
    %385 = vector.extract_strided_slice %379 {offsets = [2, 0, 0], sizes = [1, 26, 128], strides = [1, 1, 1]} : vector<26x26x128xf32> to vector<1x26x128xf32>
    %386 = vector.shape_cast %385 : vector<1x26x128xf32> to vector<26x128xf32>
    %387 = arith.maximumf %384, %386 : vector<26x128xf32>
    %388 = vector.extract_strided_slice %387 {offsets = [0, 0], sizes = [24, 128], strides = [1, 1]} : vector<26x128xf32> to vector<24x128xf32>
    %389 = vector.extract_strided_slice %387 {offsets = [1, 0], sizes = [24, 128], strides = [1, 1]} : vector<26x128xf32> to vector<24x128xf32>
    %390 = arith.maximumf %388, %389 : vector<24x128xf32>
    %391 = vector.extract_strided_slice %387 {offsets = [2, 0], sizes = [24, 128], strides = [1, 1]} : vector<26x128xf32> to vector<24x128xf32>
    %392 = arith.maximumf %390, %391 : vector<24x128xf32>
    %cst_39 = arith.constant 0.000000e+00 : f32
    %393 = vector.broadcast %cst_39 : f32 to vector<24x128xf32>
    %394 = arith.maximumf %392, %393 : vector<24x128xf32>
    %c384 = arith.constant 384 : index
    %c0_40 = arith.constant 0 : index
    %395 = vector.load %arg7[%c384, %c0_40] : memref<576x128xf32, #tpu.memory_space<vmem>>, vector<24x128xf32>
    tpu.vector_store %arg7[%c384, %c0_40], %394 {strides = array<i32>} : memref<576x128xf32, #tpu.memory_space<vmem>>, vector<24x128xf32>,
    %396 = vector.extract_strided_slice %379 {offsets = [3, 0, 0], sizes = [1, 26, 128], strides = [1, 1, 1]} : vector<26x26x128xf32> to vector<1x26x128xf32>
    %397 = vector.shape_cast %396 : vector<1x26x128xf32> to vector<26x128xf32>
    %398 = vector.extract_strided_slice %379 {offsets = [4, 0, 0], sizes = [1, 26, 128], strides = [1, 1, 1]} : vector<26x26x128xf32> to vector<1x26x128xf32>
    %399 = vector.shape_cast %398 : vector<1x26x128xf32> to vector<26x128xf32>
    %400 = arith.maximumf %397, %399 : vector<26x128xf32>
    %401 = vector.extract_strided_slice %379 {offsets = [5, 0, 0], sizes = [1, 26, 128], strides = [1, 1, 1]} : vector<26x26x128xf32> to vector<1x26x128xf32>
    %402 = vector.shape_cast %401 : vector<1x26x128xf32> to vector<26x128xf32>
    %403 = arith.maximumf %400, %402 : vector<26x128xf32>
    %404 = vector.extract_strided_slice %403 {offsets = [0, 0], sizes = [24, 128], strides = [1, 1]} : vector<26x128xf32> to vector<24x128xf32>
    %405 = vector.extract_strided_slice %403 {offsets = [1, 0], sizes = [24, 128], strides = [1, 1]} : vector<26x128xf32> to vector<24x128xf32>
    %406 = arith.maximumf %404, %405 : vector<24x128xf32>
    %407 = vector.extract_strided_slice %403 {offsets = [2, 0], sizes = [24, 128], strides = [1, 1]} : vector<26x128xf32> to vector<24x128xf32>
    %408 = arith.maximumf %406, %407 : vector<24x128xf32>
    %cst_41 = arith.constant 0.000000e+00 : f32
    %409 = vector.broadcast %cst_41 : f32 to vector<24x128xf32>
    %410 = arith.maximumf %408, %409 : vector<24x128xf32>
    %c408 = arith.constant 408 : index
    %c0_42 = arith.constant 0 : index
    %411 = vector.load %arg7[%c408, %c0_42] : memref<576x128xf32, #tpu.memory_space<vmem>>, vector<24x128xf32>
    tpu.vector_store %arg7[%c408, %c0_42], %410 {strides = array<i32>} : memref<576x128xf32, #tpu.memory_space<vmem>>, vector<24x128xf32>,
    %412 = vector.extract_strided_slice %379 {offsets = [6, 0, 0], sizes = [1, 26, 128], strides = [1, 1, 1]} : vector<26x26x128xf32> to vector<1x26x128xf32>
    %413 = vector.shape_cast %412 : vector<1x26x128xf32> to vector<26x128xf32>
    %414 = vector.extract_strided_slice %379 {offsets = [7, 0, 0], sizes = [1, 26, 128], strides = [1, 1, 1]} : vector<26x26x128xf32> to vector<1x26x128xf32>
    %415 = vector.shape_cast %414 : vector<1x26x128xf32> to vector<26x128xf32>
    %416 = arith.maximumf %413, %415 : vector<26x128xf32>
    %417 = vector.extract_strided_slice %379 {offsets = [8, 0, 0], sizes = [1, 26, 128], strides = [1, 1, 1]} : vector<26x26x128xf32> to vector<1x26x128xf32>
    %418 = vector.shape_cast %417 : vector<1x26x128xf32> to vector<26x128xf32>
    %419 = arith.maximumf %416, %418 : vector<26x128xf32>
    %420 = vector.extract_strided_slice %419 {offsets = [0, 0], sizes = [24, 128], strides = [1, 1]} : vector<26x128xf32> to vector<24x128xf32>
    %421 = vector.extract_strided_slice %419 {offsets = [1, 0], sizes = [24, 128], strides = [1, 1]} : vector<26x128xf32> to vector<24x128xf32>
    %422 = arith.maximumf %420, %421 : vector<24x128xf32>
    %423 = vector.extract_strided_slice %419 {offsets = [2, 0], sizes = [24, 128], strides = [1, 1]} : vector<26x128xf32> to vector<24x128xf32>
    %424 = arith.maximumf %422, %423 : vector<24x128xf32>
    %cst_43 = arith.constant 0.000000e+00 : f32
    %425 = vector.broadcast %cst_43 : f32 to vector<24x128xf32>
    %426 = arith.maximumf %424, %425 : vector<24x128xf32>
    %c432 = arith.constant 432 : index
    %c0_44 = arith.constant 0 : index
    %427 = vector.load %arg7[%c432, %c0_44] : memref<576x128xf32, #tpu.memory_space<vmem>>, vector<24x128xf32>
    tpu.vector_store %arg7[%c432, %c0_44], %426 {strides = array<i32>} : memref<576x128xf32, #tpu.memory_space<vmem>>, vector<24x128xf32>,
    %428 = vector.extract_strided_slice %379 {offsets = [9, 0, 0], sizes = [1, 26, 128], strides = [1, 1, 1]} : vector<26x26x128xf32> to vector<1x26x128xf32>
    %429 = vector.shape_cast %428 : vector<1x26x128xf32> to vector<26x128xf32>
    %430 = vector.extract_strided_slice %379 {offsets = [10, 0, 0], sizes = [1, 26, 128], strides = [1, 1, 1]} : vector<26x26x128xf32> to vector<1x26x128xf32>
    %431 = vector.shape_cast %430 : vector<1x26x128xf32> to vector<26x128xf32>
    %432 = arith.maximumf %429, %431 : vector<26x128xf32>
    %433 = vector.extract_strided_slice %379 {offsets = [11, 0, 0], sizes = [1, 26, 128], strides = [1, 1, 1]} : vector<26x26x128xf32> to vector<1x26x128xf32>
    %434 = vector.shape_cast %433 : vector<1x26x128xf32> to vector<26x128xf32>
    %435 = arith.maximumf %432, %434 : vector<26x128xf32>
    %436 = vector.extract_strided_slice %435 {offsets = [0, 0], sizes = [24, 128], strides = [1, 1]} : vector<26x128xf32> to vector<24x128xf32>
    %437 = vector.extract_strided_slice %435 {offsets = [1, 0], sizes = [24, 128], strides = [1, 1]} : vector<26x128xf32> to vector<24x128xf32>
    %438 = arith.maximumf %436, %437 : vector<24x128xf32>
    %439 = vector.extract_strided_slice %435 {offsets = [2, 0], sizes = [24, 128], strides = [1, 1]} : vector<26x128xf32> to vector<24x128xf32>
    %440 = arith.maximumf %438, %439 : vector<24x128xf32>
    %cst_45 = arith.constant 0.000000e+00 : f32
    %441 = vector.broadcast %cst_45 : f32 to vector<24x128xf32>
    %442 = arith.maximumf %440, %441 : vector<24x128xf32>
    %c456 = arith.constant 456 : index
    %c0_46 = arith.constant 0 : index
    %443 = vector.load %arg7[%c456, %c0_46] : memref<576x128xf32, #tpu.memory_space<vmem>>, vector<24x128xf32>
    tpu.vector_store %arg7[%c456, %c0_46], %442 {strides = array<i32>} : memref<576x128xf32, #tpu.memory_space<vmem>>, vector<24x128xf32>,
    %444 = vector.extract_strided_slice %379 {offsets = [12, 0, 0], sizes = [1, 26, 128], strides = [1, 1, 1]} : vector<26x26x128xf32> to vector<1x26x128xf32>
    %445 = vector.shape_cast %444 : vector<1x26x128xf32> to vector<26x128xf32>
    %446 = vector.extract_strided_slice %379 {offsets = [13, 0, 0], sizes = [1, 26, 128], strides = [1, 1, 1]} : vector<26x26x128xf32> to vector<1x26x128xf32>
    %447 = vector.shape_cast %446 : vector<1x26x128xf32> to vector<26x128xf32>
    %448 = arith.maximumf %445, %447 : vector<26x128xf32>
    %449 = vector.extract_strided_slice %379 {offsets = [14, 0, 0], sizes = [1, 26, 128], strides = [1, 1, 1]} : vector<26x26x128xf32> to vector<1x26x128xf32>
    %450 = vector.shape_cast %449 : vector<1x26x128xf32> to vector<26x128xf32>
    %451 = arith.maximumf %448, %450 : vector<26x128xf32>
    %452 = vector.extract_strided_slice %451 {offsets = [0, 0], sizes = [24, 128], strides = [1, 1]} : vector<26x128xf32> to vector<24x128xf32>
    %453 = vector.extract_strided_slice %451 {offsets = [1, 0], sizes = [24, 128], strides = [1, 1]} : vector<26x128xf32> to vector<24x128xf32>
    %454 = arith.maximumf %452, %453 : vector<24x128xf32>
    %455 = vector.extract_strided_slice %451 {offsets = [2, 0], sizes = [24, 128], strides = [1, 1]} : vector<26x128xf32> to vector<24x128xf32>
    %456 = arith.maximumf %454, %455 : vector<24x128xf32>
    %cst_47 = arith.constant 0.000000e+00 : f32
    %457 = vector.broadcast %cst_47 : f32 to vector<24x128xf32>
    %458 = arith.maximumf %456, %457 : vector<24x128xf32>
    %c480 = arith.constant 480 : index
    %c0_48 = arith.constant 0 : index
    %459 = vector.load %arg7[%c480, %c0_48] : memref<576x128xf32, #tpu.memory_space<vmem>>, vector<24x128xf32>
    tpu.vector_store %arg7[%c480, %c0_48], %458 {strides = array<i32>} : memref<576x128xf32, #tpu.memory_space<vmem>>, vector<24x128xf32>,
    %460 = vector.extract_strided_slice %379 {offsets = [15, 0, 0], sizes = [1, 26, 128], strides = [1, 1, 1]} : vector<26x26x128xf32> to vector<1x26x128xf32>
    %461 = vector.shape_cast %460 : vector<1x26x128xf32> to vector<26x128xf32>
    %462 = vector.extract_strided_slice %379 {offsets = [16, 0, 0], sizes = [1, 26, 128], strides = [1, 1, 1]} : vector<26x26x128xf32> to vector<1x26x128xf32>
    %463 = vector.shape_cast %462 : vector<1x26x128xf32> to vector<26x128xf32>
    %464 = arith.maximumf %461, %463 : vector<26x128xf32>
    %465 = vector.extract_strided_slice %379 {offsets = [17, 0, 0], sizes = [1, 26, 128], strides = [1, 1, 1]} : vector<26x26x128xf32> to vector<1x26x128xf32>
    %466 = vector.shape_cast %465 : vector<1x26x128xf32> to vector<26x128xf32>
    %467 = arith.maximumf %464, %466 : vector<26x128xf32>
    %468 = vector.extract_strided_slice %467 {offsets = [0, 0], sizes = [24, 128], strides = [1, 1]} : vector<26x128xf32> to vector<24x128xf32>
    %469 = vector.extract_strided_slice %467 {offsets = [1, 0], sizes = [24, 128], strides = [1, 1]} : vector<26x128xf32> to vector<24x128xf32>
    %470 = arith.maximumf %468, %469 : vector<24x128xf32>
    %471 = vector.extract_strided_slice %467 {offsets = [2, 0], sizes = [24, 128], strides = [1, 1]} : vector<26x128xf32> to vector<24x128xf32>
    %472 = arith.maximumf %470, %471 : vector<24x128xf32>
    %cst_49 = arith.constant 0.000000e+00 : f32
    %473 = vector.broadcast %cst_49 : f32 to vector<24x128xf32>
    %474 = arith.maximumf %472, %473 : vector<24x128xf32>
    %c504 = arith.constant 504 : index
    %c0_50 = arith.constant 0 : index
    %475 = vector.load %arg7[%c504, %c0_50] : memref<576x128xf32, #tpu.memory_space<vmem>>, vector<24x128xf32>
    tpu.vector_store %arg7[%c504, %c0_50], %474 {strides = array<i32>} : memref<576x128xf32, #tpu.memory_space<vmem>>, vector<24x128xf32>,
    %476 = vector.extract_strided_slice %379 {offsets = [18, 0, 0], sizes = [1, 26, 128], strides = [1, 1, 1]} : vector<26x26x128xf32> to vector<1x26x128xf32>
    %477 = vector.shape_cast %476 : vector<1x26x128xf32> to vector<26x128xf32>
    %478 = vector.extract_strided_slice %379 {offsets = [19, 0, 0], sizes = [1, 26, 128], strides = [1, 1, 1]} : vector<26x26x128xf32> to vector<1x26x128xf32>
    %479 = vector.shape_cast %478 : vector<1x26x128xf32> to vector<26x128xf32>
    %480 = arith.maximumf %477, %479 : vector<26x128xf32>
    %481 = vector.extract_strided_slice %379 {offsets = [20, 0, 0], sizes = [1, 26, 128], strides = [1, 1, 1]} : vector<26x26x128xf32> to vector<1x26x128xf32>
    %482 = vector.shape_cast %481 : vector<1x26x128xf32> to vector<26x128xf32>
    %483 = arith.maximumf %480, %482 : vector<26x128xf32>
    %484 = vector.extract_strided_slice %483 {offsets = [0, 0], sizes = [24, 128], strides = [1, 1]} : vector<26x128xf32> to vector<24x128xf32>
    %485 = vector.extract_strided_slice %483 {offsets = [1, 0], sizes = [24, 128], strides = [1, 1]} : vector<26x128xf32> to vector<24x128xf32>
    %486 = arith.maximumf %484, %485 : vector<24x128xf32>
    %487 = vector.extract_strided_slice %483 {offsets = [2, 0], sizes = [24, 128], strides = [1, 1]} : vector<26x128xf32> to vector<24x128xf32>
    %488 = arith.maximumf %486, %487 : vector<24x128xf32>
    %cst_51 = arith.constant 0.000000e+00 : f32
    %489 = vector.broadcast %cst_51 : f32 to vector<24x128xf32>
    %490 = arith.maximumf %488, %489 : vector<24x128xf32>
    %c528 = arith.constant 528 : index
    %c0_52 = arith.constant 0 : index
    %491 = vector.load %arg7[%c528, %c0_52] : memref<576x128xf32, #tpu.memory_space<vmem>>, vector<24x128xf32>
    tpu.vector_store %arg7[%c528, %c0_52], %490 {strides = array<i32>} : memref<576x128xf32, #tpu.memory_space<vmem>>, vector<24x128xf32>,
    %492 = vector.extract_strided_slice %379 {offsets = [21, 0, 0], sizes = [1, 26, 128], strides = [1, 1, 1]} : vector<26x26x128xf32> to vector<1x26x128xf32>
    %493 = vector.shape_cast %492 : vector<1x26x128xf32> to vector<26x128xf32>
    %494 = vector.extract_strided_slice %379 {offsets = [22, 0, 0], sizes = [1, 26, 128], strides = [1, 1, 1]} : vector<26x26x128xf32> to vector<1x26x128xf32>
    %495 = vector.shape_cast %494 : vector<1x26x128xf32> to vector<26x128xf32>
    %496 = arith.maximumf %493, %495 : vector<26x128xf32>
    %497 = vector.extract_strided_slice %379 {offsets = [23, 0, 0], sizes = [1, 26, 128], strides = [1, 1, 1]} : vector<26x26x128xf32> to vector<1x26x128xf32>
    %498 = vector.shape_cast %497 : vector<1x26x128xf32> to vector<26x128xf32>
    %499 = arith.maximumf %496, %498 : vector<26x128xf32>
    %500 = vector.extract_strided_slice %499 {offsets = [0, 0], sizes = [24, 128], strides = [1, 1]} : vector<26x128xf32> to vector<24x128xf32>
    %501 = vector.extract_strided_slice %499 {offsets = [1, 0], sizes = [24, 128], strides = [1, 1]} : vector<26x128xf32> to vector<24x128xf32>
    %502 = arith.maximumf %500, %501 : vector<24x128xf32>
    %503 = vector.extract_strided_slice %499 {offsets = [2, 0], sizes = [24, 128], strides = [1, 1]} : vector<26x128xf32> to vector<24x128xf32>
    %504 = arith.maximumf %502, %503 : vector<24x128xf32>
    %cst_53 = arith.constant 0.000000e+00 : f32
    %505 = vector.broadcast %cst_53 : f32 to vector<24x128xf32>
    %506 = arith.maximumf %504, %505 : vector<24x128xf32>
    %c552 = arith.constant 552 : index
    %c0_54 = arith.constant 0 : index
    %507 = vector.load %arg7[%c552, %c0_54] : memref<576x128xf32, #tpu.memory_space<vmem>>, vector<24x128xf32>
    tpu.vector_store %arg7[%c552, %c0_54], %506 {strides = array<i32>} : memref<576x128xf32, #tpu.memory_space<vmem>>, vector<24x128xf32>,
    %c0_55 = arith.constant 0 : index
    %c0_56 = arith.constant 0 : index
    %508 = vector.load %arg4[%c0_55, %c0_56] : memref<10x576xf32, #tpu.memory_space<vmem>>, vector<10x576xf32>
    %c0_57 = arith.constant 0 : index
    %c0_58 = arith.constant 0 : index
    %509 = vector.load %arg7[%c0_57, %c0_58] : memref<576x128xf32, #tpu.memory_space<vmem>>, vector<576x128xf32>
    %cst_59 = arith.constant dense<0.000000e+00> : vector<10x128xf32>
    %510 = tpu.matmul %508, %509, %cst_59 {dimension_numbers = #tpu.dot_dimension_numbers<[1], [0], [0], [1], [0, 0, 1, 1], [], []>} : vector<10x576xf32>, vector<576x128xf32>, vector<10x128xf32> -> vector<10x128xf32>
    %c0_60 = arith.constant 0 : index
    %c0_61 = arith.constant 0 : index
    %511 = vector.load %arg5[%c0_60, %c0_61] : memref<10x1xf32, #tpu.memory_space<vmem>>, vector<10x1xf32>
    %512 = vector.broadcast %511 : vector<10x1xf32> to vector<10x128xf32>
    %513 = arith.addf %510, %512 : vector<10x128xf32>
    %cst_62 = arith.constant dense<0xFF800000> : vector<128xf32>
    %514 = vector.multi_reduction <maximumf>, %513, %cst_62 [0] : vector<10x128xf32> to vector<128xf32>
    %515 = vector.shape_cast %514 : vector<128xf32> to vector<1x128xf32>
    %516 = vector.broadcast %515 : vector<1x128xf32> to vector<10x128xf32>
    %517 = arith.subf %513, %516 : vector<10x128xf32>
    %518 = math.exp %517 : vector<10x128xf32>
    %cst_63 = arith.constant dense<0.000000e+00> : vector<128xf32>
    %519 = vector.multi_reduction <add>, %518, %cst_63 [0] : vector<10x128xf32> to vector<128xf32>
    %520 = vector.shape_cast %519 : vector<128xf32> to vector<1x128xf32>
    %521 = math.log %520 : vector<1x128xf32>
    %522 = vector.broadcast %521 : vector<1x128xf32> to vector<10x128xf32>
    %523 = arith.subf %517, %522 : vector<10x128xf32>
    %c0_64 = arith.constant 0 : index
    %c0_65 = arith.constant 0 : index
    %524 = vector.load %arg6[%c0_64, %c0_65] : memref<10x128xf32, #tpu.memory_space<vmem>>, vector<10x128xf32>
    tpu.vector_store %arg6[%c0_64, %c0_65], %523 {strides = array<i32>} : memref<10x128xf32, #tpu.memory_space<vmem>>, vector<10x128xf32>,
    return
  }
  func.func @transform_0(%arg0: i32) -> (i32, i32, i32) {
    %c0_i32 = arith.constant 0 : i32
    %c0_i32_0 = arith.constant 0 : i32
    %c0_i32_1 = arith.constant 0 : i32
    return %c0_i32, %c0_i32_0, %arg0 : i32, i32, i32
  }
  func.func @transform_1(%arg0: i32) -> i32 {
    %c0_i32 = arith.constant 0 : i32
    %c0_i32_0 = arith.constant 0 : i32
    return %c0_i32 : i32
  }
  func.func @transform_2(%arg0: i32) -> i32 {
    %c0_i32 = arith.constant 0 : i32
    %c0_i32_0 = arith.constant 0 : i32
    return %c0_i32 : i32
  }
  func.func @transform_3(%arg0: i32) -> (i32, i32) {
    %c0_i32 = arith.constant 0 : i32
    %c0_i32_0 = arith.constant 0 : i32
    %c0_i32_1 = arith.constant 0 : i32
    return %c0_i32, %c0_i32_0 : i32, i32
  }
  func.func @transform_4(%arg0: i32) -> (i32, i32) {
    %c0_i32 = arith.constant 0 : i32
    %c0_i32_0 = arith.constant 0 : i32
    %c0_i32_1 = arith.constant 0 : i32
    return %c0_i32, %c0_i32_0 : i32, i32
  }
  func.func @transform_5(%arg0: i32) -> (i32, i32) {
    %c0_i32 = arith.constant 0 : i32
    %c0_i32_0 = arith.constant 0 : i32
    return %c0_i32, %arg0 : i32, i32
  }
}

</mosaic_0001>

<llo_original>
// kernel: convnet_forward.1
$region0: #{convnet_forward.1}
  #allocation0 [shape = 'u32[]', space=smem, size = 0x4, offset = 0x4, fixed_abs, tag = 'smem constant byte address 0x4 - core index']
  #allocation1 [shape = 'u32[72,128]{1,0:T(1,128)}', space=vmem, size = 0x9000, scoped, tag = 'internal scratch']
  #allocation2 [shape = 'f32[576,128]{1,0:T(8,128)}', space=vmem, size = 0x48000, scoped, tag = 'scratch operand']
  %s0 = inlined_call_operand.vmem [shape: f32[28,28,128], index: 0, kind: input, shape index: {}]
  %s1 = inlined_call_operand.vmem [shape: f32[27], index: 1, kind: input, shape index: {}]
  %s2 = inlined_call_operand.vmem [shape: f32[3], index: 2, kind: input, shape index: {}]
  %s3 = inlined_call_operand.vmem [shape: f32[10,576], index: 3, kind: input, shape index: {}]
  %s4 = inlined_call_operand.vmem [shape: f32[10,1], index: 4, kind: input, shape index: {}]
  %s5 = inlined_call_operand.vmem [shape: f32[10,128], index: 5, kind: output, shape index: {}]
  %s6 = sld [smem:[#allocation0]]
  $region38: #{convnet_forward.1} parent=0
    _
  %s8 = ssub.s32 1, %s6
  %s9 = scalar_select 0, %s8, %s6
  $region1: #{convnet_forward.1} parent=0
    #allocation3 [shape = 'u8[512]{0}', space=smem, size = 0x200, scoped, tag = 'input window, operand 1, single buffered']
    #allocation4 [shape = 's32[1]{0}', space=sflag, size = 0x4, scoped, tag = 'scoped memory for convnet_forward.1']
    #allocation5 [shape = 'u8[512]{0}', space=smem, size = 0x200, scoped, tag = 'input window, operand 2, single buffered']
    #allocation6 [shape = 's32[1]{0}', space=sflag, size = 0x4, scoped, tag = 'scoped memory for convnet_forward.1']
    %10 = vsyncpa [#allocation4], 0
    %11 = vsyncpa [#allocation6], 0
    // Predicated region
    $region2: #{convnet_forward.1} parent=1 // pred_check
      _
    $region3: #{convnet_forward.1} parent=1 // pred_check_branch
      %13 = sbr.rel (0) target = $region5
    $region4: #{convnet_forward.1} parent=1 // pred_region
      _
    $region5: #{convnet_forward.1} parent=1 // pred_fallthru
      _
    // Predicated region
    $region6: #{convnet_forward.1} parent=1 // pred_check
      _
    $region7: #{convnet_forward.1} parent=1 // pred_check_branch
      %15 = sbr.rel (0) target = $region9
    $region8: #{convnet_forward.1} parent=1 // pred_region
      %17 = vsyncadd [#allocation4], 0
      %s19 = sshll.u32 %s1, 4
      %s20 = int_to_ptr.vmem [resolvable:$true] %s19
      %22 = dma.vmem_to_smem %s20, 16, [#allocation3], [#allocation4]
    $region9: #{convnet_forward.1} parent=1 // pred_fallthru
      _
    // Predicated region
    $region10: #{convnet_forward.1} parent=1 // pred_check
      _
    $region11: #{convnet_forward.1} parent=1 // pred_check_branch
      %24 = sbr.rel (0) target = $region13
    $region12: #{convnet_forward.1} parent=1 // pred_region
      %26 = vsyncadd [#allocation6], 0
      %s28 = sshll.u32 %s2, 4
      %s29 = int_to_ptr.vmem [resolvable:$true] %s28
      %31 = dma.vmem_to_smem %s29, 16, [#allocation5], [#allocation6]
    $region13: #{convnet_forward.1} parent=1 // pred_fallthru
      _
    // Predicated region
    $region14: #{convnet_forward.1} parent=1 // pred_check
      _
    $region15: #{convnet_forward.1} parent=1 // pred_check_branch
      %33 = sbr.rel (0) target = $region17
    $region16: #{convnet_forward.1} parent=1 // pred_region
      _
    $region17: #{convnet_forward.1} parent=1 // pred_fallthru
      _
    // Predicated region
    $region18: #{convnet_forward.1} parent=1 // pred_check
      _
    $region19: #{convnet_forward.1} parent=1 // pred_check_branch
      %35 = sbr.rel (0) target = $region21
    $region20: #{convnet_forward.1} parent=1 // pred_region
      _
    $region21: #{convnet_forward.1} parent=1 // pred_fallthru
      _
    // Predicated region
    $region22: #{convnet_forward.1} parent=1 // pred_check
      _
    $region23: #{convnet_forward.1} parent=1 // pred_check_branch
      %37 = sbr.rel (0) target = $region25
    $region24: #{convnet_forward.1} parent=1 // pred_region
      %39 = dma.done [#allocation4], 16
    $region25: #{convnet_forward.1} parent=1 // pred_fallthru
      _
    // Predicated region
    $region26: #{convnet_forward.1} parent=1 // pred_check
      _
    $region27: #{convnet_forward.1} parent=1 // pred_check_branch
      %41 = sbr.rel (0) target = $region29
    $region28: #{convnet_forward.1} parent=1 // pred_region
      %43 = dma.done [#allocation6], 16
    $region29: #{convnet_forward.1} parent=1 // pred_fallthru
      _
    %44 = sfence
    %v45 = vld [vmem:[%s0] sm:$0xff]
    %v46 = vld [vmem:[%s0 + $0x8] sm:$0xff]
    %v47 = vld [vmem:[%s0 + $0x10] sm:$0xff]
    %v48 = vld [vmem:[%s0 + $0x18] sm:$0xf]
    %v49 = vld [vmem:[%s0 + $0x20] sm:$0xff]
    %v50 = vld [vmem:[%s0 + $0x28] sm:$0xff]
    %v51 = vld [vmem:[%s0 + $0x30] sm:$0xff]
    %v52 = vld [vmem:[%s0 + $0x38] sm:$0xf]
    %v53 = vld [vmem:[%s0 + $0x40] sm:$0xff]
    %v54 = vld [vmem:[%s0 + $0x48] sm:$0xff]
    %v55 = vld [vmem:[%s0 + $0x50] sm:$0xff]
    %v56 = vld [vmem:[%s0 + $0x58] sm:$0xf]
    %v57 = vld [vmem:[%s0 + $0x60] sm:$0xff]
    %v58 = vld [vmem:[%s0 + $0x68] sm:$0xff]
    %v59 = vld [vmem:[%s0 + $0x70] sm:$0xff]
    %v60 = vld [vmem:[%s0 + $0x78] sm:$0xf]
    %v61 = vld [vmem:[%s0 + $0x80] sm:$0xff]
    %v62 = vld [vmem:[%s0 + $0x88] sm:$0xff]
    %v63 = vld [vmem:[%s0 + $0x90] sm:$0xff]
    %v64 = vld [vmem:[%s0 + $0x98] sm:$0xf]
    %v65 = vld [vmem:[%s0 + $0xa0] sm:$0xff]
    %v66 = vld [vmem:[%s0 + $0xa8] sm:$0xff]
    %v67 = vld [vmem:[%s0 + $0xb0] sm:$0xff]
    %v68 = vld [vmem:[%s0 + $0xb8] sm:$0xf]
    %v69 = vld [vmem:[%s0 + $0xc0] sm:$0xff]
    %v70 = vld [vmem:[%s0 + $0xc8] sm:$0xff]
    %v71 = vld [vmem:[%s0 + $0xd0] sm:$0xff]
    %v72 = vld [vmem:[%s0 + $0xd8] sm:$0xf]
    %v73 = vld [vmem:[%s0 + $0xe0] sm:$0xff]
    %v74 = vld [vmem:[%s0 + $0xe8] sm:$0xff]
    %v75 = vld [vmem:[%s0 + $0xf0] sm:$0xff]
    %v76 = vld [vmem:[%s0 + $0xf8] sm:$0xf]
    %v77 = vld [vmem:[%s0 + $0x100] sm:$0xff]
    %v78 = vld [vmem:[%s0 + $0x108] sm:$0xff]
    %v79 = vld [vmem:[%s0 + $0x110] sm:$0xff]
    %v80 = vld [vmem:[%s0 + $0x118] sm:$0xf]
    %v81 = vld [vmem:[%s0 + $0x120] sm:$0xff]
    %v82 = vld [vmem:[%s0 + $0x128] sm:$0xff]
    %v83 = vld [vmem:[%s0 + $0x130] sm:$0xff]
    %v84 = vld [vmem:[%s0 + $0x138] sm:$0xf]
    %v85 = vld [vmem:[%s0 + $0x140] sm:$0xff]
    %v86 = vld [vmem:[%s0 + $0x148] sm:$0xff]
    %v87 = vld [vmem:[%s0 + $0x150] sm:$0xff]
    %v88 = vld [vmem:[%s0 + $0x158] sm:$0xf]
    %v89 = vld [vmem:[%s0 + $0x160] sm:$0xff]
    %v90 = vld [vmem:[%s0 + $0x168] sm:$0xff]
    %v91 = vld [vmem:[%s0 + $0x170] sm:$0xff]
    %v92 = vld [vmem:[%s0 + $0x178] sm:$0xf]
    %v93 = vld [vmem:[%s0 + $0x180] sm:$0xff]
    %v94 = vld [vmem:[%s0 + $0x188] sm:$0xff]
    %v95 = vld [vmem:[%s0 + $0x190] sm:$0xff]
    %v96 = vld [vmem:[%s0 + $0x198] sm:$0xf]
    %v97 = vld [vmem:[%s0 + $0x1a0] sm:$0xff]
    %v98 = vld [vmem:[%s0 + $0x1a8] sm:$0xff]
    %v99 = vld [vmem:[%s0 + $0x1b0] sm:$0xff]
    %v100 = vld [vmem:[%s0 + $0x1b8] sm:$0xf]
    %v101 = vld [vmem:[%s0 + $0x1c0] sm:$0xff]
    %v102 = vld [vmem:[%s0 + $0x1c8] sm:$0xff]
    %v103 = vld [vmem:[%s0 + $0x1d0] sm:$0xff]
    %v104 = vld [vmem:[%s0 + $0x1d8] sm:$0xf]
    %v105 = vld [vmem:[%s0 + $0x1e0] sm:$0xff]
    %v106 = vld [vmem:[%s0 + $0x1e8] sm:$0xff]
    %v107 = vld [vmem:[%s0 + $0x1f0] sm:$0xff]
    %v108 = vld [vmem:[%s0 + $0x1f8] sm:$0xf]
    %v109 = vld [vmem:[%s0 + $0x200] sm:$0xff]
    %v110 = vld [vmem:[%s0 + $0x208] sm:$0xff]
    %v111 = vld [vmem:[%s0 + $0x210] sm:$0xff]
    %v112 = vld [vmem:[%s0 + $0x218] sm:$0xf]
    %v113 = vld [vmem:[%s0 + $0x220] sm:$0xff]
    %v114 = vld [vmem:[%s0 + $0x228] sm:$0xff]
    %v115 = vld [vmem:[%s0 + $0x230] sm:$0xff]
    %v116 = vld [vmem:[%s0 + $0x238] sm:$0xf]
    %v117 = vld [vmem:[%s0 + $0x240] sm:$0xff]
    %v118 = vld [vmem:[%s0 + $0x248] sm:$0xff]
    %v119 = vld [vmem:[%s0 + $0x250] sm:$0xff]
    %v120 = vld [vmem:[%s0 + $0x258] sm:$0xf]
    %v121 = vld [vmem:[%s0 + $0x260] sm:$0xff]
    %v122 = vld [vmem:[%s0 + $0x268] sm:$0xff]
    %v123 = vld [vmem:[%s0 + $0x270] sm:$0xff]
    %v124 = vld [vmem:[%s0 + $0x278] sm:$0xf]
    %v125 = vld [vmem:[%s0 + $0x280] sm:$0xff]
    %v126 = vld [vmem:[%s0 + $0x288] sm:$0xff]
    %v127 = vld [vmem:[%s0 + $0x290] sm:$0xff]
    %v128 = vld [vmem:[%s0 + $0x298] sm:$0xf]
    %v129 = vld [vmem:[%s0 + $0x2a0] sm:$0xff]
    %v130 = vld [vmem:[%s0 + $0x2a8] sm:$0xff]
    %v131 = vld [vmem:[%s0 + $0x2b0] sm:$0xff]
    %v132 = vld [vmem:[%s0 + $0x2b8] sm:$0xf]
    %v133 = vld [vmem:[%s0 + $0x2c0] sm:$0xff]
    %v134 = vld [vmem:[%s0 + $0x2c8] sm:$0xff]
    %v135 = vld [vmem:[%s0 + $0x2d0] sm:$0xff]
    %v136 = vld [vmem:[%s0 + $0x2d8] sm:$0xf]
    %v137 = vld [vmem:[%s0 + $0x2e0] sm:$0xff]
    %v138 = vld [vmem:[%s0 + $0x2e8] sm:$0xff]
    %v139 = vld [vmem:[%s0 + $0x2f0] sm:$0xff]
    %v140 = vld [vmem:[%s0 + $0x2f8] sm:$0xf]
    %v141 = vld [vmem:[%s0 + $0x300] sm:$0xff]
    %v142 = vld [vmem:[%s0 + $0x308] sm:$0xff]
    %v143 = vld [vmem:[%s0 + $0x310] sm:$0xff]
    %v144 = vld [vmem:[%s0 + $0x318] sm:$0xf]
    %v145 = vld [vmem:[%s0 + $0x320] sm:$0xff]
    %v146 = vld [vmem:[%s0 + $0x328] sm:$0xff]
    %v147 = vld [vmem:[%s0 + $0x330] sm:$0xff]
    %v148 = vld [vmem:[%s0 + $0x338] sm:$0xf]
    %s149 = sld [smem:[#allocation3]]
    %v150 = vstv %s149
    %v151 = vmul.f32 %v45, %v150
    %v152 = vmul.f32 %v46, %v150
    %v153 = vmul.f32 %v47, %v150
    %v154 = vmul.f32 %v48, %v150
    %v155 = vmul.f32 %v49, %v150
    %v156 = vmul.f32 %v50, %v150
    %v157 = vmul.f32 %v51, %v150
    %v158 = vmul.f32 %v52, %v150
    %v159 = vmul.f32 %v53, %v150
    %v160 = vmul.f32 %v54, %v150
    %v161 = vmul.f32 %v55, %v150
    %v162 = vmul.f32 %v56, %v150
    %v163 = vmul.f32 %v57, %v150
    %v164 = vmul.f32 %v58, %v150
    %v165 = vmul.f32 %v59, %v150
    %v166 = vmul.f32 %v60, %v150
    %v167 = vmul.f32 %v61, %v150
    %v168 = vmul.f32 %v62, %v150
    %v169 = vmul.f32 %v63, %v150
    %v170 = vmul.f32 %v64, %v150
    %v171 = vmul.f32 %v65, %v150
    %v172 = vmul.f32 %v66, %v150
    %v173 = vmul.f32 %v67, %v150
    %v174 = vmul.f32 %v68, %v150
    %v175 = vmul.f32 %v69, %v150
    %v176 = vmul.f32 %v70, %v150
    %v177 = vmul.f32 %v71, %v150
    %v178 = vmul.f32 %v72, %v150
    %v179 = vmul.f32 %v73, %v150
    %v180 = vmul.f32 %v74, %v150
    %v181 = vmul.f32 %v75, %v150
    %v182 = vmul.f32 %v76, %v150
    %v183 = vmul.f32 %v77, %v150
    %v184 = vmul.f32 %v78, %v150
    %v185 = vmul.f32 %v79, %v150
    %v186 = vmul.f32 %v80, %v150
    %v187 = vmul.f32 %v81, %v150
    %v188 = vmul.f32 %v82, %v150
    %v189 = vmul.f32 %v83, %v150
    %v190 = vmul.f32 %v84, %v150
    %v191 = vmul.f32 %v85, %v150
    %v192 = vmul.f32 %v86, %v150
    %v193 = vmul.f32 %v87, %v150
    %v194 = vmul.f32 %v88, %v150
    %v195 = vmul.f32 %v89, %v150
    %v196 = vmul.f32 %v90, %v150
    %v197 = vmul.f32 %v91, %v150
    %v198 = vmul.f32 %v92, %v150
    %v199 = vmul.f32 %v93, %v150
    %v200 = vmul.f32 %v94, %v150
    %v201 = vmul.f32 %v95, %v150
    %v202 = vmul.f32 %v96, %v150
    %v203 = vmul.f32 %v97, %v150
    %v204 = vmul.f32 %v98, %v150
    %v205 = vmul.f32 %v99, %v150
    %v206 = vmul.f32 %v100, %v150
    %v207 = vmul.f32 %v101, %v150
    %v208 = vmul.f32 %v102, %v150
    %v209 = vmul.f32 %v103, %v150
    %v210 = vmul.f32 %v104, %v150
    %v211 = vmul.f32 %v105, %v150
    %v212 = vmul.f32 %v106, %v150
    %v213 = vmul.f32 %v107, %v150
    %v214 = vmul.f32 %v108, %v150
    %v215 = vmul.f32 %v109, %v150
    %v216 = vmul.f32 %v110, %v150
    %v217 = vmul.f32 %v111, %v150
    %v218 = vmul.f32 %v112, %v150
    %v219 = vmul.f32 %v113, %v150
    %v220 = vmul.f32 %v114, %v150
    %v221 = vmul.f32 %v115, %v150
    %v222 = vmul.f32 %v116, %v150
    %v223 = vmul.f32 %v117, %v150
    %v224 = vmul.f32 %v118, %v150
    %v225 = vmul.f32 %v119, %v150
    %v226 = vmul.f32 %v120, %v150
    %v227 = vmul.f32 %v121, %v150
    %v228 = vmul.f32 %v122, %v150
    %v229 = vmul.f32 %v123, %v150
    %v230 = vmul.f32 %v124, %v150
    %v231 = vmul.f32 %v125, %v150
    %v232 = vmul.f32 %v126, %v150
    %v233 = vmul.f32 %v127, %v150
    %v234 = vmul.f32 %v128, %v150
    %v235 = vmul.f32 %v129, %v150
    %v236 = vmul.f32 %v130, %v150
    %v237 = vmul.f32 %v131, %v150
    %v238 = vmul.f32 %v132, %v150
    %v239 = vmul.f32 %v133, %v150
    %v240 = vmul.f32 %v134, %v150
    %v241 = vmul.f32 %v135, %v150
    %v242 = vmul.f32 %v136, %v150
    %v243 = vmul.f32 %v137, %v150
    %v244 = vmul.f32 %v138, %v150
    %v245 = vmul.f32 %v139, %v150
    %v246 = vmul.f32 %v140, %v150
    %s247 = sld [smem:[#allocation3 + $0x1]]
    %v248 = vstv %s247
    %v249 = vmul.f32 %v45, %v248
    %v250 = vmul.f32 %v46, %v248
    %v251 = vmul.f32 %v47, %v248
    %v252 = vmul.f32 %v48, %v248
    %v253 = vmul.f32 %v49, %v248
    %v254 = vmul.f32 %v50, %v248
    %v255 = vmul.f32 %v51, %v248
    %v256 = vmul.f32 %v52, %v248
    %v257 = vmul.f32 %v53, %v248
    %v258 = vmul.f32 %v54, %v248
    %v259 = vmul.f32 %v55, %v248
    %v260 = vmul.f32 %v56, %v248
    %v261 = vmul.f32 %v57, %v248
    %v262 = vmul.f32 %v58, %v248
    %v263 = vmul.f32 %v59, %v248
    %v264 = vmul.f32 %v60, %v248
    %v265 = vmul.f32 %v61, %v248
    %v266 = vmul.f32 %v62, %v248
    %v267 = vmul.f32 %v63, %v248
    %v268 = vmul.f32 %v64, %v248
    %v269 = vmul.f32 %v65, %v248
    %v270 = vmul.f32 %v66, %v248
    %v271 = vmul.f32 %v67, %v248
    %v272 = vmul.f32 %v68, %v248
    %v273 = vmul.f32 %v69, %v248
    %v274 = vmul.f32 %v70, %v248
    %v275 = vmul.f32 %v71, %v248
    %v276 = vmul.f32 %v72, %v248
    %v277 = vmul.f32 %v73, %v248
    %v278 = vmul.f32 %v74, %v248
    %v279 = vmul.f32 %v75, %v248
    %v280 = vmul.f32 %v76, %v248
    %v281 = vmul.f32 %v77, %v248
    %v282 = vmul.f32 %v78, %v248
    %v283 = vmul.f32 %v79, %v248
    %v284 = vmul.f32 %v80, %v248
    %v285 = vmul.f32 %v81, %v248
    %v286 = vmul.f32 %v82, %v248
    %v287 = vmul.f32 %v83, %v248
    %v288 = vmul.f32 %v84, %v248
    %v289 = vmul.f32 %v85, %v248
    %v290 = vmul.f32 %v86, %v248
    %v291 = vmul.f32 %v87, %v248
    %v292 = vmul.f32 %v88, %v248
    %v293 = vmul.f32 %v89, %v248
    %v294 = vmul.f32 %v90, %v248
    %v295 = vmul.f32 %v91, %v248
    %v296 = vmul.f32 %v92, %v248
    %v297 = vmul.f32 %v93, %v248
    %v298 = vmul.f32 %v94, %v248
    %v299 = vmul.f32 %v95, %v248
    %v300 = vmul.f32 %v96, %v248
    %v301 = vmul.f32 %v97, %v248
    %v302 = vmul.f32 %v98, %v248
    %v303 = vmul.f32 %v99, %v248
    %v304 = vmul.f32 %v100, %v248
    %v305 = vmul.f32 %v101, %v248
    %v306 = vmul.f32 %v102, %v248
    %v307 = vmul.f32 %v103, %v248
    %v308 = vmul.f32 %v104, %v248
    %v309 = vmul.f32 %v105, %v248
    %v310 = vmul.f32 %v106, %v248
    %v311 = vmul.f32 %v107, %v248
    %v312 = vmul.f32 %v108, %v248
    %v313 = vmul.f32 %v109, %v248
    %v314 = vmul.f32 %v110, %v248
    %v315 = vmul.f32 %v111, %v248
    %v316 = vmul.f32 %v112, %v248
    %v317 = vmul.f32 %v113, %v248
    %v318 = vmul.f32 %v114, %v248
    %v319 = vmul.f32 %v115, %v248
    %v320 = vmul.f32 %v116, %v248
    %v321 = vmul.f32 %v117, %v248
    %v322 = vmul.f32 %v118, %v248
    %v323 = vmul.f32 %v119, %v248
    %v324 = vmul.f32 %v120, %v248
    %v325 = vmul.f32 %v121, %v248
    %v326 = vmul.f32 %v122, %v248
    %v327 = vmul.f32 %v123, %v248
    %v328 = vmul.f32 %v124, %v248
    %v329 = vmul.f32 %v125, %v248
    %v330 = vmul.f32 %v126, %v248
    %v331 = vmul.f32 %v127, %v248
    %v332 = vmul.f32 %v128, %v248
    %v333 = vmul.f32 %v129, %v248
    %v334 = vmul.f32 %v130, %v248
    %v335 = vmul.f32 %v131, %v248
    %v336 = vmul.f32 %v132, %v248
    %v337 = vmul.f32 %v133, %v248
    %v338 = vmul.f32 %v134, %v248
    %v339 = vmul.f32 %v135, %v248
    %v340 = vmul.f32 %v136, %v248
    %v341 = vmul.f32 %v137, %v248
    %v342 = vmul.f32 %v138, %v248
    %v343 = vmul.f32 %v139, %v248
    %v344 = vmul.f32 %v140, %v248
    %vm441 = vcmask 1046528
    %v442 = vrot.slane %v249, 1
    %v443 = vrot.slane %v250, 1
    %v444 = vsel %vm441, %v442, %v443
    %v445 = vrot.slane %v251, 1
    %v446 = vsel %vm441, %v443, %v445
    %v447 = vrot.slane %v252, 1
    %v448 = vsel %vm441, %v445, %v447
    %v449 = vrot.slane %v253, 1
    %v450 = vrot.slane %v254, 1
    %v451 = vsel %vm441, %v449, %v450
    %v452 = vrot.slane %v255, 1
    %v453 = vsel %vm441, %v450, %v452
    %v454 = vrot.slane %v256, 1
    %v455 = vsel %vm441, %v452, %v454
    %v456 = vrot.slane %v257, 1
    %v457 = vrot.slane %v258, 1
    %v458 = vsel %vm441, %v456, %v457
    %v459 = vrot.slane %v259, 1
    %v460 = vsel %vm441, %v457, %v459
    %v461 = vrot.slane %v260, 1
    %v462 = vsel %vm441, %v459, %v461
    %v463 = vrot.slane %v261, 1
    %v464 = vrot.slane %v262, 1
    %v465 = vsel %vm441, %v463, %v464
    %v466 = vrot.slane %v263, 1
    %v467 = vsel %vm441, %v464, %v466
    %v468 = vrot.slane %v264, 1
    %v469 = vsel %vm441, %v466, %v468
    %v470 = vrot.slane %v265, 1
    %v471 = vrot.slane %v266, 1
    %v472 = vsel %vm441, %v470, %v471
    %v473 = vrot.slane %v267, 1
    %v474 = vsel %vm441, %v471, %v473
    %v475 = vrot.slane %v268, 1
    %v476 = vsel %vm441, %v473, %v475
    %v477 = vrot.slane %v269, 1
    %v478 = vrot.slane %v270, 1
    %v479 = vsel %vm441, %v477, %v478
    %v480 = vrot.slane %v271, 1
    %v481 = vsel %vm441, %v478, %v480
    %v482 = vrot.slane %v272, 1
    %v483 = vsel %vm441, %v480, %v482
    %v484 = vrot.slane %v273, 1
    %v485 = vrot.slane %v274, 1
    %v486 = vsel %vm441, %v484, %v485
    %v487 = vrot.slane %v275, 1
    %v488 = vsel %vm441, %v485, %v487
    %v489 = vrot.slane %v276, 1
    %v490 = vsel %vm441, %v487, %v489
    %v491 = vrot.slane %v277, 1
    %v492 = vrot.slane %v278, 1
    %v493 = vsel %vm441, %v491, %v492
    %v494 = vrot.slane %v279, 1
    %v495 = vsel %vm441, %v492, %v494
    %v496 = vrot.slane %v280, 1
    %v497 = vsel %vm441, %v494, %v496
    %v498 = vrot.slane %v281, 1
    %v499 = vrot.slane %v282, 1
    %v500 = vsel %vm441, %v498, %v499
    %v501 = vrot.slane %v283, 1
    %v502 = vsel %vm441, %v499, %v501
    %v503 = vrot.slane %v284, 1
    %v504 = vsel %vm441, %v501, %v503
    %v505 = vrot.slane %v285, 1
    %v506 = vrot.slane %v286, 1
    %v507 = vsel %vm441, %v505, %v506
    %v508 = vrot.slane %v287, 1
    %v509 = vsel %vm441, %v506, %v508
    %v510 = vrot.slane %v288, 1
    %v511 = vsel %vm441, %v508, %v510
    %v512 = vrot.slane %v289, 1
    %v513 = vrot.slane %v290, 1
    %v514 = vsel %vm441, %v512, %v513
    %v515 = vrot.slane %v291, 1
    %v516 = vsel %vm441, %v513, %v515
    %v517 = vrot.slane %v292, 1
    %v518 = vsel %vm441, %v515, %v517
    %v519 = vrot.slane %v293, 1
    %v520 = vrot.slane %v294, 1
    %v521 = vsel %vm441, %v519, %v520
    %v522 = vrot.slane %v295, 1
    %v523 = vsel %vm441, %v520, %v522
    %v524 = vrot.slane %v296, 1
    %v525 = vsel %vm441, %v522, %v524
    %v526 = vrot.slane %v297, 1
    %v527 = vrot.slane %v298, 1
    %v528 = vsel %vm441, %v526, %v527
    %v529 = vrot.slane %v299, 1
    %v530 = vsel %vm441, %v527, %v529
    %v531 = vrot.slane %v300, 1
    %v532 = vsel %vm441, %v529, %v531
    %v533 = vrot.slane %v301, 1
    %v534 = vrot.slane %v302, 1
    %v535 = vsel %vm441, %v533, %v534
    %v536 = vrot.slane %v303, 1
    %v537 = vsel %vm441, %v534, %v536
    %v538 = vrot.slane %v304, 1
    %v539 = vsel %vm441, %v536, %v538
    %v540 = vrot.slane %v305, 1
    %v541 = vrot.slane %v306, 1
    %v542 = vsel %vm441, %v540, %v541
    %v543 = vrot.slane %v307, 1
    %v544 = vsel %vm441, %v541, %v543
    %v545 = vrot.slane %v308, 1
    %v546 = vsel %vm441, %v543, %v545
    %v547 = vrot.slane %v309, 1
    %v548 = vrot.slane %v310, 1
    %v549 = vsel %vm441, %v547, %v548
    %v550 = vrot.slane %v311, 1
    %v551 = vsel %vm441, %v548, %v550
    %v552 = vrot.slane %v312, 1
    %v553 = vsel %vm441, %v550, %v552
    %v554 = vrot.slane %v313, 1
    %v555 = vrot.slane %v314, 1
    %v556 = vsel %vm441, %v554, %v555
    %v557 = vrot.slane %v315, 1
    %v558 = vsel %vm441, %v555, %v557
    %v559 = vrot.slane %v316, 1
    %v560 = vsel %vm441, %v557, %v559
    %v561 = vrot.slane %v317, 1
    %v562 = vrot.slane %v318, 1
    %v563 = vsel %vm441, %v561, %v562
    %v564 = vrot.slane %v319, 1
    %v565 = vsel %vm441, %v562, %v564
    %v566 = vrot.slane %v320, 1
    %v567 = vsel %vm441, %v564, %v566
    %v568 = vrot.slane %v321, 1
    %v569 = vrot.slane %v322, 1
    %v570 = vsel %vm441, %v568, %v569
    %v571 = vrot.slane %v323, 1
    %v572 = vsel %vm441, %v569, %v571
    %v573 = vrot.slane %v324, 1
    %v574 = vsel %vm441, %v571, %v573
    %v575 = vrot.slane %v325, 1
    %v576 = vrot.slane %v326, 1
    %v577 = vsel %vm441, %v575, %v576
    %v578 = vrot.slane %v327, 1
    %v579 = vsel %vm441, %v576, %v578
    %v580 = vrot.slane %v328, 1
    %v581 = vsel %vm441, %v578, %v580
    %v582 = vrot.slane %v329, 1
    %v583 = vrot.slane %v330, 1
    %v584 = vsel %vm441, %v582, %v583
    %v585 = vrot.slane %v331, 1
    %v586 = vsel %vm441, %v583, %v585
    %v587 = vrot.slane %v332, 1
    %v588 = vsel %vm441, %v585, %v587
    %v589 = vrot.slane %v333, 1
    %v590 = vrot.slane %v334, 1
    %v591 = vsel %vm441, %v589, %v590
    %v592 = vrot.slane %v335, 1
    %v593 = vsel %vm441, %v590, %v592
    %v594 = vrot.slane %v336, 1
    %v595 = vsel %vm441, %v592, %v594
    %v596 = vrot.slane %v337, 1
    %v597 = vrot.slane %v338, 1
    %v598 = vsel %vm441, %v596, %v597
    %v599 = vrot.slane %v339, 1
    %v600 = vsel %vm441, %v597, %v599
    %v601 = vrot.slane %v340, 1
    %v602 = vsel %vm441, %v599, %v601
    %v603 = vrot.slane %v341, 1
    %v604 = vrot.slane %v342, 1
    %v605 = vsel %vm441, %v603, %v604
    %v606 = vrot.slane %v343, 1
    %v607 = vsel %vm441, %v604, %v606
    %v608 = vrot.slane %v344, 1
    %v609 = vsel %vm441, %v606, %v608
    %v706 = vadd.f32 %v151, %v444
    %v707 = vadd.f32 %v152, %v446
    %v708 = vadd.f32 %v153, %v448
    %v709 = vadd.f32 %v154, %v447
    %v710 = vadd.f32 %v155, %v451
    %v711 = vadd.f32 %v156, %v453
    %v712 = vadd.f32 %v157, %v455
    %v713 = vadd.f32 %v158, %v454
    %v714 = vadd.f32 %v159, %v458
    %v715 = vadd.f32 %v160, %v460
    %v716 = vadd.f32 %v161, %v462
    %v717 = vadd.f32 %v162, %v461
    %v718 = vadd.f32 %v163, %v465
    %v719 = vadd.f32 %v164, %v467
    %v720 = vadd.f32 %v165, %v469
    %v721 = vadd.f32 %v166, %v468
    %v722 = vadd.f32 %v167, %v472
    %v723 = vadd.f32 %v168, %v474
    %v724 = vadd.f32 %v169, %v476
    %v725 = vadd.f32 %v170, %v475
    %v726 = vadd.f32 %v171, %v479
    %v727 = vadd.f32 %v172, %v481
    %v728 = vadd.f32 %v173, %v483
    %v729 = vadd.f32 %v174, %v482
    %v730 = vadd.f32 %v175, %v486
    %v731 = vadd.f32 %v176, %v488
    %v732 = vadd.f32 %v177, %v490
    %v733 = vadd.f32 %v178, %v489
    %v734 = vadd.f32 %v179, %v493
    %v735 = vadd.f32 %v180, %v495
    %v736 = vadd.f32 %v181, %v497
    %v737 = vadd.f32 %v182, %v496
    %v738 = vadd.f32 %v183, %v500
    %v739 = vadd.f32 %v184, %v502
    %v740 = vadd.f32 %v185, %v504
    %v741 = vadd.f32 %v186, %v503
    %v742 = vadd.f32 %v187, %v507
    %v743 = vadd.f32 %v188, %v509
    %v744 = vadd.f32 %v189, %v511
    %v745 = vadd.f32 %v190, %v510
    %v746 = vadd.f32 %v191, %v514
    %v747 = vadd.f32 %v192, %v516
    %v748 = vadd.f32 %v193, %v518
    %v749 = vadd.f32 %v194, %v517
    %v750 = vadd.f32 %v195, %v521
    %v751 = vadd.f32 %v196, %v523
    %v752 = vadd.f32 %v197, %v525
    %v753 = vadd.f32 %v198, %v524
    %v754 = vadd.f32 %v199, %v528
    %v755 = vadd.f32 %v200, %v530
    %v756 = vadd.f32 %v201, %v532
    %v757 = vadd.f32 %v202, %v531
    %v758 = vadd.f32 %v203, %v535
    %v759 = vadd.f32 %v204, %v537
    %v760 = vadd.f32 %v205, %v539
    %v761 = vadd.f32 %v206, %v538
    %v762 = vadd.f32 %v207, %v542
    %v763 = vadd.f32 %v208, %v544
    %v764 = vadd.f32 %v209, %v546
    %v765 = vadd.f32 %v210, %v545
    %v766 = vadd.f32 %v211, %v549
    %v767 = vadd.f32 %v212, %v551
    %v768 = vadd.f32 %v213, %v553
    %v769 = vadd.f32 %v214, %v552
    %v770 = vadd.f32 %v215, %v556
    %v771 = vadd.f32 %v216, %v558
    %v772 = vadd.f32 %v217, %v560
    %v773 = vadd.f32 %v218, %v559
    %v774 = vadd.f32 %v219, %v563
    %v775 = vadd.f32 %v220, %v565
    %v776 = vadd.f32 %v221, %v567
    %v777 = vadd.f32 %v222, %v566
    %v778 = vadd.f32 %v223, %v570
    %v779 = vadd.f32 %v224, %v572
    %v780 = vadd.f32 %v225, %v574
    %v781 = vadd.f32 %v226, %v573
    %v782 = vadd.f32 %v227, %v577
    %v783 = vadd.f32 %v228, %v579
    %v784 = vadd.f32 %v229, %v581
    %v785 = vadd.f32 %v230, %v580
    %v786 = vadd.f32 %v231, %v584
    %v787 = vadd.f32 %v232, %v586
    %v788 = vadd.f32 %v233, %v588
    %v789 = vadd.f32 %v234, %v587
    %v790 = vadd.f32 %v235, %v591
    %v791 = vadd.f32 %v236, %v593
    %v792 = vadd.f32 %v237, %v595
    %v793 = vadd.f32 %v238, %v594
    %v794 = vadd.f32 %v239, %v598
    %v795 = vadd.f32 %v240, %v600
    %v796 = vadd.f32 %v241, %v602
    %v797 = vadd.f32 %v242, %v601
    %v798 = vadd.f32 %v243, %v605
    %v799 = vadd.f32 %v244, %v607
    %v800 = vadd.f32 %v245, %v609
    %v801 = vadd.f32 %v246, %v608
    %s802 = sld [smem:[#allocation3 + $0x2]]
    %v803 = vstv %s802
    %v804 = vmul.f32 %v45, %v803
    %v805 = vmul.f32 %v46, %v803
    %v806 = vmul.f32 %v47, %v803
    %v807 = vmul.f32 %v48, %v803
    %v808 = vmul.f32 %v49, %v803
    %v809 = vmul.f32 %v50, %v803
    %v810 = vmul.f32 %v51, %v803
    %v811 = vmul.f32 %v52, %v803
    %v812 = vmul.f32 %v53, %v803
    %v813 = vmul.f32 %v54, %v803
    %v814 = vmul.f32 %v55, %v803
    %v815 = vmul.f32 %v56, %v803
    %v816 = vmul.f32 %v57, %v803
    %v817 = vmul.f32 %v58, %v803
    %v818 = vmul.f32 %v59, %v803
    %v819 = vmul.f32 %v60, %v803
    %v820 = vmul.f32 %v61, %v803
    %v821 = vmul.f32 %v62, %v803
    %v822 = vmul.f32 %v63, %v803
    %v823 = vmul.f32 %v64, %v803
    %v824 = vmul.f32 %v65, %v803
    %v825 = vmul.f32 %v66, %v803
    %v826 = vmul.f32 %v67, %v803
    %v827 = vmul.f32 %v68, %v803
    %v828 = vmul.f32 %v69, %v803
    %v829 = vmul.f32 %v70, %v803
    %v830 = vmul.f32 %v71, %v803
    %v831 = vmul.f32 %v72, %v803
    %v832 = vmul.f32 %v73, %v803
    %v833 = vmul.f32 %v74, %v803
    %v834 = vmul.f32 %v75, %v803
    %v835 = vmul.f32 %v76, %v803
    %v836 = vmul.f32 %v77, %v803
    %v837 = vmul.f32 %v78, %v803
    %v838 = vmul.f32 %v79, %v803
    %v839 = vmul.f32 %v80, %v803
    %v840 = vmul.f32 %v81, %v803
    %v841 = vmul.f32 %v82, %v803
    %v842 = vmul.f32 %v83, %v803
    %v843 = vmul.f32 %v84, %v803
    %v844 = vmul.f32 %v85, %v803
    %v845 = vmul.f32 %v86, %v803
    %v846 = vmul.f32 %v87, %v803
    %v847 = vmul.f32 %v88, %v803
    %v848 = vmul.f32 %v89, %v803
    %v849 = vmul.f32 %v90, %v803
    %v850 = vmul.f32 %v91, %v803
    %v851 = vmul.f32 %v92, %v803
    %v852 = vmul.f32 %v93, %v803
    %v853 = vmul.f32 %v94, %v803
    %v854 = vmul.f32 %v95, %v803
    %v855 = vmul.f32 %v96, %v803
    %v856 = vmul.f32 %v97, %v803
    %v857 = vmul.f32 %v98, %v803
    %v858 = vmul.f32 %v99, %v803
    %v859 = vmul.f32 %v100, %v803
    %v860 = vmul.f32 %v101, %v803
    %v861 = vmul.f32 %v102, %v803
    %v862 = vmul.f32 %v103, %v803
    %v863 = vmul.f32 %v104, %v803
    %v864 = vmul.f32 %v105, %v803
    %v865 = vmul.f32 %v106, %v803
    %v866 = vmul.f32 %v107, %v803
    %v867 = vmul.f32 %v108, %v803
    %v868 = vmul.f32 %v109, %v803
    %v869 = vmul.f32 %v110, %v803
    %v870 = vmul.f32 %v111, %v803
    %v871 = vmul.f32 %v112, %v803
    %v872 = vmul.f32 %v113, %v803
    %v873 = vmul.f32 %v114, %v803
    %v874 = vmul.f32 %v115, %v803
    %v875 = vmul.f32 %v116, %v803
    %v876 = vmul.f32 %v117, %v803
    %v877 = vmul.f32 %v118, %v803
    %v878 = vmul.f32 %v119, %v803
    %v879 = vmul.f32 %v120, %v803
    %v880 = vmul.f32 %v121, %v803
    %v881 = vmul.f32 %v122, %v803
    %v882 = vmul.f32 %v123, %v803
    %v883 = vmul.f32 %v124, %v803
    %v884 = vmul.f32 %v125, %v803
    %v885 = vmul.f32 %v126, %v803
    %v886 = vmul.f32 %v127, %v803
    %v887 = vmul.f32 %v128, %v803
    %v888 = vmul.f32 %v129, %v803
    %v889 = vmul.f32 %v130, %v803
    %v890 = vmul.f32 %v131, %v803
    %v891 = vmul.f32 %v132, %v803
    %v892 = vmul.f32 %v133, %v803
    %v893 = vmul.f32 %v134, %v803
    %v894 = vmul.f32 %v135, %v803
    %v895 = vmul.f32 %v136, %v803
    %v896 = vmul.f32 %v137, %v803
    %v897 = vmul.f32 %v138, %v803
    %v898 = vmul.f32 %v139, %v803
    %v899 = vmul.f32 %v140, %v803
    %vm996 = vcmask 1045504
    %v997 = vrot.slane %v804, 2
    %v998 = vrot.slane %v805, 2
    %v999 = vsel %vm996, %v997, %v998
    %v1000 = vrot.slane %v806, 2
    %v1001 = vsel %vm996, %v998, %v1000
    %v1002 = vrot.slane %v807, 2
    %v1003 = vsel %vm996, %v1000, %v1002
    %v1004 = vrot.slane %v808, 2
    %v1005 = vrot.slane %v809, 2
    %v1006 = vsel %vm996, %v1004, %v1005
    %v1007 = vrot.slane %v810, 2
    %v1008 = vsel %vm996, %v1005, %v1007
    %v1009 = vrot.slane %v811, 2
    %v1010 = vsel %vm996, %v1007, %v1009
    %v1011 = vrot.slane %v812, 2
    %v1012 = vrot.slane %v813, 2
    %v1013 = vsel %vm996, %v1011, %v1012
    %v1014 = vrot.slane %v814, 2
    %v1015 = vsel %vm996, %v1012, %v1014
    %v1016 = vrot.slane %v815, 2
    %v1017 = vsel %vm996, %v1014, %v1016
    %v1018 = vrot.slane %v816, 2
    %v1019 = vrot.slane %v817, 2
    %v1020 = vsel %vm996, %v1018, %v1019
    %v1021 = vrot.slane %v818, 2
    %v1022 = vsel %vm996, %v1019, %v1021
    %v1023 = vrot.slane %v819, 2
    %v1024 = vsel %vm996, %v1021, %v1023
    %v1025 = vrot.slane %v820, 2
    %v1026 = vrot.slane %v821, 2
    %v1027 = vsel %vm996, %v1025, %v1026
    %v1028 = vrot.slane %v822, 2
    %v1029 = vsel %vm996, %v1026, %v1028
    %v1030 = vrot.slane %v823, 2
    %v1031 = vsel %vm996, %v1028, %v1030
    %v1032 = vrot.slane %v824, 2
    %v1033 = vrot.slane %v825, 2
    %v1034 = vsel %vm996, %v1032, %v1033
    %v1035 = vrot.slane %v826, 2
    %v1036 = vsel %vm996, %v1033, %v1035
    %v1037 = vrot.slane %v827, 2
    %v1038 = vsel %vm996, %v1035, %v1037
    %v1039 = vrot.slane %v828, 2
    %v1040 = vrot.slane %v829, 2
    %v1041 = vsel %vm996, %v1039, %v1040
    %v1042 = vrot.slane %v830, 2
    %v1043 = vsel %vm996, %v1040, %v1042
    %v1044 = vrot.slane %v831, 2
    %v1045 = vsel %vm996, %v1042, %v1044
    %v1046 = vrot.slane %v832, 2
    %v1047 = vrot.slane %v833, 2
    %v1048 = vsel %vm996, %v1046, %v1047
    %v1049 = vrot.slane %v834, 2
    %v1050 = vsel %vm996, %v1047, %v1049
    %v1051 = vrot.slane %v835, 2
    %v1052 = vsel %vm996, %v1049, %v1051
    %v1053 = vrot.slane %v836, 2
    %v1054 = vrot.slane %v837, 2
    %v1055 = vsel %vm996, %v1053, %v1054
    %v1056 = vrot.slane %v838, 2
    %v1057 = vsel %vm996, %v1054, %v1056
    %v1058 = vrot.slane %v839, 2
    %v1059 = vsel %vm996, %v1056, %v1058
    %v1060 = vrot.slane %v840, 2
    %v1061 = vrot.slane %v841, 2
    %v1062 = vsel %vm996, %v1060, %v1061
    %v1063 = vrot.slane %v842, 2
    %v1064 = vsel %vm996, %v1061, %v1063
    %v1065 = vrot.slane %v843, 2
    %v1066 = vsel %vm996, %v1063, %v1065
    %v1067 = vrot.slane %v844, 2
    %v1068 = vrot.slane %v845, 2
    %v1069 = vsel %vm996, %v1067, %v1068
    %v1070 = vrot.slane %v846, 2
    %v1071 = vsel %vm996, %v1068, %v1070
    %v1072 = vrot.slane %v847, 2
    %v1073 = vsel %vm996, %v1070, %v1072
    %v1074 = vrot.slane %v848, 2
    %v1075 = vrot.slane %v849, 2
    %v1076 = vsel %vm996, %v1074, %v1075
    %v1077 = vrot.slane %v850, 2
    %v1078 = vsel %vm996, %v1075, %v1077
    %v1079 = vrot.slane %v851, 2
    %v1080 = vsel %vm996, %v1077, %v1079
    %v1081 = vrot.slane %v852, 2
    %v1082 = vrot.slane %v853, 2
    %v1083 = vsel %vm996, %v1081, %v1082
    %v1084 = vrot.slane %v854, 2
    %v1085 = vsel %vm996, %v1082, %v1084
    %v1086 = vrot.slane %v855, 2
    %v1087 = vsel %vm996, %v1084, %v1086
    %v1088 = vrot.slane %v856, 2
    %v1089 = vrot.slane %v857, 2
    %v1090 = vsel %vm996, %v1088, %v1089
    %v1091 = vrot.slane %v858, 2
    %v1092 = vsel %vm996, %v1089, %v1091
    %v1093 = vrot.slane %v859, 2
    %v1094 = vsel %vm996, %v1091, %v1093
    %v1095 = vrot.slane %v860, 2
    %v1096 = vrot.slane %v861, 2
    %v1097 = vsel %vm996, %v1095, %v1096
    %v1098 = vrot.slane %v862, 2
    %v1099 = vsel %vm996, %v1096, %v1098
    %v1100 = vrot.slane %v863, 2
    %v1101 = vsel %vm996, %v1098, %v1100
    %v1102 = vrot.slane %v864, 2
    %v1103 = vrot.slane %v865, 2
    %v1104 = vsel %vm996, %v1102, %v1103
    %v1105 = vrot.slane %v866, 2
    %v1106 = vsel %vm996, %v1103, %v1105
    %v1107 = vrot.slane %v867, 2
    %v1108 = vsel %vm996, %v1105, %v1107
    %v1109 = vrot.slane %v868, 2
    %v1110 = vrot.slane %v869, 2
    %v1111 = vsel %vm996, %v1109, %v1110
    %v1112 = vrot.slane %v870, 2
    %v1113 = vsel %vm996, %v1110, %v1112
    %v1114 = vrot.slane %v871, 2
    %v1115 = vsel %vm996, %v1112, %v1114
    %v1116 = vrot.slane %v872, 2
    %v1117 = vrot.slane %v873, 2
    %v1118 = vsel %vm996, %v1116, %v1117
    %v1119 = vrot.slane %v874, 2
    %v1120 = vsel %vm996, %v1117, %v1119
    %v1121 = vrot.slane %v875, 2
    %v1122 = vsel %vm996, %v1119, %v1121
    %v1123 = vrot.slane %v876, 2
    %v1124 = vrot.slane %v877, 2
    %v1125 = vsel %vm996, %v1123, %v1124
    %v1126 = vrot.slane %v878, 2
    %v1127 = vsel %vm996, %v1124, %v1126
    %v1128 = vrot.slane %v879, 2
    %v1129 = vsel %vm996, %v1126, %v1128
    %v1130 = vrot.slane %v880, 2
    %v1131 = vrot.slane %v881, 2
    %v1132 = vsel %vm996, %v1130, %v1131
    %v1133 = vrot.slane %v882, 2
    %v1134 = vsel %vm996, %v1131, %v1133
    %v1135 = vrot.slane %v883, 2
    %v1136 = vsel %vm996, %v1133, %v1135
    %v1137 = vrot.slane %v884, 2
    %v1138 = vrot.slane %v885, 2
    %v1139 = vsel %vm996, %v1137, %v1138
    %v1140 = vrot.slane %v886, 2
    %v1141 = vsel %vm996, %v1138, %v1140
    %v1142 = vrot.slane %v887, 2
    %v1143 = vsel %vm996, %v1140, %v1142
    %v1144 = vrot.slane %v888, 2
    %v1145 = vrot.slane %v889, 2
    %v1146 = vsel %vm996, %v1144, %v1145
    %v1147 = vrot.slane %v890, 2
    %v1148 = vsel %vm996, %v1145, %v1147
    %v1149 = vrot.slane %v891, 2
    %v1150 = vsel %vm996, %v1147, %v1149
    %v1151 = vrot.slane %v892, 2
    %v1152 = vrot.slane %v893, 2
    %v1153 = vsel %vm996, %v1151, %v1152
    %v1154 = vrot.slane %v894, 2
    %v1155 = vsel %vm996, %v1152, %v1154
    %v1156 = vrot.slane %v895, 2
    %v1157 = vsel %vm996, %v1154, %v1156
    %v1158 = vrot.slane %v896, 2
    %v1159 = vrot.slane %v897, 2
    %v1160 = vsel %vm996, %v1158, %v1159
    %v1161 = vrot.slane %v898, 2
    %v1162 = vsel %vm996, %v1159, %v1161
    %v1163 = vrot.slane %v899, 2
    %v1164 = vsel %vm996, %v1161, %v1163
    %v1261 = vadd.f32 %v706, %v999
    %v1262 = vadd.f32 %v707, %v1001
    %v1263 = vadd.f32 %v708, %v1003
    %v1264 = vadd.f32 %v709, %v1002
    %v1265 = vadd.f32 %v710, %v1006
    %v1266 = vadd.f32 %v711, %v1008
    %v1267 = vadd.f32 %v712, %v1010
    %v1268 = vadd.f32 %v713, %v1009
    %v1269 = vadd.f32 %v714, %v1013
    %v1270 = vadd.f32 %v715, %v1015
    %v1271 = vadd.f32 %v716, %v1017
    %v1272 = vadd.f32 %v717, %v1016
    %v1273 = vadd.f32 %v718, %v1020
    %v1274 = vadd.f32 %v719, %v1022
    %v1275 = vadd.f32 %v720, %v1024
    %v1276 = vadd.f32 %v721, %v1023
    %v1277 = vadd.f32 %v722, %v1027
    %v1278 = vadd.f32 %v723, %v1029
    %v1279 = vadd.f32 %v724, %v1031
    %v1280 = vadd.f32 %v725, %v1030
    %v1281 = vadd.f32 %v726, %v1034
    %v1282 = vadd.f32 %v727, %v1036
    %v1283 = vadd.f32 %v728, %v1038
    %v1284 = vadd.f32 %v729, %v1037
    %v1285 = vadd.f32 %v730, %v1041
    %v1286 = vadd.f32 %v731, %v1043
    %v1287 = vadd.f32 %v732, %v1045
    %v1288 = vadd.f32 %v733, %v1044
    %v1289 = vadd.f32 %v734, %v1048
    %v1290 = vadd.f32 %v735, %v1050
    %v1291 = vadd.f32 %v736, %v1052
    %v1292 = vadd.f32 %v737, %v1051
    %v1293 = vadd.f32 %v738, %v1055
    %v1294 = vadd.f32 %v739, %v1057
    %v1295 = vadd.f32 %v740, %v1059
    %v1296 = vadd.f32 %v741, %v1058
    %v1297 = vadd.f32 %v742, %v1062
    %v1298 = vadd.f32 %v743, %v1064
    %v1299 = vadd.f32 %v744, %v1066
    %v1300 = vadd.f32 %v745, %v1065
    %v1301 = vadd.f32 %v746, %v1069
    %v1302 = vadd.f32 %v747, %v1071
    %v1303 = vadd.f32 %v748, %v1073
    %v1304 = vadd.f32 %v749, %v1072
    %v1305 = vadd.f32 %v750, %v1076
    %v1306 = vadd.f32 %v751, %v1078
    %v1307 = vadd.f32 %v752, %v1080
    %v1308 = vadd.f32 %v753, %v1079
    %v1309 = vadd.f32 %v754, %v1083
    %v1310 = vadd.f32 %v755, %v1085
    %v1311 = vadd.f32 %v756, %v1087
    %v1312 = vadd.f32 %v757, %v1086
    %v1313 = vadd.f32 %v758, %v1090
    %v1314 = vadd.f32 %v759, %v1092
    %v1315 = vadd.f32 %v760, %v1094
    %v1316 = vadd.f32 %v761, %v1093
    %v1317 = vadd.f32 %v762, %v1097
    %v1318 = vadd.f32 %v763, %v1099
    %v1319 = vadd.f32 %v764, %v1101
    %v1320 = vadd.f32 %v765, %v1100
    %v1321 = vadd.f32 %v766, %v1104
    %v1322 = vadd.f32 %v767, %v1106
    %v1323 = vadd.f32 %v768, %v1108
    %v1324 = vadd.f32 %v769, %v1107
    %v1325 = vadd.f32 %v770, %v1111
    %v1326 = vadd.f32 %v771, %v1113
    %v1327 = vadd.f32 %v772, %v1115
    %v1328 = vadd.f32 %v773, %v1114
    %v1329 = vadd.f32 %v774, %v1118
    %v1330 = vadd.f32 %v775, %v1120
    %v1331 = vadd.f32 %v776, %v1122
    %v1332 = vadd.f32 %v777, %v1121
    %v1333 = vadd.f32 %v778, %v1125
    %v1334 = vadd.f32 %v779, %v1127
    %v1335 = vadd.f32 %v780, %v1129
    %v1336 = vadd.f32 %v781, %v1128
    %v1337 = vadd.f32 %v782, %v1132
    %v1338 = vadd.f32 %v783, %v1134
    %v1339 = vadd.f32 %v784, %v1136
    %v1340 = vadd.f32 %v785, %v1135
    %v1341 = vadd.f32 %v786, %v1139
    %v1342 = vadd.f32 %v787, %v1141
    %v1343 = vadd.f32 %v788, %v1143
    %v1344 = vadd.f32 %v789, %v1142
    %v1345 = vadd.f32 %v790, %v1146
    %v1346 = vadd.f32 %v791, %v1148
    %v1347 = vadd.f32 %v792, %v1150
    %v1348 = vadd.f32 %v793, %v1149
    %v1349 = vadd.f32 %v794, %v1153
    %v1350 = vadd.f32 %v795, %v1155
    %v1351 = vadd.f32 %v796, %v1157
    %v1352 = vadd.f32 %v797, %v1156
    %v1353 = vadd.f32 %v798, %v1160
    %v1354 = vadd.f32 %v799, %v1162
    %v1355 = vadd.f32 %v800, %v1164
    %v1356 = vadd.f32 %v801, %v1163
    %s1357 = sld [smem:[#allocation3 + $0x3]]
    %v1358 = vstv %s1357
    %v1359 = vmul.f32 %v49, %v1358
    %v1360 = vmul.f32 %v50, %v1358
    %v1361 = vmul.f32 %v51, %v1358
    %v1362 = vmul.f32 %v52, %v1358
    %v1363 = vmul.f32 %v53, %v1358
    %v1364 = vmul.f32 %v54, %v1358
    %v1365 = vmul.f32 %v55, %v1358
    %v1366 = vmul.f32 %v56, %v1358
    %v1367 = vmul.f32 %v57, %v1358
    %v1368 = vmul.f32 %v58, %v1358
    %v1369 = vmul.f32 %v59, %v1358
    %v1370 = vmul.f32 %v60, %v1358
    %v1371 = vmul.f32 %v61, %v1358
    %v1372 = vmul.f32 %v62, %v1358
    %v1373 = vmul.f32 %v63, %v1358
    %v1374 = vmul.f32 %v64, %v1358
    %v1375 = vmul.f32 %v65, %v1358
    %v1376 = vmul.f32 %v66, %v1358
    %v1377 = vmul.f32 %v67, %v1358
    %v1378 = vmul.f32 %v68, %v1358
    %v1379 = vmul.f32 %v69, %v1358
    %v1380 = vmul.f32 %v70, %v1358
    %v1381 = vmul.f32 %v71, %v1358
    %v1382 = vmul.f32 %v72, %v1358
    %v1383 = vmul.f32 %v73, %v1358
    %v1384 = vmul.f32 %v74, %v1358
    %v1385 = vmul.f32 %v75, %v1358
    %v1386 = vmul.f32 %v76, %v1358
    %v1387 = vmul.f32 %v77, %v1358
    %v1388 = vmul.f32 %v78, %v1358
    %v1389 = vmul.f32 %v79, %v1358
    %v1390 = vmul.f32 %v80, %v1358
    %v1391 = vmul.f32 %v81, %v1358
    %v1392 = vmul.f32 %v82, %v1358
    %v1393 = vmul.f32 %v83, %v1358
    %v1394 = vmul.f32 %v84, %v1358
    %v1395 = vmul.f32 %v85, %v1358
    %v1396 = vmul.f32 %v86, %v1358
    %v1397 = vmul.f32 %v87, %v1358
    %v1398 = vmul.f32 %v88, %v1358
    %v1399 = vmul.f32 %v89, %v1358
    %v1400 = vmul.f32 %v90, %v1358
    %v1401 = vmul.f32 %v91, %v1358
    %v1402 = vmul.f32 %v92, %v1358
    %v1403 = vmul.f32 %v93, %v1358
    %v1404 = vmul.f32 %v94, %v1358
    %v1405 = vmul.f32 %v95, %v1358
    %v1406 = vmul.f32 %v96, %v1358
    %v1407 = vmul.f32 %v97, %v1358
    %v1408 = vmul.f32 %v98, %v1358
    %v1409 = vmul.f32 %v99, %v1358
    %v1410 = vmul.f32 %v100, %v1358
    %v1411 = vmul.f32 %v101, %v1358
    %v1412 = vmul.f32 %v102, %v1358
    %v1413 = vmul.f32 %v103, %v1358
    %v1414 = vmul.f32 %v104, %v1358
    %v1415 = vmul.f32 %v105, %v1358
    %v1416 = vmul.f32 %v106, %v1358
    %v1417 = vmul.f32 %v107, %v1358
    %v1418 = vmul.f32 %v108, %v1358
    %v1419 = vmul.f32 %v109, %v1358
    %v1420 = vmul.f32 %v110, %v1358
    %v1421 = vmul.f32 %v111, %v1358
    %v1422 = vmul.f32 %v112, %v1358
    %v1423 = vmul.f32 %v113, %v1358
    %v1424 = vmul.f32 %v114, %v1358
    %v1425 = vmul.f32 %v115, %v1358
    %v1426 = vmul.f32 %v116, %v1358
    %v1427 = vmul.f32 %v117, %v1358
    %v1428 = vmul.f32 %v118, %v1358
    %v1429 = vmul.f32 %v119, %v1358
    %v1430 = vmul.f32 %v120, %v1358
    %v1431 = vmul.f32 %v121, %v1358
    %v1432 = vmul.f32 %v122, %v1358
    %v1433 = vmul.f32 %v123, %v1358
    %v1434 = vmul.f32 %v124, %v1358
    %v1435 = vmul.f32 %v125, %v1358
    %v1436 = vmul.f32 %v126, %v1358
    %v1437 = vmul.f32 %v127, %v1358
    %v1438 = vmul.f32 %v128, %v1358
    %v1439 = vmul.f32 %v129, %v1358
    %v1440 = vmul.f32 %v130, %v1358
    %v1441 = vmul.f32 %v131, %v1358
    %v1442 = vmul.f32 %v132, %v1358
    %v1443 = vmul.f32 %v133, %v1358
    %v1444 = vmul.f32 %v134, %v1358
    %v1445 = vmul.f32 %v135, %v1358
    %v1446 = vmul.f32 %v136, %v1358
    %v1447 = vmul.f32 %v137, %v1358
    %v1448 = vmul.f32 %v138, %v1358
    %v1449 = vmul.f32 %v139, %v1358
    %v1450 = vmul.f32 %v140, %v1358
    %v1451 = vmul.f32 %v141, %v1358
    %v1452 = vmul.f32 %v142, %v1358
    %v1453 = vmul.f32 %v143, %v1358
    %v1454 = vmul.f32 %v144, %v1358
    %v1455 = vadd.f32 %v1261, %v1359
    %v1456 = vadd.f32 %v1262, %v1360
    %v1457 = vadd.f32 %v1263, %v1361
    %v1458 = vadd.f32 %v1264, %v1362
    %v1459 = vadd.f32 %v1265, %v1363
    %v1460 = vadd.f32 %v1266, %v1364
    %v1461 = vadd.f32 %v1267, %v1365
    %v1462 = vadd.f32 %v1268, %v1366
    %v1463 = vadd.f32 %v1269, %v1367
    %v1464 = vadd.f32 %v1270, %v1368
    %v1465 = vadd.f32 %v1271, %v1369
    %v1466 = vadd.f32 %v1272, %v1370
    %v1467 = vadd.f32 %v1273, %v1371
    %v1468 = vadd.f32 %v1274, %v1372
    %v1469 = vadd.f32 %v1275, %v1373
    %v1470 = vadd.f32 %v1276, %v1374
    %v1471 = vadd.f32 %v1277, %v1375
    %v1472 = vadd.f32 %v1278, %v1376
    %v1473 = vadd.f32 %v1279, %v1377
    %v1474 = vadd.f32 %v1280, %v1378
    %v1475 = vadd.f32 %v1281, %v1379
    %v1476 = vadd.f32 %v1282, %v1380
    %v1477 = vadd.f32 %v1283, %v1381
    %v1478 = vadd.f32 %v1284, %v1382
    %v1479 = vadd.f32 %v1285, %v1383
    %v1480 = vadd.f32 %v1286, %v1384
    %v1481 = vadd.f32 %v1287, %v1385
    %v1482 = vadd.f32 %v1288, %v1386
    %v1483 = vadd.f32 %v1289, %v1387
    %v1484 = vadd.f32 %v1290, %v1388
    %v1485 = vadd.f32 %v1291, %v1389
    %v1486 = vadd.f32 %v1292, %v1390
    %v1487 = vadd.f32 %v1293, %v1391
    %v1488 = vadd.f32 %v1294, %v1392
    %v1489 = vadd.f32 %v1295, %v1393
    %v1490 = vadd.f32 %v1296, %v1394
    %v1491 = vadd.f32 %v1297, %v1395
    %v1492 = vadd.f32 %v1298, %v1396
    %v1493 = vadd.f32 %v1299, %v1397
    %v1494 = vadd.f32 %v1300, %v1398
    %v1495 = vadd.f32 %v1301, %v1399
    %v1496 = vadd.f32 %v1302, %v1400
    %v1497 = vadd.f32 %v1303, %v1401
    %v1498 = vadd.f32 %v1304, %v1402
    %v1499 = vadd.f32 %v1305, %v1403
    %v1500 = vadd.f32 %v1306, %v1404
    %v1501 = vadd.f32 %v1307, %v1405
    %v1502 = vadd.f32 %v1308, %v1406
    %v1503 = vadd.f32 %v1309, %v1407
    %v1504 = vadd.f32 %v1310, %v1408
    %v1505 = vadd.f32 %v1311, %v1409
    %v1506 = vadd.f32 %v1312, %v1410
    %v1507 = vadd.f32 %v1313, %v1411
    %v1508 = vadd.f32 %v1314, %v1412
    %v1509 = vadd.f32 %v1315, %v1413
    %v1510 = vadd.f32 %v1316, %v1414
    %v1511 = vadd.f32 %v1317, %v1415
    %v1512 = vadd.f32 %v1318, %v1416
    %v1513 = vadd.f32 %v1319, %v1417
    %v1514 = vadd.f32 %v1320, %v1418
    %v1515 = vadd.f32 %v1321, %v1419
    %v1516 = vadd.f32 %v1322, %v1420
    %v1517 = vadd.f32 %v1323, %v1421
    %v1518 = vadd.f32 %v1324, %v1422
    %v1519 = vadd.f32 %v1325, %v1423
    %v1520 = vadd.f32 %v1326, %v1424
    %v1521 = vadd.f32 %v1327, %v1425
    %v1522 = vadd.f32 %v1328, %v1426
    %v1523 = vadd.f32 %v1329, %v1427
    %v1524 = vadd.f32 %v1330, %v1428
    %v1525 = vadd.f32 %v1331, %v1429
    %v1526 = vadd.f32 %v1332, %v1430
    %v1527 = vadd.f32 %v1333, %v1431
    %v1528 = vadd.f32 %v1334, %v1432
    %v1529 = vadd.f32 %v1335, %v1433
    %v1530 = vadd.f32 %v1336, %v1434
    %v1531 = vadd.f32 %v1337, %v1435
    %v1532 = vadd.f32 %v1338, %v1436
    %v1533 = vadd.f32 %v1339, %v1437
    %v1534 = vadd.f32 %v1340, %v1438
    %v1535 = vadd.f32 %v1341, %v1439
    %v1536 = vadd.f32 %v1342, %v1440
    %v1537 = vadd.f32 %v1343, %v1441
    %v1538 = vadd.f32 %v1344, %v1442
    %v1539 = vadd.f32 %v1345, %v1443
    %v1540 = vadd.f32 %v1346, %v1444
    %v1541 = vadd.f32 %v1347, %v1445
    %v1542 = vadd.f32 %v1348, %v1446
    %v1543 = vadd.f32 %v1349, %v1447
    %v1544 = vadd.f32 %v1350, %v1448
    %v1545 = vadd.f32 %v1351, %v1449
    %v1546 = vadd.f32 %v1352, %v1450
    %v1547 = vadd.f32 %v1353, %v1451
    %v1548 = vadd.f32 %v1354, %v1452
    %v1549 = vadd.f32 %v1355, %v1453
    %v1550 = vadd.f32 %v1356, %v1454
    %s1551 = sld [smem:[#allocation3 + $0x4]]
    %v1552 = vstv %s1551
    %v1553 = vmul.f32 %v49, %v1552
    %v1554 = vmul.f32 %v50, %v1552
    %v1555 = vmul.f32 %v51, %v1552
    %v1556 = vmul.f32 %v52, %v1552
    %v1557 = vmul.f32 %v53, %v1552
    %v1558 = vmul.f32 %v54, %v1552
    %v1559 = vmul.f32 %v55, %v1552
    %v1560 = vmul.f32 %v56, %v1552
    %v1561 = vmul.f32 %v57, %v1552
    %v1562 = vmul.f32 %v58, %v1552
    %v1563 = vmul.f32 %v59, %v1552
    %v1564 = vmul.f32 %v60, %v1552
    %v1565 = vmul.f32 %v61, %v1552
    %v1566 = vmul.f32 %v62, %v1552
    %v1567 = vmul.f32 %v63, %v1552
    %v1568 = vmul.f32 %v64, %v1552
    %v1569 = vmul.f32 %v65, %v1552
    %v1570 = vmul.f32 %v66, %v1552
    %v1571 = vmul.f32 %v67, %v1552
    %v1572 = vmul.f32 %v68, %v1552
    %v1573 = vmul.f32 %v69, %v1552
    %v1574 = vmul.f32 %v70, %v1552
    %v1575 = vmul.f32 %v71, %v1552
    %v1576 = vmul.f32 %v72, %v1552
    %v1577 = vmul.f32 %v73, %v1552
    %v1578 = vmul.f32 %v74, %v1552
    %v1579 = vmul.f32 %v75, %v1552
    %v1580 = vmul.f32 %v76, %v1552
    %v1581 = vmul.f32 %v77, %v1552
    %v1582 = vmul.f32 %v78, %v1552
    %v1583 = vmul.f32 %v79, %v1552
    %v1584 = vmul.f32 %v80, %v1552
    %v1585 = vmul.f32 %v81, %v1552
    %v1586 = vmul.f32 %v82, %v1552
    %v1587 = vmul.f32 %v83, %v1552
    %v1588 = vmul.f32 %v84, %v1552
    %v1589 = vmul.f32 %v85, %v1552
    %v1590 = vmul.f32 %v86, %v1552
    %v1591 = vmul.f32 %v87, %v1552
    %v1592 = vmul.f32 %v88, %v1552
    %v1593 = vmul.f32 %v89, %v1552
    %v1594 = vmul.f32 %v90, %v1552
    %v1595 = vmul.f32 %v91, %v1552
    %v1596 = vmul.f32 %v92, %v1552
    %v1597 = vmul.f32 %v93, %v1552
    %v1598 = vmul.f32 %v94, %v1552
    %v1599 = vmul.f32 %v95, %v1552
    %v1600 = vmul.f32 %v96, %v1552
    %v1601 = vmul.f32 %v97, %v1552
    %v1602 = vmul.f32 %v98, %v1552
    %v1603 = vmul.f32 %v99, %v1552
    %v1604 = vmul.f32 %v100, %v1552
    %v1605 = vmul.f32 %v101, %v1552
    %v1606 = vmul.f32 %v102, %v1552
    %v1607 = vmul.f32 %v103, %v1552
    %v1608 = vmul.f32 %v104, %v1552
    %v1609 = vmul.f32 %v105, %v1552
    %v1610 = vmul.f32 %v106, %v1552
    %v1611 = vmul.f32 %v107, %v1552
    %v1612 = vmul.f32 %v108, %v1552
    %v1613 = vmul.f32 %v109, %v1552
    %v1614 = vmul.f32 %v110, %v1552
    %v1615 = vmul.f32 %v111, %v1552
    %v1616 = vmul.f32 %v112, %v1552
    %v1617 = vmul.f32 %v113, %v1552
    %v1618 = vmul.f32 %v114, %v1552
    %v1619 = vmul.f32 %v115, %v1552
    %v1620 = vmul.f32 %v116, %v1552
    %v1621 = vmul.f32 %v117, %v1552
    %v1622 = vmul.f32 %v118, %v1552
    %v1623 = vmul.f32 %v119, %v1552
    %v1624 = vmul.f32 %v120, %v1552
    %v1625 = vmul.f32 %v121, %v1552
    %v1626 = vmul.f32 %v122, %v1552
    %v1627 = vmul.f32 %v123, %v1552
    %v1628 = vmul.f32 %v124, %v1552
    %v1629 = vmul.f32 %v125, %v1552
    %v1630 = vmul.f32 %v126, %v1552
    %v1631 = vmul.f32 %v127, %v1552
    %v1632 = vmul.f32 %v128, %v1552
    %v1633 = vmul.f32 %v129, %v1552
    %v1634 = vmul.f32 %v130, %v1552
    %v1635 = vmul.f32 %v131, %v1552
    %v1636 = vmul.f32 %v132, %v1552
    %v1637 = vmul.f32 %v133, %v1552
    %v1638 = vmul.f32 %v134, %v1552
    %v1639 = vmul.f32 %v135, %v1552
    %v1640 = vmul.f32 %v136, %v1552
    %v1641 = vmul.f32 %v137, %v1552
    %v1642 = vmul.f32 %v138, %v1552
    %v1643 = vmul.f32 %v139, %v1552
    %v1644 = vmul.f32 %v140, %v1552
    %v1645 = vmul.f32 %v141, %v1552
    %v1646 = vmul.f32 %v142, %v1552
    %v1647 = vmul.f32 %v143, %v1552
    %v1648 = vmul.f32 %v144, %v1552
    %v1745 = vrot.slane %v1553, 1
    %v1746 = vrot.slane %v1554, 1
    %v1747 = vsel %vm441, %v1745, %v1746
    %v1748 = vrot.slane %v1555, 1
    %v1749 = vsel %vm441, %v1746, %v1748
    %v1750 = vrot.slane %v1556, 1
    %v1751 = vsel %vm441, %v1748, %v1750
    %v1752 = vrot.slane %v1557, 1
    %v1753 = vrot.slane %v1558, 1
    %v1754 = vsel %vm441, %v1752, %v1753
    %v1755 = vrot.slane %v1559, 1
    %v1756 = vsel %vm441, %v1753, %v1755
    %v1757 = vrot.slane %v1560, 1
    %v1758 = vsel %vm441, %v1755, %v1757
    %v1759 = vrot.slane %v1561, 1
    %v1760 = vrot.slane %v1562, 1
    %v1761 = vsel %vm441, %v1759, %v1760
    %v1762 = vrot.slane %v1563, 1
    %v1763 = vsel %vm441, %v1760, %v1762
    %v1764 = vrot.slane %v1564, 1
    %v1765 = vsel %vm441, %v1762, %v1764
    %v1766 = vrot.slane %v1565, 1
    %v1767 = vrot.slane %v1566, 1
    %v1768 = vsel %vm441, %v1766, %v1767
    %v1769 = vrot.slane %v1567, 1
    %v1770 = vsel %vm441, %v1767, %v1769
    %v1771 = vrot.slane %v1568, 1
    %v1772 = vsel %vm441, %v1769, %v1771
    %v1773 = vrot.slane %v1569, 1
    %v1774 = vrot.slane %v1570, 1
    %v1775 = vsel %vm441, %v1773, %v1774
    %v1776 = vrot.slane %v1571, 1
    %v1777 = vsel %vm441, %v1774, %v1776
    %v1778 = vrot.slane %v1572, 1
    %v1779 = vsel %vm441, %v1776, %v1778
    %v1780 = vrot.slane %v1573, 1
    %v1781 = vrot.slane %v1574, 1
    %v1782 = vsel %vm441, %v1780, %v1781
    %v1783 = vrot.slane %v1575, 1
    %v1784 = vsel %vm441, %v1781, %v1783
    %v1785 = vrot.slane %v1576, 1
    %v1786 = vsel %vm441, %v1783, %v1785
    %v1787 = vrot.slane %v1577, 1
    %v1788 = vrot.slane %v1578, 1
    %v1789 = vsel %vm441, %v1787, %v1788
    %v1790 = vrot.slane %v1579, 1
    %v1791 = vsel %vm441, %v1788, %v1790
    %v1792 = vrot.slane %v1580, 1
    %v1793 = vsel %vm441, %v1790, %v1792
    %v1794 = vrot.slane %v1581, 1
    %v1795 = vrot.slane %v1582, 1
    %v1796 = vsel %vm441, %v1794, %v1795
    %v1797 = vrot.slane %v1583, 1
    %v1798 = vsel %vm441, %v1795, %v1797
    %v1799 = vrot.slane %v1584, 1
    %v1800 = vsel %vm441, %v1797, %v1799
    %v1801 = vrot.slane %v1585, 1
    %v1802 = vrot.slane %v1586, 1
    %v1803 = vsel %vm441, %v1801, %v1802
    %v1804 = vrot.slane %v1587, 1
    %v1805 = vsel %vm441, %v1802, %v1804
    %v1806 = vrot.slane %v1588, 1
    %v1807 = vsel %vm441, %v1804, %v1806
    %v1808 = vrot.slane %v1589, 1
    %v1809 = vrot.slane %v1590, 1
    %v1810 = vsel %vm441, %v1808, %v1809
    %v1811 = vrot.slane %v1591, 1
    %v1812 = vsel %vm441, %v1809, %v1811
    %v1813 = vrot.slane %v1592, 1
    %v1814 = vsel %vm441, %v1811, %v1813
    %v1815 = vrot.slane %v1593, 1
    %v1816 = vrot.slane %v1594, 1
    %v1817 = vsel %vm441, %v1815, %v1816
    %v1818 = vrot.slane %v1595, 1
    %v1819 = vsel %vm441, %v1816, %v1818
    %v1820 = vrot.slane %v1596, 1
    %v1821 = vsel %vm441, %v1818, %v1820
    %v1822 = vrot.slane %v1597, 1
    %v1823 = vrot.slane %v1598, 1
    %v1824 = vsel %vm441, %v1822, %v1823
    %v1825 = vrot.slane %v1599, 1
    %v1826 = vsel %vm441, %v1823, %v1825
    %v1827 = vrot.slane %v1600, 1
    %v1828 = vsel %vm441, %v1825, %v1827
    %v1829 = vrot.slane %v1601, 1
    %v1830 = vrot.slane %v1602, 1
    %v1831 = vsel %vm441, %v1829, %v1830
    %v1832 = vrot.slane %v1603, 1
    %v1833 = vsel %vm441, %v1830, %v1832
    %v1834 = vrot.slane %v1604, 1
    %v1835 = vsel %vm441, %v1832, %v1834
    %v1836 = vrot.slane %v1605, 1
    %v1837 = vrot.slane %v1606, 1
    %v1838 = vsel %vm441, %v1836, %v1837
    %v1839 = vrot.slane %v1607, 1
    %v1840 = vsel %vm441, %v1837, %v1839
    %v1841 = vrot.slane %v1608, 1
    %v1842 = vsel %vm441, %v1839, %v1841
    %v1843 = vrot.slane %v1609, 1
    %v1844 = vrot.slane %v1610, 1
    %v1845 = vsel %vm441, %v1843, %v1844
    %v1846 = vrot.slane %v1611, 1
    %v1847 = vsel %vm441, %v1844, %v1846
    %v1848 = vrot.slane %v1612, 1
    %v1849 = vsel %vm441, %v1846, %v1848
    %v1850 = vrot.slane %v1613, 1
    %v1851 = vrot.slane %v1614, 1
    %v1852 = vsel %vm441, %v1850, %v1851
    %v1853 = vrot.slane %v1615, 1
    %v1854 = vsel %vm441, %v1851, %v1853
    %v1855 = vrot.slane %v1616, 1
    %v1856 = vsel %vm441, %v1853, %v1855
    %v1857 = vrot.slane %v1617, 1
    %v1858 = vrot.slane %v1618, 1
    %v1859 = vsel %vm441, %v1857, %v1858
    %v1860 = vrot.slane %v1619, 1
    %v1861 = vsel %vm441, %v1858, %v1860
    %v1862 = vrot.slane %v1620, 1
    %v1863 = vsel %vm441, %v1860, %v1862
    %v1864 = vrot.slane %v1621, 1
    %v1865 = vrot.slane %v1622, 1
    %v1866 = vsel %vm441, %v1864, %v1865
    %v1867 = vrot.slane %v1623, 1
    %v1868 = vsel %vm441, %v1865, %v1867
    %v1869 = vrot.slane %v1624, 1
    %v1870 = vsel %vm441, %v1867, %v1869
    %v1871 = vrot.slane %v1625, 1
    %v1872 = vrot.slane %v1626, 1
    %v1873 = vsel %vm441, %v1871, %v1872
    %v1874 = vrot.slane %v1627, 1
    %v1875 = vsel %vm441, %v1872, %v1874
    %v1876 = vrot.slane %v1628, 1
    %v1877 = vsel %vm441, %v1874, %v1876
    %v1878 = vrot.slane %v1629, 1
    %v1879 = vrot.slane %v1630, 1
    %v1880 = vsel %vm441, %v1878, %v1879
    %v1881 = vrot.slane %v1631, 1
    %v1882 = vsel %vm441, %v1879, %v1881
    %v1883 = vrot.slane %v1632, 1
    %v1884 = vsel %vm441, %v1881, %v1883
    %v1885 = vrot.slane %v1633, 1
    %v1886 = vrot.slane %v1634, 1
    %v1887 = vsel %vm441, %v1885, %v1886
    %v1888 = vrot.slane %v1635, 1
    %v1889 = vsel %vm441, %v1886, %v1888
    %v1890 = vrot.slane %v1636, 1
    %v1891 = vsel %vm441, %v1888, %v1890
    %v1892 = vrot.slane %v1637, 1
    %v1893 = vrot.slane %v1638, 1
    %v1894 = vsel %vm441, %v1892, %v1893
    %v1895 = vrot.slane %v1639, 1
    %v1896 = vsel %vm441, %v1893, %v1895
    %v1897 = vrot.slane %v1640, 1
    %v1898 = vsel %vm441, %v1895, %v1897
    %v1899 = vrot.slane %v1641, 1
    %v1900 = vrot.slane %v1642, 1
    %v1901 = vsel %vm441, %v1899, %v1900
    %v1902 = vrot.slane %v1643, 1
    %v1903 = vsel %vm441, %v1900, %v1902
    %v1904 = vrot.slane %v1644, 1
    %v1905 = vsel %vm441, %v1902, %v1904
    %v1906 = vrot.slane %v1645, 1
    %v1907 = vrot.slane %v1646, 1
    %v1908 = vsel %vm441, %v1906, %v1907
    %v1909 = vrot.slane %v1647, 1
    %v1910 = vsel %vm441, %v1907, %v1909
    %v1911 = vrot.slane %v1648, 1
    %v1912 = vsel %vm441, %v1909, %v1911
    %v2009 = vadd.f32 %v1455, %v1747
    %v2010 = vadd.f32 %v1456, %v1749
    %v2011 = vadd.f32 %v1457, %v1751
    %v2012 = vadd.f32 %v1458, %v1750
    %v2013 = vadd.f32 %v1459, %v1754
    %v2014 = vadd.f32 %v1460, %v1756
    %v2015 = vadd.f32 %v1461, %v1758
    %v2016 = vadd.f32 %v1462, %v1757
    %v2017 = vadd.f32 %v1463, %v1761
    %v2018 = vadd.f32 %v1464, %v1763
    %v2019 = vadd.f32 %v1465, %v1765
    %v2020 = vadd.f32 %v1466, %v1764
    %v2021 = vadd.f32 %v1467, %v1768
    %v2022 = vadd.f32 %v1468, %v1770
    %v2023 = vadd.f32 %v1469, %v1772
    %v2024 = vadd.f32 %v1470, %v1771
    %v2025 = vadd.f32 %v1471, %v1775
    %v2026 = vadd.f32 %v1472, %v1777
    %v2027 = vadd.f32 %v1473, %v1779
    %v2028 = vadd.f32 %v1474, %v1778
    %v2029 = vadd.f32 %v1475, %v1782
    %v2030 = vadd.f32 %v1476, %v1784
    %v2031 = vadd.f32 %v1477, %v1786
    %v2032 = vadd.f32 %v1478, %v1785
    %v2033 = vadd.f32 %v1479, %v1789
    %v2034 = vadd.f32 %v1480, %v1791
    %v2035 = vadd.f32 %v1481, %v1793
    %v2036 = vadd.f32 %v1482, %v1792
    %v2037 = vadd.f32 %v1483, %v1796
    %v2038 = vadd.f32 %v1484, %v1798
    %v2039 = vadd.f32 %v1485, %v1800
    %v2040 = vadd.f32 %v1486, %v1799
    %v2041 = vadd.f32 %v1487, %v1803
    %v2042 = vadd.f32 %v1488, %v1805
    %v2043 = vadd.f32 %v1489, %v1807
    %v2044 = vadd.f32 %v1490, %v1806
    %v2045 = vadd.f32 %v1491, %v1810
    %v2046 = vadd.f32 %v1492, %v1812
    %v2047 = vadd.f32 %v1493, %v1814
    %v2048 = vadd.f32 %v1494, %v1813
    %v2049 = vadd.f32 %v1495, %v1817
    %v2050 = vadd.f32 %v1496, %v1819
    %v2051 = vadd.f32 %v1497, %v1821
    %v2052 = vadd.f32 %v1498, %v1820
    %v2053 = vadd.f32 %v1499, %v1824
    %v2054 = vadd.f32 %v1500, %v1826
    %v2055 = vadd.f32 %v1501, %v1828
    %v2056 = vadd.f32 %v1502, %v1827
    %v2057 = vadd.f32 %v1503, %v1831
    %v2058 = vadd.f32 %v1504, %v1833
    %v2059 = vadd.f32 %v1505, %v1835
    %v2060 = vadd.f32 %v1506, %v1834
    %v2061 = vadd.f32 %v1507, %v1838
    %v2062 = vadd.f32 %v1508, %v1840
    %v2063 = vadd.f32 %v1509, %v1842
    %v2064 = vadd.f32 %v1510, %v1841
    %v2065 = vadd.f32 %v1511, %v1845
    %v2066 = vadd.f32 %v1512, %v1847
    %v2067 = vadd.f32 %v1513, %v1849
    %v2068 = vadd.f32 %v1514, %v1848
    %v2069 = vadd.f32 %v1515, %v1852
    %v2070 = vadd.f32 %v1516, %v1854
    %v2071 = vadd.f32 %v1517, %v1856
    %v2072 = vadd.f32 %v1518, %v1855
    %v2073 = vadd.f32 %v1519, %v1859
    %v2074 = vadd.f32 %v1520, %v1861
    %v2075 = vadd.f32 %v1521, %v1863
    %v2076 = vadd.f32 %v1522, %v1862
    %v2077 = vadd.f32 %v1523, %v1866
    %v2078 = vadd.f32 %v1524, %v1868
    %v2079 = vadd.f32 %v1525, %v1870
    %v2080 = vadd.f32 %v1526, %v1869
    %v2081 = vadd.f32 %v1527, %v1873
    %v2082 = vadd.f32 %v1528, %v1875
    %v2083 = vadd.f32 %v1529, %v1877
    %v2084 = vadd.f32 %v1530, %v1876
    %v2085 = vadd.f32 %v1531, %v1880
    %v2086 = vadd.f32 %v1532, %v1882
    %v2087 = vadd.f32 %v1533, %v1884
    %v2088 = vadd.f32 %v1534, %v1883
    %v2089 = vadd.f32 %v1535, %v1887
    %v2090 = vadd.f32 %v1536, %v1889
    %v2091 = vadd.f32 %v1537, %v1891
    %v2092 = vadd.f32 %v1538, %v1890
    %v2093 = vadd.f32 %v1539, %v1894
    %v2094 = vadd.f32 %v1540, %v1896
    %v2095 = vadd.f32 %v1541, %v1898
    %v2096 = vadd.f32 %v1542, %v1897
    %v2097 = vadd.f32 %v1543, %v1901
    %v2098 = vadd.f32 %v1544, %v1903
    %v2099 = vadd.f32 %v1545, %v1905
    %v2100 = vadd.f32 %v1546, %v1904
    %v2101 = vadd.f32 %v1547, %v1908
    %v2102 = vadd.f32 %v1548, %v1910
    %v2103 = vadd.f32 %v1549, %v1912
    %v2104 = vadd.f32 %v1550, %v1911
    %s2105 = sld [smem:[#allocation3 + $0x5]]
    %v2106 = vstv %s2105
    %v2107 = vmul.f32 %v49, %v2106
    %v2108 = vmul.f32 %v50, %v2106
    %v2109 = vmul.f32 %v51, %v2106
    %v2110 = vmul.f32 %v52, %v2106
    %v2111 = vmul.f32 %v53, %v2106
    %v2112 = vmul.f32 %v54, %v2106
    %v2113 = vmul.f32 %v55, %v2106
    %v2114 = vmul.f32 %v56, %v2106
    %v2115 = vmul.f32 %v57, %v2106
    %v2116 = vmul.f32 %v58, %v2106
    %v2117 = vmul.f32 %v59, %v2106
    %v2118 = vmul.f32 %v60, %v2106
    %v2119 = vmul.f32 %v61, %v2106
    %v2120 = vmul.f32 %v62, %v2106
    %v2121 = vmul.f32 %v63, %v2106
    %v2122 = vmul.f32 %v64, %v2106
    %v2123 = vmul.f32 %v65, %v2106
    %v2124 = vmul.f32 %v66, %v2106
    %v2125 = vmul.f32 %v67, %v2106
    %v2126 = vmul.f32 %v68, %v2106
    %v2127 = vmul.f32 %v69, %v2106
    %v2128 = vmul.f32 %v70, %v2106
    %v2129 = vmul.f32 %v71, %v2106
    %v2130 = vmul.f32 %v72, %v2106
    %v2131 = vmul.f32 %v73, %v2106
    %v2132 = vmul.f32 %v74, %v2106
    %v2133 = vmul.f32 %v75, %v2106
    %v2134 = vmul.f32 %v76, %v2106
    %v2135 = vmul.f32 %v77, %v2106
    %v2136 = vmul.f32 %v78, %v2106
    %v2137 = vmul.f32 %v79, %v2106
    %v2138 = vmul.f32 %v80, %v2106
    %v2139 = vmul.f32 %v81, %v2106
    %v2140 = vmul.f32 %v82, %v2106
    %v2141 = vmul.f32 %v83, %v2106
    %v2142 = vmul.f32 %v84, %v2106
    %v2143 = vmul.f32 %v85, %v2106
    %v2144 = vmul.f32 %v86, %v2106
    %v2145 = vmul.f32 %v87, %v2106
    %v2146 = vmul.f32 %v88, %v2106
    %v2147 = vmul.f32 %v89, %v2106
    %v2148 = vmul.f32 %v90, %v2106
    %v2149 = vmul.f32 %v91, %v2106
    %v2150 = vmul.f32 %v92, %v2106
    %v2151 = vmul.f32 %v93, %v2106
    %v2152 = vmul.f32 %v94, %v2106
    %v2153 = vmul.f32 %v95, %v2106
    %v2154 = vmul.f32 %v96, %v2106
    %v2155 = vmul.f32 %v97, %v2106
    %v2156 = vmul.f32 %v98, %v2106
    %v2157 = vmul.f32 %v99, %v2106
    %v2158 = vmul.f32 %v100, %v2106
    %v2159 = vmul.f32 %v101, %v2106
    %v2160 = vmul.f32 %v102, %v2106
    %v2161 = vmul.f32 %v103, %v2106
    %v2162 = vmul.f32 %v104, %v2106
    %v2163 = vmul.f32 %v105, %v2106
    %v2164 = vmul.f32 %v106, %v2106
    %v2165 = vmul.f32 %v107, %v2106
    %v2166 = vmul.f32 %v108, %v2106
    %v2167 = vmul.f32 %v109, %v2106
    %v2168 = vmul.f32 %v110, %v2106
    %v2169 = vmul.f32 %v111, %v2106
    %v2170 = vmul.f32 %v112, %v2106
    %v2171 = vmul.f32 %v113, %v2106
    %v2172 = vmul.f32 %v114, %v2106
    %v2173 = vmul.f32 %v115, %v2106
    %v2174 = vmul.f32 %v116, %v2106
    %v2175 = vmul.f32 %v117, %v2106
    %v2176 = vmul.f32 %v118, %v2106
    %v2177 = vmul.f32 %v119, %v2106
    %v2178 = vmul.f32 %v120, %v2106
    %v2179 = vmul.f32 %v121, %v2106
    %v2180 = vmul.f32 %v122, %v2106
    %v2181 = vmul.f32 %v123, %v2106
    %v2182 = vmul.f32 %v124, %v2106
    %v2183 = vmul.f32 %v125, %v2106
    %v2184 = vmul.f32 %v126, %v2106
    %v2185 = vmul.f32 %v127, %v2106
    %v2186 = vmul.f32 %v128, %v2106
    %v2187 = vmul.f32 %v129, %v2106
    %v2188 = vmul.f32 %v130, %v2106
    %v2189 = vmul.f32 %v131, %v2106
    %v2190 = vmul.f32 %v132, %v2106
    %v2191 = vmul.f32 %v133, %v2106
    %v2192 = vmul.f32 %v134, %v2106
    %v2193 = vmul.f32 %v135, %v2106
    %v2194 = vmul.f32 %v136, %v2106
    %v2195 = vmul.f32 %v137, %v2106
    %v2196 = vmul.f32 %v138, %v2106
    %v2197 = vmul.f32 %v139, %v2106
    %v2198 = vmul.f32 %v140, %v2106
    %v2199 = vmul.f32 %v141, %v2106
    %v2200 = vmul.f32 %v142, %v2106
    %v2201 = vmul.f32 %v143, %v2106
    %v2202 = vmul.f32 %v144, %v2106
    %v2299 = vrot.slane %v2107, 2
    %v2300 = vrot.slane %v2108, 2
    %v2301 = vsel %vm996, %v2299, %v2300
    %v2302 = vrot.slane %v2109, 2
    %v2303 = vsel %vm996, %v2300, %v2302
    %v2304 = vrot.slane %v2110, 2
    %v2305 = vsel %vm996, %v2302, %v2304
    %v2306 = vrot.slane %v2111, 2
    %v2307 = vrot.slane %v2112, 2
    %v2308 = vsel %vm996, %v2306, %v2307
    %v2309 = vrot.slane %v2113, 2
    %v2310 = vsel %vm996, %v2307, %v2309
    %v2311 = vrot.slane %v2114, 2
    %v2312 = vsel %vm996, %v2309, %v2311
    %v2313 = vrot.slane %v2115, 2
    %v2314 = vrot.slane %v2116, 2
    %v2315 = vsel %vm996, %v2313, %v2314
    %v2316 = vrot.slane %v2117, 2
    %v2317 = vsel %vm996, %v2314, %v2316
    %v2318 = vrot.slane %v2118, 2
    %v2319 = vsel %vm996, %v2316, %v2318
    %v2320 = vrot.slane %v2119, 2
    %v2321 = vrot.slane %v2120, 2
    %v2322 = vsel %vm996, %v2320, %v2321
    %v2323 = vrot.slane %v2121, 2
    %v2324 = vsel %vm996, %v2321, %v2323
    %v2325 = vrot.slane %v2122, 2
    %v2326 = vsel %vm996, %v2323, %v2325
    %v2327 = vrot.slane %v2123, 2
    %v2328 = vrot.slane %v2124, 2
    %v2329 = vsel %vm996, %v2327, %v2328
    %v2330 = vrot.slane %v2125, 2
    %v2331 = vsel %vm996, %v2328, %v2330
    %v2332 = vrot.slane %v2126, 2
    %v2333 = vsel %vm996, %v2330, %v2332
    %v2334 = vrot.slane %v2127, 2
    %v2335 = vrot.slane %v2128, 2
    %v2336 = vsel %vm996, %v2334, %v2335
    %v2337 = vrot.slane %v2129, 2
    %v2338 = vsel %vm996, %v2335, %v2337
    %v2339 = vrot.slane %v2130, 2
    %v2340 = vsel %vm996, %v2337, %v2339
    %v2341 = vrot.slane %v2131, 2
    %v2342 = vrot.slane %v2132, 2
    %v2343 = vsel %vm996, %v2341, %v2342
    %v2344 = vrot.slane %v2133, 2
    %v2345 = vsel %vm996, %v2342, %v2344
    %v2346 = vrot.slane %v2134, 2
    %v2347 = vsel %vm996, %v2344, %v2346
    %v2348 = vrot.slane %v2135, 2
    %v2349 = vrot.slane %v2136, 2
    %v2350 = vsel %vm996, %v2348, %v2349
    %v2351 = vrot.slane %v2137, 2
    %v2352 = vsel %vm996, %v2349, %v2351
    %v2353 = vrot.slane %v2138, 2
    %v2354 = vsel %vm996, %v2351, %v2353
    %v2355 = vrot.slane %v2139, 2
    %v2356 = vrot.slane %v2140, 2
    %v2357 = vsel %vm996, %v2355, %v2356
    %v2358 = vrot.slane %v2141, 2
    %v2359 = vsel %vm996, %v2356, %v2358
    %v2360 = vrot.slane %v2142, 2
    %v2361 = vsel %vm996, %v2358, %v2360
    %v2362 = vrot.slane %v2143, 2
    %v2363 = vrot.slane %v2144, 2
    %v2364 = vsel %vm996, %v2362, %v2363
    %v2365 = vrot.slane %v2145, 2
    %v2366 = vsel %vm996, %v2363, %v2365
    %v2367 = vrot.slane %v2146, 2
    %v2368 = vsel %vm996, %v2365, %v2367
    %v2369 = vrot.slane %v2147, 2
    %v2370 = vrot.slane %v2148, 2
    %v2371 = vsel %vm996, %v2369, %v2370
    %v2372 = vrot.slane %v2149, 2
    %v2373 = vsel %vm996, %v2370, %v2372
    %v2374 = vrot.slane %v2150, 2
    %v2375 = vsel %vm996, %v2372, %v2374
    %v2376 = vrot.slane %v2151, 2
    %v2377 = vrot.slane %v2152, 2
    %v2378 = vsel %vm996, %v2376, %v2377
    %v2379 = vrot.slane %v2153, 2
    %v2380 = vsel %vm996, %v2377, %v2379
    %v2381 = vrot.slane %v2154, 2
    %v2382 = vsel %vm996, %v2379, %v2381
    %v2383 = vrot.slane %v2155, 2
    %v2384 = vrot.slane %v2156, 2
    %v2385 = vsel %vm996, %v2383, %v2384
    %v2386 = vrot.slane %v2157, 2
    %v2387 = vsel %vm996, %v2384, %v2386
    %v2388 = vrot.slane %v2158, 2
    %v2389 = vsel %vm996, %v2386, %v2388
    %v2390 = vrot.slane %v2159, 2
    %v2391 = vrot.slane %v2160, 2
    %v2392 = vsel %vm996, %v2390, %v2391
    %v2393 = vrot.slane %v2161, 2
    %v2394 = vsel %vm996, %v2391, %v2393
    %v2395 = vrot.slane %v2162, 2
    %v2396 = vsel %vm996, %v2393, %v2395
    %v2397 = vrot.slane %v2163, 2
    %v2398 = vrot.slane %v2164, 2
    %v2399 = vsel %vm996, %v2397, %v2398
    %v2400 = vrot.slane %v2165, 2
    %v2401 = vsel %vm996, %v2398, %v2400
    %v2402 = vrot.slane %v2166, 2
    %v2403 = vsel %vm996, %v2400, %v2402
    %v2404 = vrot.slane %v2167, 2
    %v2405 = vrot.slane %v2168, 2
    %v2406 = vsel %vm996, %v2404, %v2405
    %v2407 = vrot.slane %v2169, 2
    %v2408 = vsel %vm996, %v2405, %v2407
    %v2409 = vrot.slane %v2170, 2
    %v2410 = vsel %vm996, %v2407, %v2409
    %v2411 = vrot.slane %v2171, 2
    %v2412 = vrot.slane %v2172, 2
    %v2413 = vsel %vm996, %v2411, %v2412
    %v2414 = vrot.slane %v2173, 2
    %v2415 = vsel %vm996, %v2412, %v2414
    %v2416 = vrot.slane %v2174, 2
    %v2417 = vsel %vm996, %v2414, %v2416
    %v2418 = vrot.slane %v2175, 2
    %v2419 = vrot.slane %v2176, 2
    %v2420 = vsel %vm996, %v2418, %v2419
    %v2421 = vrot.slane %v2177, 2
    %v2422 = vsel %vm996, %v2419, %v2421
    %v2423 = vrot.slane %v2178, 2
    %v2424 = vsel %vm996, %v2421, %v2423
    %v2425 = vrot.slane %v2179, 2
    %v2426 = vrot.slane %v2180, 2
    %v2427 = vsel %vm996, %v2425, %v2426
    %v2428 = vrot.slane %v2181, 2
    %v2429 = vsel %vm996, %v2426, %v2428
    %v2430 = vrot.slane %v2182, 2
    %v2431 = vsel %vm996, %v2428, %v2430
    %v2432 = vrot.slane %v2183, 2
    %v2433 = vrot.slane %v2184, 2
    %v2434 = vsel %vm996, %v2432, %v2433
    %v2435 = vrot.slane %v2185, 2
    %v2436 = vsel %vm996, %v2433, %v2435
    %v2437 = vrot.slane %v2186, 2
    %v2438 = vsel %vm996, %v2435, %v2437
    %v2439 = vrot.slane %v2187, 2
    %v2440 = vrot.slane %v2188, 2
    %v2441 = vsel %vm996, %v2439, %v2440
    %v2442 = vrot.slane %v2189, 2
    %v2443 = vsel %vm996, %v2440, %v2442
    %v2444 = vrot.slane %v2190, 2
    %v2445 = vsel %vm996, %v2442, %v2444
    %v2446 = vrot.slane %v2191, 2
    %v2447 = vrot.slane %v2192, 2
    %v2448 = vsel %vm996, %v2446, %v2447
    %v2449 = vrot.slane %v2193, 2
    %v2450 = vsel %vm996, %v2447, %v2449
    %v2451 = vrot.slane %v2194, 2
    %v2452 = vsel %vm996, %v2449, %v2451
    %v2453 = vrot.slane %v2195, 2
    %v2454 = vrot.slane %v2196, 2
    %v2455 = vsel %vm996, %v2453, %v2454
    %v2456 = vrot.slane %v2197, 2
    %v2457 = vsel %vm996, %v2454, %v2456
    %v2458 = vrot.slane %v2198, 2
    %v2459 = vsel %vm996, %v2456, %v2458
    %v2460 = vrot.slane %v2199, 2
    %v2461 = vrot.slane %v2200, 2
    %v2462 = vsel %vm996, %v2460, %v2461
    %v2463 = vrot.slane %v2201, 2
    %v2464 = vsel %vm996, %v2461, %v2463
    %v2465 = vrot.slane %v2202, 2
    %v2466 = vsel %vm996, %v2463, %v2465
    %v2563 = vadd.f32 %v2009, %v2301
    %v2564 = vadd.f32 %v2010, %v2303
    %v2565 = vadd.f32 %v2011, %v2305
    %v2566 = vadd.f32 %v2012, %v2304
    %v2567 = vadd.f32 %v2013, %v2308
    %v2568 = vadd.f32 %v2014, %v2310
    %v2569 = vadd.f32 %v2015, %v2312
    %v2570 = vadd.f32 %v2016, %v2311
    %v2571 = vadd.f32 %v2017, %v2315
    %v2572 = vadd.f32 %v2018, %v2317
    %v2573 = vadd.f32 %v2019, %v2319
    %v2574 = vadd.f32 %v2020, %v2318
    %v2575 = vadd.f32 %v2021, %v2322
    %v2576 = vadd.f32 %v2022, %v2324
    %v2577 = vadd.f32 %v2023, %v2326
    %v2578 = vadd.f32 %v2024, %v2325
    %v2579 = vadd.f32 %v2025, %v2329
    %v2580 = vadd.f32 %v2026, %v2331
    %v2581 = vadd.f32 %v2027, %v2333
    %v2582 = vadd.f32 %v2028, %v2332
    %v2583 = vadd.f32 %v2029, %v2336
    %v2584 = vadd.f32 %v2030, %v2338
    %v2585 = vadd.f32 %v2031, %v2340
    %v2586 = vadd.f32 %v2032, %v2339
    %v2587 = vadd.f32 %v2033, %v2343
    %v2588 = vadd.f32 %v2034, %v2345
    %v2589 = vadd.f32 %v2035, %v2347
    %v2590 = vadd.f32 %v2036, %v2346
    %v2591 = vadd.f32 %v2037, %v2350
    %v2592 = vadd.f32 %v2038, %v2352
    %v2593 = vadd.f32 %v2039, %v2354
    %v2594 = vadd.f32 %v2040, %v2353
    %v2595 = vadd.f32 %v2041, %v2357
    %v2596 = vadd.f32 %v2042, %v2359
    %v2597 = vadd.f32 %v2043, %v2361
    %v2598 = vadd.f32 %v2044, %v2360
    %v2599 = vadd.f32 %v2045, %v2364
    %v2600 = vadd.f32 %v2046, %v2366
    %v2601 = vadd.f32 %v2047, %v2368
    %v2602 = vadd.f32 %v2048, %v2367
    %v2603 = vadd.f32 %v2049, %v2371
    %v2604 = vadd.f32 %v2050, %v2373
    %v2605 = vadd.f32 %v2051, %v2375
    %v2606 = vadd.f32 %v2052, %v2374
    %v2607 = vadd.f32 %v2053, %v2378
    %v2608 = vadd.f32 %v2054, %v2380
    %v2609 = vadd.f32 %v2055, %v2382
    %v2610 = vadd.f32 %v2056, %v2381
    %v2611 = vadd.f32 %v2057, %v2385
    %v2612 = vadd.f32 %v2058, %v2387
    %v2613 = vadd.f32 %v2059, %v2389
    %v2614 = vadd.f32 %v2060, %v2388
    %v2615 = vadd.f32 %v2061, %v2392
    %v2616 = vadd.f32 %v2062, %v2394
    %v2617 = vadd.f32 %v2063, %v2396
    %v2618 = vadd.f32 %v2064, %v2395
    %v2619 = vadd.f32 %v2065, %v2399
    %v2620 = vadd.f32 %v2066, %v2401
    %v2621 = vadd.f32 %v2067, %v2403
    %v2622 = vadd.f32 %v2068, %v2402
    %v2623 = vadd.f32 %v2069, %v2406
    %v2624 = vadd.f32 %v2070, %v2408
    %v2625 = vadd.f32 %v2071, %v2410
    %v2626 = vadd.f32 %v2072, %v2409
    %v2627 = vadd.f32 %v2073, %v2413
    %v2628 = vadd.f32 %v2074, %v2415
    %v2629 = vadd.f32 %v2075, %v2417
    %v2630 = vadd.f32 %v2076, %v2416
    %v2631 = vadd.f32 %v2077, %v2420
    %v2632 = vadd.f32 %v2078, %v2422
    %v2633 = vadd.f32 %v2079, %v2424
    %v2634 = vadd.f32 %v2080, %v2423
    %v2635 = vadd.f32 %v2081, %v2427
    %v2636 = vadd.f32 %v2082, %v2429
    %v2637 = vadd.f32 %v2083, %v2431
    %v2638 = vadd.f32 %v2084, %v2430
    %v2639 = vadd.f32 %v2085, %v2434
    %v2640 = vadd.f32 %v2086, %v2436
    %v2641 = vadd.f32 %v2087, %v2438
    %v2642 = vadd.f32 %v2088, %v2437
    %v2643 = vadd.f32 %v2089, %v2441
    %v2644 = vadd.f32 %v2090, %v2443
    %v2645 = vadd.f32 %v2091, %v2445
    %v2646 = vadd.f32 %v2092, %v2444
    %v2647 = vadd.f32 %v2093, %v2448
    %v2648 = vadd.f32 %v2094, %v2450
    %v2649 = vadd.f32 %v2095, %v2452
    %v2650 = vadd.f32 %v2096, %v2451
    %v2651 = vadd.f32 %v2097, %v2455
    %v2652 = vadd.f32 %v2098, %v2457
    %v2653 = vadd.f32 %v2099, %v2459
    %v2654 = vadd.f32 %v2100, %v2458
    %v2655 = vadd.f32 %v2101, %v2462
    %v2656 = vadd.f32 %v2102, %v2464
    %v2657 = vadd.f32 %v2103, %v2466
    %v2658 = vadd.f32 %v2104, %v2465
    %s2659 = sld [smem:[#allocation3 + $0x6]]
    %v2660 = vstv %s2659
    %v2661 = vmul.f32 %v53, %v2660
    %v2662 = vmul.f32 %v54, %v2660
    %v2663 = vmul.f32 %v55, %v2660
    %v2664 = vmul.f32 %v56, %v2660
    %v2665 = vmul.f32 %v57, %v2660
    %v2666 = vmul.f32 %v58, %v2660
    %v2667 = vmul.f32 %v59, %v2660
    %v2668 = vmul.f32 %v60, %v2660
    %v2669 = vmul.f32 %v61, %v2660
    %v2670 = vmul.f32 %v62, %v2660
    %v2671 = vmul.f32 %v63, %v2660
    %v2672 = vmul.f32 %v64, %v2660
    %v2673 = vmul.f32 %v65, %v2660
    %v2674 = vmul.f32 %v66, %v2660
    %v2675 = vmul.f32 %v67, %v2660
    %v2676 = vmul.f32 %v68, %v2660
    %v2677 = vmul.f32 %v69, %v2660
    %v2678 = vmul.f32 %v70, %v2660
    %v2679 = vmul.f32 %v71, %v2660
    %v2680 = vmul.f32 %v72, %v2660
    %v2681 = vmul.f32 %v73, %v2660
    %v2682 = vmul.f32 %v74, %v2660
    %v2683 = vmul.f32 %v75, %v2660
    %v2684 = vmul.f32 %v76, %v2660
    %v2685 = vmul.f32 %v77, %v2660
    %v2686 = vmul.f32 %v78, %v2660
    %v2687 = vmul.f32 %v79, %v2660
    %v2688 = vmul.f32 %v80, %v2660
    %v2689 = vmul.f32 %v81, %v2660
    %v2690 = vmul.f32 %v82, %v2660
    %v2691 = vmul.f32 %v83, %v2660
    %v2692 = vmul.f32 %v84, %v2660
    %v2693 = vmul.f32 %v85, %v2660
    %v2694 = vmul.f32 %v86, %v2660
    %v2695 = vmul.f32 %v87, %v2660
    %v2696 = vmul.f32 %v88, %v2660
    %v2697 = vmul.f32 %v89, %v2660
    %v2698 = vmul.f32 %v90, %v2660
    %v2699 = vmul.f32 %v91, %v2660
    %v2700 = vmul.f32 %v92, %v2660
    %v2701 = vmul.f32 %v93, %v2660
    %v2702 = vmul.f32 %v94, %v2660
    %v2703 = vmul.f32 %v95, %v2660
    %v2704 = vmul.f32 %v96, %v2660
    %v2705 = vmul.f32 %v97, %v2660
    %v2706 = vmul.f32 %v98, %v2660
    %v2707 = vmul.f32 %v99, %v2660
    %v2708 = vmul.f32 %v100, %v2660
    %v2709 = vmul.f32 %v101, %v2660
    %v2710 = vmul.f32 %v102, %v2660
    %v2711 = vmul.f32 %v103, %v2660
    %v2712 = vmul.f32 %v104, %v2660
    %v2713 = vmul.f32 %v105, %v2660
    %v2714 = vmul.f32 %v106, %v2660
    %v2715 = vmul.f32 %v107, %v2660
    %v2716 = vmul.f32 %v108, %v2660
    %v2717 = vmul.f32 %v109, %v2660
    %v2718 = vmul.f32 %v110, %v2660
    %v2719 = vmul.f32 %v111, %v2660
    %v2720 = vmul.f32 %v112, %v2660
    %v2721 = vmul.f32 %v113, %v2660
    %v2722 = vmul.f32 %v114, %v2660
    %v2723 = vmul.f32 %v115, %v2660
    %v2724 = vmul.f32 %v116, %v2660
    %v2725 = vmul.f32 %v117, %v2660
    %v2726 = vmul.f32 %v118, %v2660
    %v2727 = vmul.f32 %v119, %v2660
    %v2728 = vmul.f32 %v120, %v2660
    %v2729 = vmul.f32 %v121, %v2660
    %v2730 = vmul.f32 %v122, %v2660
    %v2731 = vmul.f32 %v123, %v2660
    %v2732 = vmul.f32 %v124, %v2660
    %v2733 = vmul.f32 %v125, %v2660
    %v2734 = vmul.f32 %v126, %v2660
    %v2735 = vmul.f32 %v127, %v2660
    %v2736 = vmul.f32 %v128, %v2660
    %v2737 = vmul.f32 %v129, %v2660
    %v2738 = vmul.f32 %v130, %v2660
    %v2739 = vmul.f32 %v131, %v2660
    %v2740 = vmul.f32 %v132, %v2660
    %v2741 = vmul.f32 %v133, %v2660
    %v2742 = vmul.f32 %v134, %v2660
    %v2743 = vmul.f32 %v135, %v2660
    %v2744 = vmul.f32 %v136, %v2660
    %v2745 = vmul.f32 %v137, %v2660
    %v2746 = vmul.f32 %v138, %v2660
    %v2747 = vmul.f32 %v139, %v2660
    %v2748 = vmul.f32 %v140, %v2660
    %v2749 = vmul.f32 %v141, %v2660
    %v2750 = vmul.f32 %v142, %v2660
    %v2751 = vmul.f32 %v143, %v2660
    %v2752 = vmul.f32 %v144, %v2660
    %v2753 = vmul.f32 %v145, %v2660
    %v2754 = vmul.f32 %v146, %v2660
    %v2755 = vmul.f32 %v147, %v2660
    %v2756 = vmul.f32 %v148, %v2660
    %v2757 = vadd.f32 %v2563, %v2661
    %v2758 = vadd.f32 %v2564, %v2662
    %v2759 = vadd.f32 %v2565, %v2663
    %v2760 = vadd.f32 %v2566, %v2664
    %v2761 = vadd.f32 %v2567, %v2665
    %v2762 = vadd.f32 %v2568, %v2666
    %v2763 = vadd.f32 %v2569, %v2667
    %v2764 = vadd.f32 %v2570, %v2668
    %v2765 = vadd.f32 %v2571, %v2669
    %v2766 = vadd.f32 %v2572, %v2670
    %v2767 = vadd.f32 %v2573, %v2671
    %v2768 = vadd.f32 %v2574, %v2672
    %v2769 = vadd.f32 %v2575, %v2673
    %v2770 = vadd.f32 %v2576, %v2674
    %v2771 = vadd.f32 %v2577, %v2675
    %v2772 = vadd.f32 %v2578, %v2676
    %v2773 = vadd.f32 %v2579, %v2677
    %v2774 = vadd.f32 %v2580, %v2678
    %v2775 = vadd.f32 %v2581, %v2679
    %v2776 = vadd.f32 %v2582, %v2680
    %v2777 = vadd.f32 %v2583, %v2681
    %v2778 = vadd.f32 %v2584, %v2682
    %v2779 = vadd.f32 %v2585, %v2683
    %v2780 = vadd.f32 %v2586, %v2684
    %v2781 = vadd.f32 %v2587, %v2685
    %v2782 = vadd.f32 %v2588, %v2686
    %v2783 = vadd.f32 %v2589, %v2687
    %v2784 = vadd.f32 %v2590, %v2688
    %v2785 = vadd.f32 %v2591, %v2689
    %v2786 = vadd.f32 %v2592, %v2690
    %v2787 = vadd.f32 %v2593, %v2691
    %v2788 = vadd.f32 %v2594, %v2692
    %v2789 = vadd.f32 %v2595, %v2693
    %v2790 = vadd.f32 %v2596, %v2694
    %v2791 = vadd.f32 %v2597, %v2695
    %v2792 = vadd.f32 %v2598, %v2696
    %v2793 = vadd.f32 %v2599, %v2697
    %v2794 = vadd.f32 %v2600, %v2698
    %v2795 = vadd.f32 %v2601, %v2699
    %v2796 = vadd.f32 %v2602, %v2700
    %v2797 = vadd.f32 %v2603, %v2701
    %v2798 = vadd.f32 %v2604, %v2702
    %v2799 = vadd.f32 %v2605, %v2703
    %v2800 = vadd.f32 %v2606, %v2704
    %v2801 = vadd.f32 %v2607, %v2705
    %v2802 = vadd.f32 %v2608, %v2706
    %v2803 = vadd.f32 %v2609, %v2707
    %v2804 = vadd.f32 %v2610, %v2708
    %v2805 = vadd.f32 %v2611, %v2709
    %v2806 = vadd.f32 %v2612, %v2710
    %v2807 = vadd.f32 %v2613, %v2711
    %v2808 = vadd.f32 %v2614, %v2712
    %v2809 = vadd.f32 %v2615, %v2713
    %v2810 = vadd.f32 %v2616, %v2714
    %v2811 = vadd.f32 %v2617, %v2715
    %v2812 = vadd.f32 %v2618, %v2716
    %v2813 = vadd.f32 %v2619, %v2717
    %v2814 = vadd.f32 %v2620, %v2718
    %v2815 = vadd.f32 %v2621, %v2719
    %v2816 = vadd.f32 %v2622, %v2720
    %v2817 = vadd.f32 %v2623, %v2721
    %v2818 = vadd.f32 %v2624, %v2722
    %v2819 = vadd.f32 %v2625, %v2723
    %v2820 = vadd.f32 %v2626, %v2724
    %v2821 = vadd.f32 %v2627, %v2725
    %v2822 = vadd.f32 %v2628, %v2726
    %v2823 = vadd.f32 %v2629, %v2727
    %v2824 = vadd.f32 %v2630, %v2728
    %v2825 = vadd.f32 %v2631, %v2729
    %v2826 = vadd.f32 %v2632, %v2730
    %v2827 = vadd.f32 %v2633, %v2731
    %v2828 = vadd.f32 %v2634, %v2732
    %v2829 = vadd.f32 %v2635, %v2733
    %v2830 = vadd.f32 %v2636, %v2734
    %v2831 = vadd.f32 %v2637, %v2735
    %v2832 = vadd.f32 %v2638, %v2736
    %v2833 = vadd.f32 %v2639, %v2737
    %v2834 = vadd.f32 %v2640, %v2738
    %v2835 = vadd.f32 %v2641, %v2739
    %v2836 = vadd.f32 %v2642, %v2740
    %v2837 = vadd.f32 %v2643, %v2741
    %v2838 = vadd.f32 %v2644, %v2742
    %v2839 = vadd.f32 %v2645, %v2743
    %v2840 = vadd.f32 %v2646, %v2744
    %v2841 = vadd.f32 %v2647, %v2745
    %v2842 = vadd.f32 %v2648, %v2746
    %v2843 = vadd.f32 %v2649, %v2747
    %v2844 = vadd.f32 %v2650, %v2748
    %v2845 = vadd.f32 %v2651, %v2749
    %v2846 = vadd.f32 %v2652, %v2750
    %v2847 = vadd.f32 %v2653, %v2751
    %v2848 = vadd.f32 %v2654, %v2752
    %v2849 = vadd.f32 %v2655, %v2753
    %v2850 = vadd.f32 %v2656, %v2754
    %v2851 = vadd.f32 %v2657, %v2755
    %v2852 = vadd.f32 %v2658, %v2756
    %s2853 = sld [smem:[#allocation3 + $0x7]]
    %v2854 = vstv %s2853
    %v2855 = vmul.f32 %v53, %v2854
    %v2856 = vmul.f32 %v54, %v2854
    %v2857 = vmul.f32 %v55, %v2854
    %v2858 = vmul.f32 %v56, %v2854
    %v2859 = vmul.f32 %v57, %v2854
    %v2860 = vmul.f32 %v58, %v2854
    %v2861 = vmul.f32 %v59, %v2854
    %v2862 = vmul.f32 %v60, %v2854
    %v2863 = vmul.f32 %v61, %v2854
    %v2864 = vmul.f32 %v62, %v2854
    %v2865 = vmul.f32 %v63, %v2854
    %v2866 = vmul.f32 %v64, %v2854
    %v2867 = vmul.f32 %v65, %v2854
    %v2868 = vmul.f32 %v66, %v2854
    %v2869 = vmul.f32 %v67, %v2854
    %v2870 = vmul.f32 %v68, %v2854
    %v2871 = vmul.f32 %v69, %v2854
    %v2872 = vmul.f32 %v70, %v2854
    %v2873 = vmul.f32 %v71, %v2854
    %v2874 = vmul.f32 %v72, %v2854
    %v2875 = vmul.f32 %v73, %v2854
    %v2876 = vmul.f32 %v74, %v2854
    %v2877 = vmul.f32 %v75, %v2854
    %v2878 = vmul.f32 %v76, %v2854
    %v2879 = vmul.f32 %v77, %v2854
    %v2880 = vmul.f32 %v78, %v2854
    %v2881 = vmul.f32 %v79, %v2854
    %v2882 = vmul.f32 %v80, %v2854
    %v2883 = vmul.f32 %v81, %v2854
    %v2884 = vmul.f32 %v82, %v2854
    %v2885 = vmul.f32 %v83, %v2854
    %v2886 = vmul.f32 %v84, %v2854
    %v2887 = vmul.f32 %v85, %v2854
    %v2888 = vmul.f32 %v86, %v2854
    %v2889 = vmul.f32 %v87, %v2854
    %v2890 = vmul.f32 %v88, %v2854
    %v2891 = vmul.f32 %v89, %v2854
    %v2892 = vmul.f32 %v90, %v2854
    %v2893 = vmul.f32 %v91, %v2854
    %v2894 = vmul.f32 %v92, %v2854
    %v2895 = vmul.f32 %v93, %v2854
    %v2896 = vmul.f32 %v94, %v2854
    %v2897 = vmul.f32 %v95, %v2854
    %v2898 = vmul.f32 %v96, %v2854
    %v2899 = vmul.f32 %v97, %v2854
    %v2900 = vmul.f32 %v98, %v2854
    %v2901 = vmul.f32 %v99, %v2854
    %v2902 = vmul.f32 %v100, %v2854
    %v2903 = vmul.f32 %v101, %v2854
    %v2904 = vmul.f32 %v102, %v2854
    %v2905 = vmul.f32 %v103, %v2854
    %v2906 = vmul.f32 %v104, %v2854
    %v2907 = vmul.f32 %v105, %v2854
    %v2908 = vmul.f32 %v106, %v2854
    %v2909 = vmul.f32 %v107, %v2854
    %v2910 = vmul.f32 %v108, %v2854
    %v2911 = vmul.f32 %v109, %v2854
    %v2912 = vmul.f32 %v110, %v2854
    %v2913 = vmul.f32 %v111, %v2854
    %v2914 = vmul.f32 %v112, %v2854
    %v2915 = vmul.f32 %v113, %v2854
    %v2916 = vmul.f32 %v114, %v2854
    %v2917 = vmul.f32 %v115, %v2854
    %v2918 = vmul.f32 %v116, %v2854
    %v2919 = vmul.f32 %v117, %v2854
    %v2920 = vmul.f32 %v118, %v2854
    %v2921 = vmul.f32 %v119, %v2854
    %v2922 = vmul.f32 %v120, %v2854
    %v2923 = vmul.f32 %v121, %v2854
    %v2924 = vmul.f32 %v122, %v2854
    %v2925 = vmul.f32 %v123, %v2854
    %v2926 = vmul.f32 %v124, %v2854
    %v2927 = vmul.f32 %v125, %v2854
    %v2928 = vmul.f32 %v126, %v2854
    %v2929 = vmul.f32 %v127, %v2854
    %v2930 = vmul.f32 %v128, %v2854
    %v2931 = vmul.f32 %v129, %v2854
    %v2932 = vmul.f32 %v130, %v2854
    %v2933 = vmul.f32 %v131, %v2854
    %v2934 = vmul.f32 %v132, %v2854
    %v2935 = vmul.f32 %v133, %v2854
    %v2936 = vmul.f32 %v134, %v2854
    %v2937 = vmul.f32 %v135, %v2854
    %v2938 = vmul.f32 %v136, %v2854
    %v2939 = vmul.f32 %v137, %v2854
    %v2940 = vmul.f32 %v138, %v2854
    %v2941 = vmul.f32 %v139, %v2854
    %v2942 = vmul.f32 %v140, %v2854
    %v2943 = vmul.f32 %v141, %v2854
    %v2944 = vmul.f32 %v142, %v2854
    %v2945 = vmul.f32 %v143, %v2854
    %v2946 = vmul.f32 %v144, %v2854
    %v2947 = vmul.f32 %v145, %v2854
    %v2948 = vmul.f32 %v146, %v2854
    %v2949 = vmul.f32 %v147, %v2854
    %v2950 = vmul.f32 %v148, %v2854
    %v3047 = vrot.slane %v2855, 1
    %v3048 = vrot.slane %v2856, 1
    %v3049 = vsel %vm441, %v3047, %v3048
    %v3050 = vrot.slane %v2857, 1
    %v3051 = vsel %vm441, %v3048, %v3050
    %v3052 = vrot.slane %v2858, 1
    %v3053 = vsel %vm441, %v3050, %v3052
    %v3054 = vrot.slane %v2859, 1
    %v3055 = vrot.slane %v2860, 1
    %v3056 = vsel %vm441, %v3054, %v3055
    %v3057 = vrot.slane %v2861, 1
    %v3058 = vsel %vm441, %v3055, %v3057
    %v3059 = vrot.slane %v2862, 1
    %v3060 = vsel %vm441, %v3057, %v3059
    %v3061 = vrot.slane %v2863, 1
    %v3062 = vrot.slane %v2864, 1
    %v3063 = vsel %vm441, %v3061, %v3062
    %v3064 = vrot.slane %v2865, 1
    %v3065 = vsel %vm441, %v3062, %v3064
    %v3066 = vrot.slane %v2866, 1
    %v3067 = vsel %vm441, %v3064, %v3066
    %v3068 = vrot.slane %v2867, 1
    %v3069 = vrot.slane %v2868, 1
    %v3070 = vsel %vm441, %v3068, %v3069
    %v3071 = vrot.slane %v2869, 1
    %v3072 = vsel %vm441, %v3069, %v3071
    %v3073 = vrot.slane %v2870, 1
    %v3074 = vsel %vm441, %v3071, %v3073
    %v3075 = vrot.slane %v2871, 1
    %v3076 = vrot.slane %v2872, 1
    %v3077 = vsel %vm441, %v3075, %v3076
    %v3078 = vrot.slane %v2873, 1
    %v3079 = vsel %vm441, %v3076, %v3078
    %v3080 = vrot.slane %v2874, 1
    %v3081 = vsel %vm441, %v3078, %v3080
    %v3082 = vrot.slane %v2875, 1
    %v3083 = vrot.slane %v2876, 1
    %v3084 = vsel %vm441, %v3082, %v3083
    %v3085 = vrot.slane %v2877, 1
    %v3086 = vsel %vm441, %v3083, %v3085
    %v3087 = vrot.slane %v2878, 1
    %v3088 = vsel %vm441, %v3085, %v3087
    %v3089 = vrot.slane %v2879, 1
    %v3090 = vrot.slane %v2880, 1
    %v3091 = vsel %vm441, %v3089, %v3090
    %v3092 = vrot.slane %v2881, 1
    %v3093 = vsel %vm441, %v3090, %v3092
    %v3094 = vrot.slane %v2882, 1
    %v3095 = vsel %vm441, %v3092, %v3094
    %v3096 = vrot.slane %v2883, 1
    %v3097 = vrot.slane %v2884, 1
    %v3098 = vsel %vm441, %v3096, %v3097
    %v3099 = vrot.slane %v2885, 1
    %v3100 = vsel %vm441, %v3097, %v3099
    %v3101 = vrot.slane %v2886, 1
    %v3102 = vsel %vm441, %v3099, %v3101
    %v3103 = vrot.slane %v2887, 1
    %v3104 = vrot.slane %v2888, 1
    %v3105 = vsel %vm441, %v3103, %v3104
    %v3106 = vrot.slane %v2889, 1
    %v3107 = vsel %vm441, %v3104, %v3106
    %v3108 = vrot.slane %v2890, 1
    %v3109 = vsel %vm441, %v3106, %v3108
    %v3110 = vrot.slane %v2891, 1
    %v3111 = vrot.slane %v2892, 1
    %v3112 = vsel %vm441, %v3110, %v3111
    %v3113 = vrot.slane %v2893, 1
    %v3114 = vsel %vm441, %v3111, %v3113
    %v3115 = vrot.slane %v2894, 1
    %v3116 = vsel %vm441, %v3113, %v3115
    %v3117 = vrot.slane %v2895, 1
    %v3118 = vrot.slane %v2896, 1
    %v3119 = vsel %vm441, %v3117, %v3118
    %v3120 = vrot.slane %v2897, 1
    %v3121 = vsel %vm441, %v3118, %v3120
    %v3122 = vrot.slane %v2898, 1
    %v3123 = vsel %vm441, %v3120, %v3122
    %v3124 = vrot.slane %v2899, 1
    %v3125 = vrot.slane %v2900, 1
    %v3126 = vsel %vm441, %v3124, %v3125
    %v3127 = vrot.slane %v2901, 1
    %v3128 = vsel %vm441, %v3125, %v3127
    %v3129 = vrot.slane %v2902, 1
    %v3130 = vsel %vm441, %v3127, %v3129
    %v3131 = vrot.slane %v2903, 1
    %v3132 = vrot.slane %v2904, 1
    %v3133 = vsel %vm441, %v3131, %v3132
    %v3134 = vrot.slane %v2905, 1
    %v3135 = vsel %vm441, %v3132, %v3134
    %v3136 = vrot.slane %v2906, 1
    %v3137 = vsel %vm441, %v3134, %v3136
    %v3138 = vrot.slane %v2907, 1
    %v3139 = vrot.slane %v2908, 1
    %v3140 = vsel %vm441, %v3138, %v3139
    %v3141 = vrot.slane %v2909, 1
    %v3142 = vsel %vm441, %v3139, %v3141
    %v3143 = vrot.slane %v2910, 1
    %v3144 = vsel %vm441, %v3141, %v3143
    %v3145 = vrot.slane %v2911, 1
    %v3146 = vrot.slane %v2912, 1
    %v3147 = vsel %vm441, %v3145, %v3146
    %v3148 = vrot.slane %v2913, 1
    %v3149 = vsel %vm441, %v3146, %v3148
    %v3150 = vrot.slane %v2914, 1
    %v3151 = vsel %vm441, %v3148, %v3150
    %v3152 = vrot.slane %v2915, 1
    %v3153 = vrot.slane %v2916, 1
    %v3154 = vsel %vm441, %v3152, %v3153
    %v3155 = vrot.slane %v2917, 1
    %v3156 = vsel %vm441, %v3153, %v3155
    %v3157 = vrot.slane %v2918, 1
    %v3158 = vsel %vm441, %v3155, %v3157
    %v3159 = vrot.slane %v2919, 1
    %v3160 = vrot.slane %v2920, 1
    %v3161 = vsel %vm441, %v3159, %v3160
    %v3162 = vrot.slane %v2921, 1
    %v3163 = vsel %vm441, %v3160, %v3162
    %v3164 = vrot.slane %v2922, 1
    %v3165 = vsel %vm441, %v3162, %v3164
    %v3166 = vrot.slane %v2923, 1
    %v3167 = vrot.slane %v2924, 1
    %v3168 = vsel %vm441, %v3166, %v3167
    %v3169 = vrot.slane %v2925, 1
    %v3170 = vsel %vm441, %v3167, %v3169
    %v3171 = vrot.slane %v2926, 1
    %v3172 = vsel %vm441, %v3169, %v3171
    %v3173 = vrot.slane %v2927, 1
    %v3174 = vrot.slane %v2928, 1
    %v3175 = vsel %vm441, %v3173, %v3174
    %v3176 = vrot.slane %v2929, 1
    %v3177 = vsel %vm441, %v3174, %v3176
    %v3178 = vrot.slane %v2930, 1
    %v3179 = vsel %vm441, %v3176, %v3178
    %v3180 = vrot.slane %v2931, 1
    %v3181 = vrot.slane %v2932, 1
    %v3182 = vsel %vm441, %v3180, %v3181
    %v3183 = vrot.slane %v2933, 1
    %v3184 = vsel %vm441, %v3181, %v3183
    %v3185 = vrot.slane %v2934, 1
    %v3186 = vsel %vm441, %v3183, %v3185
    %v3187 = vrot.slane %v2935, 1
    %v3188 = vrot.slane %v2936, 1
    %v3189 = vsel %vm441, %v3187, %v3188
    %v3190 = vrot.slane %v2937, 1
    %v3191 = vsel %vm441, %v3188, %v3190
    %v3192 = vrot.slane %v2938, 1
    %v3193 = vsel %vm441, %v3190, %v3192
    %v3194 = vrot.slane %v2939, 1
    %v3195 = vrot.slane %v2940, 1
    %v3196 = vsel %vm441, %v3194, %v3195
    %v3197 = vrot.slane %v2941, 1
    %v3198 = vsel %vm441, %v3195, %v3197
    %v3199 = vrot.slane %v2942, 1
    %v3200 = vsel %vm441, %v3197, %v3199
    %v3201 = vrot.slane %v2943, 1
    %v3202 = vrot.slane %v2944, 1
    %v3203 = vsel %vm441, %v3201, %v3202
    %v3204 = vrot.slane %v2945, 1
    %v3205 = vsel %vm441, %v3202, %v3204
    %v3206 = vrot.slane %v2946, 1
    %v3207 = vsel %vm441, %v3204, %v3206
    %v3208 = vrot.slane %v2947, 1
    %v3209 = vrot.slane %v2948, 1
    %v3210 = vsel %vm441, %v3208, %v3209
    %v3211 = vrot.slane %v2949, 1
    %v3212 = vsel %vm441, %v3209, %v3211
    %v3213 = vrot.slane %v2950, 1
    %v3214 = vsel %vm441, %v3211, %v3213
    %v3311 = vadd.f32 %v2757, %v3049
    %v3312 = vadd.f32 %v2758, %v3051
    %v3313 = vadd.f32 %v2759, %v3053
    %v3314 = vadd.f32 %v2760, %v3052
    %v3315 = vadd.f32 %v2761, %v3056
    %v3316 = vadd.f32 %v2762, %v3058
    %v3317 = vadd.f32 %v2763, %v3060
    %v3318 = vadd.f32 %v2764, %v3059
    %v3319 = vadd.f32 %v2765, %v3063
    %v3320 = vadd.f32 %v2766, %v3065
    %v3321 = vadd.f32 %v2767, %v3067
    %v3322 = vadd.f32 %v2768, %v3066
    %v3323 = vadd.f32 %v2769, %v3070
    %v3324 = vadd.f32 %v2770, %v3072
    %v3325 = vadd.f32 %v2771, %v3074
    %v3326 = vadd.f32 %v2772, %v3073
    %v3327 = vadd.f32 %v2773, %v3077
    %v3328 = vadd.f32 %v2774, %v3079
    %v3329 = vadd.f32 %v2775, %v3081
    %v3330 = vadd.f32 %v2776, %v3080
    %v3331 = vadd.f32 %v2777, %v3084
    %v3332 = vadd.f32 %v2778, %v3086
    %v3333 = vadd.f32 %v2779, %v3088
    %v3334 = vadd.f32 %v2780, %v3087
    %v3335 = vadd.f32 %v2781, %v3091
    %v3336 = vadd.f32 %v2782, %v3093
    %v3337 = vadd.f32 %v2783, %v3095
    %v3338 = vadd.f32 %v2784, %v3094
    %v3339 = vadd.f32 %v2785, %v3098
    %v3340 = vadd.f32 %v2786, %v3100
    %v3341 = vadd.f32 %v2787, %v3102
    %v3342 = vadd.f32 %v2788, %v3101
    %v3343 = vadd.f32 %v2789, %v3105
    %v3344 = vadd.f32 %v2790, %v3107
    %v3345 = vadd.f32 %v2791, %v3109
    %v3346 = vadd.f32 %v2792, %v3108
    %v3347 = vadd.f32 %v2793, %v3112
    %v3348 = vadd.f32 %v2794, %v3114
    %v3349 = vadd.f32 %v2795, %v3116
    %v3350 = vadd.f32 %v2796, %v3115
    %v3351 = vadd.f32 %v2797, %v3119
    %v3352 = vadd.f32 %v2798, %v3121
    %v3353 = vadd.f32 %v2799, %v3123
    %v3354 = vadd.f32 %v2800, %v3122
    %v3355 = vadd.f32 %v2801, %v3126
    %v3356 = vadd.f32 %v2802, %v3128
    %v3357 = vadd.f32 %v2803, %v3130
    %v3358 = vadd.f32 %v2804, %v3129
    %v3359 = vadd.f32 %v2805, %v3133
    %v3360 = vadd.f32 %v2806, %v3135
    %v3361 = vadd.f32 %v2807, %v3137
    %v3362 = vadd.f32 %v2808, %v3136
    %v3363 = vadd.f32 %v2809, %v3140
    %v3364 = vadd.f32 %v2810, %v3142
    %v3365 = vadd.f32 %v2811, %v3144
    %v3366 = vadd.f32 %v2812, %v3143
    %v3367 = vadd.f32 %v2813, %v3147
    %v3368 = vadd.f32 %v2814, %v3149
    %v3369 = vadd.f32 %v2815, %v3151
    %v3370 = vadd.f32 %v2816, %v3150
    %v3371 = vadd.f32 %v2817, %v3154
    %v3372 = vadd.f32 %v2818, %v3156
    %v3373 = vadd.f32 %v2819, %v3158
    %v3374 = vadd.f32 %v2820, %v3157
    %v3375 = vadd.f32 %v2821, %v3161
    %v3376 = vadd.f32 %v2822, %v3163
    %v3377 = vadd.f32 %v2823, %v3165
    %v3378 = vadd.f32 %v2824, %v3164
    %v3379 = vadd.f32 %v2825, %v3168
    %v3380 = vadd.f32 %v2826, %v3170
    %v3381 = vadd.f32 %v2827, %v3172
    %v3382 = vadd.f32 %v2828, %v3171
    %v3383 = vadd.f32 %v2829, %v3175
    %v3384 = vadd.f32 %v2830, %v3177
    %v3385 = vadd.f32 %v2831, %v3179
    %v3386 = vadd.f32 %v2832, %v3178
    %v3387 = vadd.f32 %v2833, %v3182
    %v3388 = vadd.f32 %v2834, %v3184
    %v3389 = vadd.f32 %v2835, %v3186
    %v3390 = vadd.f32 %v2836, %v3185
    %v3391 = vadd.f32 %v2837, %v3189
    %v3392 = vadd.f32 %v2838, %v3191
    %v3393 = vadd.f32 %v2839, %v3193
    %v3394 = vadd.f32 %v2840, %v3192
    %v3395 = vadd.f32 %v2841, %v3196
    %v3396 = vadd.f32 %v2842, %v3198
    %v3397 = vadd.f32 %v2843, %v3200
    %v3398 = vadd.f32 %v2844, %v3199
    %v3399 = vadd.f32 %v2845, %v3203
    %v3400 = vadd.f32 %v2846, %v3205
    %v3401 = vadd.f32 %v2847, %v3207
    %v3402 = vadd.f32 %v2848, %v3206
    %v3403 = vadd.f32 %v2849, %v3210
    %v3404 = vadd.f32 %v2850, %v3212
    %v3405 = vadd.f32 %v2851, %v3214
    %v3406 = vadd.f32 %v2852, %v3213
    %s3407 = sld [smem:[#allocation3 + $0x8]]
    %v3408 = vstv %s3407
    %v3409 = vmul.f32 %v53, %v3408
    %v3410 = vmul.f32 %v54, %v3408
    %v3411 = vmul.f32 %v55, %v3408
    %v3412 = vmul.f32 %v56, %v3408
    %v3413 = vmul.f32 %v57, %v3408
    %v3414 = vmul.f32 %v58, %v3408
    %v3415 = vmul.f32 %v59, %v3408
    %v3416 = vmul.f32 %v60, %v3408
    %v3417 = vmul.f32 %v61, %v3408
    %v3418 = vmul.f32 %v62, %v3408
    %v3419 = vmul.f32 %v63, %v3408
    %v3420 = vmul.f32 %v64, %v3408
    %v3421 = vmul.f32 %v65, %v3408
    %v3422 = vmul.f32 %v66, %v3408
    %v3423 = vmul.f32 %v67, %v3408
    %v3424 = vmul.f32 %v68, %v3408
    %v3425 = vmul.f32 %v69, %v3408
    %v3426 = vmul.f32 %v70, %v3408
    %v3427 = vmul.f32 %v71, %v3408
    %v3428 = vmul.f32 %v72, %v3408
    %v3429 = vmul.f32 %v73, %v3408
    %v3430 = vmul.f32 %v74, %v3408
    %v3431 = vmul.f32 %v75, %v3408
    %v3432 = vmul.f32 %v76, %v3408
    %v3433 = vmul.f32 %v77, %v3408
    %v3434 = vmul.f32 %v78, %v3408
    %v3435 = vmul.f32 %v79, %v3408
    %v3436 = vmul.f32 %v80, %v3408
    %v3437 = vmul.f32 %v81, %v3408
    %v3438 = vmul.f32 %v82, %v3408
    %v3439 = vmul.f32 %v83, %v3408
    %v3440 = vmul.f32 %v84, %v3408
    %v3441 = vmul.f32 %v85, %v3408
    %v3442 = vmul.f32 %v86, %v3408
    %v3443 = vmul.f32 %v87, %v3408
    %v3444 = vmul.f32 %v88, %v3408
    %v3445 = vmul.f32 %v89, %v3408
    %v3446 = vmul.f32 %v90, %v3408
    %v3447 = vmul.f32 %v91, %v3408
    %v3448 = vmul.f32 %v92, %v3408
    %v3449 = vmul.f32 %v93, %v3408
    %v3450 = vmul.f32 %v94, %v3408
    %v3451 = vmul.f32 %v95, %v3408
    %v3452 = vmul.f32 %v96, %v3408
    %v3453 = vmul.f32 %v97, %v3408
    %v3454 = vmul.f32 %v98, %v3408
    %v3455 = vmul.f32 %v99, %v3408
    %v3456 = vmul.f32 %v100, %v3408
    %v3457 = vmul.f32 %v101, %v3408
    %v3458 = vmul.f32 %v102, %v3408
    %v3459 = vmul.f32 %v103, %v3408
    %v3460 = vmul.f32 %v104, %v3408
    %v3461 = vmul.f32 %v105, %v3408
    %v3462 = vmul.f32 %v106, %v3408
    %v3463 = vmul.f32 %v107, %v3408
    %v3464 = vmul.f32 %v108, %v3408
    %v3465 = vmul.f32 %v109, %v3408
    %v3466 = vmul.f32 %v110, %v3408
    %v3467 = vmul.f32 %v111, %v3408
    %v3468 = vmul.f32 %v112, %v3408
    %v3469 = vmul.f32 %v113, %v3408
    %v3470 = vmul.f32 %v114, %v3408
    %v3471 = vmul.f32 %v115, %v3408
    %v3472 = vmul.f32 %v116, %v3408
    %v3473 = vmul.f32 %v117, %v3408
    %v3474 = vmul.f32 %v118, %v3408
    %v3475 = vmul.f32 %v119, %v3408
    %v3476 = vmul.f32 %v120, %v3408
    %v3477 = vmul.f32 %v121, %v3408
    %v3478 = vmul.f32 %v122, %v3408
    %v3479 = vmul.f32 %v123, %v3408
    %v3480 = vmul.f32 %v124, %v3408
    %v3481 = vmul.f32 %v125, %v3408
    %v3482 = vmul.f32 %v126, %v3408
    %v3483 = vmul.f32 %v127, %v3408
    %v3484 = vmul.f32 %v128, %v3408
    %v3485 = vmul.f32 %v129, %v3408
    %v3486 = vmul.f32 %v130, %v3408
    %v3487 = vmul.f32 %v131, %v3408
    %v3488 = vmul.f32 %v132, %v3408
    %v3489 = vmul.f32 %v133, %v3408
    %v3490 = vmul.f32 %v134, %v3408
    %v3491 = vmul.f32 %v135, %v3408
    %v3492 = vmul.f32 %v136, %v3408
    %v3493 = vmul.f32 %v137, %v3408
    %v3494 = vmul.f32 %v138, %v3408
    %v3495 = vmul.f32 %v139, %v3408
    %v3496 = vmul.f32 %v140, %v3408
    %v3497 = vmul.f32 %v141, %v3408
    %v3498 = vmul.f32 %v142, %v3408
    %v3499 = vmul.f32 %v143, %v3408
    %v3500 = vmul.f32 %v144, %v3408
    %v3501 = vmul.f32 %v145, %v3408
    %v3502 = vmul.f32 %v146, %v3408
    %v3503 = vmul.f32 %v147, %v3408
    %v3504 = vmul.f32 %v148, %v3408
    %v3601 = vrot.slane %v3409, 2
    %v3602 = vrot.slane %v3410, 2
    %v3603 = vsel %vm996, %v3601, %v3602
    %v3604 = vrot.slane %v3411, 2
    %v3605 = vsel %vm996, %v3602, %v3604
    %v3606 = vrot.slane %v3412, 2
    %v3607 = vsel %vm996, %v3604, %v3606
    %v3608 = vrot.slane %v3413, 2
    %v3609 = vrot.slane %v3414, 2
    %v3610 = vsel %vm996, %v3608, %v3609
    %v3611 = vrot.slane %v3415, 2
    %v3612 = vsel %vm996, %v3609, %v3611
    %v3613 = vrot.slane %v3416, 2
    %v3614 = vsel %vm996, %v3611, %v3613
    %v3615 = vrot.slane %v3417, 2
    %v3616 = vrot.slane %v3418, 2
    %v3617 = vsel %vm996, %v3615, %v3616
    %v3618 = vrot.slane %v3419, 2
    %v3619 = vsel %vm996, %v3616, %v3618
    %v3620 = vrot.slane %v3420, 2
    %v3621 = vsel %vm996, %v3618, %v3620
    %v3622 = vrot.slane %v3421, 2
    %v3623 = vrot.slane %v3422, 2
    %v3624 = vsel %vm996, %v3622, %v3623
    %v3625 = vrot.slane %v3423, 2
    %v3626 = vsel %vm996, %v3623, %v3625
    %v3627 = vrot.slane %v3424, 2
    %v3628 = vsel %vm996, %v3625, %v3627
    %v3629 = vrot.slane %v3425, 2
    %v3630 = vrot.slane %v3426, 2
    %v3631 = vsel %vm996, %v3629, %v3630
    %v3632 = vrot.slane %v3427, 2
    %v3633 = vsel %vm996, %v3630, %v3632
    %v3634 = vrot.slane %v3428, 2
    %v3635 = vsel %vm996, %v3632, %v3634
    %v3636 = vrot.slane %v3429, 2
    %v3637 = vrot.slane %v3430, 2
    %v3638 = vsel %vm996, %v3636, %v3637
    %v3639 = vrot.slane %v3431, 2
    %v3640 = vsel %vm996, %v3637, %v3639
    %v3641 = vrot.slane %v3432, 2
    %v3642 = vsel %vm996, %v3639, %v3641
    %v3643 = vrot.slane %v3433, 2
    %v3644 = vrot.slane %v3434, 2
    %v3645 = vsel %vm996, %v3643, %v3644
    %v3646 = vrot.slane %v3435, 2
    %v3647 = vsel %vm996, %v3644, %v3646
    %v3648 = vrot.slane %v3436, 2
    %v3649 = vsel %vm996, %v3646, %v3648
    %v3650 = vrot.slane %v3437, 2
    %v3651 = vrot.slane %v3438, 2
    %v3652 = vsel %vm996, %v3650, %v3651
    %v3653 = vrot.slane %v3439, 2
    %v3654 = vsel %vm996, %v3651, %v3653
    %v3655 = vrot.slane %v3440, 2
    %v3656 = vsel %vm996, %v3653, %v3655
    %v3657 = vrot.slane %v3441, 2
    %v3658 = vrot.slane %v3442, 2
    %v3659 = vsel %vm996, %v3657, %v3658
    %v3660 = vrot.slane %v3443, 2
    %v3661 = vsel %vm996, %v3658, %v3660
    %v3662 = vrot.slane %v3444, 2
    %v3663 = vsel %vm996, %v3660, %v3662
    %v3664 = vrot.slane %v3445, 2
    %v3665 = vrot.slane %v3446, 2
    %v3666 = vsel %vm996, %v3664, %v3665
    %v3667 = vrot.slane %v3447, 2
    %v3668 = vsel %vm996, %v3665, %v3667
    %v3669 = vrot.slane %v3448, 2
    %v3670 = vsel %vm996, %v3667, %v3669
    %v3671 = vrot.slane %v3449, 2
    %v3672 = vrot.slane %v3450, 2
    %v3673 = vsel %vm996, %v3671, %v3672
    %v3674 = vrot.slane %v3451, 2
    %v3675 = vsel %vm996, %v3672, %v3674
    %v3676 = vrot.slane %v3452, 2
    %v3677 = vsel %vm996, %v3674, %v3676
    %v3678 = vrot.slane %v3453, 2
    %v3679 = vrot.slane %v3454, 2
    %v3680 = vsel %vm996, %v3678, %v3679
    %v3681 = vrot.slane %v3455, 2
    %v3682 = vsel %vm996, %v3679, %v3681
    %v3683 = vrot.slane %v3456, 2
    %v3684 = vsel %vm996, %v3681, %v3683
    %v3685 = vrot.slane %v3457, 2
    %v3686 = vrot.slane %v3458, 2
    %v3687 = vsel %vm996, %v3685, %v3686
    %v3688 = vrot.slane %v3459, 2
    %v3689 = vsel %vm996, %v3686, %v3688
    %v3690 = vrot.slane %v3460, 2
    %v3691 = vsel %vm996, %v3688, %v3690
    %v3692 = vrot.slane %v3461, 2
    %v3693 = vrot.slane %v3462, 2
    %v3694 = vsel %vm996, %v3692, %v3693
    %v3695 = vrot.slane %v3463, 2
    %v3696 = vsel %vm996, %v3693, %v3695
    %v3697 = vrot.slane %v3464, 2
    %v3698 = vsel %vm996, %v3695, %v3697
    %v3699 = vrot.slane %v3465, 2
    %v3700 = vrot.slane %v3466, 2
    %v3701 = vsel %vm996, %v3699, %v3700
    %v3702 = vrot.slane %v3467, 2
    %v3703 = vsel %vm996, %v3700, %v3702
    %v3704 = vrot.slane %v3468, 2
    %v3705 = vsel %vm996, %v3702, %v3704
    %v3706 = vrot.slane %v3469, 2
    %v3707 = vrot.slane %v3470, 2
    %v3708 = vsel %vm996, %v3706, %v3707
    %v3709 = vrot.slane %v3471, 2
    %v3710 = vsel %vm996, %v3707, %v3709
    %v3711 = vrot.slane %v3472, 2
    %v3712 = vsel %vm996, %v3709, %v3711
    %v3713 = vrot.slane %v3473, 2
    %v3714 = vrot.slane %v3474, 2
    %v3715 = vsel %vm996, %v3713, %v3714
    %v3716 = vrot.slane %v3475, 2
    %v3717 = vsel %vm996, %v3714, %v3716
    %v3718 = vrot.slane %v3476, 2
    %v3719 = vsel %vm996, %v3716, %v3718
    %v3720 = vrot.slane %v3477, 2
    %v3721 = vrot.slane %v3478, 2
    %v3722 = vsel %vm996, %v3720, %v3721
    %v3723 = vrot.slane %v3479, 2
    %v3724 = vsel %vm996, %v3721, %v3723
    %v3725 = vrot.slane %v3480, 2
    %v3726 = vsel %vm996, %v3723, %v3725
    %v3727 = vrot.slane %v3481, 2
    %v3728 = vrot.slane %v3482, 2
    %v3729 = vsel %vm996, %v3727, %v3728
    %v3730 = vrot.slane %v3483, 2
    %v3731 = vsel %vm996, %v3728, %v3730
    %v3732 = vrot.slane %v3484, 2
    %v3733 = vsel %vm996, %v3730, %v3732
    %v3734 = vrot.slane %v3485, 2
    %v3735 = vrot.slane %v3486, 2
    %v3736 = vsel %vm996, %v3734, %v3735
    %v3737 = vrot.slane %v3487, 2
    %v3738 = vsel %vm996, %v3735, %v3737
    %v3739 = vrot.slane %v3488, 2
    %v3740 = vsel %vm996, %v3737, %v3739
    %v3741 = vrot.slane %v3489, 2
    %v3742 = vrot.slane %v3490, 2
    %v3743 = vsel %vm996, %v3741, %v3742
    %v3744 = vrot.slane %v3491, 2
    %v3745 = vsel %vm996, %v3742, %v3744
    %v3746 = vrot.slane %v3492, 2
    %v3747 = vsel %vm996, %v3744, %v3746
    %v3748 = vrot.slane %v3493, 2
    %v3749 = vrot.slane %v3494, 2
    %v3750 = vsel %vm996, %v3748, %v3749
    %v3751 = vrot.slane %v3495, 2
    %v3752 = vsel %vm996, %v3749, %v3751
    %v3753 = vrot.slane %v3496, 2
    %v3754 = vsel %vm996, %v3751, %v3753
    %v3755 = vrot.slane %v3497, 2
    %v3756 = vrot.slane %v3498, 2
    %v3757 = vsel %vm996, %v3755, %v3756
    %v3758 = vrot.slane %v3499, 2
    %v3759 = vsel %vm996, %v3756, %v3758
    %v3760 = vrot.slane %v3500, 2
    %v3761 = vsel %vm996, %v3758, %v3760
    %v3762 = vrot.slane %v3501, 2
    %v3763 = vrot.slane %v3502, 2
    %v3764 = vsel %vm996, %v3762, %v3763
    %v3765 = vrot.slane %v3503, 2
    %v3766 = vsel %vm996, %v3763, %v3765
    %v3767 = vrot.slane %v3504, 2
    %v3768 = vsel %vm996, %v3765, %v3767
    %v3865 = vadd.f32 %v3311, %v3603
    %v3866 = vadd.f32 %v3312, %v3605
    %v3867 = vadd.f32 %v3313, %v3607
    %v3868 = vadd.f32 %v3314, %v3606
    %v3869 = vadd.f32 %v3315, %v3610
    %v3870 = vadd.f32 %v3316, %v3612
    %v3871 = vadd.f32 %v3317, %v3614
    %v3872 = vadd.f32 %v3318, %v3613
    %v3873 = vadd.f32 %v3319, %v3617
    %v3874 = vadd.f32 %v3320, %v3619
    %v3875 = vadd.f32 %v3321, %v3621
    %v3876 = vadd.f32 %v3322, %v3620
    %v3877 = vadd.f32 %v3323, %v3624
    %v3878 = vadd.f32 %v3324, %v3626
    %v3879 = vadd.f32 %v3325, %v3628
    %v3880 = vadd.f32 %v3326, %v3627
    %v3881 = vadd.f32 %v3327, %v3631
    %v3882 = vadd.f32 %v3328, %v3633
    %v3883 = vadd.f32 %v3329, %v3635
    %v3884 = vadd.f32 %v3330, %v3634
    %v3885 = vadd.f32 %v3331, %v3638
    %v3886 = vadd.f32 %v3332, %v3640
    %v3887 = vadd.f32 %v3333, %v3642
    %v3888 = vadd.f32 %v3334, %v3641
    %v3889 = vadd.f32 %v3335, %v3645
    %v3890 = vadd.f32 %v3336, %v3647
    %v3891 = vadd.f32 %v3337, %v3649
    %v3892 = vadd.f32 %v3338, %v3648
    %v3893 = vadd.f32 %v3339, %v3652
    %v3894 = vadd.f32 %v3340, %v3654
    %v3895 = vadd.f32 %v3341, %v3656
    %v3896 = vadd.f32 %v3342, %v3655
    %v3897 = vadd.f32 %v3343, %v3659
    %v3898 = vadd.f32 %v3344, %v3661
    %v3899 = vadd.f32 %v3345, %v3663
    %v3900 = vadd.f32 %v3346, %v3662
    %v3901 = vadd.f32 %v3347, %v3666
    %v3902 = vadd.f32 %v3348, %v3668
    %v3903 = vadd.f32 %v3349, %v3670
    %v3904 = vadd.f32 %v3350, %v3669
    %v3905 = vadd.f32 %v3351, %v3673
    %v3906 = vadd.f32 %v3352, %v3675
    %v3907 = vadd.f32 %v3353, %v3677
    %v3908 = vadd.f32 %v3354, %v3676
    %v3909 = vadd.f32 %v3355, %v3680
    %v3910 = vadd.f32 %v3356, %v3682
    %v3911 = vadd.f32 %v3357, %v3684
    %v3912 = vadd.f32 %v3358, %v3683
    %v3913 = vadd.f32 %v3359, %v3687
    %v3914 = vadd.f32 %v3360, %v3689
    %v3915 = vadd.f32 %v3361, %v3691
    %v3916 = vadd.f32 %v3362, %v3690
    %v3917 = vadd.f32 %v3363, %v3694
    %v3918 = vadd.f32 %v3364, %v3696
    %v3919 = vadd.f32 %v3365, %v3698
    %v3920 = vadd.f32 %v3366, %v3697
    %v3921 = vadd.f32 %v3367, %v3701
    %v3922 = vadd.f32 %v3368, %v3703
    %v3923 = vadd.f32 %v3369, %v3705
    %v3924 = vadd.f32 %v3370, %v3704
    %v3925 = vadd.f32 %v3371, %v3708
    %v3926 = vadd.f32 %v3372, %v3710
    %v3927 = vadd.f32 %v3373, %v3712
    %v3928 = vadd.f32 %v3374, %v3711
    %v3929 = vadd.f32 %v3375, %v3715
    %v3930 = vadd.f32 %v3376, %v3717
    %v3931 = vadd.f32 %v3377, %v3719
    %v3932 = vadd.f32 %v3378, %v3718
    %v3933 = vadd.f32 %v3379, %v3722
    %v3934 = vadd.f32 %v3380, %v3724
    %v3935 = vadd.f32 %v3381, %v3726
    %v3936 = vadd.f32 %v3382, %v3725
    %v3937 = vadd.f32 %v3383, %v3729
    %v3938 = vadd.f32 %v3384, %v3731
    %v3939 = vadd.f32 %v3385, %v3733
    %v3940 = vadd.f32 %v3386, %v3732
    %v3941 = vadd.f32 %v3387, %v3736
    %v3942 = vadd.f32 %v3388, %v3738
    %v3943 = vadd.f32 %v3389, %v3740
    %v3944 = vadd.f32 %v3390, %v3739
    %v3945 = vadd.f32 %v3391, %v3743
    %v3946 = vadd.f32 %v3392, %v3745
    %v3947 = vadd.f32 %v3393, %v3747
    %v3948 = vadd.f32 %v3394, %v3746
    %v3949 = vadd.f32 %v3395, %v3750
    %v3950 = vadd.f32 %v3396, %v3752
    %v3951 = vadd.f32 %v3397, %v3754
    %v3952 = vadd.f32 %v3398, %v3753
    %v3953 = vadd.f32 %v3399, %v3757
    %v3954 = vadd.f32 %v3400, %v3759
    %v3955 = vadd.f32 %v3401, %v3761
    %v3956 = vadd.f32 %v3402, %v3760
    %v3957 = vadd.f32 %v3403, %v3764
    %v3958 = vadd.f32 %v3404, %v3766
    %v3959 = vadd.f32 %v3405, %v3768
    %v3960 = vadd.f32 %v3406, %v3767
    %s3961 = sld [smem:[#allocation5]]
    %v3962 = vstv %s3961
    %v3963 = vadd.f32 %v3865, %v3962
    %v3964 = vadd.f32 %v3866, %v3962
    %v3965 = vadd.f32 %v3867, %v3962
    %v3966 = vadd.f32 %v3868, %v3962
    %v3967 = vadd.f32 %v3869, %v3962
    %v3968 = vadd.f32 %v3870, %v3962
    %v3969 = vadd.f32 %v3871, %v3962
    %v3970 = vadd.f32 %v3872, %v3962
    %v3971 = vadd.f32 %v3873, %v3962
    %v3972 = vadd.f32 %v3874, %v3962
    %v3973 = vadd.f32 %v3875, %v3962
    %v3974 = vadd.f32 %v3876, %v3962
    %v3975 = vadd.f32 %v3877, %v3962
    %v3976 = vadd.f32 %v3878, %v3962
    %v3977 = vadd.f32 %v3879, %v3962
    %v3978 = vadd.f32 %v3880, %v3962
    %v3979 = vadd.f32 %v3881, %v3962
    %v3980 = vadd.f32 %v3882, %v3962
    %v3981 = vadd.f32 %v3883, %v3962
    %v3982 = vadd.f32 %v3884, %v3962
    %v3983 = vadd.f32 %v3885, %v3962
    %v3984 = vadd.f32 %v3886, %v3962
    %v3985 = vadd.f32 %v3887, %v3962
    %v3986 = vadd.f32 %v3888, %v3962
    %v3987 = vadd.f32 %v3889, %v3962
    %v3988 = vadd.f32 %v3890, %v3962
    %v3989 = vadd.f32 %v3891, %v3962
    %v3990 = vadd.f32 %v3892, %v3962
    %v3991 = vadd.f32 %v3893, %v3962
    %v3992 = vadd.f32 %v3894, %v3962
    %v3993 = vadd.f32 %v3895, %v3962
    %v3994 = vadd.f32 %v3896, %v3962
    %v3995 = vadd.f32 %v3897, %v3962
    %v3996 = vadd.f32 %v3898, %v3962
    %v3997 = vadd.f32 %v3899, %v3962
    %v3998 = vadd.f32 %v3900, %v3962
    %v3999 = vadd.f32 %v3901, %v3962
    %v4000 = vadd.f32 %v3902, %v3962
    %v4001 = vadd.f32 %v3903, %v3962
    %v4002 = vadd.f32 %v3904, %v3962
    %v4003 = vadd.f32 %v3905, %v3962
    %v4004 = vadd.f32 %v3906, %v3962
    %v4005 = vadd.f32 %v3907, %v3962
    %v4006 = vadd.f32 %v3908, %v3962
    %v4007 = vadd.f32 %v3909, %v3962
    %v4008 = vadd.f32 %v3910, %v3962
    %v4009 = vadd.f32 %v3911, %v3962
    %v4010 = vadd.f32 %v3912, %v3962
    %v4011 = vadd.f32 %v3913, %v3962
    %v4012 = vadd.f32 %v3914, %v3962
    %v4013 = vadd.f32 %v3915, %v3962
    %v4014 = vadd.f32 %v3916, %v3962
    %v4015 = vadd.f32 %v3917, %v3962
    %v4016 = vadd.f32 %v3918, %v3962
    %v4017 = vadd.f32 %v3919, %v3962
    %v4018 = vadd.f32 %v3920, %v3962
    %v4019 = vadd.f32 %v3921, %v3962
    %v4020 = vadd.f32 %v3922, %v3962
    %v4021 = vadd.f32 %v3923, %v3962
    %v4022 = vadd.f32 %v3924, %v3962
    %v4023 = vadd.f32 %v3925, %v3962
    %v4024 = vadd.f32 %v3926, %v3962
    %v4025 = vadd.f32 %v3927, %v3962
    %v4026 = vadd.f32 %v3928, %v3962
    %v4027 = vadd.f32 %v3929, %v3962
    %v4028 = vadd.f32 %v3930, %v3962
    %v4029 = vadd.f32 %v3931, %v3962
    %v4030 = vadd.f32 %v3932, %v3962
    %v4031 = vadd.f32 %v3933, %v3962
    %v4032 = vadd.f32 %v3934, %v3962
    %v4033 = vadd.f32 %v3935, %v3962
    %v4034 = vadd.f32 %v3936, %v3962
    %v4035 = vadd.f32 %v3937, %v3962
    %v4036 = vadd.f32 %v3938, %v3962
    %v4037 = vadd.f32 %v3939, %v3962
    %v4038 = vadd.f32 %v3940, %v3962
    %v4039 = vadd.f32 %v3941, %v3962
    %v4040 = vadd.f32 %v3942, %v3962
    %v4041 = vadd.f32 %v3943, %v3962
    %v4042 = vadd.f32 %v3944, %v3962
    %v4043 = vadd.f32 %v3945, %v3962
    %v4044 = vadd.f32 %v3946, %v3962
    %v4045 = vadd.f32 %v3947, %v3962
    %v4046 = vadd.f32 %v3948, %v3962
    %v4047 = vadd.f32 %v3949, %v3962
    %v4048 = vadd.f32 %v3950, %v3962
    %v4049 = vadd.f32 %v3951, %v3962
    %v4050 = vadd.f32 %v3952, %v3962
    %v4051 = vadd.f32 %v3953, %v3962
    %v4052 = vadd.f32 %v3954, %v3962
    %v4053 = vadd.f32 %v3955, %v3962
    %v4054 = vadd.f32 %v3956, %v3962
    %v4055 = vadd.f32 %v3957, %v3962
    %v4056 = vadd.f32 %v3958, %v3962
    %v4057 = vadd.f32 %v3959, %v3962
    %v4058 = vadd.f32 %v3960, %v3962
    %v4059 = vmax.f32 %v3963, %v3967
    %v4060 = vmax.f32 %v3964, %v3968
    %v4061 = vmax.f32 %v3965, %v3969
    %v4062 = vmax.f32 %v3966, %v3970
    %v4063 = vmax.f32 %v4059, %v3971
    %v4064 = vmax.f32 %v4060, %v3972
    %v4065 = vmax.f32 %v4061, %v3973
    %v4066 = vmax.f32 %v4062, %v3974
    %v4071 = vrot.slane %v4063, 1
    %v4072 = vrot.slane %v4064, 1
    %v4073 = vsel %vm441, %v4071, %v4072
    %v4074 = vrot.slane %v4065, 1
    %v4075 = vsel %vm441, %v4072, %v4074
    %v4076 = vrot.slane %v4066, 1
    %v4077 = vsel %vm441, %v4074, %v4076
    %v4081 = vmax.f32 %v4063, %v4073
    %v4082 = vmax.f32 %v4064, %v4075
    %v4083 = vmax.f32 %v4065, %v4077
    %v4084 = vrot.slane %v4063, 2
    %v4085 = vrot.slane %v4064, 2
    %v4086 = vsel %vm996, %v4084, %v4085
    %v4087 = vrot.slane %v4065, 2
    %v4088 = vsel %vm996, %v4085, %v4087
    %v4089 = vrot.slane %v4066, 2
    %v4090 = vsel %vm996, %v4087, %v4089
    %v4094 = vmax.f32 %v4081, %v4086
    %v4095 = vmax.f32 %v4082, %v4088
    %v4096 = vmax.f32 %v4083, %v4090
    %v4097 = vmax.f32 %v4094, 0.0
    %v4098 = vmax.f32 %v4095, 0.0
    %v4099 = vmax.f32 %v4096, 0.0
    %4100 = vst [vmem:[#allocation2] sm:$0xff] %v4097
    %4101 = vst [vmem:[#allocation2 + $0x8] sm:$0xff] %v4098
    %4102 = vst [vmem:[#allocation2 + $0x10] sm:$0xff] %v4099
    %v4103 = vmax.f32 %v3975, %v3979
    %v4104 = vmax.f32 %v3976, %v3980
    %v4105 = vmax.f32 %v3977, %v3981
    %v4106 = vmax.f32 %v3978, %v3982
    %v4107 = vmax.f32 %v4103, %v3983
    %v4108 = vmax.f32 %v4104, %v3984
    %v4109 = vmax.f32 %v4105, %v3985
    %v4110 = vmax.f32 %v4106, %v3986
    %v4115 = vrot.slane %v4107, 1
    %v4116 = vrot.slane %v4108, 1
    %v4117 = vsel %vm441, %v4115, %v4116
    %v4118 = vrot.slane %v4109, 1
    %v4119 = vsel %vm441, %v4116, %v4118
    %v4120 = vrot.slane %v4110, 1
    %v4121 = vsel %vm441, %v4118, %v4120
    %v4125 = vmax.f32 %v4107, %v4117
    %v4126 = vmax.f32 %v4108, %v4119
    %v4127 = vmax.f32 %v4109, %v4121
    %v4128 = vrot.slane %v4107, 2
    %v4129 = vrot.slane %v4108, 2
    %v4130 = vsel %vm996, %v4128, %v4129
    %v4131 = vrot.slane %v4109, 2
    %v4132 = vsel %vm996, %v4129, %v4131
    %v4133 = vrot.slane %v4110, 2
    %v4134 = vsel %vm996, %v4131, %v4133
    %v4138 = vmax.f32 %v4125, %v4130
    %v4139 = vmax.f32 %v4126, %v4132
    %v4140 = vmax.f32 %v4127, %v4134
    %v4141 = vmax.f32 %v4138, 0.0
    %v4142 = vmax.f32 %v4139, 0.0
    %v4143 = vmax.f32 %v4140, 0.0
    %4144 = vst [vmem:[#allocation2 + $0x18] sm:$0xff] %v4141
    %4145 = vst [vmem:[#allocation2 + $0x20] sm:$0xff] %v4142
    %4146 = vst [vmem:[#allocation2 + $0x28] sm:$0xff] %v4143
    %v4147 = vmax.f32 %v3987, %v3991
    %v4148 = vmax.f32 %v3988, %v3992
    %v4149 = vmax.f32 %v3989, %v3993
    %v4150 = vmax.f32 %v3990, %v3994
    %v4151 = vmax.f32 %v4147, %v3995
    %v4152 = vmax.f32 %v4148, %v3996
    %v4153 = vmax.f32 %v4149, %v3997
    %v4154 = vmax.f32 %v4150, %v3998
    %v4159 = vrot.slane %v4151, 1
    %v4160 = vrot.slane %v4152, 1
    %v4161 = vsel %vm441, %v4159, %v4160
    %v4162 = vrot.slane %v4153, 1
    %v4163 = vsel %vm441, %v4160, %v4162
    %v4164 = vrot.slane %v4154, 1
    %v4165 = vsel %vm441, %v4162, %v4164
    %v4169 = vmax.f32 %v4151, %v4161
    %v4170 = vmax.f32 %v4152, %v4163
    %v4171 = vmax.f32 %v4153, %v4165
    %v4172 = vrot.slane %v4151, 2
    %v4173 = vrot.slane %v4152, 2
    %v4174 = vsel %vm996, %v4172, %v4173
    %v4175 = vrot.slane %v4153, 2
    %v4176 = vsel %vm996, %v4173, %v4175
    %v4177 = vrot.slane %v4154, 2
    %v4178 = vsel %vm996, %v4175, %v4177
    %v4182 = vmax.f32 %v4169, %v4174
    %v4183 = vmax.f32 %v4170, %v4176
    %v4184 = vmax.f32 %v4171, %v4178
    %v4185 = vmax.f32 %v4182, 0.0
    %v4186 = vmax.f32 %v4183, 0.0
    %v4187 = vmax.f32 %v4184, 0.0
    %4188 = vst [vmem:[#allocation2 + $0x30] sm:$0xff] %v4185
    %4189 = vst [vmem:[#allocation2 + $0x38] sm:$0xff] %v4186
    %4190 = vst [vmem:[#allocation2 + $0x40] sm:$0xff] %v4187
    %v4191 = vmax.f32 %v3999, %v4003
    %v4192 = vmax.f32 %v4000, %v4004
    %v4193 = vmax.f32 %v4001, %v4005
    %v4194 = vmax.f32 %v4002, %v4006
    %v4195 = vmax.f32 %v4191, %v4007
    %v4196 = vmax.f32 %v4192, %v4008
    %v4197 = vmax.f32 %v4193, %v4009
    %v4198 = vmax.f32 %v4194, %v4010
    %v4203 = vrot.slane %v4195, 1
    %v4204 = vrot.slane %v4196, 1
    %v4205 = vsel %vm441, %v4203, %v4204
    %v4206 = vrot.slane %v4197, 1
    %v4207 = vsel %vm441, %v4204, %v4206
    %v4208 = vrot.slane %v4198, 1
    %v4209 = vsel %vm441, %v4206, %v4208
    %v4213 = vmax.f32 %v4195, %v4205
    %v4214 = vmax.f32 %v4196, %v4207
    %v4215 = vmax.f32 %v4197, %v4209
    %v4216 = vrot.slane %v4195, 2
    %v4217 = vrot.slane %v4196, 2
    %v4218 = vsel %vm996, %v4216, %v4217
    %v4219 = vrot.slane %v4197, 2
    %v4220 = vsel %vm996, %v4217, %v4219
    %v4221 = vrot.slane %v4198, 2
    %v4222 = vsel %vm996, %v4219, %v4221
    %v4226 = vmax.f32 %v4213, %v4218
    %v4227 = vmax.f32 %v4214, %v4220
    %v4228 = vmax.f32 %v4215, %v4222
    %v4229 = vmax.f32 %v4226, 0.0
    %v4230 = vmax.f32 %v4227, 0.0
    %v4231 = vmax.f32 %v4228, 0.0
    %4232 = vst [vmem:[#allocation2 + $0x48] sm:$0xff] %v4229
    %4233 = vst [vmem:[#allocation2 + $0x50] sm:$0xff] %v4230
    %4234 = vst [vmem:[#allocation2 + $0x58] sm:$0xff] %v4231
    %v4235 = vmax.f32 %v4011, %v4015
    %v4236 = vmax.f32 %v4012, %v4016
    %v4237 = vmax.f32 %v4013, %v4017
    %v4238 = vmax.f32 %v4014, %v4018
    %v4239 = vmax.f32 %v4235, %v4019
    %v4240 = vmax.f32 %v4236, %v4020
    %v4241 = vmax.f32 %v4237, %v4021
    %v4242 = vmax.f32 %v4238, %v4022
    %v4247 = vrot.slane %v4239, 1
    %v4248 = vrot.slane %v4240, 1
    %v4249 = vsel %vm441, %v4247, %v4248
    %v4250 = vrot.slane %v4241, 1
    %v4251 = vsel %vm441, %v4248, %v4250
    %v4252 = vrot.slane %v4242, 1
    %v4253 = vsel %vm441, %v4250, %v4252
    %v4257 = vmax.f32 %v4239, %v4249
    %v4258 = vmax.f32 %v4240, %v4251
    %v4259 = vmax.f32 %v4241, %v4253
    %v4260 = vrot.slane %v4239, 2
    %v4261 = vrot.slane %v4240, 2
    %v4262 = vsel %vm996, %v4260, %v4261
    %v4263 = vrot.slane %v4241, 2
    %v4264 = vsel %vm996, %v4261, %v4263
    %v4265 = vrot.slane %v4242, 2
    %v4266 = vsel %vm996, %v4263, %v4265
    %v4270 = vmax.f32 %v4257, %v4262
    %v4271 = vmax.f32 %v4258, %v4264
    %v4272 = vmax.f32 %v4259, %v4266
    %v4273 = vmax.f32 %v4270, 0.0
    %v4274 = vmax.f32 %v4271, 0.0
    %v4275 = vmax.f32 %v4272, 0.0
    %4276 = vst [vmem:[#allocation2 + $0x60] sm:$0xff] %v4273
    %4277 = vst [vmem:[#allocation2 + $0x68] sm:$0xff] %v4274
    %4278 = vst [vmem:[#allocation2 + $0x70] sm:$0xff] %v4275
    %v4279 = vmax.f32 %v4023, %v4027
    %v4280 = vmax.f32 %v4024, %v4028
    %v4281 = vmax.f32 %v4025, %v4029
    %v4282 = vmax.f32 %v4026, %v4030
    %v4283 = vmax.f32 %v4279, %v4031
    %v4284 = vmax.f32 %v4280, %v4032
    %v4285 = vmax.f32 %v4281, %v4033
    %v4286 = vmax.f32 %v4282, %v4034
    %v4291 = vrot.slane %v4283, 1
    %v4292 = vrot.slane %v4284, 1
    %v4293 = vsel %vm441, %v4291, %v4292
    %v4294 = vrot.slane %v4285, 1
    %v4295 = vsel %vm441, %v4292, %v4294
    %v4296 = vrot.slane %v4286, 1
    %v4297 = vsel %vm441, %v4294, %v4296
    %v4301 = vmax.f32 %v4283, %v4293
    %v4302 = vmax.f32 %v4284, %v4295
    %v4303 = vmax.f32 %v4285, %v4297
    %v4304 = vrot.slane %v4283, 2
    %v4305 = vrot.slane %v4284, 2
    %v4306 = vsel %vm996, %v4304, %v4305
    %v4307 = vrot.slane %v4285, 2
    %v4308 = vsel %vm996, %v4305, %v4307
    %v4309 = vrot.slane %v4286, 2
    %v4310 = vsel %vm996, %v4307, %v4309
    %v4314 = vmax.f32 %v4301, %v4306
    %v4315 = vmax.f32 %v4302, %v4308
    %v4316 = vmax.f32 %v4303, %v4310
    %v4317 = vmax.f32 %v4314, 0.0
    %v4318 = vmax.f32 %v4315, 0.0
    %v4319 = vmax.f32 %v4316, 0.0
    %4320 = vst [vmem:[#allocation2 + $0x78] sm:$0xff] %v4317
    %4321 = vst [vmem:[#allocation2 + $0x80] sm:$0xff] %v4318
    %4322 = vst [vmem:[#allocation2 + $0x88] sm:$0xff] %v4319
    %v4323 = vmax.f32 %v4035, %v4039
    %v4324 = vmax.f32 %v4036, %v4040
    %v4325 = vmax.f32 %v4037, %v4041
    %v4326 = vmax.f32 %v4038, %v4042
    %v4327 = vmax.f32 %v4323, %v4043
    %v4328 = vmax.f32 %v4324, %v4044
    %v4329 = vmax.f32 %v4325, %v4045
    %v4330 = vmax.f32 %v4326, %v4046
    %v4335 = vrot.slane %v4327, 1
    %v4336 = vrot.slane %v4328, 1
    %v4337 = vsel %vm441, %v4335, %v4336
    %v4338 = vrot.slane %v4329, 1
    %v4339 = vsel %vm441, %v4336, %v4338
    %v4340 = vrot.slane %v4330, 1
    %v4341 = vsel %vm441, %v4338, %v4340
    %v4345 = vmax.f32 %v4327, %v4337
    %v4346 = vmax.f32 %v4328, %v4339
    %v4347 = vmax.f32 %v4329, %v4341
    %v4348 = vrot.slane %v4327, 2
    %v4349 = vrot.slane %v4328, 2
    %v4350 = vsel %vm996, %v4348, %v4349
    %v4351 = vrot.slane %v4329, 2
    %v4352 = vsel %vm996, %v4349, %v4351
    %v4353 = vrot.slane %v4330, 2
    %v4354 = vsel %vm996, %v4351, %v4353
    %v4358 = vmax.f32 %v4345, %v4350
    %v4359 = vmax.f32 %v4346, %v4352
    %v4360 = vmax.f32 %v4347, %v4354
    %v4361 = vmax.f32 %v4358, 0.0
    %v4362 = vmax.f32 %v4359, 0.0
    %v4363 = vmax.f32 %v4360, 0.0
    %4364 = vst [vmem:[#allocation2 + $0x90] sm:$0xff] %v4361
    %4365 = vst [vmem:[#allocation2 + $0x98] sm:$0xff] %v4362
    %4366 = vst [vmem:[#allocation2 + $0xa0] sm:$0xff] %v4363
    %v4367 = vmax.f32 %v4047, %v4051
    %v4368 = vmax.f32 %v4048, %v4052
    %v4369 = vmax.f32 %v4049, %v4053
    %v4370 = vmax.f32 %v4050, %v4054
    %v4371 = vmax.f32 %v4367, %v4055
    %v4372 = vmax.f32 %v4368, %v4056
    %v4373 = vmax.f32 %v4369, %v4057
    %v4374 = vmax.f32 %v4370, %v4058
    %v4379 = vrot.slane %v4371, 1
    %v4380 = vrot.slane %v4372, 1
    %v4381 = vsel %vm441, %v4379, %v4380
    %v4382 = vrot.slane %v4373, 1
    %v4383 = vsel %vm441, %v4380, %v4382
    %v4384 = vrot.slane %v4374, 1
    %v4385 = vsel %vm441, %v4382, %v4384
    %v4389 = vmax.f32 %v4371, %v4381
    %v4390 = vmax.f32 %v4372, %v4383
    %v4391 = vmax.f32 %v4373, %v4385
    %v4392 = vrot.slane %v4371, 2
    %v4393 = vrot.slane %v4372, 2
    %v4394 = vsel %vm996, %v4392, %v4393
    %v4395 = vrot.slane %v4373, 2
    %v4396 = vsel %vm996, %v4393, %v4395
    %v4397 = vrot.slane %v4374, 2
    %v4398 = vsel %vm996, %v4395, %v4397
    %v4402 = vmax.f32 %v4389, %v4394
    %v4403 = vmax.f32 %v4390, %v4396
    %v4404 = vmax.f32 %v4391, %v4398
    %v4405 = vmax.f32 %v4402, 0.0
    %v4406 = vmax.f32 %v4403, 0.0
    %v4407 = vmax.f32 %v4404, 0.0
    %4408 = vst [vmem:[#allocation2 + $0xa8] sm:$0xff] %v4405
    %4409 = vst [vmem:[#allocation2 + $0xb0] sm:$0xff] %v4406
    %4410 = vst [vmem:[#allocation2 + $0xb8] sm:$0xff] %v4407
    %s4411 = sld [smem:[#allocation3 + $0x9]]
    %v4412 = vstv %s4411
    %v4413 = vmul.f32 %v45, %v4412
    %v4414 = vmul.f32 %v46, %v4412
    %v4415 = vmul.f32 %v47, %v4412
    %v4416 = vmul.f32 %v48, %v4412
    %v4417 = vmul.f32 %v49, %v4412
    %v4418 = vmul.f32 %v50, %v4412
    %v4419 = vmul.f32 %v51, %v4412
    %v4420 = vmul.f32 %v52, %v4412
    %v4421 = vmul.f32 %v53, %v4412
    %v4422 = vmul.f32 %v54, %v4412
    %v4423 = vmul.f32 %v55, %v4412
    %v4424 = vmul.f32 %v56, %v4412
    %v4425 = vmul.f32 %v57, %v4412
    %v4426 = vmul.f32 %v58, %v4412
    %v4427 = vmul.f32 %v59, %v4412
    %v4428 = vmul.f32 %v60, %v4412
    %v4429 = vmul.f32 %v61, %v4412
    %v4430 = vmul.f32 %v62, %v4412
    %v4431 = vmul.f32 %v63, %v4412
    %v4432 = vmul.f32 %v64, %v4412
    %v4433 = vmul.f32 %v65, %v4412
    %v4434 = vmul.f32 %v66, %v4412
    %v4435 = vmul.f32 %v67, %v4412
    %v4436 = vmul.f32 %v68, %v4412
    %v4437 = vmul.f32 %v69, %v4412
    %v4438 = vmul.f32 %v70, %v4412
    %v4439 = vmul.f32 %v71, %v4412
    %v4440 = vmul.f32 %v72, %v4412
    %v4441 = vmul.f32 %v73, %v4412
    %v4442 = vmul.f32 %v74, %v4412
    %v4443 = vmul.f32 %v75, %v4412
    %v4444 = vmul.f32 %v76, %v4412
    %v4445 = vmul.f32 %v77, %v4412
    %v4446 = vmul.f32 %v78, %v4412
    %v4447 = vmul.f32 %v79, %v4412
    %v4448 = vmul.f32 %v80, %v4412
    %v4449 = vmul.f32 %v81, %v4412
    %v4450 = vmul.f32 %v82, %v4412
    %v4451 = vmul.f32 %v83, %v4412
    %v4452 = vmul.f32 %v84, %v4412
    %v4453 = vmul.f32 %v85, %v4412
    %v4454 = vmul.f32 %v86, %v4412
    %v4455 = vmul.f32 %v87, %v4412
    %v4456 = vmul.f32 %v88, %v4412
    %v4457 = vmul.f32 %v89, %v4412
    %v4458 = vmul.f32 %v90, %v4412
    %v4459 = vmul.f32 %v91, %v4412
    %v4460 = vmul.f32 %v92, %v4412
    %v4461 = vmul.f32 %v93, %v4412
    %v4462 = vmul.f32 %v94, %v4412
    %v4463 = vmul.f32 %v95, %v4412
    %v4464 = vmul.f32 %v96, %v4412
    %v4465 = vmul.f32 %v97, %v4412
    %v4466 = vmul.f32 %v98, %v4412
    %v4467 = vmul.f32 %v99, %v4412
    %v4468 = vmul.f32 %v100, %v4412
    %v4469 = vmul.f32 %v101, %v4412
    %v4470 = vmul.f32 %v102, %v4412
    %v4471 = vmul.f32 %v103, %v4412
    %v4472 = vmul.f32 %v104, %v4412
    %v4473 = vmul.f32 %v105, %v4412
    %v4474 = vmul.f32 %v106, %v4412
    %v4475 = vmul.f32 %v107, %v4412
    %v4476 = vmul.f32 %v108, %v4412
    %v4477 = vmul.f32 %v109, %v4412
    %v4478 = vmul.f32 %v110, %v4412
    %v4479 = vmul.f32 %v111, %v4412
    %v4480 = vmul.f32 %v112, %v4412
    %v4481 = vmul.f32 %v113, %v4412
    %v4482 = vmul.f32 %v114, %v4412
    %v4483 = vmul.f32 %v115, %v4412
    %v4484 = vmul.f32 %v116, %v4412
    %v4485 = vmul.f32 %v117, %v4412
    %v4486 = vmul.f32 %v118, %v4412
    %v4487 = vmul.f32 %v119, %v4412
    %v4488 = vmul.f32 %v120, %v4412
    %v4489 = vmul.f32 %v121, %v4412
    %v4490 = vmul.f32 %v122, %v4412
    %v4491 = vmul.f32 %v123, %v4412
    %v4492 = vmul.f32 %v124, %v4412
    %v4493 = vmul.f32 %v125, %v4412
    %v4494 = vmul.f32 %v126, %v4412
    %v4495 = vmul.f32 %v127, %v4412
    %v4496 = vmul.f32 %v128, %v4412
    %v4497 = vmul.f32 %v129, %v4412
    %v4498 = vmul.f32 %v130, %v4412
    %v4499 = vmul.f32 %v131, %v4412
    %v4500 = vmul.f32 %v132, %v4412
    %v4501 = vmul.f32 %v133, %v4412
    %v4502 = vmul.f32 %v134, %v4412
    %v4503 = vmul.f32 %v135, %v4412
    %v4504 = vmul.f32 %v136, %v4412
    %v4505 = vmul.f32 %v137, %v4412
    %v4506 = vmul.f32 %v138, %v4412
    %v4507 = vmul.f32 %v139, %v4412
    %v4508 = vmul.f32 %v140, %v4412
    %s4509 = sld [smem:[#allocation3 + $0xa]]
    %v4510 = vstv %s4509
    %v4511 = vmul.f32 %v45, %v4510
    %v4512 = vmul.f32 %v46, %v4510
    %v4513 = vmul.f32 %v47, %v4510
    %v4514 = vmul.f32 %v48, %v4510
    %v4515 = vmul.f32 %v49, %v4510
    %v4516 = vmul.f32 %v50, %v4510
    %v4517 = vmul.f32 %v51, %v4510
    %v4518 = vmul.f32 %v52, %v4510
    %v4519 = vmul.f32 %v53, %v4510
    %v4520 = vmul.f32 %v54, %v4510
    %v4521 = vmul.f32 %v55, %v4510
    %v4522 = vmul.f32 %v56, %v4510
    %v4523 = vmul.f32 %v57, %v4510
    %v4524 = vmul.f32 %v58, %v4510
    %v4525 = vmul.f32 %v59, %v4510
    %v4526 = vmul.f32 %v60, %v4510
    %v4527 = vmul.f32 %v61, %v4510
    %v4528 = vmul.f32 %v62, %v4510
    %v4529 = vmul.f32 %v63, %v4510
    %v4530 = vmul.f32 %v64, %v4510
    %v4531 = vmul.f32 %v65, %v4510
    %v4532 = vmul.f32 %v66, %v4510
    %v4533 = vmul.f32 %v67, %v4510
    %v4534 = vmul.f32 %v68, %v4510
    %v4535 = vmul.f32 %v69, %v4510
    %v4536 = vmul.f32 %v70, %v4510
    %v4537 = vmul.f32 %v71, %v4510
    %v4538 = vmul.f32 %v72, %v4510
    %v4539 = vmul.f32 %v73, %v4510
    %v4540 = vmul.f32 %v74, %v4510
    %v4541 = vmul.f32 %v75, %v4510
    %v4542 = vmul.f32 %v76, %v4510
    %v4543 = vmul.f32 %v77, %v4510
    %v4544 = vmul.f32 %v78, %v4510
    %v4545 = vmul.f32 %v79, %v4510
    %v4546 = vmul.f32 %v80, %v4510
    %v4547 = vmul.f32 %v81, %v4510
    %v4548 = vmul.f32 %v82, %v4510
    %v4549 = vmul.f32 %v83, %v4510
    %v4550 = vmul.f32 %v84, %v4510
    %v4551 = vmul.f32 %v85, %v4510
    %v4552 = vmul.f32 %v86, %v4510
    %v4553 = vmul.f32 %v87, %v4510
    %v4554 = vmul.f32 %v88, %v4510
    %v4555 = vmul.f32 %v89, %v4510
    %v4556 = vmul.f32 %v90, %v4510
    %v4557 = vmul.f32 %v91, %v4510
    %v4558 = vmul.f32 %v92, %v4510
    %v4559 = vmul.f32 %v93, %v4510
    %v4560 = vmul.f32 %v94, %v4510
    %v4561 = vmul.f32 %v95, %v4510
    %v4562 = vmul.f32 %v96, %v4510
    %v4563 = vmul.f32 %v97, %v4510
    %v4564 = vmul.f32 %v98, %v4510
    %v4565 = vmul.f32 %v99, %v4510
    %v4566 = vmul.f32 %v100, %v4510
    %v4567 = vmul.f32 %v101, %v4510
    %v4568 = vmul.f32 %v102, %v4510
    %v4569 = vmul.f32 %v103, %v4510
    %v4570 = vmul.f32 %v104, %v4510
    %v4571 = vmul.f32 %v105, %v4510
    %v4572 = vmul.f32 %v106, %v4510
    %v4573 = vmul.f32 %v107, %v4510
    %v4574 = vmul.f32 %v108, %v4510
    %v4575 = vmul.f32 %v109, %v4510
    %v4576 = vmul.f32 %v110, %v4510
    %v4577 = vmul.f32 %v111, %v4510
    %v4578 = vmul.f32 %v112, %v4510
    %v4579 = vmul.f32 %v113, %v4510
    %v4580 = vmul.f32 %v114, %v4510
    %v4581 = vmul.f32 %v115, %v4510
    %v4582 = vmul.f32 %v116, %v4510
    %v4583 = vmul.f32 %v117, %v4510
    %v4584 = vmul.f32 %v118, %v4510
    %v4585 = vmul.f32 %v119, %v4510
    %v4586 = vmul.f32 %v120, %v4510
    %v4587 = vmul.f32 %v121, %v4510
    %v4588 = vmul.f32 %v122, %v4510
    %v4589 = vmul.f32 %v123, %v4510
    %v4590 = vmul.f32 %v124, %v4510
    %v4591 = vmul.f32 %v125, %v4510
    %v4592 = vmul.f32 %v126, %v4510
    %v4593 = vmul.f32 %v127, %v4510
    %v4594 = vmul.f32 %v128, %v4510
    %v4595 = vmul.f32 %v129, %v4510
    %v4596 = vmul.f32 %v130, %v4510
    %v4597 = vmul.f32 %v131, %v4510
    %v4598 = vmul.f32 %v132, %v4510
    %v4599 = vmul.f32 %v133, %v4510
    %v4600 = vmul.f32 %v134, %v4510
    %v4601 = vmul.f32 %v135, %v4510
    %v4602 = vmul.f32 %v136, %v4510
    %v4603 = vmul.f32 %v137, %v4510
    %v4604 = vmul.f32 %v138, %v4510
    %v4605 = vmul.f32 %v139, %v4510
    %v4606 = vmul.f32 %v140, %v4510
    %v4703 = vrot.slane %v4511, 1
    %v4704 = vrot.slane %v4512, 1
    %v4705 = vsel %vm441, %v4703, %v4704
    %v4706 = vrot.slane %v4513, 1
    %v4707 = vsel %vm441, %v4704, %v4706
    %v4708 = vrot.slane %v4514, 1
    %v4709 = vsel %vm441, %v4706, %v4708
    %v4710 = vrot.slane %v4515, 1
    %v4711 = vrot.slane %v4516, 1
    %v4712 = vsel %vm441, %v4710, %v4711
    %v4713 = vrot.slane %v4517, 1
    %v4714 = vsel %vm441, %v4711, %v4713
    %v4715 = vrot.slane %v4518, 1
    %v4716 = vsel %vm441, %v4713, %v4715
    %v4717 = vrot.slane %v4519, 1
    %v4718 = vrot.slane %v4520, 1
    %v4719 = vsel %vm441, %v4717, %v4718
    %v4720 = vrot.slane %v4521, 1
    %v4721 = vsel %vm441, %v4718, %v4720
    %v4722 = vrot.slane %v4522, 1
    %v4723 = vsel %vm441, %v4720, %v4722
    %v4724 = vrot.slane %v4523, 1
    %v4725 = vrot.slane %v4524, 1
    %v4726 = vsel %vm441, %v4724, %v4725
    %v4727 = vrot.slane %v4525, 1
    %v4728 = vsel %vm441, %v4725, %v4727
    %v4729 = vrot.slane %v4526, 1
    %v4730 = vsel %vm441, %v4727, %v4729
    %v4731 = vrot.slane %v4527, 1
    %v4732 = vrot.slane %v4528, 1
    %v4733 = vsel %vm441, %v4731, %v4732
    %v4734 = vrot.slane %v4529, 1
    %v4735 = vsel %vm441, %v4732, %v4734
    %v4736 = vrot.slane %v4530, 1
    %v4737 = vsel %vm441, %v4734, %v4736
    %v4738 = vrot.slane %v4531, 1
    %v4739 = vrot.slane %v4532, 1
    %v4740 = vsel %vm441, %v4738, %v4739
    %v4741 = vrot.slane %v4533, 1
    %v4742 = vsel %vm441, %v4739, %v4741
    %v4743 = vrot.slane %v4534, 1
    %v4744 = vsel %vm441, %v4741, %v4743
    %v4745 = vrot.slane %v4535, 1
    %v4746 = vrot.slane %v4536, 1
    %v4747 = vsel %vm441, %v4745, %v4746
    %v4748 = vrot.slane %v4537, 1
    %v4749 = vsel %vm441, %v4746, %v4748
    %v4750 = vrot.slane %v4538, 1
    %v4751 = vsel %vm441, %v4748, %v4750
    %v4752 = vrot.slane %v4539, 1
    %v4753 = vrot.slane %v4540, 1
    %v4754 = vsel %vm441, %v4752, %v4753
    %v4755 = vrot.slane %v4541, 1
    %v4756 = vsel %vm441, %v4753, %v4755
    %v4757 = vrot.slane %v4542, 1
    %v4758 = vsel %vm441, %v4755, %v4757
    %v4759 = vrot.slane %v4543, 1
    %v4760 = vrot.slane %v4544, 1
    %v4761 = vsel %vm441, %v4759, %v4760
    %v4762 = vrot.slane %v4545, 1
    %v4763 = vsel %vm441, %v4760, %v4762
    %v4764 = vrot.slane %v4546, 1
    %v4765 = vsel %vm441, %v4762, %v4764
    %v4766 = vrot.slane %v4547, 1
    %v4767 = vrot.slane %v4548, 1
    %v4768 = vsel %vm441, %v4766, %v4767
    %v4769 = vrot.slane %v4549, 1
    %v4770 = vsel %vm441, %v4767, %v4769
    %v4771 = vrot.slane %v4550, 1
    %v4772 = vsel %vm441, %v4769, %v4771
    %v4773 = vrot.slane %v4551, 1
    %v4774 = vrot.slane %v4552, 1
    %v4775 = vsel %vm441, %v4773, %v4774
    %v4776 = vrot.slane %v4553, 1
    %v4777 = vsel %vm441, %v4774, %v4776
    %v4778 = vrot.slane %v4554, 1
    %v4779 = vsel %vm441, %v4776, %v4778
    %v4780 = vrot.slane %v4555, 1
    %v4781 = vrot.slane %v4556, 1
    %v4782 = vsel %vm441, %v4780, %v4781
    %v4783 = vrot.slane %v4557, 1
    %v4784 = vsel %vm441, %v4781, %v4783
    %v4785 = vrot.slane %v4558, 1
    %v4786 = vsel %vm441, %v4783, %v4785
    %v4787 = vrot.slane %v4559, 1
    %v4788 = vrot.slane %v4560, 1
    %v4789 = vsel %vm441, %v4787, %v4788
    %v4790 = vrot.slane %v4561, 1
    %v4791 = vsel %vm441, %v4788, %v4790
    %v4792 = vrot.slane %v4562, 1
    %v4793 = vsel %vm441, %v4790, %v4792
    %v4794 = vrot.slane %v4563, 1
    %v4795 = vrot.slane %v4564, 1
    %v4796 = vsel %vm441, %v4794, %v4795
    %v4797 = vrot.slane %v4565, 1
    %v4798 = vsel %vm441, %v4795, %v4797
    %v4799 = vrot.slane %v4566, 1
    %v4800 = vsel %vm441, %v4797, %v4799
    %v4801 = vrot.slane %v4567, 1
    %v4802 = vrot.slane %v4568, 1
    %v4803 = vsel %vm441, %v4801, %v4802
    %v4804 = vrot.slane %v4569, 1
    %v4805 = vsel %vm441, %v4802, %v4804
    %v4806 = vrot.slane %v4570, 1
    %v4807 = vsel %vm441, %v4804, %v4806
    %v4808 = vrot.slane %v4571, 1
    %v4809 = vrot.slane %v4572, 1
    %v4810 = vsel %vm441, %v4808, %v4809
    %v4811 = vrot.slane %v4573, 1
    %v4812 = vsel %vm441, %v4809, %v4811
    %v4813 = vrot.slane %v4574, 1
    %v4814 = vsel %vm441, %v4811, %v4813
    %v4815 = vrot.slane %v4575, 1
    %v4816 = vrot.slane %v4576, 1
    %v4817 = vsel %vm441, %v4815, %v4816
    %v4818 = vrot.slane %v4577, 1
    %v4819 = vsel %vm441, %v4816, %v4818
    %v4820 = vrot.slane %v4578, 1
    %v4821 = vsel %vm441, %v4818, %v4820
    %v4822 = vrot.slane %v4579, 1
    %v4823 = vrot.slane %v4580, 1
    %v4824 = vsel %vm441, %v4822, %v4823
    %v4825 = vrot.slane %v4581, 1
    %v4826 = vsel %vm441, %v4823, %v4825
    %v4827 = vrot.slane %v4582, 1
    %v4828 = vsel %vm441, %v4825, %v4827
    %v4829 = vrot.slane %v4583, 1
    %v4830 = vrot.slane %v4584, 1
    %v4831 = vsel %vm441, %v4829, %v4830
    %v4832 = vrot.slane %v4585, 1
    %v4833 = vsel %vm441, %v4830, %v4832
    %v4834 = vrot.slane %v4586, 1
    %v4835 = vsel %vm441, %v4832, %v4834
    %v4836 = vrot.slane %v4587, 1
    %v4837 = vrot.slane %v4588, 1
    %v4838 = vsel %vm441, %v4836, %v4837
    %v4839 = vrot.slane %v4589, 1
    %v4840 = vsel %vm441, %v4837, %v4839
    %v4841 = vrot.slane %v4590, 1
    %v4842 = vsel %vm441, %v4839, %v4841
    %v4843 = vrot.slane %v4591, 1
    %v4844 = vrot.slane %v4592, 1
    %v4845 = vsel %vm441, %v4843, %v4844
    %v4846 = vrot.slane %v4593, 1
    %v4847 = vsel %vm441, %v4844, %v4846
    %v4848 = vrot.slane %v4594, 1
    %v4849 = vsel %vm441, %v4846, %v4848
    %v4850 = vrot.slane %v4595, 1
    %v4851 = vrot.slane %v4596, 1
    %v4852 = vsel %vm441, %v4850, %v4851
    %v4853 = vrot.slane %v4597, 1
    %v4854 = vsel %vm441, %v4851, %v4853
    %v4855 = vrot.slane %v4598, 1
    %v4856 = vsel %vm441, %v4853, %v4855
    %v4857 = vrot.slane %v4599, 1
    %v4858 = vrot.slane %v4600, 1
    %v4859 = vsel %vm441, %v4857, %v4858
    %v4860 = vrot.slane %v4601, 1
    %v4861 = vsel %vm441, %v4858, %v4860
    %v4862 = vrot.slane %v4602, 1
    %v4863 = vsel %vm441, %v4860, %v4862
    %v4864 = vrot.slane %v4603, 1
    %v4865 = vrot.slane %v4604, 1
    %v4866 = vsel %vm441, %v4864, %v4865
    %v4867 = vrot.slane %v4605, 1
    %v4868 = vsel %vm441, %v4865, %v4867
    %v4869 = vrot.slane %v4606, 1
    %v4870 = vsel %vm441, %v4867, %v4869
    %v4967 = vadd.f32 %v4413, %v4705
    %v4968 = vadd.f32 %v4414, %v4707
    %v4969 = vadd.f32 %v4415, %v4709
    %v4970 = vadd.f32 %v4416, %v4708
    %v4971 = vadd.f32 %v4417, %v4712
    %v4972 = vadd.f32 %v4418, %v4714
    %v4973 = vadd.f32 %v4419, %v4716
    %v4974 = vadd.f32 %v4420, %v4715
    %v4975 = vadd.f32 %v4421, %v4719
    %v4976 = vadd.f32 %v4422, %v4721
    %v4977 = vadd.f32 %v4423, %v4723
    %v4978 = vadd.f32 %v4424, %v4722
    %v4979 = vadd.f32 %v4425, %v4726
    %v4980 = vadd.f32 %v4426, %v4728
    %v4981 = vadd.f32 %v4427, %v4730
    %v4982 = vadd.f32 %v4428, %v4729
    %v4983 = vadd.f32 %v4429, %v4733
    %v4984 = vadd.f32 %v4430, %v4735
    %v4985 = vadd.f32 %v4431, %v4737
    %v4986 = vadd.f32 %v4432, %v4736
    %v4987 = vadd.f32 %v4433, %v4740
    %v4988 = vadd.f32 %v4434, %v4742
    %v4989 = vadd.f32 %v4435, %v4744
    %v4990 = vadd.f32 %v4436, %v4743
    %v4991 = vadd.f32 %v4437, %v4747
    %v4992 = vadd.f32 %v4438, %v4749
    %v4993 = vadd.f32 %v4439, %v4751
    %v4994 = vadd.f32 %v4440, %v4750
    %v4995 = vadd.f32 %v4441, %v4754
    %v4996 = vadd.f32 %v4442, %v4756
    %v4997 = vadd.f32 %v4443, %v4758
    %v4998 = vadd.f32 %v4444, %v4757
    %v4999 = vadd.f32 %v4445, %v4761
    %v5000 = vadd.f32 %v4446, %v4763
    %v5001 = vadd.f32 %v4447, %v4765
    %v5002 = vadd.f32 %v4448, %v4764
    %v5003 = vadd.f32 %v4449, %v4768
    %v5004 = vadd.f32 %v4450, %v4770
    %v5005 = vadd.f32 %v4451, %v4772
    %v5006 = vadd.f32 %v4452, %v4771
    %v5007 = vadd.f32 %v4453, %v4775
    %v5008 = vadd.f32 %v4454, %v4777
    %v5009 = vadd.f32 %v4455, %v4779
    %v5010 = vadd.f32 %v4456, %v4778
    %v5011 = vadd.f32 %v4457, %v4782
    %v5012 = vadd.f32 %v4458, %v4784
    %v5013 = vadd.f32 %v4459, %v4786
    %v5014 = vadd.f32 %v4460, %v4785
    %v5015 = vadd.f32 %v4461, %v4789
    %v5016 = vadd.f32 %v4462, %v4791
    %v5017 = vadd.f32 %v4463, %v4793
    %v5018 = vadd.f32 %v4464, %v4792
    %v5019 = vadd.f32 %v4465, %v4796
    %v5020 = vadd.f32 %v4466, %v4798
    %v5021 = vadd.f32 %v4467, %v4800
    %v5022 = vadd.f32 %v4468, %v4799
    %v5023 = vadd.f32 %v4469, %v4803
    %v5024 = vadd.f32 %v4470, %v4805
    %v5025 = vadd.f32 %v4471, %v4807
    %v5026 = vadd.f32 %v4472, %v4806
    %v5027 = vadd.f32 %v4473, %v4810
    %v5028 = vadd.f32 %v4474, %v4812
    %v5029 = vadd.f32 %v4475, %v4814
    %v5030 = vadd.f32 %v4476, %v4813
    %v5031 = vadd.f32 %v4477, %v4817
    %v5032 = vadd.f32 %v4478, %v4819
    %v5033 = vadd.f32 %v4479, %v4821
    %v5034 = vadd.f32 %v4480, %v4820
    %v5035 = vadd.f32 %v4481, %v4824
    %v5036 = vadd.f32 %v4482, %v4826
    %v5037 = vadd.f32 %v4483, %v4828
    %v5038 = vadd.f32 %v4484, %v4827
    %v5039 = vadd.f32 %v4485, %v4831
    %v5040 = vadd.f32 %v4486, %v4833
    %v5041 = vadd.f32 %v4487, %v4835
    %v5042 = vadd.f32 %v4488, %v4834
    %v5043 = vadd.f32 %v4489, %v4838
    %v5044 = vadd.f32 %v4490, %v4840
    %v5045 = vadd.f32 %v4491, %v4842
    %v5046 = vadd.f32 %v4492, %v4841
    %v5047 = vadd.f32 %v4493, %v4845
    %v5048 = vadd.f32 %v4494, %v4847
    %v5049 = vadd.f32 %v4495, %v4849
    %v5050 = vadd.f32 %v4496, %v4848
    %v5051 = vadd.f32 %v4497, %v4852
    %v5052 = vadd.f32 %v4498, %v4854
    %v5053 = vadd.f32 %v4499, %v4856
    %v5054 = vadd.f32 %v4500, %v4855
    %v5055 = vadd.f32 %v4501, %v4859
    %v5056 = vadd.f32 %v4502, %v4861
    %v5057 = vadd.f32 %v4503, %v4863
    %v5058 = vadd.f32 %v4504, %v4862
    %v5059 = vadd.f32 %v4505, %v4866
    %v5060 = vadd.f32 %v4506, %v4868
    %v5061 = vadd.f32 %v4507, %v4870
    %v5062 = vadd.f32 %v4508, %v4869
    %s5063 = sld [smem:[#allocation3 + $0xb]]
    %v5064 = vstv %s5063
    %v5065 = vmul.f32 %v45, %v5064
    %v5066 = vmul.f32 %v46, %v5064
    %v5067 = vmul.f32 %v47, %v5064
    %v5068 = vmul.f32 %v48, %v5064
    %v5069 = vmul.f32 %v49, %v5064
    %v5070 = vmul.f32 %v50, %v5064
    %v5071 = vmul.f32 %v51, %v5064
    %v5072 = vmul.f32 %v52, %v5064
    %v5073 = vmul.f32 %v53, %v5064
    %v5074 = vmul.f32 %v54, %v5064
    %v5075 = vmul.f32 %v55, %v5064
    %v5076 = vmul.f32 %v56, %v5064
    %v5077 = vmul.f32 %v57, %v5064
    %v5078 = vmul.f32 %v58, %v5064
    %v5079 = vmul.f32 %v59, %v5064
    %v5080 = vmul.f32 %v60, %v5064
    %v5081 = vmul.f32 %v61, %v5064
    %v5082 = vmul.f32 %v62, %v5064
    %v5083 = vmul.f32 %v63, %v5064
    %v5084 = vmul.f32 %v64, %v5064
    %v5085 = vmul.f32 %v65, %v5064
    %v5086 = vmul.f32 %v66, %v5064
    %v5087 = vmul.f32 %v67, %v5064
    %v5088 = vmul.f32 %v68, %v5064
    %v5089 = vmul.f32 %v69, %v5064
    %v5090 = vmul.f32 %v70, %v5064
    %v5091 = vmul.f32 %v71, %v5064
    %v5092 = vmul.f32 %v72, %v5064
    %v5093 = vmul.f32 %v73, %v5064
    %v5094 = vmul.f32 %v74, %v5064
    %v5095 = vmul.f32 %v75, %v5064
    %v5096 = vmul.f32 %v76, %v5064
    %v5097 = vmul.f32 %v77, %v5064
    %v5098 = vmul.f32 %v78, %v5064
    %v5099 = vmul.f32 %v79, %v5064
    %v5100 = vmul.f32 %v80, %v5064
    %v5101 = vmul.f32 %v81, %v5064
    %v5102 = vmul.f32 %v82, %v5064
    %v5103 = vmul.f32 %v83, %v5064
    %v5104 = vmul.f32 %v84, %v5064
    %v5105 = vmul.f32 %v85, %v5064
    %v5106 = vmul.f32 %v86, %v5064
    %v5107 = vmul.f32 %v87, %v5064
    %v5108 = vmul.f32 %v88, %v5064
    %v5109 = vmul.f32 %v89, %v5064
    %v5110 = vmul.f32 %v90, %v5064
    %v5111 = vmul.f32 %v91, %v5064
    %v5112 = vmul.f32 %v92, %v5064
    %v5113 = vmul.f32 %v93, %v5064
    %v5114 = vmul.f32 %v94, %v5064
    %v5115 = vmul.f32 %v95, %v5064
    %v5116 = vmul.f32 %v96, %v5064
    %v5117 = vmul.f32 %v97, %v5064
    %v5118 = vmul.f32 %v98, %v5064
    %v5119 = vmul.f32 %v99, %v5064
    %v5120 = vmul.f32 %v100, %v5064
    %v5121 = vmul.f32 %v101, %v5064
    %v5122 = vmul.f32 %v102, %v5064
    %v5123 = vmul.f32 %v103, %v5064
    %v5124 = vmul.f32 %v104, %v5064
    %v5125 = vmul.f32 %v105, %v5064
    %v5126 = vmul.f32 %v106, %v5064
    %v5127 = vmul.f32 %v107, %v5064
    %v5128 = vmul.f32 %v108, %v5064
    %v5129 = vmul.f32 %v109, %v5064
    %v5130 = vmul.f32 %v110, %v5064
    %v5131 = vmul.f32 %v111, %v5064
    %v5132 = vmul.f32 %v112, %v5064
    %v5133 = vmul.f32 %v113, %v5064
    %v5134 = vmul.f32 %v114, %v5064
    %v5135 = vmul.f32 %v115, %v5064
    %v5136 = vmul.f32 %v116, %v5064
    %v5137 = vmul.f32 %v117, %v5064
    %v5138 = vmul.f32 %v118, %v5064
    %v5139 = vmul.f32 %v119, %v5064
    %v5140 = vmul.f32 %v120, %v5064
    %v5141 = vmul.f32 %v121, %v5064
    %v5142 = vmul.f32 %v122, %v5064
    %v5143 = vmul.f32 %v123, %v5064
    %v5144 = vmul.f32 %v124, %v5064
    %v5145 = vmul.f32 %v125, %v5064
    %v5146 = vmul.f32 %v126, %v5064
    %v5147 = vmul.f32 %v127, %v5064
    %v5148 = vmul.f32 %v128, %v5064
    %v5149 = vmul.f32 %v129, %v5064
    %v5150 = vmul.f32 %v130, %v5064
    %v5151 = vmul.f32 %v131, %v5064
    %v5152 = vmul.f32 %v132, %v5064
    %v5153 = vmul.f32 %v133, %v5064
    %v5154 = vmul.f32 %v134, %v5064
    %v5155 = vmul.f32 %v135, %v5064
    %v5156 = vmul.f32 %v136, %v5064
    %v5157 = vmul.f32 %v137, %v5064
    %v5158 = vmul.f32 %v138, %v5064
    %v5159 = vmul.f32 %v139, %v5064
    %v5160 = vmul.f32 %v140, %v5064
    %v5257 = vrot.slane %v5065, 2
    %v5258 = vrot.slane %v5066, 2
    %v5259 = vsel %vm996, %v5257, %v5258
    %v5260 = vrot.slane %v5067, 2
    %v5261 = vsel %vm996, %v5258, %v5260
    %v5262 = vrot.slane %v5068, 2
    %v5263 = vsel %vm996, %v5260, %v5262
    %v5264 = vrot.slane %v5069, 2
    %v5265 = vrot.slane %v5070, 2
    %v5266 = vsel %vm996, %v5264, %v5265
    %v5267 = vrot.slane %v5071, 2
    %v5268 = vsel %vm996, %v5265, %v5267
    %v5269 = vrot.slane %v5072, 2
    %v5270 = vsel %vm996, %v5267, %v5269
    %v5271 = vrot.slane %v5073, 2
    %v5272 = vrot.slane %v5074, 2
    %v5273 = vsel %vm996, %v5271, %v5272
    %v5274 = vrot.slane %v5075, 2
    %v5275 = vsel %vm996, %v5272, %v5274
    %v5276 = vrot.slane %v5076, 2
    %v5277 = vsel %vm996, %v5274, %v5276
    %v5278 = vrot.slane %v5077, 2
    %v5279 = vrot.slane %v5078, 2
    %v5280 = vsel %vm996, %v5278, %v5279
    %v5281 = vrot.slane %v5079, 2
    %v5282 = vsel %vm996, %v5279, %v5281
    %v5283 = vrot.slane %v5080, 2
    %v5284 = vsel %vm996, %v5281, %v5283
    %v5285 = vrot.slane %v5081, 2
    %v5286 = vrot.slane %v5082, 2
    %v5287 = vsel %vm996, %v5285, %v5286
    %v5288 = vrot.slane %v5083, 2
    %v5289 = vsel %vm996, %v5286, %v5288
    %v5290 = vrot.slane %v5084, 2
    %v5291 = vsel %vm996, %v5288, %v5290
    %v5292 = vrot.slane %v5085, 2
    %v5293 = vrot.slane %v5086, 2
    %v5294 = vsel %vm996, %v5292, %v5293
    %v5295 = vrot.slane %v5087, 2
    %v5296 = vsel %vm996, %v5293, %v5295
    %v5297 = vrot.slane %v5088, 2
    %v5298 = vsel %vm996, %v5295, %v5297
    %v5299 = vrot.slane %v5089, 2
    %v5300 = vrot.slane %v5090, 2
    %v5301 = vsel %vm996, %v5299, %v5300
    %v5302 = vrot.slane %v5091, 2
    %v5303 = vsel %vm996, %v5300, %v5302
    %v5304 = vrot.slane %v5092, 2
    %v5305 = vsel %vm996, %v5302, %v5304
    %v5306 = vrot.slane %v5093, 2
    %v5307 = vrot.slane %v5094, 2
    %v5308 = vsel %vm996, %v5306, %v5307
    %v5309 = vrot.slane %v5095, 2
    %v5310 = vsel %vm996, %v5307, %v5309
    %v5311 = vrot.slane %v5096, 2
    %v5312 = vsel %vm996, %v5309, %v5311
    %v5313 = vrot.slane %v5097, 2
    %v5314 = vrot.slane %v5098, 2
    %v5315 = vsel %vm996, %v5313, %v5314
    %v5316 = vrot.slane %v5099, 2
    %v5317 = vsel %vm996, %v5314, %v5316
    %v5318 = vrot.slane %v5100, 2
    %v5319 = vsel %vm996, %v5316, %v5318
    %v5320 = vrot.slane %v5101, 2
    %v5321 = vrot.slane %v5102, 2
    %v5322 = vsel %vm996, %v5320, %v5321
    %v5323 = vrot.slane %v5103, 2
    %v5324 = vsel %vm996, %v5321, %v5323
    %v5325 = vrot.slane %v5104, 2
    %v5326 = vsel %vm996, %v5323, %v5325
    %v5327 = vrot.slane %v5105, 2
    %v5328 = vrot.slane %v5106, 2
    %v5329 = vsel %vm996, %v5327, %v5328
    %v5330 = vrot.slane %v5107, 2
    %v5331 = vsel %vm996, %v5328, %v5330
    %v5332 = vrot.slane %v5108, 2
    %v5333 = vsel %vm996, %v5330, %v5332
    %v5334 = vrot.slane %v5109, 2
    %v5335 = vrot.slane %v5110, 2
    %v5336 = vsel %vm996, %v5334, %v5335
    %v5337 = vrot.slane %v5111, 2
    %v5338 = vsel %vm996, %v5335, %v5337
    %v5339 = vrot.slane %v5112, 2
    %v5340 = vsel %vm996, %v5337, %v5339
    %v5341 = vrot.slane %v5113, 2
    %v5342 = vrot.slane %v5114, 2
    %v5343 = vsel %vm996, %v5341, %v5342
    %v5344 = vrot.slane %v5115, 2
    %v5345 = vsel %vm996, %v5342, %v5344
    %v5346 = vrot.slane %v5116, 2
    %v5347 = vsel %vm996, %v5344, %v5346
    %v5348 = vrot.slane %v5117, 2
    %v5349 = vrot.slane %v5118, 2
    %v5350 = vsel %vm996, %v5348, %v5349
    %v5351 = vrot.slane %v5119, 2
    %v5352 = vsel %vm996, %v5349, %v5351
    %v5353 = vrot.slane %v5120, 2
    %v5354 = vsel %vm996, %v5351, %v5353
    %v5355 = vrot.slane %v5121, 2
    %v5356 = vrot.slane %v5122, 2
    %v5357 = vsel %vm996, %v5355, %v5356
    %v5358 = vrot.slane %v5123, 2
    %v5359 = vsel %vm996, %v5356, %v5358
    %v5360 = vrot.slane %v5124, 2
    %v5361 = vsel %vm996, %v5358, %v5360
    %v5362 = vrot.slane %v5125, 2
    %v5363 = vrot.slane %v5126, 2
    %v5364 = vsel %vm996, %v5362, %v5363
    %v5365 = vrot.slane %v5127, 2
    %v5366 = vsel %vm996, %v5363, %v5365
    %v5367 = vrot.slane %v5128, 2
    %v5368 = vsel %vm996, %v5365, %v5367
    %v5369 = vrot.slane %v5129, 2
    %v5370 = vrot.slane %v5130, 2
    %v5371 = vsel %vm996, %v5369, %v5370
    %v5372 = vrot.slane %v5131, 2
    %v5373 = vsel %vm996, %v5370, %v5372
    %v5374 = vrot.slane %v5132, 2
    %v5375 = vsel %vm996, %v5372, %v5374
    %v5376 = vrot.slane %v5133, 2
    %v5377 = vrot.slane %v5134, 2
    %v5378 = vsel %vm996, %v5376, %v5377
    %v5379 = vrot.slane %v5135, 2
    %v5380 = vsel %vm996, %v5377, %v5379
    %v5381 = vrot.slane %v5136, 2
    %v5382 = vsel %vm996, %v5379, %v5381
    %v5383 = vrot.slane %v5137, 2
    %v5384 = vrot.slane %v5138, 2
    %v5385 = vsel %vm996, %v5383, %v5384
    %v5386 = vrot.slane %v5139, 2
    %v5387 = vsel %vm996, %v5384, %v5386
    %v5388 = vrot.slane %v5140, 2
    %v5389 = vsel %vm996, %v5386, %v5388
    %v5390 = vrot.slane %v5141, 2
    %v5391 = vrot.slane %v5142, 2
    %v5392 = vsel %vm996, %v5390, %v5391
    %v5393 = vrot.slane %v5143, 2
    %v5394 = vsel %vm996, %v5391, %v5393
    %v5395 = vrot.slane %v5144, 2
    %v5396 = vsel %vm996, %v5393, %v5395
    %v5397 = vrot.slane %v5145, 2
    %v5398 = vrot.slane %v5146, 2
    %v5399 = vsel %vm996, %v5397, %v5398
    %v5400 = vrot.slane %v5147, 2
    %v5401 = vsel %vm996, %v5398, %v5400
    %v5402 = vrot.slane %v5148, 2
    %v5403 = vsel %vm996, %v5400, %v5402
    %v5404 = vrot.slane %v5149, 2
    %v5405 = vrot.slane %v5150, 2
    %v5406 = vsel %vm996, %v5404, %v5405
    %v5407 = vrot.slane %v5151, 2
    %v5408 = vsel %vm996, %v5405, %v5407
    %v5409 = vrot.slane %v5152, 2
    %v5410 = vsel %vm996, %v5407, %v5409
    %v5411 = vrot.slane %v5153, 2
    %v5412 = vrot.slane %v5154, 2
    %v5413 = vsel %vm996, %v5411, %v5412
    %v5414 = vrot.slane %v5155, 2
    %v5415 = vsel %vm996, %v5412, %v5414
    %v5416 = vrot.slane %v5156, 2
    %v5417 = vsel %vm996, %v5414, %v5416
    %v5418 = vrot.slane %v5157, 2
    %v5419 = vrot.slane %v5158, 2
    %v5420 = vsel %vm996, %v5418, %v5419
    %v5421 = vrot.slane %v5159, 2
    %v5422 = vsel %vm996, %v5419, %v5421
    %v5423 = vrot.slane %v5160, 2
    %v5424 = vsel %vm996, %v5421, %v5423
    %v5521 = vadd.f32 %v4967, %v5259
    %v5522 = vadd.f32 %v4968, %v5261
    %v5523 = vadd.f32 %v4969, %v5263
    %v5524 = vadd.f32 %v4970, %v5262
    %v5525 = vadd.f32 %v4971, %v5266
    %v5526 = vadd.f32 %v4972, %v5268
    %v5527 = vadd.f32 %v4973, %v5270
    %v5528 = vadd.f32 %v4974, %v5269
    %v5529 = vadd.f32 %v4975, %v5273
    %v5530 = vadd.f32 %v4976, %v5275
    %v5531 = vadd.f32 %v4977, %v5277
    %v5532 = vadd.f32 %v4978, %v5276
    %v5533 = vadd.f32 %v4979, %v5280
    %v5534 = vadd.f32 %v4980, %v5282
    %v5535 = vadd.f32 %v4981, %v5284
    %v5536 = vadd.f32 %v4982, %v5283
    %v5537 = vadd.f32 %v4983, %v5287
    %v5538 = vadd.f32 %v4984, %v5289
    %v5539 = vadd.f32 %v4985, %v5291
    %v5540 = vadd.f32 %v4986, %v5290
    %v5541 = vadd.f32 %v4987, %v5294
    %v5542 = vadd.f32 %v4988, %v5296
    %v5543 = vadd.f32 %v4989, %v5298
    %v5544 = vadd.f32 %v4990, %v5297
    %v5545 = vadd.f32 %v4991, %v5301
    %v5546 = vadd.f32 %v4992, %v5303
    %v5547 = vadd.f32 %v4993, %v5305
    %v5548 = vadd.f32 %v4994, %v5304
    %v5549 = vadd.f32 %v4995, %v5308
    %v5550 = vadd.f32 %v4996, %v5310
    %v5551 = vadd.f32 %v4997, %v5312
    %v5552 = vadd.f32 %v4998, %v5311
    %v5553 = vadd.f32 %v4999, %v5315
    %v5554 = vadd.f32 %v5000, %v5317
    %v5555 = vadd.f32 %v5001, %v5319
    %v5556 = vadd.f32 %v5002, %v5318
    %v5557 = vadd.f32 %v5003, %v5322
    %v5558 = vadd.f32 %v5004, %v5324
    %v5559 = vadd.f32 %v5005, %v5326
    %v5560 = vadd.f32 %v5006, %v5325
    %v5561 = vadd.f32 %v5007, %v5329
    %v5562 = vadd.f32 %v5008, %v5331
    %v5563 = vadd.f32 %v5009, %v5333
    %v5564 = vadd.f32 %v5010, %v5332
    %v5565 = vadd.f32 %v5011, %v5336
    %v5566 = vadd.f32 %v5012, %v5338
    %v5567 = vadd.f32 %v5013, %v5340
    %v5568 = vadd.f32 %v5014, %v5339
    %v5569 = vadd.f32 %v5015, %v5343
    %v5570 = vadd.f32 %v5016, %v5345
    %v5571 = vadd.f32 %v5017, %v5347
    %v5572 = vadd.f32 %v5018, %v5346
    %v5573 = vadd.f32 %v5019, %v5350
    %v5574 = vadd.f32 %v5020, %v5352
    %v5575 = vadd.f32 %v5021, %v5354
    %v5576 = vadd.f32 %v5022, %v5353
    %v5577 = vadd.f32 %v5023, %v5357
    %v5578 = vadd.f32 %v5024, %v5359
    %v5579 = vadd.f32 %v5025, %v5361
    %v5580 = vadd.f32 %v5026, %v5360
    %v5581 = vadd.f32 %v5027, %v5364
    %v5582 = vadd.f32 %v5028, %v5366
    %v5583 = vadd.f32 %v5029, %v5368
    %v5584 = vadd.f32 %v5030, %v5367
    %v5585 = vadd.f32 %v5031, %v5371
    %v5586 = vadd.f32 %v5032, %v5373
    %v5587 = vadd.f32 %v5033, %v5375
    %v5588 = vadd.f32 %v5034, %v5374
    %v5589 = vadd.f32 %v5035, %v5378
    %v5590 = vadd.f32 %v5036, %v5380
    %v5591 = vadd.f32 %v5037, %v5382
    %v5592 = vadd.f32 %v5038, %v5381
    %v5593 = vadd.f32 %v5039, %v5385
    %v5594 = vadd.f32 %v5040, %v5387
    %v5595 = vadd.f32 %v5041, %v5389
    %v5596 = vadd.f32 %v5042, %v5388
    %v5597 = vadd.f32 %v5043, %v5392
    %v5598 = vadd.f32 %v5044, %v5394
    %v5599 = vadd.f32 %v5045, %v5396
    %v5600 = vadd.f32 %v5046, %v5395
    %v5601 = vadd.f32 %v5047, %v5399
    %v5602 = vadd.f32 %v5048, %v5401
    %v5603 = vadd.f32 %v5049, %v5403
    %v5604 = vadd.f32 %v5050, %v5402
    %v5605 = vadd.f32 %v5051, %v5406
    %v5606 = vadd.f32 %v5052, %v5408
    %v5607 = vadd.f32 %v5053, %v5410
    %v5608 = vadd.f32 %v5054, %v5409
    %v5609 = vadd.f32 %v5055, %v5413
    %v5610 = vadd.f32 %v5056, %v5415
    %v5611 = vadd.f32 %v5057, %v5417
    %v5612 = vadd.f32 %v5058, %v5416
    %v5613 = vadd.f32 %v5059, %v5420
    %v5614 = vadd.f32 %v5060, %v5422
    %v5615 = vadd.f32 %v5061, %v5424
    %v5616 = vadd.f32 %v5062, %v5423
    %s5617 = sld [smem:[#allocation3 + $0xc]]
    %v5618 = vstv %s5617
    %v5619 = vmul.f32 %v49, %v5618
    %v5620 = vmul.f32 %v50, %v5618
    %v5621 = vmul.f32 %v51, %v5618
    %v5622 = vmul.f32 %v52, %v5618
    %v5623 = vmul.f32 %v53, %v5618
    %v5624 = vmul.f32 %v54, %v5618
    %v5625 = vmul.f32 %v55, %v5618
    %v5626 = vmul.f32 %v56, %v5618
    %v5627 = vmul.f32 %v57, %v5618
    %v5628 = vmul.f32 %v58, %v5618
    %v5629 = vmul.f32 %v59, %v5618
    %v5630 = vmul.f32 %v60, %v5618
    %v5631 = vmul.f32 %v61, %v5618
    %v5632 = vmul.f32 %v62, %v5618
    %v5633 = vmul.f32 %v63, %v5618
    %v5634 = vmul.f32 %v64, %v5618
    %v5635 = vmul.f32 %v65, %v5618
    %v5636 = vmul.f32 %v66, %v5618
    %v5637 = vmul.f32 %v67, %v5618
    %v5638 = vmul.f32 %v68, %v5618
    %v5639 = vmul.f32 %v69, %v5618
    %v5640 = vmul.f32 %v70, %v5618
    %v5641 = vmul.f32 %v71, %v5618
    %v5642 = vmul.f32 %v72, %v5618
    %v5643 = vmul.f32 %v73, %v5618
    %v5644 = vmul.f32 %v74, %v5618
    %v5645 = vmul.f32 %v75, %v5618
    %v5646 = vmul.f32 %v76, %v5618
    %v5647 = vmul.f32 %v77, %v5618
    %v5648 = vmul.f32 %v78, %v5618
    %v5649 = vmul.f32 %v79, %v5618
    %v5650 = vmul.f32 %v80, %v5618
    %v5651 = vmul.f32 %v81, %v5618
    %v5652 = vmul.f32 %v82, %v5618
    %v5653 = vmul.f32 %v83, %v5618
    %v5654 = vmul.f32 %v84, %v5618
    %v5655 = vmul.f32 %v85, %v5618
    %v5656 = vmul.f32 %v86, %v5618
    %v5657 = vmul.f32 %v87, %v5618
    %v5658 = vmul.f32 %v88, %v5618
    %v5659 = vmul.f32 %v89, %v5618
    %v5660 = vmul.f32 %v90, %v5618
    %v5661 = vmul.f32 %v91, %v5618
    %v5662 = vmul.f32 %v92, %v5618
    %v5663 = vmul.f32 %v93, %v5618
    %v5664 = vmul.f32 %v94, %v5618
    %v5665 = vmul.f32 %v95, %v5618
    %v5666 = vmul.f32 %v96, %v5618
    %v5667 = vmul.f32 %v97, %v5618
    %v5668 = vmul.f32 %v98, %v5618
    %v5669 = vmul.f32 %v99, %v5618
    %v5670 = vmul.f32 %v100, %v5618
    %v5671 = vmul.f32 %v101, %v5618
    %v5672 = vmul.f32 %v102, %v5618
    %v5673 = vmul.f32 %v103, %v5618
    %v5674 = vmul.f32 %v104, %v5618
    %v5675 = vmul.f32 %v105, %v5618
    %v5676 = vmul.f32 %v106, %v5618
    %v5677 = vmul.f32 %v107, %v5618
    %v5678 = vmul.f32 %v108, %v5618
    %v5679 = vmul.f32 %v109, %v5618
    %v5680 = vmul.f32 %v110, %v5618
    %v5681 = vmul.f32 %v111, %v5618
    %v5682 = vmul.f32 %v112, %v5618
    %v5683 = vmul.f32 %v113, %v5618
    %v5684 = vmul.f32 %v114, %v5618
    %v5685 = vmul.f32 %v115, %v5618
    %v5686 = vmul.f32 %v116, %v5618
    %v5687 = vmul.f32 %v117, %v5618
    %v5688 = vmul.f32 %v118, %v5618
    %v5689 = vmul.f32 %v119, %v5618
    %v5690 = vmul.f32 %v120, %v5618
    %v5691 = vmul.f32 %v121, %v5618
    %v5692 = vmul.f32 %v122, %v5618
    %v5693 = vmul.f32 %v123, %v5618
    %v5694 = vmul.f32 %v124, %v5618
    %v5695 = vmul.f32 %v125, %v5618
    %v5696 = vmul.f32 %v126, %v5618
    %v5697 = vmul.f32 %v127, %v5618
    %v5698 = vmul.f32 %v128, %v5618
    %v5699 = vmul.f32 %v129, %v5618
    %v5700 = vmul.f32 %v130, %v5618
    %v5701 = vmul.f32 %v131, %v5618
    %v5702 = vmul.f32 %v132, %v5618
    %v5703 = vmul.f32 %v133, %v5618
    %v5704 = vmul.f32 %v134, %v5618
    %v5705 = vmul.f32 %v135, %v5618
    %v5706 = vmul.f32 %v136, %v5618
    %v5707 = vmul.f32 %v137, %v5618
    %v5708 = vmul.f32 %v138, %v5618
    %v5709 = vmul.f32 %v139, %v5618
    %v5710 = vmul.f32 %v140, %v5618
    %v5711 = vmul.f32 %v141, %v5618
    %v5712 = vmul.f32 %v142, %v5618
    %v5713 = vmul.f32 %v143, %v5618
    %v5714 = vmul.f32 %v144, %v5618
    %v5715 = vadd.f32 %v5521, %v5619
    %v5716 = vadd.f32 %v5522, %v5620
    %v5717 = vadd.f32 %v5523, %v5621
    %v5718 = vadd.f32 %v5524, %v5622
    %v5719 = vadd.f32 %v5525, %v5623
    %v5720 = vadd.f32 %v5526, %v5624
    %v5721 = vadd.f32 %v5527, %v5625
    %v5722 = vadd.f32 %v5528, %v5626
    %v5723 = vadd.f32 %v5529, %v5627
    %v5724 = vadd.f32 %v5530, %v5628
    %v5725 = vadd.f32 %v5531, %v5629
    %v5726 = vadd.f32 %v5532, %v5630
    %v5727 = vadd.f32 %v5533, %v5631
    %v5728 = vadd.f32 %v5534, %v5632
    %v5729 = vadd.f32 %v5535, %v5633
    %v5730 = vadd.f32 %v5536, %v5634
    %v5731 = vadd.f32 %v5537, %v5635
    %v5732 = vadd.f32 %v5538, %v5636
    %v5733 = vadd.f32 %v5539, %v5637
    %v5734 = vadd.f32 %v5540, %v5638
    %v5735 = vadd.f32 %v5541, %v5639
    %v5736 = vadd.f32 %v5542, %v5640
    %v5737 = vadd.f32 %v5543, %v5641
    %v5738 = vadd.f32 %v5544, %v5642
    %v5739 = vadd.f32 %v5545, %v5643
    %v5740 = vadd.f32 %v5546, %v5644
    %v5741 = vadd.f32 %v5547, %v5645
    %v5742 = vadd.f32 %v5548, %v5646
    %v5743 = vadd.f32 %v5549, %v5647
    %v5744 = vadd.f32 %v5550, %v5648
    %v5745 = vadd.f32 %v5551, %v5649
    %v5746 = vadd.f32 %v5552, %v5650
    %v5747 = vadd.f32 %v5553, %v5651
    %v5748 = vadd.f32 %v5554, %v5652
    %v5749 = vadd.f32 %v5555, %v5653
    %v5750 = vadd.f32 %v5556, %v5654
    %v5751 = vadd.f32 %v5557, %v5655
    %v5752 = vadd.f32 %v5558, %v5656
    %v5753 = vadd.f32 %v5559, %v5657
    %v5754 = vadd.f32 %v5560, %v5658
    %v5755 = vadd.f32 %v5561, %v5659
    %v5756 = vadd.f32 %v5562, %v5660
    %v5757 = vadd.f32 %v5563, %v5661
    %v5758 = vadd.f32 %v5564, %v5662
    %v5759 = vadd.f32 %v5565, %v5663
    %v5760 = vadd.f32 %v5566, %v5664
    %v5761 = vadd.f32 %v5567, %v5665
    %v5762 = vadd.f32 %v5568, %v5666
    %v5763 = vadd.f32 %v5569, %v5667
    %v5764 = vadd.f32 %v5570, %v5668
    %v5765 = vadd.f32 %v5571, %v5669
    %v5766 = vadd.f32 %v5572, %v5670
    %v5767 = vadd.f32 %v5573, %v5671
    %v5768 = vadd.f32 %v5574, %v5672
    %v5769 = vadd.f32 %v5575, %v5673
    %v5770 = vadd.f32 %v5576, %v5674
    %v5771 = vadd.f32 %v5577, %v5675
    %v5772 = vadd.f32 %v5578, %v5676
    %v5773 = vadd.f32 %v5579, %v5677
    %v5774 = vadd.f32 %v5580, %v5678
    %v5775 = vadd.f32 %v5581, %v5679
    %v5776 = vadd.f32 %v5582, %v5680
    %v5777 = vadd.f32 %v5583, %v5681
    %v5778 = vadd.f32 %v5584, %v5682
    %v5779 = vadd.f32 %v5585, %v5683
    %v5780 = vadd.f32 %v5586, %v5684
    %v5781 = vadd.f32 %v5587, %v5685
    %v5782 = vadd.f32 %v5588, %v5686
    %v5783 = vadd.f32 %v5589, %v5687
    %v5784 = vadd.f32 %v5590, %v5688
    %v5785 = vadd.f32 %v5591, %v5689
    %v5786 = vadd.f32 %v5592, %v5690
    %v5787 = vadd.f32 %v5593, %v5691
    %v5788 = vadd.f32 %v5594, %v5692
    %v5789 = vadd.f32 %v5595, %v5693
    %v5790 = vadd.f32 %v5596, %v5694
    %v5791 = vadd.f32 %v5597, %v5695
    %v5792 = vadd.f32 %v5598, %v5696
    %v5793 = vadd.f32 %v5599, %v5697
    %v5794 = vadd.f32 %v5600, %v5698
    %v5795 = vadd.f32 %v5601, %v5699
    %v5796 = vadd.f32 %v5602, %v5700
    %v5797 = vadd.f32 %v5603, %v5701
    %v5798 = vadd.f32 %v5604, %v5702
    %v5799 = vadd.f32 %v5605, %v5703
    %v5800 = vadd.f32 %v5606, %v5704
    %v5801 = vadd.f32 %v5607, %v5705
    %v5802 = vadd.f32 %v5608, %v5706
    %v5803 = vadd.f32 %v5609, %v5707
    %v5804 = vadd.f32 %v5610, %v5708
    %v5805 = vadd.f32 %v5611, %v5709
    %v5806 = vadd.f32 %v5612, %v5710
    %v5807 = vadd.f32 %v5613, %v5711
    %v5808 = vadd.f32 %v5614, %v5712
    %v5809 = vadd.f32 %v5615, %v5713
    %v5810 = vadd.f32 %v5616, %v5714
    %s5811 = sld [smem:[#allocation3 + $0xd]]
    %v5812 = vstv %s5811
    %v5813 = vmul.f32 %v49, %v5812
    %v5814 = vmul.f32 %v50, %v5812
    %v5815 = vmul.f32 %v51, %v5812
    %v5816 = vmul.f32 %v52, %v5812
    %v5817 = vmul.f32 %v53, %v5812
    %v5818 = vmul.f32 %v54, %v5812
    %v5819 = vmul.f32 %v55, %v5812
    %v5820 = vmul.f32 %v56, %v5812
    %v5821 = vmul.f32 %v57, %v5812
    %v5822 = vmul.f32 %v58, %v5812
    %v5823 = vmul.f32 %v59, %v5812
    %v5824 = vmul.f32 %v60, %v5812
    %v5825 = vmul.f32 %v61, %v5812
    %v5826 = vmul.f32 %v62, %v5812
    %v5827 = vmul.f32 %v63, %v5812
    %v5828 = vmul.f32 %v64, %v5812
    %v5829 = vmul.f32 %v65, %v5812
    %v5830 = vmul.f32 %v66, %v5812
    %v5831 = vmul.f32 %v67, %v5812
    %v5832 = vmul.f32 %v68, %v5812
    %v5833 = vmul.f32 %v69, %v5812
    %v5834 = vmul.f32 %v70, %v5812
    %v5835 = vmul.f32 %v71, %v5812
    %v5836 = vmul.f32 %v72, %v5812
    %v5837 = vmul.f32 %v73, %v5812
    %v5838 = vmul.f32 %v74, %v5812
    %v5839 = vmul.f32 %v75, %v5812
    %v5840 = vmul.f32 %v76, %v5812
    %v5841 = vmul.f32 %v77, %v5812
    %v5842 = vmul.f32 %v78, %v5812
    %v5843 = vmul.f32 %v79, %v5812
    %v5844 = vmul.f32 %v80, %v5812
    %v5845 = vmul.f32 %v81, %v5812
    %v5846 = vmul.f32 %v82, %v5812
    %v5847 = vmul.f32 %v83, %v5812
    %v5848 = vmul.f32 %v84, %v5812
    %v5849 = vmul.f32 %v85, %v5812
    %v5850 = vmul.f32 %v86, %v5812
    %v5851 = vmul.f32 %v87, %v5812
    %v5852 = vmul.f32 %v88, %v5812
    %v5853 = vmul.f32 %v89, %v5812
    %v5854 = vmul.f32 %v90, %v5812
    %v5855 = vmul.f32 %v91, %v5812
    %v5856 = vmul.f32 %v92, %v5812
    %v5857 = vmul.f32 %v93, %v5812
    %v5858 = vmul.f32 %v94, %v5812
    %v5859 = vmul.f32 %v95, %v5812
    %v5860 = vmul.f32 %v96, %v5812
    %v5861 = vmul.f32 %v97, %v5812
    %v5862 = vmul.f32 %v98, %v5812
    %v5863 = vmul.f32 %v99, %v5812
    %v5864 = vmul.f32 %v100, %v5812
    %v5865 = vmul.f32 %v101, %v5812
    %v5866 = vmul.f32 %v102, %v5812
    %v5867 = vmul.f32 %v103, %v5812
    %v5868 = vmul.f32 %v104, %v5812
    %v5869 = vmul.f32 %v105, %v5812
    %v5870 = vmul.f32 %v106, %v5812
    %v5871 = vmul.f32 %v107, %v5812
    %v5872 = vmul.f32 %v108, %v5812
    %v5873 = vmul.f32 %v109, %v5812
    %v5874 = vmul.f32 %v110, %v5812
    %v5875 = vmul.f32 %v111, %v5812
    %v5876 = vmul.f32 %v112, %v5812
    %v5877 = vmul.f32 %v113, %v5812
    %v5878 = vmul.f32 %v114, %v5812
    %v5879 = vmul.f32 %v115, %v5812
    %v5880 = vmul.f32 %v116, %v5812
    %v5881 = vmul.f32 %v117, %v5812
    %v5882 = vmul.f32 %v118, %v5812
    %v5883 = vmul.f32 %v119, %v5812
    %v5884 = vmul.f32 %v120, %v5812
    %v5885 = vmul.f32 %v121, %v5812
    %v5886 = vmul.f32 %v122, %v5812
    %v5887 = vmul.f32 %v123, %v5812
    %v5888 = vmul.f32 %v124, %v5812
    %v5889 = vmul.f32 %v125, %v5812
    %v5890 = vmul.f32 %v126, %v5812
    %v5891 = vmul.f32 %v127, %v5812
    %v5892 = vmul.f32 %v128, %v5812
    %v5893 = vmul.f32 %v129, %v5812
    %v5894 = vmul.f32 %v130, %v5812
    %v5895 = vmul.f32 %v131, %v5812
    %v5896 = vmul.f32 %v132, %v5812
    %v5897 = vmul.f32 %v133, %v5812
    %v5898 = vmul.f32 %v134, %v5812
    %v5899 = vmul.f32 %v135, %v5812
    %v5900 = vmul.f32 %v136, %v5812
    %v5901 = vmul.f32 %v137, %v5812
    %v5902 = vmul.f32 %v138, %v5812
    %v5903 = vmul.f32 %v139, %v5812
    %v5904 = vmul.f32 %v140, %v5812
    %v5905 = vmul.f32 %v141, %v5812
    %v5906 = vmul.f32 %v142, %v5812
    %v5907 = vmul.f32 %v143, %v5812
    %v5908 = vmul.f32 %v144, %v5812
    %v6005 = vrot.slane %v5813, 1
    %v6006 = vrot.slane %v5814, 1
    %v6007 = vsel %vm441, %v6005, %v6006
    %v6008 = vrot.slane %v5815, 1
    %v6009 = vsel %vm441, %v6006, %v6008
    %v6010 = vrot.slane %v5816, 1
    %v6011 = vsel %vm441, %v6008, %v6010
    %v6012 = vrot.slane %v5817, 1
    %v6013 = vrot.slane %v5818, 1
    %v6014 = vsel %vm441, %v6012, %v6013
    %v6015 = vrot.slane %v5819, 1
    %v6016 = vsel %vm441, %v6013, %v6015
    %v6017 = vrot.slane %v5820, 1
    %v6018 = vsel %vm441, %v6015, %v6017
    %v6019 = vrot.slane %v5821, 1
    %v6020 = vrot.slane %v5822, 1
    %v6021 = vsel %vm441, %v6019, %v6020
    %v6022 = vrot.slane %v5823, 1
    %v6023 = vsel %vm441, %v6020, %v6022
    %v6024 = vrot.slane %v5824, 1
    %v6025 = vsel %vm441, %v6022, %v6024
    %v6026 = vrot.slane %v5825, 1
    %v6027 = vrot.slane %v5826, 1
    %v6028 = vsel %vm441, %v6026, %v6027
    %v6029 = vrot.slane %v5827, 1
    %v6030 = vsel %vm441, %v6027, %v6029
    %v6031 = vrot.slane %v5828, 1
    %v6032 = vsel %vm441, %v6029, %v6031
    %v6033 = vrot.slane %v5829, 1
    %v6034 = vrot.slane %v5830, 1
    %v6035 = vsel %vm441, %v6033, %v6034
    %v6036 = vrot.slane %v5831, 1
    %v6037 = vsel %vm441, %v6034, %v6036
    %v6038 = vrot.slane %v5832, 1
    %v6039 = vsel %vm441, %v6036, %v6038
    %v6040 = vrot.slane %v5833, 1
    %v6041 = vrot.slane %v5834, 1
    %v6042 = vsel %vm441, %v6040, %v6041
    %v6043 = vrot.slane %v5835, 1
    %v6044 = vsel %vm441, %v6041, %v6043
    %v6045 = vrot.slane %v5836, 1
    %v6046 = vsel %vm441, %v6043, %v6045
    %v6047 = vrot.slane %v5837, 1
    %v6048 = vrot.slane %v5838, 1
    %v6049 = vsel %vm441, %v6047, %v6048
    %v6050 = vrot.slane %v5839, 1
    %v6051 = vsel %vm441, %v6048, %v6050
    %v6052 = vrot.slane %v5840, 1
    %v6053 = vsel %vm441, %v6050, %v6052
    %v6054 = vrot.slane %v5841, 1
    %v6055 = vrot.slane %v5842, 1
    %v6056 = vsel %vm441, %v6054, %v6055
    %v6057 = vrot.slane %v5843, 1
    %v6058 = vsel %vm441, %v6055, %v6057
    %v6059 = vrot.slane %v5844, 1
    %v6060 = vsel %vm441, %v6057, %v6059
    %v6061 = vrot.slane %v5845, 1
    %v6062 = vrot.slane %v5846, 1
    %v6063 = vsel %vm441, %v6061, %v6062
    %v6064 = vrot.slane %v5847, 1
    %v6065 = vsel %vm441, %v6062, %v6064
    %v6066 = vrot.slane %v5848, 1
    %v6067 = vsel %vm441, %v6064, %v6066
    %v6068 = vrot.slane %v5849, 1
    %v6069 = vrot.slane %v5850, 1
    %v6070 = vsel %vm441, %v6068, %v6069
    %v6071 = vrot.slane %v5851, 1
    %v6072 = vsel %vm441, %v6069, %v6071
    %v6073 = vrot.slane %v5852, 1
    %v6074 = vsel %vm441, %v6071, %v6073
    %v6075 = vrot.slane %v5853, 1
    %v6076 = vrot.slane %v5854, 1
    %v6077 = vsel %vm441, %v6075, %v6076
    %v6078 = vrot.slane %v5855, 1
    %v6079 = vsel %vm441, %v6076, %v6078
    %v6080 = vrot.slane %v5856, 1
    %v6081 = vsel %vm441, %v6078, %v6080
    %v6082 = vrot.slane %v5857, 1
    %v6083 = vrot.slane %v5858, 1
    %v6084 = vsel %vm441, %v6082, %v6083
    %v6085 = vrot.slane %v5859, 1
    %v6086 = vsel %vm441, %v6083, %v6085
    %v6087 = vrot.slane %v5860, 1
    %v6088 = vsel %vm441, %v6085, %v6087
    %v6089 = vrot.slane %v5861, 1
    %v6090 = vrot.slane %v5862, 1
    %v6091 = vsel %vm441, %v6089, %v6090
    %v6092 = vrot.slane %v5863, 1
    %v6093 = vsel %vm441, %v6090, %v6092
    %v6094 = vrot.slane %v5864, 1
    %v6095 = vsel %vm441, %v6092, %v6094
    %v6096 = vrot.slane %v5865, 1
    %v6097 = vrot.slane %v5866, 1
    %v6098 = vsel %vm441, %v6096, %v6097
    %v6099 = vrot.slane %v5867, 1
    %v6100 = vsel %vm441, %v6097, %v6099
    %v6101 = vrot.slane %v5868, 1
    %v6102 = vsel %vm441, %v6099, %v6101
    %v6103 = vrot.slane %v5869, 1
    %v6104 = vrot.slane %v5870, 1
    %v6105 = vsel %vm441, %v6103, %v6104
    %v6106 = vrot.slane %v5871, 1
    %v6107 = vsel %vm441, %v6104, %v6106
    %v6108 = vrot.slane %v5872, 1
    %v6109 = vsel %vm441, %v6106, %v6108
    %v6110 = vrot.slane %v5873, 1
    %v6111 = vrot.slane %v5874, 1
    %v6112 = vsel %vm441, %v6110, %v6111
    %v6113 = vrot.slane %v5875, 1
    %v6114 = vsel %vm441, %v6111, %v6113
    %v6115 = vrot.slane %v5876, 1
    %v6116 = vsel %vm441, %v6113, %v6115
    %v6117 = vrot.slane %v5877, 1
    %v6118 = vrot.slane %v5878, 1
    %v6119 = vsel %vm441, %v6117, %v6118
    %v6120 = vrot.slane %v5879, 1
    %v6121 = vsel %vm441, %v6118, %v6120
    %v6122 = vrot.slane %v5880, 1
    %v6123 = vsel %vm441, %v6120, %v6122
    %v6124 = vrot.slane %v5881, 1
    %v6125 = vrot.slane %v5882, 1
    %v6126 = vsel %vm441, %v6124, %v6125
    %v6127 = vrot.slane %v5883, 1
    %v6128 = vsel %vm441, %v6125, %v6127
    %v6129 = vrot.slane %v5884, 1
    %v6130 = vsel %vm441, %v6127, %v6129
    %v6131 = vrot.slane %v5885, 1
    %v6132 = vrot.slane %v5886, 1
    %v6133 = vsel %vm441, %v6131, %v6132
    %v6134 = vrot.slane %v5887, 1
    %v6135 = vsel %vm441, %v6132, %v6134
    %v6136 = vrot.slane %v5888, 1
    %v6137 = vsel %vm441, %v6134, %v6136
    %v6138 = vrot.slane %v5889, 1
    %v6139 = vrot.slane %v5890, 1
    %v6140 = vsel %vm441, %v6138, %v6139
    %v6141 = vrot.slane %v5891, 1
    %v6142 = vsel %vm441, %v6139, %v6141
    %v6143 = vrot.slane %v5892, 1
    %v6144 = vsel %vm441, %v6141, %v6143
    %v6145 = vrot.slane %v5893, 1
    %v6146 = vrot.slane %v5894, 1
    %v6147 = vsel %vm441, %v6145, %v6146
    %v6148 = vrot.slane %v5895, 1
    %v6149 = vsel %vm441, %v6146, %v6148
    %v6150 = vrot.slane %v5896, 1
    %v6151 = vsel %vm441, %v6148, %v6150
    %v6152 = vrot.slane %v5897, 1
    %v6153 = vrot.slane %v5898, 1
    %v6154 = vsel %vm441, %v6152, %v6153
    %v6155 = vrot.slane %v5899, 1
    %v6156 = vsel %vm441, %v6153, %v6155
    %v6157 = vrot.slane %v5900, 1
    %v6158 = vsel %vm441, %v6155, %v6157
    %v6159 = vrot.slane %v5901, 1
    %v6160 = vrot.slane %v5902, 1
    %v6161 = vsel %vm441, %v6159, %v6160
    %v6162 = vrot.slane %v5903, 1
    %v6163 = vsel %vm441, %v6160, %v6162
    %v6164 = vrot.slane %v5904, 1
    %v6165 = vsel %vm441, %v6162, %v6164
    %v6166 = vrot.slane %v5905, 1
    %v6167 = vrot.slane %v5906, 1
    %v6168 = vsel %vm441, %v6166, %v6167
    %v6169 = vrot.slane %v5907, 1
    %v6170 = vsel %vm441, %v6167, %v6169
    %v6171 = vrot.slane %v5908, 1
    %v6172 = vsel %vm441, %v6169, %v6171
    %v6269 = vadd.f32 %v5715, %v6007
    %v6270 = vadd.f32 %v5716, %v6009
    %v6271 = vadd.f32 %v5717, %v6011
    %v6272 = vadd.f32 %v5718, %v6010
    %v6273 = vadd.f32 %v5719, %v6014
    %v6274 = vadd.f32 %v5720, %v6016
    %v6275 = vadd.f32 %v5721, %v6018
    %v6276 = vadd.f32 %v5722, %v6017
    %v6277 = vadd.f32 %v5723, %v6021
    %v6278 = vadd.f32 %v5724, %v6023
    %v6279 = vadd.f32 %v5725, %v6025
    %v6280 = vadd.f32 %v5726, %v6024
    %v6281 = vadd.f32 %v5727, %v6028
    %v6282 = vadd.f32 %v5728, %v6030
    %v6283 = vadd.f32 %v5729, %v6032
    %v6284 = vadd.f32 %v5730, %v6031
    %v6285 = vadd.f32 %v5731, %v6035
    %v6286 = vadd.f32 %v5732, %v6037
    %v6287 = vadd.f32 %v5733, %v6039
    %v6288 = vadd.f32 %v5734, %v6038
    %v6289 = vadd.f32 %v5735, %v6042
    %v6290 = vadd.f32 %v5736, %v6044
    %v6291 = vadd.f32 %v5737, %v6046
    %v6292 = vadd.f32 %v5738, %v6045
    %v6293 = vadd.f32 %v5739, %v6049
    %v6294 = vadd.f32 %v5740, %v6051
    %v6295 = vadd.f32 %v5741, %v6053
    %v6296 = vadd.f32 %v5742, %v6052
    %v6297 = vadd.f32 %v5743, %v6056
    %v6298 = vadd.f32 %v5744, %v6058
    %v6299 = vadd.f32 %v5745, %v6060
    %v6300 = vadd.f32 %v5746, %v6059
    %v6301 = vadd.f32 %v5747, %v6063
    %v6302 = vadd.f32 %v5748, %v6065
    %v6303 = vadd.f32 %v5749, %v6067
    %v6304 = vadd.f32 %v5750, %v6066
    %v6305 = vadd.f32 %v5751, %v6070
    %v6306 = vadd.f32 %v5752, %v6072
    %v6307 = vadd.f32 %v5753, %v6074
    %v6308 = vadd.f32 %v5754, %v6073
    %v6309 = vadd.f32 %v5755, %v6077
    %v6310 = vadd.f32 %v5756, %v6079
    %v6311 = vadd.f32 %v5757, %v6081
    %v6312 = vadd.f32 %v5758, %v6080
    %v6313 = vadd.f32 %v5759, %v6084
    %v6314 = vadd.f32 %v5760, %v6086
    %v6315 = vadd.f32 %v5761, %v6088
    %v6316 = vadd.f32 %v5762, %v6087
    %v6317 = vadd.f32 %v5763, %v6091
    %v6318 = vadd.f32 %v5764, %v6093
    %v6319 = vadd.f32 %v5765, %v6095
    %v6320 = vadd.f32 %v5766, %v6094
    %v6321 = vadd.f32 %v5767, %v6098
    %v6322 = vadd.f32 %v5768, %v6100
    %v6323 = vadd.f32 %v5769, %v6102
    %v6324 = vadd.f32 %v5770, %v6101
    %v6325 = vadd.f32 %v5771, %v6105
    %v6326 = vadd.f32 %v5772, %v6107
    %v6327 = vadd.f32 %v5773, %v6109
    %v6328 = vadd.f32 %v5774, %v6108
    %v6329 = vadd.f32 %v5775, %v6112
    %v6330 = vadd.f32 %v5776, %v6114
    %v6331 = vadd.f32 %v5777, %v6116
    %v6332 = vadd.f32 %v5778, %v6115
    %v6333 = vadd.f32 %v5779, %v6119
    %v6334 = vadd.f32 %v5780, %v6121
    %v6335 = vadd.f32 %v5781, %v6123
    %v6336 = vadd.f32 %v5782, %v6122
    %v6337 = vadd.f32 %v5783, %v6126
    %v6338 = vadd.f32 %v5784, %v6128
    %v6339 = vadd.f32 %v5785, %v6130
    %v6340 = vadd.f32 %v5786, %v6129
    %v6341 = vadd.f32 %v5787, %v6133
    %v6342 = vadd.f32 %v5788, %v6135
    %v6343 = vadd.f32 %v5789, %v6137
    %v6344 = vadd.f32 %v5790, %v6136
    %v6345 = vadd.f32 %v5791, %v6140
    %v6346 = vadd.f32 %v5792, %v6142
    %v6347 = vadd.f32 %v5793, %v6144
    %v6348 = vadd.f32 %v5794, %v6143
    %v6349 = vadd.f32 %v5795, %v6147
    %v6350 = vadd.f32 %v5796, %v6149
    %v6351 = vadd.f32 %v5797, %v6151
    %v6352 = vadd.f32 %v5798, %v6150
    %v6353 = vadd.f32 %v5799, %v6154
    %v6354 = vadd.f32 %v5800, %v6156
    %v6355 = vadd.f32 %v5801, %v6158
    %v6356 = vadd.f32 %v5802, %v6157
    %v6357 = vadd.f32 %v5803, %v6161
    %v6358 = vadd.f32 %v5804, %v6163
    %v6359 = vadd.f32 %v5805, %v6165
    %v6360 = vadd.f32 %v5806, %v6164
    %v6361 = vadd.f32 %v5807, %v6168
    %v6362 = vadd.f32 %v5808, %v6170
    %v6363 = vadd.f32 %v5809, %v6172
    %v6364 = vadd.f32 %v5810, %v6171
    %s6365 = sld [smem:[#allocation3 + $0xe]]
    %v6366 = vstv %s6365
    %v6367 = vmul.f32 %v49, %v6366
    %v6368 = vmul.f32 %v50, %v6366
    %v6369 = vmul.f32 %v51, %v6366
    %v6370 = vmul.f32 %v52, %v6366
    %v6371 = vmul.f32 %v53, %v6366
    %v6372 = vmul.f32 %v54, %v6366
    %v6373 = vmul.f32 %v55, %v6366
    %v6374 = vmul.f32 %v56, %v6366
    %v6375 = vmul.f32 %v57, %v6366
    %v6376 = vmul.f32 %v58, %v6366
    %v6377 = vmul.f32 %v59, %v6366
    %v6378 = vmul.f32 %v60, %v6366
    %v6379 = vmul.f32 %v61, %v6366
    %v6380 = vmul.f32 %v62, %v6366
    %v6381 = vmul.f32 %v63, %v6366
    %v6382 = vmul.f32 %v64, %v6366
    %v6383 = vmul.f32 %v65, %v6366
    %v6384 = vmul.f32 %v66, %v6366
    %v6385 = vmul.f32 %v67, %v6366
    %v6386 = vmul.f32 %v68, %v6366
    %v6387 = vmul.f32 %v69, %v6366
    %v6388 = vmul.f32 %v70, %v6366
    %v6389 = vmul.f32 %v71, %v6366
    %v6390 = vmul.f32 %v72, %v6366
    %v6391 = vmul.f32 %v73, %v6366
    %v6392 = vmul.f32 %v74, %v6366
    %v6393 = vmul.f32 %v75, %v6366
    %v6394 = vmul.f32 %v76, %v6366
    %v6395 = vmul.f32 %v77, %v6366
    %v6396 = vmul.f32 %v78, %v6366
    %v6397 = vmul.f32 %v79, %v6366
    %v6398 = vmul.f32 %v80, %v6366
    %v6399 = vmul.f32 %v81, %v6366
    %v6400 = vmul.f32 %v82, %v6366
    %v6401 = vmul.f32 %v83, %v6366
    %v6402 = vmul.f32 %v84, %v6366
    %v6403 = vmul.f32 %v85, %v6366
    %v6404 = vmul.f32 %v86, %v6366
    %v6405 = vmul.f32 %v87, %v6366
    %v6406 = vmul.f32 %v88, %v6366
    %v6407 = vmul.f32 %v89, %v6366
    %v6408 = vmul.f32 %v90, %v6366
    %v6409 = vmul.f32 %v91, %v6366
    %v6410 = vmul.f32 %v92, %v6366
    %v6411 = vmul.f32 %v93, %v6366
    %v6412 = vmul.f32 %v94, %v6366
    %v6413 = vmul.f32 %v95, %v6366
    %v6414 = vmul.f32 %v96, %v6366
    %v6415 = vmul.f32 %v97, %v6366
    %v6416 = vmul.f32 %v98, %v6366
    %v6417 = vmul.f32 %v99, %v6366
    %v6418 = vmul.f32 %v100, %v6366
    %v6419 = vmul.f32 %v101, %v6366
    %v6420 = vmul.f32 %v102, %v6366
    %v6421 = vmul.f32 %v103, %v6366
    %v6422 = vmul.f32 %v104, %v6366
    %v6423 = vmul.f32 %v105, %v6366
    %v6424 = vmul.f32 %v106, %v6366
    %v6425 = vmul.f32 %v107, %v6366
    %v6426 = vmul.f32 %v108, %v6366
    %v6427 = vmul.f32 %v109, %v6366
    %v6428 = vmul.f32 %v110, %v6366
    %v6429 = vmul.f32 %v111, %v6366
    %v6430 = vmul.f32 %v112, %v6366
    %v6431 = vmul.f32 %v113, %v6366
    %v6432 = vmul.f32 %v114, %v6366
    %v6433 = vmul.f32 %v115, %v6366
    %v6434 = vmul.f32 %v116, %v6366
    %v6435 = vmul.f32 %v117, %v6366
    %v6436 = vmul.f32 %v118, %v6366
    %v6437 = vmul.f32 %v119, %v6366
    %v6438 = vmul.f32 %v120, %v6366
    %v6439 = vmul.f32 %v121, %v6366
    %v6440 = vmul.f32 %v122, %v6366
    %v6441 = vmul.f32 %v123, %v6366
    %v6442 = vmul.f32 %v124, %v6366
    %v6443 = vmul.f32 %v125, %v6366
    %v6444 = vmul.f32 %v126, %v6366
    %v6445 = vmul.f32 %v127, %v6366
    %v6446 = vmul.f32 %v128, %v6366
    %v6447 = vmul.f32 %v129, %v6366
    %v6448 = vmul.f32 %v130, %v6366
    %v6449 = vmul.f32 %v131, %v6366
    %v6450 = vmul.f32 %v132, %v6366
    %v6451 = vmul.f32 %v133, %v6366
    %v6452 = vmul.f32 %v134, %v6366
    %v6453 = vmul.f32 %v135, %v6366
    %v6454 = vmul.f32 %v136, %v6366
    %v6455 = vmul.f32 %v137, %v6366
    %v6456 = vmul.f32 %v138, %v6366
    %v6457 = vmul.f32 %v139, %v6366
    %v6458 = vmul.f32 %v140, %v6366
    %v6459 = vmul.f32 %v141, %v6366
    %v6460 = vmul.f32 %v142, %v6366
    %v6461 = vmul.f32 %v143, %v6366
    %v6462 = vmul.f32 %v144, %v6366
    %v6559 = vrot.slane %v6367, 2
    %v6560 = vrot.slane %v6368, 2
    %v6561 = vsel %vm996, %v6559, %v6560
    %v6562 = vrot.slane %v6369, 2
    %v6563 = vsel %vm996, %v6560, %v6562
    %v6564 = vrot.slane %v6370, 2
    %v6565 = vsel %vm996, %v6562, %v6564
    %v6566 = vrot.slane %v6371, 2
    %v6567 = vrot.slane %v6372, 2
    %v6568 = vsel %vm996, %v6566, %v6567
    %v6569 = vrot.slane %v6373, 2
    %v6570 = vsel %vm996, %v6567, %v6569
    %v6571 = vrot.slane %v6374, 2
    %v6572 = vsel %vm996, %v6569, %v6571
    %v6573 = vrot.slane %v6375, 2
    %v6574 = vrot.slane %v6376, 2
    %v6575 = vsel %vm996, %v6573, %v6574
    %v6576 = vrot.slane %v6377, 2
    %v6577 = vsel %vm996, %v6574, %v6576
    %v6578 = vrot.slane %v6378, 2
    %v6579 = vsel %vm996, %v6576, %v6578
    %v6580 = vrot.slane %v6379, 2
    %v6581 = vrot.slane %v6380, 2
    %v6582 = vsel %vm996, %v6580, %v6581
    %v6583 = vrot.slane %v6381, 2
    %v6584 = vsel %vm996, %v6581, %v6583
    %v6585 = vrot.slane %v6382, 2
    %v6586 = vsel %vm996, %v6583, %v6585
    %v6587 = vrot.slane %v6383, 2
    %v6588 = vrot.slane %v6384, 2
    %v6589 = vsel %vm996, %v6587, %v6588
    %v6590 = vrot.slane %v6385, 2
    %v6591 = vsel %vm996, %v6588, %v6590
    %v6592 = vrot.slane %v6386, 2
    %v6593 = vsel %vm996, %v6590, %v6592
    %v6594 = vrot.slane %v6387, 2
    %v6595 = vrot.slane %v6388, 2
    %v6596 = vsel %vm996, %v6594, %v6595
    %v6597 = vrot.slane %v6389, 2
    %v6598 = vsel %vm996, %v6595, %v6597
    %v6599 = vrot.slane %v6390, 2
    %v6600 = vsel %vm996, %v6597, %v6599
    %v6601 = vrot.slane %v6391, 2
    %v6602 = vrot.slane %v6392, 2
    %v6603 = vsel %vm996, %v6601, %v6602
    %v6604 = vrot.slane %v6393, 2
    %v6605 = vsel %vm996, %v6602, %v6604
    %v6606 = vrot.slane %v6394, 2
    %v6607 = vsel %vm996, %v6604, %v6606
    %v6608 = vrot.slane %v6395, 2
    %v6609 = vrot.slane %v6396, 2
    %v6610 = vsel %vm996, %v6608, %v6609
    %v6611 = vrot.slane %v6397, 2
    %v6612 = vsel %vm996, %v6609, %v6611
    %v6613 = vrot.slane %v6398, 2
    %v6614 = vsel %vm996, %v6611, %v6613
    %v6615 = vrot.slane %v6399, 2
    %v6616 = vrot.slane %v6400, 2
    %v6617 = vsel %vm996, %v6615, %v6616
    %v6618 = vrot.slane %v6401, 2
    %v6619 = vsel %vm996, %v6616, %v6618
    %v6620 = vrot.slane %v6402, 2
    %v6621 = vsel %vm996, %v6618, %v6620
    %v6622 = vrot.slane %v6403, 2
    %v6623 = vrot.slane %v6404, 2
    %v6624 = vsel %vm996, %v6622, %v6623
    %v6625 = vrot.slane %v6405, 2
    %v6626 = vsel %vm996, %v6623, %v6625
    %v6627 = vrot.slane %v6406, 2
    %v6628 = vsel %vm996, %v6625, %v6627
    %v6629 = vrot.slane %v6407, 2
    %v6630 = vrot.slane %v6408, 2
    %v6631 = vsel %vm996, %v6629, %v6630
    %v6632 = vrot.slane %v6409, 2
    %v6633 = vsel %vm996, %v6630, %v6632
    %v6634 = vrot.slane %v6410, 2
    %v6635 = vsel %vm996, %v6632, %v6634
    %v6636 = vrot.slane %v6411, 2
    %v6637 = vrot.slane %v6412, 2
    %v6638 = vsel %vm996, %v6636, %v6637
    %v6639 = vrot.slane %v6413, 2
    %v6640 = vsel %vm996, %v6637, %v6639
    %v6641 = vrot.slane %v6414, 2
    %v6642 = vsel %vm996, %v6639, %v6641
    %v6643 = vrot.slane %v6415, 2
    %v6644 = vrot.slane %v6416, 2
    %v6645 = vsel %vm996, %v6643, %v6644
    %v6646 = vrot.slane %v6417, 2
    %v6647 = vsel %vm996, %v6644, %v6646
    %v6648 = vrot.slane %v6418, 2
    %v6649 = vsel %vm996, %v6646, %v6648
    %v6650 = vrot.slane %v6419, 2
    %v6651 = vrot.slane %v6420, 2
    %v6652 = vsel %vm996, %v6650, %v6651
    %v6653 = vrot.slane %v6421, 2
    %v6654 = vsel %vm996, %v6651, %v6653
    %v6655 = vrot.slane %v6422, 2
    %v6656 = vsel %vm996, %v6653, %v6655
    %v6657 = vrot.slane %v6423, 2
    %v6658 = vrot.slane %v6424, 2
    %v6659 = vsel %vm996, %v6657, %v6658
    %v6660 = vrot.slane %v6425, 2
    %v6661 = vsel %vm996, %v6658, %v6660
    %v6662 = vrot.slane %v6426, 2
    %v6663 = vsel %vm996, %v6660, %v6662
    %v6664 = vrot.slane %v6427, 2
    %v6665 = vrot.slane %v6428, 2
    %v6666 = vsel %vm996, %v6664, %v6665
    %v6667 = vrot.slane %v6429, 2
    %v6668 = vsel %vm996, %v6665, %v6667
    %v6669 = vrot.slane %v6430, 2
    %v6670 = vsel %vm996, %v6667, %v6669
    %v6671 = vrot.slane %v6431, 2
    %v6672 = vrot.slane %v6432, 2
    %v6673 = vsel %vm996, %v6671, %v6672
    %v6674 = vrot.slane %v6433, 2
    %v6675 = vsel %vm996, %v6672, %v6674
    %v6676 = vrot.slane %v6434, 2
    %v6677 = vsel %vm996, %v6674, %v6676
    %v6678 = vrot.slane %v6435, 2
    %v6679 = vrot.slane %v6436, 2
    %v6680 = vsel %vm996, %v6678, %v6679
    %v6681 = vrot.slane %v6437, 2
    %v6682 = vsel %vm996, %v6679, %v6681
    %v6683 = vrot.slane %v6438, 2
    %v6684 = vsel %vm996, %v6681, %v6683
    %v6685 = vrot.slane %v6439, 2
    %v6686 = vrot.slane %v6440, 2
    %v6687 = vsel %vm996, %v6685, %v6686
    %v6688 = vrot.slane %v6441, 2
    %v6689 = vsel %vm996, %v6686, %v6688
    %v6690 = vrot.slane %v6442, 2
    %v6691 = vsel %vm996, %v6688, %v6690
    %v6692 = vrot.slane %v6443, 2
    %v6693 = vrot.slane %v6444, 2
    %v6694 = vsel %vm996, %v6692, %v6693
    %v6695 = vrot.slane %v6445, 2
    %v6696 = vsel %vm996, %v6693, %v6695
    %v6697 = vrot.slane %v6446, 2
    %v6698 = vsel %vm996, %v6695, %v6697
    %v6699 = vrot.slane %v6447, 2
    %v6700 = vrot.slane %v6448, 2
    %v6701 = vsel %vm996, %v6699, %v6700
    %v6702 = vrot.slane %v6449, 2
    %v6703 = vsel %vm996, %v6700, %v6702
    %v6704 = vrot.slane %v6450, 2
    %v6705 = vsel %vm996, %v6702, %v6704
    %v6706 = vrot.slane %v6451, 2
    %v6707 = vrot.slane %v6452, 2
    %v6708 = vsel %vm996, %v6706, %v6707
    %v6709 = vrot.slane %v6453, 2
    %v6710 = vsel %vm996, %v6707, %v6709
    %v6711 = vrot.slane %v6454, 2
    %v6712 = vsel %vm996, %v6709, %v6711
    %v6713 = vrot.slane %v6455, 2
    %v6714 = vrot.slane %v6456, 2
    %v6715 = vsel %vm996, %v6713, %v6714
    %v6716 = vrot.slane %v6457, 2
    %v6717 = vsel %vm996, %v6714, %v6716
    %v6718 = vrot.slane %v6458, 2
    %v6719 = vsel %vm996, %v6716, %v6718
    %v6720 = vrot.slane %v6459, 2
    %v6721 = vrot.slane %v6460, 2
    %v6722 = vsel %vm996, %v6720, %v6721
    %v6723 = vrot.slane %v6461, 2
    %v6724 = vsel %vm996, %v6721, %v6723
    %v6725 = vrot.slane %v6462, 2
    %v6726 = vsel %vm996, %v6723, %v6725
    %v6823 = vadd.f32 %v6269, %v6561
    %v6824 = vadd.f32 %v6270, %v6563
    %v6825 = vadd.f32 %v6271, %v6565
    %v6826 = vadd.f32 %v6272, %v6564
    %v6827 = vadd.f32 %v6273, %v6568
    %v6828 = vadd.f32 %v6274, %v6570
    %v6829 = vadd.f32 %v6275, %v6572
    %v6830 = vadd.f32 %v6276, %v6571
    %v6831 = vadd.f32 %v6277, %v6575
    %v6832 = vadd.f32 %v6278, %v6577
    %v6833 = vadd.f32 %v6279, %v6579
    %v6834 = vadd.f32 %v6280, %v6578
    %v6835 = vadd.f32 %v6281, %v6582
    %v6836 = vadd.f32 %v6282, %v6584
    %v6837 = vadd.f32 %v6283, %v6586
    %v6838 = vadd.f32 %v6284, %v6585
    %v6839 = vadd.f32 %v6285, %v6589
    %v6840 = vadd.f32 %v6286, %v6591
    %v6841 = vadd.f32 %v6287, %v6593
    %v6842 = vadd.f32 %v6288, %v6592
    %v6843 = vadd.f32 %v6289, %v6596
    %v6844 = vadd.f32 %v6290, %v6598
    %v6845 = vadd.f32 %v6291, %v6600
    %v6846 = vadd.f32 %v6292, %v6599
    %v6847 = vadd.f32 %v6293, %v6603
    %v6848 = vadd.f32 %v6294, %v6605
    %v6849 = vadd.f32 %v6295, %v6607
    %v6850 = vadd.f32 %v6296, %v6606
    %v6851 = vadd.f32 %v6297, %v6610
    %v6852 = vadd.f32 %v6298, %v6612
    %v6853 = vadd.f32 %v6299, %v6614
    %v6854 = vadd.f32 %v6300, %v6613
    %v6855 = vadd.f32 %v6301, %v6617
    %v6856 = vadd.f32 %v6302, %v6619
    %v6857 = vadd.f32 %v6303, %v6621
    %v6858 = vadd.f32 %v6304, %v6620
    %v6859 = vadd.f32 %v6305, %v6624
    %v6860 = vadd.f32 %v6306, %v6626
    %v6861 = vadd.f32 %v6307, %v6628
    %v6862 = vadd.f32 %v6308, %v6627
    %v6863 = vadd.f32 %v6309, %v6631
    %v6864 = vadd.f32 %v6310, %v6633
    %v6865 = vadd.f32 %v6311, %v6635
    %v6866 = vadd.f32 %v6312, %v6634
    %v6867 = vadd.f32 %v6313, %v6638
    %v6868 = vadd.f32 %v6314, %v6640
    %v6869 = vadd.f32 %v6315, %v6642
    %v6870 = vadd.f32 %v6316, %v6641
    %v6871 = vadd.f32 %v6317, %v6645
    %v6872 = vadd.f32 %v6318, %v6647
    %v6873 = vadd.f32 %v6319, %v6649
    %v6874 = vadd.f32 %v6320, %v6648
    %v6875 = vadd.f32 %v6321, %v6652
    %v6876 = vadd.f32 %v6322, %v6654
    %v6877 = vadd.f32 %v6323, %v6656
    %v6878 = vadd.f32 %v6324, %v6655
    %v6879 = vadd.f32 %v6325, %v6659
    %v6880 = vadd.f32 %v6326, %v6661
    %v6881 = vadd.f32 %v6327, %v6663
    %v6882 = vadd.f32 %v6328, %v6662
    %v6883 = vadd.f32 %v6329, %v6666
    %v6884 = vadd.f32 %v6330, %v6668
    %v6885 = vadd.f32 %v6331, %v6670
    %v6886 = vadd.f32 %v6332, %v6669
    %v6887 = vadd.f32 %v6333, %v6673
    %v6888 = vadd.f32 %v6334, %v6675
    %v6889 = vadd.f32 %v6335, %v6677
    %v6890 = vadd.f32 %v6336, %v6676
    %v6891 = vadd.f32 %v6337, %v6680
    %v6892 = vadd.f32 %v6338, %v6682
    %v6893 = vadd.f32 %v6339, %v6684
    %v6894 = vadd.f32 %v6340, %v6683
    %v6895 = vadd.f32 %v6341, %v6687
    %v6896 = vadd.f32 %v6342, %v6689
    %v6897 = vadd.f32 %v6343, %v6691
    %v6898 = vadd.f32 %v6344, %v6690
    %v6899 = vadd.f32 %v6345, %v6694
    %v6900 = vadd.f32 %v6346, %v6696
    %v6901 = vadd.f32 %v6347, %v6698
    %v6902 = vadd.f32 %v6348, %v6697
    %v6903 = vadd.f32 %v6349, %v6701
    %v6904 = vadd.f32 %v6350, %v6703
    %v6905 = vadd.f32 %v6351, %v6705
    %v6906 = vadd.f32 %v6352, %v6704
    %v6907 = vadd.f32 %v6353, %v6708
    %v6908 = vadd.f32 %v6354, %v6710
    %v6909 = vadd.f32 %v6355, %v6712
    %v6910 = vadd.f32 %v6356, %v6711
    %v6911 = vadd.f32 %v6357, %v6715
    %v6912 = vadd.f32 %v6358, %v6717
    %v6913 = vadd.f32 %v6359, %v6719
    %v6914 = vadd.f32 %v6360, %v6718
    %v6915 = vadd.f32 %v6361, %v6722
    %v6916 = vadd.f32 %v6362, %v6724
    %v6917 = vadd.f32 %v6363, %v6726
    %v6918 = vadd.f32 %v6364, %v6725
    %s6919 = sld [smem:[#allocation3 + $0xf]]
    %v6920 = vstv %s6919
    %v6921 = vmul.f32 %v53, %v6920
    %v6922 = vmul.f32 %v54, %v6920
    %v6923 = vmul.f32 %v55, %v6920
    %v6924 = vmul.f32 %v56, %v6920
    %v6925 = vmul.f32 %v57, %v6920
    %v6926 = vmul.f32 %v58, %v6920
    %v6927 = vmul.f32 %v59, %v6920
    %v6928 = vmul.f32 %v60, %v6920
    %v6929 = vmul.f32 %v61, %v6920
    %v6930 = vmul.f32 %v62, %v6920
    %v6931 = vmul.f32 %v63, %v6920
    %v6932 = vmul.f32 %v64, %v6920
    %v6933 = vmul.f32 %v65, %v6920
    %v6934 = vmul.f32 %v66, %v6920
    %v6935 = vmul.f32 %v67, %v6920
    %v6936 = vmul.f32 %v68, %v6920
    %v6937 = vmul.f32 %v69, %v6920
    %v6938 = vmul.f32 %v70, %v6920
    %v6939 = vmul.f32 %v71, %v6920
    %v6940 = vmul.f32 %v72, %v6920
    %v6941 = vmul.f32 %v73, %v6920
    %v6942 = vmul.f32 %v74, %v6920
    %v6943 = vmul.f32 %v75, %v6920
    %v6944 = vmul.f32 %v76, %v6920
    %v6945 = vmul.f32 %v77, %v6920
    %v6946 = vmul.f32 %v78, %v6920
    %v6947 = vmul.f32 %v79, %v6920
    %v6948 = vmul.f32 %v80, %v6920
    %v6949 = vmul.f32 %v81, %v6920
    %v6950 = vmul.f32 %v82, %v6920
    %v6951 = vmul.f32 %v83, %v6920
    %v6952 = vmul.f32 %v84, %v6920
    %v6953 = vmul.f32 %v85, %v6920
    %v6954 = vmul.f32 %v86, %v6920
    %v6955 = vmul.f32 %v87, %v6920
    %v6956 = vmul.f32 %v88, %v6920
    %v6957 = vmul.f32 %v89, %v6920
    %v6958 = vmul.f32 %v90, %v6920
    %v6959 = vmul.f32 %v91, %v6920
    %v6960 = vmul.f32 %v92, %v6920
    %v6961 = vmul.f32 %v93, %v6920
    %v6962 = vmul.f32 %v94, %v6920
    %v6963 = vmul.f32 %v95, %v6920
    %v6964 = vmul.f32 %v96, %v6920
    %v6965 = vmul.f32 %v97, %v6920
    %v6966 = vmul.f32 %v98, %v6920
    %v6967 = vmul.f32 %v99, %v6920
    %v6968 = vmul.f32 %v100, %v6920
    %v6969 = vmul.f32 %v101, %v6920
    %v6970 = vmul.f32 %v102, %v6920
    %v6971 = vmul.f32 %v103, %v6920
    %v6972 = vmul.f32 %v104, %v6920
    %v6973 = vmul.f32 %v105, %v6920
    %v6974 = vmul.f32 %v106, %v6920
    %v6975 = vmul.f32 %v107, %v6920
    %v6976 = vmul.f32 %v108, %v6920
    %v6977 = vmul.f32 %v109, %v6920
    %v6978 = vmul.f32 %v110, %v6920
    %v6979 = vmul.f32 %v111, %v6920
    %v6980 = vmul.f32 %v112, %v6920
    %v6981 = vmul.f32 %v113, %v6920
    %v6982 = vmul.f32 %v114, %v6920
    %v6983 = vmul.f32 %v115, %v6920
    %v6984 = vmul.f32 %v116, %v6920
    %v6985 = vmul.f32 %v117, %v6920
    %v6986 = vmul.f32 %v118, %v6920
    %v6987 = vmul.f32 %v119, %v6920
    %v6988 = vmul.f32 %v120, %v6920
    %v6989 = vmul.f32 %v121, %v6920
    %v6990 = vmul.f32 %v122, %v6920
    %v6991 = vmul.f32 %v123, %v6920
    %v6992 = vmul.f32 %v124, %v6920
    %v6993 = vmul.f32 %v125, %v6920
    %v6994 = vmul.f32 %v126, %v6920
    %v6995 = vmul.f32 %v127, %v6920
    %v6996 = vmul.f32 %v128, %v6920
    %v6997 = vmul.f32 %v129, %v6920
    %v6998 = vmul.f32 %v130, %v6920
    %v6999 = vmul.f32 %v131, %v6920
    %v7000 = vmul.f32 %v132, %v6920
    %v7001 = vmul.f32 %v133, %v6920
    %v7002 = vmul.f32 %v134, %v6920
    %v7003 = vmul.f32 %v135, %v6920
    %v7004 = vmul.f32 %v136, %v6920
    %v7005 = vmul.f32 %v137, %v6920
    %v7006 = vmul.f32 %v138, %v6920
    %v7007 = vmul.f32 %v139, %v6920
    %v7008 = vmul.f32 %v140, %v6920
    %v7009 = vmul.f32 %v141, %v6920
    %v7010 = vmul.f32 %v142, %v6920
    %v7011 = vmul.f32 %v143, %v6920
    %v7012 = vmul.f32 %v144, %v6920
    %v7013 = vmul.f32 %v145, %v6920
    %v7014 = vmul.f32 %v146, %v6920
    %v7015 = vmul.f32 %v147, %v6920
    %v7016 = vmul.f32 %v148, %v6920
    %v7017 = vadd.f32 %v6823, %v6921
    %v7018 = vadd.f32 %v6824, %v6922
    %v7019 = vadd.f32 %v6825, %v6923
    %v7020 = vadd.f32 %v6826, %v6924
    %v7021 = vadd.f32 %v6827, %v6925
    %v7022 = vadd.f32 %v6828, %v6926
    %v7023 = vadd.f32 %v6829, %v6927
    %v7024 = vadd.f32 %v6830, %v6928
    %v7025 = vadd.f32 %v6831, %v6929
    %v7026 = vadd.f32 %v6832, %v6930
    %v7027 = vadd.f32 %v6833, %v6931
    %v7028 = vadd.f32 %v6834, %v6932
    %v7029 = vadd.f32 %v6835, %v6933
    %v7030 = vadd.f32 %v6836, %v6934
    %v7031 = vadd.f32 %v6837, %v6935
    %v7032 = vadd.f32 %v6838, %v6936
    %v7033 = vadd.f32 %v6839, %v6937
    %v7034 = vadd.f32 %v6840, %v6938
    %v7035 = vadd.f32 %v6841, %v6939
    %v7036 = vadd.f32 %v6842, %v6940
    %v7037 = vadd.f32 %v6843, %v6941
    %v7038 = vadd.f32 %v6844, %v6942
    %v7039 = vadd.f32 %v6845, %v6943
    %v7040 = vadd.f32 %v6846, %v6944
    %v7041 = vadd.f32 %v6847, %v6945
    %v7042 = vadd.f32 %v6848, %v6946
    %v7043 = vadd.f32 %v6849, %v6947
    %v7044 = vadd.f32 %v6850, %v6948
    %v7045 = vadd.f32 %v6851, %v6949
    %v7046 = vadd.f32 %v6852, %v6950
    %v7047 = vadd.f32 %v6853, %v6951
    %v7048 = vadd.f32 %v6854, %v6952
    %v7049 = vadd.f32 %v6855, %v6953
    %v7050 = vadd.f32 %v6856, %v6954
    %v7051 = vadd.f32 %v6857, %v6955
    %v7052 = vadd.f32 %v6858, %v6956
    %v7053 = vadd.f32 %v6859, %v6957
    %v7054 = vadd.f32 %v6860, %v6958
    %v7055 = vadd.f32 %v6861, %v6959
    %v7056 = vadd.f32 %v6862, %v6960
    %v7057 = vadd.f32 %v6863, %v6961
    %v7058 = vadd.f32 %v6864, %v6962
    %v7059 = vadd.f32 %v6865, %v6963
    %v7060 = vadd.f32 %v6866, %v6964
    %v7061 = vadd.f32 %v6867, %v6965
    %v7062 = vadd.f32 %v6868, %v6966
    %v7063 = vadd.f32 %v6869, %v6967
    %v7064 = vadd.f32 %v6870, %v6968
    %v7065 = vadd.f32 %v6871, %v6969
    %v7066 = vadd.f32 %v6872, %v6970
    %v7067 = vadd.f32 %v6873, %v6971
    %v7068 = vadd.f32 %v6874, %v6972
    %v7069 = vadd.f32 %v6875, %v6973
    %v7070 = vadd.f32 %v6876, %v6974
    %v7071 = vadd.f32 %v6877, %v6975
    %v7072 = vadd.f32 %v6878, %v6976
    %v7073 = vadd.f32 %v6879, %v6977
    %v7074 = vadd.f32 %v6880, %v6978
    %v7075 = vadd.f32 %v6881, %v6979
    %v7076 = vadd.f32 %v6882, %v6980
    %v7077 = vadd.f32 %v6883, %v6981
    %v7078 = vadd.f32 %v6884, %v6982
    %v7079 = vadd.f32 %v6885, %v6983
    %v7080 = vadd.f32 %v6886, %v6984
    %v7081 = vadd.f32 %v6887, %v6985
    %v7082 = vadd.f32 %v6888, %v6986
    %v7083 = vadd.f32 %v6889, %v6987
    %v7084 = vadd.f32 %v6890, %v6988
    %v7085 = vadd.f32 %v6891, %v6989
    %v7086 = vadd.f32 %v6892, %v6990
    %v7087 = vadd.f32 %v6893, %v6991
    %v7088 = vadd.f32 %v6894, %v6992
    %v7089 = vadd.f32 %v6895, %v6993
    %v7090 = vadd.f32 %v6896, %v6994
    %v7091 = vadd.f32 %v6897, %v6995
    %v7092 = vadd.f32 %v6898, %v6996
    %v7093 = vadd.f32 %v6899, %v6997
    %v7094 = vadd.f32 %v6900, %v6998
    %v7095 = vadd.f32 %v6901, %v6999
    %v7096 = vadd.f32 %v6902, %v7000
    %v7097 = vadd.f32 %v6903, %v7001
    %v7098 = vadd.f32 %v6904, %v7002
    %v7099 = vadd.f32 %v6905, %v7003
    %v7100 = vadd.f32 %v6906, %v7004
    %v7101 = vadd.f32 %v6907, %v7005
    %v7102 = vadd.f32 %v6908, %v7006
    %v7103 = vadd.f32 %v6909, %v7007
    %v7104 = vadd.f32 %v6910, %v7008
    %v7105 = vadd.f32 %v6911, %v7009
    %v7106 = vadd.f32 %v6912, %v7010
    %v7107 = vadd.f32 %v6913, %v7011
    %v7108 = vadd.f32 %v6914, %v7012
    %v7109 = vadd.f32 %v6915, %v7013
    %v7110 = vadd.f32 %v6916, %v7014
    %v7111 = vadd.f32 %v6917, %v7015
    %v7112 = vadd.f32 %v6918, %v7016
    %s7113 = sld [smem:[#allocation3 + $0x10]]
    %v7114 = vstv %s7113
    %v7115 = vmul.f32 %v53, %v7114
    %v7116 = vmul.f32 %v54, %v7114
    %v7117 = vmul.f32 %v55, %v7114
    %v7118 = vmul.f32 %v56, %v7114
    %v7119 = vmul.f32 %v57, %v7114
    %v7120 = vmul.f32 %v58, %v7114
    %v7121 = vmul.f32 %v59, %v7114
    %v7122 = vmul.f32 %v60, %v7114
    %v7123 = vmul.f32 %v61, %v7114
    %v7124 = vmul.f32 %v62, %v7114
    %v7125 = vmul.f32 %v63, %v7114
    %v7126 = vmul.f32 %v64, %v7114
    %v7127 = vmul.f32 %v65, %v7114
    %v7128 = vmul.f32 %v66, %v7114
    %v7129 = vmul.f32 %v67, %v7114
    %v7130 = vmul.f32 %v68, %v7114
    %v7131 = vmul.f32 %v69, %v7114
    %v7132 = vmul.f32 %v70, %v7114
    %v7133 = vmul.f32 %v71, %v7114
    %v7134 = vmul.f32 %v72, %v7114
    %v7135 = vmul.f32 %v73, %v7114
    %v7136 = vmul.f32 %v74, %v7114
    %v7137 = vmul.f32 %v75, %v7114
    %v7138 = vmul.f32 %v76, %v7114
    %v7139 = vmul.f32 %v77, %v7114
    %v7140 = vmul.f32 %v78, %v7114
    %v7141 = vmul.f32 %v79, %v7114
    %v7142 = vmul.f32 %v80, %v7114
    %v7143 = vmul.f32 %v81, %v7114
    %v7144 = vmul.f32 %v82, %v7114
    %v7145 = vmul.f32 %v83, %v7114
    %v7146 = vmul.f32 %v84, %v7114
    %v7147 = vmul.f32 %v85, %v7114
    %v7148 = vmul.f32 %v86, %v7114
    %v7149 = vmul.f32 %v87, %v7114
    %v7150 = vmul.f32 %v88, %v7114
    %v7151 = vmul.f32 %v89, %v7114
    %v7152 = vmul.f32 %v90, %v7114
    %v7153 = vmul.f32 %v91, %v7114
    %v7154 = vmul.f32 %v92, %v7114
    %v7155 = vmul.f32 %v93, %v7114
    %v7156 = vmul.f32 %v94, %v7114
    %v7157 = vmul.f32 %v95, %v7114
    %v7158 = vmul.f32 %v96, %v7114
    %v7159 = vmul.f32 %v97, %v7114
    %v7160 = vmul.f32 %v98, %v7114
    %v7161 = vmul.f32 %v99, %v7114
    %v7162 = vmul.f32 %v100, %v7114
    %v7163 = vmul.f32 %v101, %v7114
    %v7164 = vmul.f32 %v102, %v7114
    %v7165 = vmul.f32 %v103, %v7114
    %v7166 = vmul.f32 %v104, %v7114
    %v7167 = vmul.f32 %v105, %v7114
    %v7168 = vmul.f32 %v106, %v7114
    %v7169 = vmul.f32 %v107, %v7114
    %v7170 = vmul.f32 %v108, %v7114
    %v7171 = vmul.f32 %v109, %v7114
    %v7172 = vmul.f32 %v110, %v7114
    %v7173 = vmul.f32 %v111, %v7114
    %v7174 = vmul.f32 %v112, %v7114
    %v7175 = vmul.f32 %v113, %v7114
    %v7176 = vmul.f32 %v114, %v7114
    %v7177 = vmul.f32 %v115, %v7114
    %v7178 = vmul.f32 %v116, %v7114
    %v7179 = vmul.f32 %v117, %v7114
    %v7180 = vmul.f32 %v118, %v7114
    %v7181 = vmul.f32 %v119, %v7114
    %v7182 = vmul.f32 %v120, %v7114
    %v7183 = vmul.f32 %v121, %v7114
    %v7184 = vmul.f32 %v122, %v7114
    %v7185 = vmul.f32 %v123, %v7114
    %v7186 = vmul.f32 %v124, %v7114
    %v7187 = vmul.f32 %v125, %v7114
    %v7188 = vmul.f32 %v126, %v7114
    %v7189 = vmul.f32 %v127, %v7114
    %v7190 = vmul.f32 %v128, %v7114
    %v7191 = vmul.f32 %v129, %v7114
    %v7192 = vmul.f32 %v130, %v7114
    %v7193 = vmul.f32 %v131, %v7114
    %v7194 = vmul.f32 %v132, %v7114
    %v7195 = vmul.f32 %v133, %v7114
    %v7196 = vmul.f32 %v134, %v7114
    %v7197 = vmul.f32 %v135, %v7114
    %v7198 = vmul.f32 %v136, %v7114
    %v7199 = vmul.f32 %v137, %v7114
    %v7200 = vmul.f32 %v138, %v7114
    %v7201 = vmul.f32 %v139, %v7114
    %v7202 = vmul.f32 %v140, %v7114
    %v7203 = vmul.f32 %v141, %v7114
    %v7204 = vmul.f32 %v142, %v7114
    %v7205 = vmul.f32 %v143, %v7114
    %v7206 = vmul.f32 %v144, %v7114
    %v7207 = vmul.f32 %v145, %v7114
    %v7208 = vmul.f32 %v146, %v7114
    %v7209 = vmul.f32 %v147, %v7114
    %v7210 = vmul.f32 %v148, %v7114
    %v7307 = vrot.slane %v7115, 1
    %v7308 = vrot.slane %v7116, 1
    %v7309 = vsel %vm441, %v7307, %v7308
    %v7310 = vrot.slane %v7117, 1
    %v7311 = vsel %vm441, %v7308, %v7310
    %v7312 = vrot.slane %v7118, 1
    %v7313 = vsel %vm441, %v7310, %v7312
    %v7314 = vrot.slane %v7119, 1
    %v7315 = vrot.slane %v7120, 1
    %v7316 = vsel %vm441, %v7314, %v7315
    %v7317 = vrot.slane %v7121, 1
    %v7318 = vsel %vm441, %v7315, %v7317
    %v7319 = vrot.slane %v7122, 1
    %v7320 = vsel %vm441, %v7317, %v7319
    %v7321 = vrot.slane %v7123, 1
    %v7322 = vrot.slane %v7124, 1
    %v7323 = vsel %vm441, %v7321, %v7322
    %v7324 = vrot.slane %v7125, 1
    %v7325 = vsel %vm441, %v7322, %v7324
    %v7326 = vrot.slane %v7126, 1
    %v7327 = vsel %vm441, %v7324, %v7326
    %v7328 = vrot.slane %v7127, 1
    %v7329 = vrot.slane %v7128, 1
    %v7330 = vsel %vm441, %v7328, %v7329
    %v7331 = vrot.slane %v7129, 1
    %v7332 = vsel %vm441, %v7329, %v7331
    %v7333 = vrot.slane %v7130, 1
    %v7334 = vsel %vm441, %v7331, %v7333
    %v7335 = vrot.slane %v7131, 1
    %v7336 = vrot.slane %v7132, 1
    %v7337 = vsel %vm441, %v7335, %v7336
    %v7338 = vrot.slane %v7133, 1
    %v7339 = vsel %vm441, %v7336, %v7338
    %v7340 = vrot.slane %v7134, 1
    %v7341 = vsel %vm441, %v7338, %v7340
    %v7342 = vrot.slane %v7135, 1
    %v7343 = vrot.slane %v7136, 1
    %v7344 = vsel %vm441, %v7342, %v7343
    %v7345 = vrot.slane %v7137, 1
    %v7346 = vsel %vm441, %v7343, %v7345
    %v7347 = vrot.slane %v7138, 1
    %v7348 = vsel %vm441, %v7345, %v7347
    %v7349 = vrot.slane %v7139, 1
    %v7350 = vrot.slane %v7140, 1
    %v7351 = vsel %vm441, %v7349, %v7350
    %v7352 = vrot.slane %v7141, 1
    %v7353 = vsel %vm441, %v7350, %v7352
    %v7354 = vrot.slane %v7142, 1
    %v7355 = vsel %vm441, %v7352, %v7354
    %v7356 = vrot.slane %v7143, 1
    %v7357 = vrot.slane %v7144, 1
    %v7358 = vsel %vm441, %v7356, %v7357
    %v7359 = vrot.slane %v7145, 1
    %v7360 = vsel %vm441, %v7357, %v7359
    %v7361 = vrot.slane %v7146, 1
    %v7362 = vsel %vm441, %v7359, %v7361
    %v7363 = vrot.slane %v7147, 1
    %v7364 = vrot.slane %v7148, 1
    %v7365 = vsel %vm441, %v7363, %v7364
    %v7366 = vrot.slane %v7149, 1
    %v7367 = vsel %vm441, %v7364, %v7366
    %v7368 = vrot.slane %v7150, 1
    %v7369 = vsel %vm441, %v7366, %v7368
    %v7370 = vrot.slane %v7151, 1
    %v7371 = vrot.slane %v7152, 1
    %v7372 = vsel %vm441, %v7370, %v7371
    %v7373 = vrot.slane %v7153, 1
    %v7374 = vsel %vm441, %v7371, %v7373
    %v7375 = vrot.slane %v7154, 1
    %v7376 = vsel %vm441, %v7373, %v7375
    %v7377 = vrot.slane %v7155, 1
    %v7378 = vrot.slane %v7156, 1
    %v7379 = vsel %vm441, %v7377, %v7378
    %v7380 = vrot.slane %v7157, 1
    %v7381 = vsel %vm441, %v7378, %v7380
    %v7382 = vrot.slane %v7158, 1
    %v7383 = vsel %vm441, %v7380, %v7382
    %v7384 = vrot.slane %v7159, 1
    %v7385 = vrot.slane %v7160, 1
    %v7386 = vsel %vm441, %v7384, %v7385
    %v7387 = vrot.slane %v7161, 1
    %v7388 = vsel %vm441, %v7385, %v7387
    %v7389 = vrot.slane %v7162, 1
    %v7390 = vsel %vm441, %v7387, %v7389
    %v7391 = vrot.slane %v7163, 1
    %v7392 = vrot.slane %v7164, 1
    %v7393 = vsel %vm441, %v7391, %v7392
    %v7394 = vrot.slane %v7165, 1
    %v7395 = vsel %vm441, %v7392, %v7394
    %v7396 = vrot.slane %v7166, 1
    %v7397 = vsel %vm441, %v7394, %v7396
    %v7398 = vrot.slane %v7167, 1
    %v7399 = vrot.slane %v7168, 1
    %v7400 = vsel %vm441, %v7398, %v7399
    %v7401 = vrot.slane %v7169, 1
    %v7402 = vsel %vm441, %v7399, %v7401
    %v7403 = vrot.slane %v7170, 1
    %v7404 = vsel %vm441, %v7401, %v7403
    %v7405 = vrot.slane %v7171, 1
    %v7406 = vrot.slane %v7172, 1
    %v7407 = vsel %vm441, %v7405, %v7406
    %v7408 = vrot.slane %v7173, 1
    %v7409 = vsel %vm441, %v7406, %v7408
    %v7410 = vrot.slane %v7174, 1
    %v7411 = vsel %vm441, %v7408, %v7410
    %v7412 = vrot.slane %v7175, 1
    %v7413 = vrot.slane %v7176, 1
    %v7414 = vsel %vm441, %v7412, %v7413
    %v7415 = vrot.slane %v7177, 1
    %v7416 = vsel %vm441, %v7413, %v7415
    %v7417 = vrot.slane %v7178, 1
    %v7418 = vsel %vm441, %v7415, %v7417
    %v7419 = vrot.slane %v7179, 1
    %v7420 = vrot.slane %v7180, 1
    %v7421 = vsel %vm441, %v7419, %v7420
    %v7422 = vrot.slane %v7181, 1
    %v7423 = vsel %vm441, %v7420, %v7422
    %v7424 = vrot.slane %v7182, 1
    %v7425 = vsel %vm441, %v7422, %v7424
    %v7426 = vrot.slane %v7183, 1
    %v7427 = vrot.slane %v7184, 1
    %v7428 = vsel %vm441, %v7426, %v7427
    %v7429 = vrot.slane %v7185, 1
    %v7430 = vsel %vm441, %v7427, %v7429
    %v7431 = vrot.slane %v7186, 1
    %v7432 = vsel %vm441, %v7429, %v7431
    %v7433 = vrot.slane %v7187, 1
    %v7434 = vrot.slane %v7188, 1
    %v7435 = vsel %vm441, %v7433, %v7434
    %v7436 = vrot.slane %v7189, 1
    %v7437 = vsel %vm441, %v7434, %v7436
    %v7438 = vrot.slane %v7190, 1
    %v7439 = vsel %vm441, %v7436, %v7438
    %v7440 = vrot.slane %v7191, 1
    %v7441 = vrot.slane %v7192, 1
    %v7442 = vsel %vm441, %v7440, %v7441
    %v7443 = vrot.slane %v7193, 1
    %v7444 = vsel %vm441, %v7441, %v7443
    %v7445 = vrot.slane %v7194, 1
    %v7446 = vsel %vm441, %v7443, %v7445
    %v7447 = vrot.slane %v7195, 1
    %v7448 = vrot.slane %v7196, 1
    %v7449 = vsel %vm441, %v7447, %v7448
    %v7450 = vrot.slane %v7197, 1
    %v7451 = vsel %vm441, %v7448, %v7450
    %v7452 = vrot.slane %v7198, 1
    %v7453 = vsel %vm441, %v7450, %v7452
    %v7454 = vrot.slane %v7199, 1
    %v7455 = vrot.slane %v7200, 1
    %v7456 = vsel %vm441, %v7454, %v7455
    %v7457 = vrot.slane %v7201, 1
    %v7458 = vsel %vm441, %v7455, %v7457
    %v7459 = vrot.slane %v7202, 1
    %v7460 = vsel %vm441, %v7457, %v7459
    %v7461 = vrot.slane %v7203, 1
    %v7462 = vrot.slane %v7204, 1
    %v7463 = vsel %vm441, %v7461, %v7462
    %v7464 = vrot.slane %v7205, 1
    %v7465 = vsel %vm441, %v7462, %v7464
    %v7466 = vrot.slane %v7206, 1
    %v7467 = vsel %vm441, %v7464, %v7466
    %v7468 = vrot.slane %v7207, 1
    %v7469 = vrot.slane %v7208, 1
    %v7470 = vsel %vm441, %v7468, %v7469
    %v7471 = vrot.slane %v7209, 1
    %v7472 = vsel %vm441, %v7469, %v7471
    %v7473 = vrot.slane %v7210, 1
    %v7474 = vsel %vm441, %v7471, %v7473
    %v7571 = vadd.f32 %v7017, %v7309
    %v7572 = vadd.f32 %v7018, %v7311
    %v7573 = vadd.f32 %v7019, %v7313
    %v7574 = vadd.f32 %v7020, %v7312
    %v7575 = vadd.f32 %v7021, %v7316
    %v7576 = vadd.f32 %v7022, %v7318
    %v7577 = vadd.f32 %v7023, %v7320
    %v7578 = vadd.f32 %v7024, %v7319
    %v7579 = vadd.f32 %v7025, %v7323
    %v7580 = vadd.f32 %v7026, %v7325
    %v7581 = vadd.f32 %v7027, %v7327
    %v7582 = vadd.f32 %v7028, %v7326
    %v7583 = vadd.f32 %v7029, %v7330
    %v7584 = vadd.f32 %v7030, %v7332
    %v7585 = vadd.f32 %v7031, %v7334
    %v7586 = vadd.f32 %v7032, %v7333
    %v7587 = vadd.f32 %v7033, %v7337
    %v7588 = vadd.f32 %v7034, %v7339
    %v7589 = vadd.f32 %v7035, %v7341
    %v7590 = vadd.f32 %v7036, %v7340
    %v7591 = vadd.f32 %v7037, %v7344
    %v7592 = vadd.f32 %v7038, %v7346
    %v7593 = vadd.f32 %v7039, %v7348
    %v7594 = vadd.f32 %v7040, %v7347
    %v7595 = vadd.f32 %v7041, %v7351
    %v7596 = vadd.f32 %v7042, %v7353
    %v7597 = vadd.f32 %v7043, %v7355
    %v7598 = vadd.f32 %v7044, %v7354
    %v7599 = vadd.f32 %v7045, %v7358
    %v7600 = vadd.f32 %v7046, %v7360
    %v7601 = vadd.f32 %v7047, %v7362
    %v7602 = vadd.f32 %v7048, %v7361
    %v7603 = vadd.f32 %v7049, %v7365
    %v7604 = vadd.f32 %v7050, %v7367
    %v7605 = vadd.f32 %v7051, %v7369
    %v7606 = vadd.f32 %v7052, %v7368
    %v7607 = vadd.f32 %v7053, %v7372
    %v7608 = vadd.f32 %v7054, %v7374
    %v7609 = vadd.f32 %v7055, %v7376
    %v7610 = vadd.f32 %v7056, %v7375
    %v7611 = vadd.f32 %v7057, %v7379
    %v7612 = vadd.f32 %v7058, %v7381
    %v7613 = vadd.f32 %v7059, %v7383
    %v7614 = vadd.f32 %v7060, %v7382
    %v7615 = vadd.f32 %v7061, %v7386
    %v7616 = vadd.f32 %v7062, %v7388
    %v7617 = vadd.f32 %v7063, %v7390
    %v7618 = vadd.f32 %v7064, %v7389
    %v7619 = vadd.f32 %v7065, %v7393
    %v7620 = vadd.f32 %v7066, %v7395
    %v7621 = vadd.f32 %v7067, %v7397
    %v7622 = vadd.f32 %v7068, %v7396
    %v7623 = vadd.f32 %v7069, %v7400
    %v7624 = vadd.f32 %v7070, %v7402
    %v7625 = vadd.f32 %v7071, %v7404
    %v7626 = vadd.f32 %v7072, %v7403
    %v7627 = vadd.f32 %v7073, %v7407
    %v7628 = vadd.f32 %v7074, %v7409
    %v7629 = vadd.f32 %v7075, %v7411
    %v7630 = vadd.f32 %v7076, %v7410
    %v7631 = vadd.f32 %v7077, %v7414
    %v7632 = vadd.f32 %v7078, %v7416
    %v7633 = vadd.f32 %v7079, %v7418
    %v7634 = vadd.f32 %v7080, %v7417
    %v7635 = vadd.f32 %v7081, %v7421
    %v7636 = vadd.f32 %v7082, %v7423
    %v7637 = vadd.f32 %v7083, %v7425
    %v7638 = vadd.f32 %v7084, %v7424
    %v7639 = vadd.f32 %v7085, %v7428
    %v7640 = vadd.f32 %v7086, %v7430
    %v7641 = vadd.f32 %v7087, %v7432
    %v7642 = vadd.f32 %v7088, %v7431
    %v7643 = vadd.f32 %v7089, %v7435
    %v7644 = vadd.f32 %v7090, %v7437
    %v7645 = vadd.f32 %v7091, %v7439
    %v7646 = vadd.f32 %v7092, %v7438
    %v7647 = vadd.f32 %v7093, %v7442
    %v7648 = vadd.f32 %v7094, %v7444
    %v7649 = vadd.f32 %v7095, %v7446
    %v7650 = vadd.f32 %v7096, %v7445
    %v7651 = vadd.f32 %v7097, %v7449
    %v7652 = vadd.f32 %v7098, %v7451
    %v7653 = vadd.f32 %v7099, %v7453
    %v7654 = vadd.f32 %v7100, %v7452
    %v7655 = vadd.f32 %v7101, %v7456
    %v7656 = vadd.f32 %v7102, %v7458
    %v7657 = vadd.f32 %v7103, %v7460
    %v7658 = vadd.f32 %v7104, %v7459
    %v7659 = vadd.f32 %v7105, %v7463
    %v7660 = vadd.f32 %v7106, %v7465
    %v7661 = vadd.f32 %v7107, %v7467
    %v7662 = vadd.f32 %v7108, %v7466
    %v7663 = vadd.f32 %v7109, %v7470
    %v7664 = vadd.f32 %v7110, %v7472
    %v7665 = vadd.f32 %v7111, %v7474
    %v7666 = vadd.f32 %v7112, %v7473
    %s7667 = sld [smem:[#allocation3 + $0x11]]
    %v7668 = vstv %s7667
    %v7669 = vmul.f32 %v53, %v7668
    %v7670 = vmul.f32 %v54, %v7668
    %v7671 = vmul.f32 %v55, %v7668
    %v7672 = vmul.f32 %v56, %v7668
    %v7673 = vmul.f32 %v57, %v7668
    %v7674 = vmul.f32 %v58, %v7668
    %v7675 = vmul.f32 %v59, %v7668
    %v7676 = vmul.f32 %v60, %v7668
    %v7677 = vmul.f32 %v61, %v7668
    %v7678 = vmul.f32 %v62, %v7668
    %v7679 = vmul.f32 %v63, %v7668
    %v7680 = vmul.f32 %v64, %v7668
    %v7681 = vmul.f32 %v65, %v7668
    %v7682 = vmul.f32 %v66, %v7668
    %v7683 = vmul.f32 %v67, %v7668
    %v7684 = vmul.f32 %v68, %v7668
    %v7685 = vmul.f32 %v69, %v7668
    %v7686 = vmul.f32 %v70, %v7668
    %v7687 = vmul.f32 %v71, %v7668
    %v7688 = vmul.f32 %v72, %v7668
    %v7689 = vmul.f32 %v73, %v7668
    %v7690 = vmul.f32 %v74, %v7668
    %v7691 = vmul.f32 %v75, %v7668
    %v7692 = vmul.f32 %v76, %v7668
    %v7693 = vmul.f32 %v77, %v7668
    %v7694 = vmul.f32 %v78, %v7668
    %v7695 = vmul.f32 %v79, %v7668
    %v7696 = vmul.f32 %v80, %v7668
    %v7697 = vmul.f32 %v81, %v7668
    %v7698 = vmul.f32 %v82, %v7668
    %v7699 = vmul.f32 %v83, %v7668
    %v7700 = vmul.f32 %v84, %v7668
    %v7701 = vmul.f32 %v85, %v7668
    %v7702 = vmul.f32 %v86, %v7668
    %v7703 = vmul.f32 %v87, %v7668
    %v7704 = vmul.f32 %v88, %v7668
    %v7705 = vmul.f32 %v89, %v7668
    %v7706 = vmul.f32 %v90, %v7668
    %v7707 = vmul.f32 %v91, %v7668
    %v7708 = vmul.f32 %v92, %v7668
    %v7709 = vmul.f32 %v93, %v7668
    %v7710 = vmul.f32 %v94, %v7668
    %v7711 = vmul.f32 %v95, %v7668
    %v7712 = vmul.f32 %v96, %v7668
    %v7713 = vmul.f32 %v97, %v7668
    %v7714 = vmul.f32 %v98, %v7668
    %v7715 = vmul.f32 %v99, %v7668
    %v7716 = vmul.f32 %v100, %v7668
    %v7717 = vmul.f32 %v101, %v7668
    %v7718 = vmul.f32 %v102, %v7668
    %v7719 = vmul.f32 %v103, %v7668
    %v7720 = vmul.f32 %v104, %v7668
    %v7721 = vmul.f32 %v105, %v7668
    %v7722 = vmul.f32 %v106, %v7668
    %v7723 = vmul.f32 %v107, %v7668
    %v7724 = vmul.f32 %v108, %v7668
    %v7725 = vmul.f32 %v109, %v7668
    %v7726 = vmul.f32 %v110, %v7668
    %v7727 = vmul.f32 %v111, %v7668
    %v7728 = vmul.f32 %v112, %v7668
    %v7729 = vmul.f32 %v113, %v7668
    %v7730 = vmul.f32 %v114, %v7668
    %v7731 = vmul.f32 %v115, %v7668
    %v7732 = vmul.f32 %v116, %v7668
    %v7733 = vmul.f32 %v117, %v7668
    %v7734 = vmul.f32 %v118, %v7668
    %v7735 = vmul.f32 %v119, %v7668
    %v7736 = vmul.f32 %v120, %v7668
    %v7737 = vmul.f32 %v121, %v7668
    %v7738 = vmul.f32 %v122, %v7668
    %v7739 = vmul.f32 %v123, %v7668
    %v7740 = vmul.f32 %v124, %v7668
    %v7741 = vmul.f32 %v125, %v7668
    %v7742 = vmul.f32 %v126, %v7668
    %v7743 = vmul.f32 %v127, %v7668
    %v7744 = vmul.f32 %v128, %v7668
    %v7745 = vmul.f32 %v129, %v7668
    %v7746 = vmul.f32 %v130, %v7668
    %v7747 = vmul.f32 %v131, %v7668
    %v7748 = vmul.f32 %v132, %v7668
    %v7749 = vmul.f32 %v133, %v7668
    %v7750 = vmul.f32 %v134, %v7668
    %v7751 = vmul.f32 %v135, %v7668
    %v7752 = vmul.f32 %v136, %v7668
    %v7753 = vmul.f32 %v137, %v7668
    %v7754 = vmul.f32 %v138, %v7668
    %v7755 = vmul.f32 %v139, %v7668
    %v7756 = vmul.f32 %v140, %v7668
    %v7757 = vmul.f32 %v141, %v7668
    %v7758 = vmul.f32 %v142, %v7668
    %v7759 = vmul.f32 %v143, %v7668
    %v7760 = vmul.f32 %v144, %v7668
    %v7761 = vmul.f32 %v145, %v7668
    %v7762 = vmul.f32 %v146, %v7668
    %v7763 = vmul.f32 %v147, %v7668
    %v7764 = vmul.f32 %v148, %v7668
    %v7861 = vrot.slane %v7669, 2
    %v7862 = vrot.slane %v7670, 2
    %v7863 = vsel %vm996, %v7861, %v7862
    %v7864 = vrot.slane %v7671, 2
    %v7865 = vsel %vm996, %v7862, %v7864
    %v7866 = vrot.slane %v7672, 2
    %v7867 = vsel %vm996, %v7864, %v7866
    %v7868 = vrot.slane %v7673, 2
    %v7869 = vrot.slane %v7674, 2
    %v7870 = vsel %vm996, %v7868, %v7869
    %v7871 = vrot.slane %v7675, 2
    %v7872 = vsel %vm996, %v7869, %v7871
    %v7873 = vrot.slane %v7676, 2
    %v7874 = vsel %vm996, %v7871, %v7873
    %v7875 = vrot.slane %v7677, 2
    %v7876 = vrot.slane %v7678, 2
    %v7877 = vsel %vm996, %v7875, %v7876
    %v7878 = vrot.slane %v7679, 2
    %v7879 = vsel %vm996, %v7876, %v7878
    %v7880 = vrot.slane %v7680, 2
    %v7881 = vsel %vm996, %v7878, %v7880
    %v7882 = vrot.slane %v7681, 2
    %v7883 = vrot.slane %v7682, 2
    %v7884 = vsel %vm996, %v7882, %v7883
    %v7885 = vrot.slane %v7683, 2
    %v7886 = vsel %vm996, %v7883, %v7885
    %v7887 = vrot.slane %v7684, 2
    %v7888 = vsel %vm996, %v7885, %v7887
    %v7889 = vrot.slane %v7685, 2
    %v7890 = vrot.slane %v7686, 2
    %v7891 = vsel %vm996, %v7889, %v7890
    %v7892 = vrot.slane %v7687, 2
    %v7893 = vsel %vm996, %v7890, %v7892
    %v7894 = vrot.slane %v7688, 2
    %v7895 = vsel %vm996, %v7892, %v7894
    %v7896 = vrot.slane %v7689, 2
    %v7897 = vrot.slane %v7690, 2
    %v7898 = vsel %vm996, %v7896, %v7897
    %v7899 = vrot.slane %v7691, 2
    %v7900 = vsel %vm996, %v7897, %v7899
    %v7901 = vrot.slane %v7692, 2
    %v7902 = vsel %vm996, %v7899, %v7901
    %v7903 = vrot.slane %v7693, 2
    %v7904 = vrot.slane %v7694, 2
    %v7905 = vsel %vm996, %v7903, %v7904
    %v7906 = vrot.slane %v7695, 2
    %v7907 = vsel %vm996, %v7904, %v7906
    %v7908 = vrot.slane %v7696, 2
    %v7909 = vsel %vm996, %v7906, %v7908
    %v7910 = vrot.slane %v7697, 2
    %v7911 = vrot.slane %v7698, 2
    %v7912 = vsel %vm996, %v7910, %v7911
    %v7913 = vrot.slane %v7699, 2
    %v7914 = vsel %vm996, %v7911, %v7913
    %v7915 = vrot.slane %v7700, 2
    %v7916 = vsel %vm996, %v7913, %v7915
    %v7917 = vrot.slane %v7701, 2
    %v7918 = vrot.slane %v7702, 2
    %v7919 = vsel %vm996, %v7917, %v7918
    %v7920 = vrot.slane %v7703, 2
    %v7921 = vsel %vm996, %v7918, %v7920
    %v7922 = vrot.slane %v7704, 2
    %v7923 = vsel %vm996, %v7920, %v7922
    %v7924 = vrot.slane %v7705, 2
    %v7925 = vrot.slane %v7706, 2
    %v7926 = vsel %vm996, %v7924, %v7925
    %v7927 = vrot.slane %v7707, 2
    %v7928 = vsel %vm996, %v7925, %v7927
    %v7929 = vrot.slane %v7708, 2
    %v7930 = vsel %vm996, %v7927, %v7929
    %v7931 = vrot.slane %v7709, 2
    %v7932 = vrot.slane %v7710, 2
    %v7933 = vsel %vm996, %v7931, %v7932
    %v7934 = vrot.slane %v7711, 2
    %v7935 = vsel %vm996, %v7932, %v7934
    %v7936 = vrot.slane %v7712, 2
    %v7937 = vsel %vm996, %v7934, %v7936
    %v7938 = vrot.slane %v7713, 2
    %v7939 = vrot.slane %v7714, 2
    %v7940 = vsel %vm996, %v7938, %v7939
    %v7941 = vrot.slane %v7715, 2
    %v7942 = vsel %vm996, %v7939, %v7941
    %v7943 = vrot.slane %v7716, 2
    %v7944 = vsel %vm996, %v7941, %v7943
    %v7945 = vrot.slane %v7717, 2
    %v7946 = vrot.slane %v7718, 2
    %v7947 = vsel %vm996, %v7945, %v7946
    %v7948 = vrot.slane %v7719, 2
    %v7949 = vsel %vm996, %v7946, %v7948
    %v7950 = vrot.slane %v7720, 2
    %v7951 = vsel %vm996, %v7948, %v7950
    %v7952 = vrot.slane %v7721, 2
    %v7953 = vrot.slane %v7722, 2
    %v7954 = vsel %vm996, %v7952, %v7953
    %v7955 = vrot.slane %v7723, 2
    %v7956 = vsel %vm996, %v7953, %v7955
    %v7957 = vrot.slane %v7724, 2
    %v7958 = vsel %vm996, %v7955, %v7957
    %v7959 = vrot.slane %v7725, 2
    %v7960 = vrot.slane %v7726, 2
    %v7961 = vsel %vm996, %v7959, %v7960
    %v7962 = vrot.slane %v7727, 2
    %v7963 = vsel %vm996, %v7960, %v7962
    %v7964 = vrot.slane %v7728, 2
    %v7965 = vsel %vm996, %v7962, %v7964
    %v7966 = vrot.slane %v7729, 2
    %v7967 = vrot.slane %v7730, 2
    %v7968 = vsel %vm996, %v7966, %v7967
    %v7969 = vrot.slane %v7731, 2
    %v7970 = vsel %vm996, %v7967, %v7969
    %v7971 = vrot.slane %v7732, 2
    %v7972 = vsel %vm996, %v7969, %v7971
    %v7973 = vrot.slane %v7733, 2
    %v7974 = vrot.slane %v7734, 2
    %v7975 = vsel %vm996, %v7973, %v7974
    %v7976 = vrot.slane %v7735, 2
    %v7977 = vsel %vm996, %v7974, %v7976
    %v7978 = vrot.slane %v7736, 2
    %v7979 = vsel %vm996, %v7976, %v7978
    %v7980 = vrot.slane %v7737, 2
    %v7981 = vrot.slane %v7738, 2
    %v7982 = vsel %vm996, %v7980, %v7981
    %v7983 = vrot.slane %v7739, 2
    %v7984 = vsel %vm996, %v7981, %v7983
    %v7985 = vrot.slane %v7740, 2
    %v7986 = vsel %vm996, %v7983, %v7985
    %v7987 = vrot.slane %v7741, 2
    %v7988 = vrot.slane %v7742, 2
    %v7989 = vsel %vm996, %v7987, %v7988
    %v7990 = vrot.slane %v7743, 2
    %v7991 = vsel %vm996, %v7988, %v7990
    %v7992 = vrot.slane %v7744, 2
    %v7993 = vsel %vm996, %v7990, %v7992
    %v7994 = vrot.slane %v7745, 2
    %v7995 = vrot.slane %v7746, 2
    %v7996 = vsel %vm996, %v7994, %v7995
    %v7997 = vrot.slane %v7747, 2
    %v7998 = vsel %vm996, %v7995, %v7997
    %v7999 = vrot.slane %v7748, 2
    %v8000 = vsel %vm996, %v7997, %v7999
    %v8001 = vrot.slane %v7749, 2
    %v8002 = vrot.slane %v7750, 2
    %v8003 = vsel %vm996, %v8001, %v8002
    %v8004 = vrot.slane %v7751, 2
    %v8005 = vsel %vm996, %v8002, %v8004
    %v8006 = vrot.slane %v7752, 2
    %v8007 = vsel %vm996, %v8004, %v8006
    %v8008 = vrot.slane %v7753, 2
    %v8009 = vrot.slane %v7754, 2
    %v8010 = vsel %vm996, %v8008, %v8009
    %v8011 = vrot.slane %v7755, 2
    %v8012 = vsel %vm996, %v8009, %v8011
    %v8013 = vrot.slane %v7756, 2
    %v8014 = vsel %vm996, %v8011, %v8013
    %v8015 = vrot.slane %v7757, 2
    %v8016 = vrot.slane %v7758, 2
    %v8017 = vsel %vm996, %v8015, %v8016
    %v8018 = vrot.slane %v7759, 2
    %v8019 = vsel %vm996, %v8016, %v8018
    %v8020 = vrot.slane %v7760, 2
    %v8021 = vsel %vm996, %v8018, %v8020
    %v8022 = vrot.slane %v7761, 2
    %v8023 = vrot.slane %v7762, 2
    %v8024 = vsel %vm996, %v8022, %v8023
    %v8025 = vrot.slane %v7763, 2
    %v8026 = vsel %vm996, %v8023, %v8025
    %v8027 = vrot.slane %v7764, 2
    %v8028 = vsel %vm996, %v8025, %v8027
    %v8125 = vadd.f32 %v7571, %v7863
    %v8126 = vadd.f32 %v7572, %v7865
    %v8127 = vadd.f32 %v7573, %v7867
    %v8128 = vadd.f32 %v7574, %v7866
    %v8129 = vadd.f32 %v7575, %v7870
    %v8130 = vadd.f32 %v7576, %v7872
    %v8131 = vadd.f32 %v7577, %v7874
    %v8132 = vadd.f32 %v7578, %v7873
    %v8133 = vadd.f32 %v7579, %v7877
    %v8134 = vadd.f32 %v7580, %v7879
    %v8135 = vadd.f32 %v7581, %v7881
    %v8136 = vadd.f32 %v7582, %v7880
    %v8137 = vadd.f32 %v7583, %v7884
    %v8138 = vadd.f32 %v7584, %v7886
    %v8139 = vadd.f32 %v7585, %v7888
    %v8140 = vadd.f32 %v7586, %v7887
    %v8141 = vadd.f32 %v7587, %v7891
    %v8142 = vadd.f32 %v7588, %v7893
    %v8143 = vadd.f32 %v7589, %v7895
    %v8144 = vadd.f32 %v7590, %v7894
    %v8145 = vadd.f32 %v7591, %v7898
    %v8146 = vadd.f32 %v7592, %v7900
    %v8147 = vadd.f32 %v7593, %v7902
    %v8148 = vadd.f32 %v7594, %v7901
    %v8149 = vadd.f32 %v7595, %v7905
    %v8150 = vadd.f32 %v7596, %v7907
    %v8151 = vadd.f32 %v7597, %v7909
    %v8152 = vadd.f32 %v7598, %v7908
    %v8153 = vadd.f32 %v7599, %v7912
    %v8154 = vadd.f32 %v7600, %v7914
    %v8155 = vadd.f32 %v7601, %v7916
    %v8156 = vadd.f32 %v7602, %v7915
    %v8157 = vadd.f32 %v7603, %v7919
    %v8158 = vadd.f32 %v7604, %v7921
    %v8159 = vadd.f32 %v7605, %v7923
    %v8160 = vadd.f32 %v7606, %v7922
    %v8161 = vadd.f32 %v7607, %v7926
    %v8162 = vadd.f32 %v7608, %v7928
    %v8163 = vadd.f32 %v7609, %v7930
    %v8164 = vadd.f32 %v7610, %v7929
    %v8165 = vadd.f32 %v7611, %v7933
    %v8166 = vadd.f32 %v7612, %v7935
    %v8167 = vadd.f32 %v7613, %v7937
    %v8168 = vadd.f32 %v7614, %v7936
    %v8169 = vadd.f32 %v7615, %v7940
    %v8170 = vadd.f32 %v7616, %v7942
    %v8171 = vadd.f32 %v7617, %v7944
    %v8172 = vadd.f32 %v7618, %v7943
    %v8173 = vadd.f32 %v7619, %v7947
    %v8174 = vadd.f32 %v7620, %v7949
    %v8175 = vadd.f32 %v7621, %v7951
    %v8176 = vadd.f32 %v7622, %v7950
    %v8177 = vadd.f32 %v7623, %v7954
    %v8178 = vadd.f32 %v7624, %v7956
    %v8179 = vadd.f32 %v7625, %v7958
    %v8180 = vadd.f32 %v7626, %v7957
    %v8181 = vadd.f32 %v7627, %v7961
    %v8182 = vadd.f32 %v7628, %v7963
    %v8183 = vadd.f32 %v7629, %v7965
    %v8184 = vadd.f32 %v7630, %v7964
    %v8185 = vadd.f32 %v7631, %v7968
    %v8186 = vadd.f32 %v7632, %v7970
    %v8187 = vadd.f32 %v7633, %v7972
    %v8188 = vadd.f32 %v7634, %v7971
    %v8189 = vadd.f32 %v7635, %v7975
    %v8190 = vadd.f32 %v7636, %v7977
    %v8191 = vadd.f32 %v7637, %v7979
    %v8192 = vadd.f32 %v7638, %v7978
    %v8193 = vadd.f32 %v7639, %v7982
    %v8194 = vadd.f32 %v7640, %v7984
    %v8195 = vadd.f32 %v7641, %v7986
    %v8196 = vadd.f32 %v7642, %v7985
    %v8197 = vadd.f32 %v7643, %v7989
    %v8198 = vadd.f32 %v7644, %v7991
    %v8199 = vadd.f32 %v7645, %v7993
    %v8200 = vadd.f32 %v7646, %v7992
    %v8201 = vadd.f32 %v7647, %v7996
    %v8202 = vadd.f32 %v7648, %v7998
    %v8203 = vadd.f32 %v7649, %v8000
    %v8204 = vadd.f32 %v7650, %v7999
    %v8205 = vadd.f32 %v7651, %v8003
    %v8206 = vadd.f32 %v7652, %v8005
    %v8207 = vadd.f32 %v7653, %v8007
    %v8208 = vadd.f32 %v7654, %v8006
    %v8209 = vadd.f32 %v7655, %v8010
    %v8210 = vadd.f32 %v7656, %v8012
    %v8211 = vadd.f32 %v7657, %v8014
    %v8212 = vadd.f32 %v7658, %v8013
    %v8213 = vadd.f32 %v7659, %v8017
    %v8214 = vadd.f32 %v7660, %v8019
    %v8215 = vadd.f32 %v7661, %v8021
    %v8216 = vadd.f32 %v7662, %v8020
    %v8217 = vadd.f32 %v7663, %v8024
    %v8218 = vadd.f32 %v7664, %v8026
    %v8219 = vadd.f32 %v7665, %v8028
    %v8220 = vadd.f32 %v7666, %v8027
    %s8221 = sld [smem:[#allocation5 + $0x1]]
    %v8222 = vstv %s8221
    %v8223 = vadd.f32 %v8125, %v8222
    %v8224 = vadd.f32 %v8126, %v8222
    %v8225 = vadd.f32 %v8127, %v8222
    %v8226 = vadd.f32 %v8128, %v8222
    %v8227 = vadd.f32 %v8129, %v8222
    %v8228 = vadd.f32 %v8130, %v8222
    %v8229 = vadd.f32 %v8131, %v8222
    %v8230 = vadd.f32 %v8132, %v8222
    %v8231 = vadd.f32 %v8133, %v8222
    %v8232 = vadd.f32 %v8134, %v8222
    %v8233 = vadd.f32 %v8135, %v8222
    %v8234 = vadd.f32 %v8136, %v8222
    %v8235 = vadd.f32 %v8137, %v8222
    %v8236 = vadd.f32 %v8138, %v8222
    %v8237 = vadd.f32 %v8139, %v8222
    %v8238 = vadd.f32 %v8140, %v8222
    %v8239 = vadd.f32 %v8141, %v8222
    %v8240 = vadd.f32 %v8142, %v8222
    %v8241 = vadd.f32 %v8143, %v8222
    %v8242 = vadd.f32 %v8144, %v8222
    %v8243 = vadd.f32 %v8145, %v8222
    %v8244 = vadd.f32 %v8146, %v8222
    %v8245 = vadd.f32 %v8147, %v8222
    %v8246 = vadd.f32 %v8148, %v8222
    %v8247 = vadd.f32 %v8149, %v8222
    %v8248 = vadd.f32 %v8150, %v8222
    %v8249 = vadd.f32 %v8151, %v8222
    %v8250 = vadd.f32 %v8152, %v8222
    %v8251 = vadd.f32 %v8153, %v8222
    %v8252 = vadd.f32 %v8154, %v8222
    %v8253 = vadd.f32 %v8155, %v8222
    %v8254 = vadd.f32 %v8156, %v8222
    %v8255 = vadd.f32 %v8157, %v8222
    %v8256 = vadd.f32 %v8158, %v8222
    %v8257 = vadd.f32 %v8159, %v8222
    %v8258 = vadd.f32 %v8160, %v8222
    %v8259 = vadd.f32 %v8161, %v8222
    %v8260 = vadd.f32 %v8162, %v8222
    %v8261 = vadd.f32 %v8163, %v8222
    %v8262 = vadd.f32 %v8164, %v8222
    %v8263 = vadd.f32 %v8165, %v8222
    %v8264 = vadd.f32 %v8166, %v8222
    %v8265 = vadd.f32 %v8167, %v8222
    %v8266 = vadd.f32 %v8168, %v8222
    %v8267 = vadd.f32 %v8169, %v8222
    %v8268 = vadd.f32 %v8170, %v8222
    %v8269 = vadd.f32 %v8171, %v8222
    %v8270 = vadd.f32 %v8172, %v8222
    %v8271 = vadd.f32 %v8173, %v8222
    %v8272 = vadd.f32 %v8174, %v8222
    %v8273 = vadd.f32 %v8175, %v8222
    %v8274 = vadd.f32 %v8176, %v8222
    %v8275 = vadd.f32 %v8177, %v8222
    %v8276 = vadd.f32 %v8178, %v8222
    %v8277 = vadd.f32 %v8179, %v8222
    %v8278 = vadd.f32 %v8180, %v8222
    %v8279 = vadd.f32 %v8181, %v8222
    %v8280 = vadd.f32 %v8182, %v8222
    %v8281 = vadd.f32 %v8183, %v8222
    %v8282 = vadd.f32 %v8184, %v8222
    %v8283 = vadd.f32 %v8185, %v8222
    %v8284 = vadd.f32 %v8186, %v8222
    %v8285 = vadd.f32 %v8187, %v8222
    %v8286 = vadd.f32 %v8188, %v8222
    %v8287 = vadd.f32 %v8189, %v8222
    %v8288 = vadd.f32 %v8190, %v8222
    %v8289 = vadd.f32 %v8191, %v8222
    %v8290 = vadd.f32 %v8192, %v8222
    %v8291 = vadd.f32 %v8193, %v8222
    %v8292 = vadd.f32 %v8194, %v8222
    %v8293 = vadd.f32 %v8195, %v8222
    %v8294 = vadd.f32 %v8196, %v8222
    %v8295 = vadd.f32 %v8197, %v8222
    %v8296 = vadd.f32 %v8198, %v8222
    %v8297 = vadd.f32 %v8199, %v8222
    %v8298 = vadd.f32 %v8200, %v8222
    %v8299 = vadd.f32 %v8201, %v8222
    %v8300 = vadd.f32 %v8202, %v8222
    %v8301 = vadd.f32 %v8203, %v8222
    %v8302 = vadd.f32 %v8204, %v8222
    %v8303 = vadd.f32 %v8205, %v8222
    %v8304 = vadd.f32 %v8206, %v8222
    %v8305 = vadd.f32 %v8207, %v8222
    %v8306 = vadd.f32 %v8208, %v8222
    %v8307 = vadd.f32 %v8209, %v8222
    %v8308 = vadd.f32 %v8210, %v8222
    %v8309 = vadd.f32 %v8211, %v8222
    %v8310 = vadd.f32 %v8212, %v8222
    %v8311 = vadd.f32 %v8213, %v8222
    %v8312 = vadd.f32 %v8214, %v8222
    %v8313 = vadd.f32 %v8215, %v8222
    %v8314 = vadd.f32 %v8216, %v8222
    %v8315 = vadd.f32 %v8217, %v8222
    %v8316 = vadd.f32 %v8218, %v8222
    %v8317 = vadd.f32 %v8219, %v8222
    %v8318 = vadd.f32 %v8220, %v8222
    %v8319 = vmax.f32 %v8223, %v8227
    %v8320 = vmax.f32 %v8224, %v8228
    %v8321 = vmax.f32 %v8225, %v8229
    %v8322 = vmax.f32 %v8226, %v8230
    %v8323 = vmax.f32 %v8319, %v8231
    %v8324 = vmax.f32 %v8320, %v8232
    %v8325 = vmax.f32 %v8321, %v8233
    %v8326 = vmax.f32 %v8322, %v8234
    %v8331 = vrot.slane %v8323, 1
    %v8332 = vrot.slane %v8324, 1
    %v8333 = vsel %vm441, %v8331, %v8332
    %v8334 = vrot.slane %v8325, 1
    %v8335 = vsel %vm441, %v8332, %v8334
    %v8336 = vrot.slane %v8326, 1
    %v8337 = vsel %vm441, %v8334, %v8336
    %v8341 = vmax.f32 %v8323, %v8333
    %v8342 = vmax.f32 %v8324, %v8335
    %v8343 = vmax.f32 %v8325, %v8337
    %v8344 = vrot.slane %v8323, 2
    %v8345 = vrot.slane %v8324, 2
    %v8346 = vsel %vm996, %v8344, %v8345
    %v8347 = vrot.slane %v8325, 2
    %v8348 = vsel %vm996, %v8345, %v8347
    %v8349 = vrot.slane %v8326, 2
    %v8350 = vsel %vm996, %v8347, %v8349
    %v8354 = vmax.f32 %v8341, %v8346
    %v8355 = vmax.f32 %v8342, %v8348
    %v8356 = vmax.f32 %v8343, %v8350
    %v8357 = vmax.f32 %v8354, 0.0
    %v8358 = vmax.f32 %v8355, 0.0
    %v8359 = vmax.f32 %v8356, 0.0
    %8360 = vst [vmem:[#allocation2 + $0xc0] sm:$0xff] %v8357
    %8361 = vst [vmem:[#allocation2 + $0xc8] sm:$0xff] %v8358
    %8362 = vst [vmem:[#allocation2 + $0xd0] sm:$0xff] %v8359
    %v8363 = vmax.f32 %v8235, %v8239
    %v8364 = vmax.f32 %v8236, %v8240
    %v8365 = vmax.f32 %v8237, %v8241
    %v8366 = vmax.f32 %v8238, %v8242
    %v8367 = vmax.f32 %v8363, %v8243
    %v8368 = vmax.f32 %v8364, %v8244
    %v8369 = vmax.f32 %v8365, %v8245
    %v8370 = vmax.f32 %v8366, %v8246
    %v8375 = vrot.slane %v8367, 1
    %v8376 = vrot.slane %v8368, 1
    %v8377 = vsel %vm441, %v8375, %v8376
    %v8378 = vrot.slane %v8369, 1
    %v8379 = vsel %vm441, %v8376, %v8378
    %v8380 = vrot.slane %v8370, 1
    %v8381 = vsel %vm441, %v8378, %v8380
    %v8385 = vmax.f32 %v8367, %v8377
    %v8386 = vmax.f32 %v8368, %v8379
    %v8387 = vmax.f32 %v8369, %v8381
    %v8388 = vrot.slane %v8367, 2
    %v8389 = vrot.slane %v8368, 2
    %v8390 = vsel %vm996, %v8388, %v8389
    %v8391 = vrot.slane %v8369, 2
    %v8392 = vsel %vm996, %v8389, %v8391
    %v8393 = vrot.slane %v8370, 2
    %v8394 = vsel %vm996, %v8391, %v8393
    %v8398 = vmax.f32 %v8385, %v8390
    %v8399 = vmax.f32 %v8386, %v8392
    %v8400 = vmax.f32 %v8387, %v8394
    %v8401 = vmax.f32 %v8398, 0.0
    %v8402 = vmax.f32 %v8399, 0.0
    %v8403 = vmax.f32 %v8400, 0.0
    %8404 = vst [vmem:[#allocation2 + $0xd8] sm:$0xff] %v8401
    %8405 = vst [vmem:[#allocation2 + $0xe0] sm:$0xff] %v8402
    %8406 = vst [vmem:[#allocation2 + $0xe8] sm:$0xff] %v8403
    %v8407 = vmax.f32 %v8247, %v8251
    %v8408 = vmax.f32 %v8248, %v8252
    %v8409 = vmax.f32 %v8249, %v8253
    %v8410 = vmax.f32 %v8250, %v8254
    %v8411 = vmax.f32 %v8407, %v8255
    %v8412 = vmax.f32 %v8408, %v8256
    %v8413 = vmax.f32 %v8409, %v8257
    %v8414 = vmax.f32 %v8410, %v8258
    %v8419 = vrot.slane %v8411, 1
    %v8420 = vrot.slane %v8412, 1
    %v8421 = vsel %vm441, %v8419, %v8420
    %v8422 = vrot.slane %v8413, 1
    %v8423 = vsel %vm441, %v8420, %v8422
    %v8424 = vrot.slane %v8414, 1
    %v8425 = vsel %vm441, %v8422, %v8424
    %v8429 = vmax.f32 %v8411, %v8421
    %v8430 = vmax.f32 %v8412, %v8423
    %v8431 = vmax.f32 %v8413, %v8425
    %v8432 = vrot.slane %v8411, 2
    %v8433 = vrot.slane %v8412, 2
    %v8434 = vsel %vm996, %v8432, %v8433
    %v8435 = vrot.slane %v8413, 2
    %v8436 = vsel %vm996, %v8433, %v8435
    %v8437 = vrot.slane %v8414, 2
    %v8438 = vsel %vm996, %v8435, %v8437
    %v8442 = vmax.f32 %v8429, %v8434
    %v8443 = vmax.f32 %v8430, %v8436
    %v8444 = vmax.f32 %v8431, %v8438
    %v8445 = vmax.f32 %v8442, 0.0
    %v8446 = vmax.f32 %v8443, 0.0
    %v8447 = vmax.f32 %v8444, 0.0
    %8448 = vst [vmem:[#allocation2 + $0xf0] sm:$0xff] %v8445
    %8449 = vst [vmem:[#allocation2 + $0xf8] sm:$0xff] %v8446
    %8450 = vst [vmem:[#allocation2 + $0x100] sm:$0xff] %v8447
    %v8451 = vmax.f32 %v8259, %v8263
    %v8452 = vmax.f32 %v8260, %v8264
    %v8453 = vmax.f32 %v8261, %v8265
    %v8454 = vmax.f32 %v8262, %v8266
    %v8455 = vmax.f32 %v8451, %v8267
    %v8456 = vmax.f32 %v8452, %v8268
    %v8457 = vmax.f32 %v8453, %v8269
    %v8458 = vmax.f32 %v8454, %v8270
    %v8463 = vrot.slane %v8455, 1
    %v8464 = vrot.slane %v8456, 1
    %v8465 = vsel %vm441, %v8463, %v8464
    %v8466 = vrot.slane %v8457, 1
    %v8467 = vsel %vm441, %v8464, %v8466
    %v8468 = vrot.slane %v8458, 1
    %v8469 = vsel %vm441, %v8466, %v8468
    %v8473 = vmax.f32 %v8455, %v8465
    %v8474 = vmax.f32 %v8456, %v8467
    %v8475 = vmax.f32 %v8457, %v8469
    %v8476 = vrot.slane %v8455, 2
    %v8477 = vrot.slane %v8456, 2
    %v8478 = vsel %vm996, %v8476, %v8477
    %v8479 = vrot.slane %v8457, 2
    %v8480 = vsel %vm996, %v8477, %v8479
    %v8481 = vrot.slane %v8458, 2
    %v8482 = vsel %vm996, %v8479, %v8481
    %v8486 = vmax.f32 %v8473, %v8478
    %v8487 = vmax.f32 %v8474, %v8480
    %v8488 = vmax.f32 %v8475, %v8482
    %v8489 = vmax.f32 %v8486, 0.0
    %v8490 = vmax.f32 %v8487, 0.0
    %v8491 = vmax.f32 %v8488, 0.0
    %8492 = vst [vmem:[#allocation2 + $0x108] sm:$0xff] %v8489
    %8493 = vst [vmem:[#allocation2 + $0x110] sm:$0xff] %v8490
    %8494 = vst [vmem:[#allocation2 + $0x118] sm:$0xff] %v8491
    %v8495 = vmax.f32 %v8271, %v8275
    %v8496 = vmax.f32 %v8272, %v8276
    %v8497 = vmax.f32 %v8273, %v8277
    %v8498 = vmax.f32 %v8274, %v8278
    %v8499 = vmax.f32 %v8495, %v8279
    %v8500 = vmax.f32 %v8496, %v8280
    %v8501 = vmax.f32 %v8497, %v8281
    %v8502 = vmax.f32 %v8498, %v8282
    %v8507 = vrot.slane %v8499, 1
    %v8508 = vrot.slane %v8500, 1
    %v8509 = vsel %vm441, %v8507, %v8508
    %v8510 = vrot.slane %v8501, 1
    %v8511 = vsel %vm441, %v8508, %v8510
    %v8512 = vrot.slane %v8502, 1
    %v8513 = vsel %vm441, %v8510, %v8512
    %v8517 = vmax.f32 %v8499, %v8509
    %v8518 = vmax.f32 %v8500, %v8511
    %v8519 = vmax.f32 %v8501, %v8513
    %v8520 = vrot.slane %v8499, 2
    %v8521 = vrot.slane %v8500, 2
    %v8522 = vsel %vm996, %v8520, %v8521
    %v8523 = vrot.slane %v8501, 2
    %v8524 = vsel %vm996, %v8521, %v8523
    %v8525 = vrot.slane %v8502, 2
    %v8526 = vsel %vm996, %v8523, %v8525
    %v8530 = vmax.f32 %v8517, %v8522
    %v8531 = vmax.f32 %v8518, %v8524
    %v8532 = vmax.f32 %v8519, %v8526
    %v8533 = vmax.f32 %v8530, 0.0
    %v8534 = vmax.f32 %v8531, 0.0
    %v8535 = vmax.f32 %v8532, 0.0
    %8536 = vst [vmem:[#allocation2 + $0x120] sm:$0xff] %v8533
    %8537 = vst [vmem:[#allocation2 + $0x128] sm:$0xff] %v8534
    %8538 = vst [vmem:[#allocation2 + $0x130] sm:$0xff] %v8535
    %v8539 = vmax.f32 %v8283, %v8287
    %v8540 = vmax.f32 %v8284, %v8288
    %v8541 = vmax.f32 %v8285, %v8289
    %v8542 = vmax.f32 %v8286, %v8290
    %v8543 = vmax.f32 %v8539, %v8291
    %v8544 = vmax.f32 %v8540, %v8292
    %v8545 = vmax.f32 %v8541, %v8293
    %v8546 = vmax.f32 %v8542, %v8294
    %v8551 = vrot.slane %v8543, 1
    %v8552 = vrot.slane %v8544, 1
    %v8553 = vsel %vm441, %v8551, %v8552
    %v8554 = vrot.slane %v8545, 1
    %v8555 = vsel %vm441, %v8552, %v8554
    %v8556 = vrot.slane %v8546, 1
    %v8557 = vsel %vm441, %v8554, %v8556
    %v8561 = vmax.f32 %v8543, %v8553
    %v8562 = vmax.f32 %v8544, %v8555
    %v8563 = vmax.f32 %v8545, %v8557
    %v8564 = vrot.slane %v8543, 2
    %v8565 = vrot.slane %v8544, 2
    %v8566 = vsel %vm996, %v8564, %v8565
    %v8567 = vrot.slane %v8545, 2
    %v8568 = vsel %vm996, %v8565, %v8567
    %v8569 = vrot.slane %v8546, 2
    %v8570 = vsel %vm996, %v8567, %v8569
    %v8574 = vmax.f32 %v8561, %v8566
    %v8575 = vmax.f32 %v8562, %v8568
    %v8576 = vmax.f32 %v8563, %v8570
    %v8577 = vmax.f32 %v8574, 0.0
    %v8578 = vmax.f32 %v8575, 0.0
    %v8579 = vmax.f32 %v8576, 0.0
    %8580 = vst [vmem:[#allocation2 + $0x138] sm:$0xff] %v8577
    %8581 = vst [vmem:[#allocation2 + $0x140] sm:$0xff] %v8578
    %8582 = vst [vmem:[#allocation2 + $0x148] sm:$0xff] %v8579
    %v8583 = vmax.f32 %v8295, %v8299
    %v8584 = vmax.f32 %v8296, %v8300
    %v8585 = vmax.f32 %v8297, %v8301
    %v8586 = vmax.f32 %v8298, %v8302
    %v8587 = vmax.f32 %v8583, %v8303
    %v8588 = vmax.f32 %v8584, %v8304
    %v8589 = vmax.f32 %v8585, %v8305
    %v8590 = vmax.f32 %v8586, %v8306
    %v8595 = vrot.slane %v8587, 1
    %v8596 = vrot.slane %v8588, 1
    %v8597 = vsel %vm441, %v8595, %v8596
    %v8598 = vrot.slane %v8589, 1
    %v8599 = vsel %vm441, %v8596, %v8598
    %v8600 = vrot.slane %v8590, 1
    %v8601 = vsel %vm441, %v8598, %v8600
    %v8605 = vmax.f32 %v8587, %v8597
    %v8606 = vmax.f32 %v8588, %v8599
    %v8607 = vmax.f32 %v8589, %v8601
    %v8608 = vrot.slane %v8587, 2
    %v8609 = vrot.slane %v8588, 2
    %v8610 = vsel %vm996, %v8608, %v8609
    %v8611 = vrot.slane %v8589, 2
    %v8612 = vsel %vm996, %v8609, %v8611
    %v8613 = vrot.slane %v8590, 2
    %v8614 = vsel %vm996, %v8611, %v8613
    %v8618 = vmax.f32 %v8605, %v8610
    %v8619 = vmax.f32 %v8606, %v8612
    %v8620 = vmax.f32 %v8607, %v8614
    %v8621 = vmax.f32 %v8618, 0.0
    %v8622 = vmax.f32 %v8619, 0.0
    %v8623 = vmax.f32 %v8620, 0.0
    %8624 = vst [vmem:[#allocation2 + $0x150] sm:$0xff] %v8621
    %8625 = vst [vmem:[#allocation2 + $0x158] sm:$0xff] %v8622
    %8626 = vst [vmem:[#allocation2 + $0x160] sm:$0xff] %v8623
    %v8627 = vmax.f32 %v8307, %v8311
    %v8628 = vmax.f32 %v8308, %v8312
    %v8629 = vmax.f32 %v8309, %v8313
    %v8630 = vmax.f32 %v8310, %v8314
    %v8631 = vmax.f32 %v8627, %v8315
    %v8632 = vmax.f32 %v8628, %v8316
    %v8633 = vmax.f32 %v8629, %v8317
    %v8634 = vmax.f32 %v8630, %v8318
    %v8639 = vrot.slane %v8631, 1
    %v8640 = vrot.slane %v8632, 1
    %v8641 = vsel %vm441, %v8639, %v8640
    %v8642 = vrot.slane %v8633, 1
    %v8643 = vsel %vm441, %v8640, %v8642
    %v8644 = vrot.slane %v8634, 1
    %v8645 = vsel %vm441, %v8642, %v8644
    %v8649 = vmax.f32 %v8631, %v8641
    %v8650 = vmax.f32 %v8632, %v8643
    %v8651 = vmax.f32 %v8633, %v8645
    %v8652 = vrot.slane %v8631, 2
    %v8653 = vrot.slane %v8632, 2
    %v8654 = vsel %vm996, %v8652, %v8653
    %v8655 = vrot.slane %v8633, 2
    %v8656 = vsel %vm996, %v8653, %v8655
    %v8657 = vrot.slane %v8634, 2
    %v8658 = vsel %vm996, %v8655, %v8657
    %v8662 = vmax.f32 %v8649, %v8654
    %v8663 = vmax.f32 %v8650, %v8656
    %v8664 = vmax.f32 %v8651, %v8658
    %v8665 = vmax.f32 %v8662, 0.0
    %v8666 = vmax.f32 %v8663, 0.0
    %v8667 = vmax.f32 %v8664, 0.0
    %8668 = vst [vmem:[#allocation2 + $0x168] sm:$0xff] %v8665
    %8669 = vst [vmem:[#allocation2 + $0x170] sm:$0xff] %v8666
    %8670 = vst [vmem:[#allocation2 + $0x178] sm:$0xff] %v8667
    %s8671 = sld [smem:[#allocation3 + $0x12]]
    %v8672 = vstv %s8671
    %v8673 = vmul.f32 %v45, %v8672
    %v8674 = vmul.f32 %v46, %v8672
    %v8675 = vmul.f32 %v47, %v8672
    %v8676 = vmul.f32 %v48, %v8672
    %v8677 = vmul.f32 %v49, %v8672
    %v8678 = vmul.f32 %v50, %v8672
    %v8679 = vmul.f32 %v51, %v8672
    %v8680 = vmul.f32 %v52, %v8672
    %v8681 = vmul.f32 %v53, %v8672
    %v8682 = vmul.f32 %v54, %v8672
    %v8683 = vmul.f32 %v55, %v8672
    %v8684 = vmul.f32 %v56, %v8672
    %v8685 = vmul.f32 %v57, %v8672
    %v8686 = vmul.f32 %v58, %v8672
    %v8687 = vmul.f32 %v59, %v8672
    %v8688 = vmul.f32 %v60, %v8672
    %v8689 = vmul.f32 %v61, %v8672
    %v8690 = vmul.f32 %v62, %v8672
    %v8691 = vmul.f32 %v63, %v8672
    %v8692 = vmul.f32 %v64, %v8672
    %v8693 = vmul.f32 %v65, %v8672
    %v8694 = vmul.f32 %v66, %v8672
    %v8695 = vmul.f32 %v67, %v8672
    %v8696 = vmul.f32 %v68, %v8672
    %v8697 = vmul.f32 %v69, %v8672
    %v8698 = vmul.f32 %v70, %v8672
    %v8699 = vmul.f32 %v71, %v8672
    %v8700 = vmul.f32 %v72, %v8672
    %v8701 = vmul.f32 %v73, %v8672
    %v8702 = vmul.f32 %v74, %v8672
    %v8703 = vmul.f32 %v75, %v8672
    %v8704 = vmul.f32 %v76, %v8672
    %v8705 = vmul.f32 %v77, %v8672
    %v8706 = vmul.f32 %v78, %v8672
    %v8707 = vmul.f32 %v79, %v8672
    %v8708 = vmul.f32 %v80, %v8672
    %v8709 = vmul.f32 %v81, %v8672
    %v8710 = vmul.f32 %v82, %v8672
    %v8711 = vmul.f32 %v83, %v8672
    %v8712 = vmul.f32 %v84, %v8672
    %v8713 = vmul.f32 %v85, %v8672
    %v8714 = vmul.f32 %v86, %v8672
    %v8715 = vmul.f32 %v87, %v8672
    %v8716 = vmul.f32 %v88, %v8672
    %v8717 = vmul.f32 %v89, %v8672
    %v8718 = vmul.f32 %v90, %v8672
    %v8719 = vmul.f32 %v91, %v8672
    %v8720 = vmul.f32 %v92, %v8672
    %v8721 = vmul.f32 %v93, %v8672
    %v8722 = vmul.f32 %v94, %v8672
    %v8723 = vmul.f32 %v95, %v8672
    %v8724 = vmul.f32 %v96, %v8672
    %v8725 = vmul.f32 %v97, %v8672
    %v8726 = vmul.f32 %v98, %v8672
    %v8727 = vmul.f32 %v99, %v8672
    %v8728 = vmul.f32 %v100, %v8672
    %v8729 = vmul.f32 %v101, %v8672
    %v8730 = vmul.f32 %v102, %v8672
    %v8731 = vmul.f32 %v103, %v8672
    %v8732 = vmul.f32 %v104, %v8672
    %v8733 = vmul.f32 %v105, %v8672
    %v8734 = vmul.f32 %v106, %v8672
    %v8735 = vmul.f32 %v107, %v8672
    %v8736 = vmul.f32 %v108, %v8672
    %v8737 = vmul.f32 %v109, %v8672
    %v8738 = vmul.f32 %v110, %v8672
    %v8739 = vmul.f32 %v111, %v8672
    %v8740 = vmul.f32 %v112, %v8672
    %v8741 = vmul.f32 %v113, %v8672
    %v8742 = vmul.f32 %v114, %v8672
    %v8743 = vmul.f32 %v115, %v8672
    %v8744 = vmul.f32 %v116, %v8672
    %v8745 = vmul.f32 %v117, %v8672
    %v8746 = vmul.f32 %v118, %v8672
    %v8747 = vmul.f32 %v119, %v8672
    %v8748 = vmul.f32 %v120, %v8672
    %v8749 = vmul.f32 %v121, %v8672
    %v8750 = vmul.f32 %v122, %v8672
    %v8751 = vmul.f32 %v123, %v8672
    %v8752 = vmul.f32 %v124, %v8672
    %v8753 = vmul.f32 %v125, %v8672
    %v8754 = vmul.f32 %v126, %v8672
    %v8755 = vmul.f32 %v127, %v8672
    %v8756 = vmul.f32 %v128, %v8672
    %v8757 = vmul.f32 %v129, %v8672
    %v8758 = vmul.f32 %v130, %v8672
    %v8759 = vmul.f32 %v131, %v8672
    %v8760 = vmul.f32 %v132, %v8672
    %v8761 = vmul.f32 %v133, %v8672
    %v8762 = vmul.f32 %v134, %v8672
    %v8763 = vmul.f32 %v135, %v8672
    %v8764 = vmul.f32 %v136, %v8672
    %v8765 = vmul.f32 %v137, %v8672
    %v8766 = vmul.f32 %v138, %v8672
    %v8767 = vmul.f32 %v139, %v8672
    %v8768 = vmul.f32 %v140, %v8672
    %s8769 = sld [smem:[#allocation3 + $0x13]]
    %v8770 = vstv %s8769
    %v8771 = vmul.f32 %v45, %v8770
    %v8772 = vmul.f32 %v46, %v8770
    %v8773 = vmul.f32 %v47, %v8770
    %v8774 = vmul.f32 %v48, %v8770
    %v8775 = vmul.f32 %v49, %v8770
    %v8776 = vmul.f32 %v50, %v8770
    %v8777 = vmul.f32 %v51, %v8770
    %v8778 = vmul.f32 %v52, %v8770
    %v8779 = vmul.f32 %v53, %v8770
    %v8780 = vmul.f32 %v54, %v8770
    %v8781 = vmul.f32 %v55, %v8770
    %v8782 = vmul.f32 %v56, %v8770
    %v8783 = vmul.f32 %v57, %v8770
    %v8784 = vmul.f32 %v58, %v8770
    %v8785 = vmul.f32 %v59, %v8770
    %v8786 = vmul.f32 %v60, %v8770
    %v8787 = vmul.f32 %v61, %v8770
    %v8788 = vmul.f32 %v62, %v8770
    %v8789 = vmul.f32 %v63, %v8770
    %v8790 = vmul.f32 %v64, %v8770
    %v8791 = vmul.f32 %v65, %v8770
    %v8792 = vmul.f32 %v66, %v8770
    %v8793 = vmul.f32 %v67, %v8770
    %v8794 = vmul.f32 %v68, %v8770
    %v8795 = vmul.f32 %v69, %v8770
    %v8796 = vmul.f32 %v70, %v8770
    %v8797 = vmul.f32 %v71, %v8770
    %v8798 = vmul.f32 %v72, %v8770
    %v8799 = vmul.f32 %v73, %v8770
    %v8800 = vmul.f32 %v74, %v8770
    %v8801 = vmul.f32 %v75, %v8770
    %v8802 = vmul.f32 %v76, %v8770
    %v8803 = vmul.f32 %v77, %v8770
    %v8804 = vmul.f32 %v78, %v8770
    %v8805 = vmul.f32 %v79, %v8770
    %v8806 = vmul.f32 %v80, %v8770
    %v8807 = vmul.f32 %v81, %v8770
    %v8808 = vmul.f32 %v82, %v8770
    %v8809 = vmul.f32 %v83, %v8770
    %v8810 = vmul.f32 %v84, %v8770
    %v8811 = vmul.f32 %v85, %v8770
    %v8812 = vmul.f32 %v86, %v8770
    %v8813 = vmul.f32 %v87, %v8770
    %v8814 = vmul.f32 %v88, %v8770
    %v8815 = vmul.f32 %v89, %v8770
    %v8816 = vmul.f32 %v90, %v8770
    %v8817 = vmul.f32 %v91, %v8770
    %v8818 = vmul.f32 %v92, %v8770
    %v8819 = vmul.f32 %v93, %v8770
    %v8820 = vmul.f32 %v94, %v8770
    %v8821 = vmul.f32 %v95, %v8770
    %v8822 = vmul.f32 %v96, %v8770
    %v8823 = vmul.f32 %v97, %v8770
    %v8824 = vmul.f32 %v98, %v8770
    %v8825 = vmul.f32 %v99, %v8770
    %v8826 = vmul.f32 %v100, %v8770
    %v8827 = vmul.f32 %v101, %v8770
    %v8828 = vmul.f32 %v102, %v8770
    %v8829 = vmul.f32 %v103, %v8770
    %v8830 = vmul.f32 %v104, %v8770
    %v8831 = vmul.f32 %v105, %v8770
    %v8832 = vmul.f32 %v106, %v8770
    %v8833 = vmul.f32 %v107, %v8770
    %v8834 = vmul.f32 %v108, %v8770
    %v8835 = vmul.f32 %v109, %v8770
    %v8836 = vmul.f32 %v110, %v8770
    %v8837 = vmul.f32 %v111, %v8770
    %v8838 = vmul.f32 %v112, %v8770
    %v8839 = vmul.f32 %v113, %v8770
    %v8840 = vmul.f32 %v114, %v8770
    %v8841 = vmul.f32 %v115, %v8770
    %v8842 = vmul.f32 %v116, %v8770
    %v8843 = vmul.f32 %v117, %v8770
    %v8844 = vmul.f32 %v118, %v8770
    %v8845 = vmul.f32 %v119, %v8770
    %v8846 = vmul.f32 %v120, %v8770
    %v8847 = vmul.f32 %v121, %v8770
    %v8848 = vmul.f32 %v122, %v8770
    %v8849 = vmul.f32 %v123, %v8770
    %v8850 = vmul.f32 %v124, %v8770
    %v8851 = vmul.f32 %v125, %v8770
    %v8852 = vmul.f32 %v126, %v8770
    %v8853 = vmul.f32 %v127, %v8770
    %v8854 = vmul.f32 %v128, %v8770
    %v8855 = vmul.f32 %v129, %v8770
    %v8856 = vmul.f32 %v130, %v8770
    %v8857 = vmul.f32 %v131, %v8770
    %v8858 = vmul.f32 %v132, %v8770
    %v8859 = vmul.f32 %v133, %v8770
    %v8860 = vmul.f32 %v134, %v8770
    %v8861 = vmul.f32 %v135, %v8770
    %v8862 = vmul.f32 %v136, %v8770
    %v8863 = vmul.f32 %v137, %v8770
    %v8864 = vmul.f32 %v138, %v8770
    %v8865 = vmul.f32 %v139, %v8770
    %v8866 = vmul.f32 %v140, %v8770
    %v8963 = vrot.slane %v8771, 1
    %v8964 = vrot.slane %v8772, 1
    %v8965 = vsel %vm441, %v8963, %v8964
    %v8966 = vrot.slane %v8773, 1
    %v8967 = vsel %vm441, %v8964, %v8966
    %v8968 = vrot.slane %v8774, 1
    %v8969 = vsel %vm441, %v8966, %v8968
    %v8970 = vrot.slane %v8775, 1
    %v8971 = vrot.slane %v8776, 1
    %v8972 = vsel %vm441, %v8970, %v8971
    %v8973 = vrot.slane %v8777, 1
    %v8974 = vsel %vm441, %v8971, %v8973
    %v8975 = vrot.slane %v8778, 1
    %v8976 = vsel %vm441, %v8973, %v8975
    %v8977 = vrot.slane %v8779, 1
    %v8978 = vrot.slane %v8780, 1
    %v8979 = vsel %vm441, %v8977, %v8978
    %v8980 = vrot.slane %v8781, 1
    %v8981 = vsel %vm441, %v8978, %v8980
    %v8982 = vrot.slane %v8782, 1
    %v8983 = vsel %vm441, %v8980, %v8982
    %v8984 = vrot.slane %v8783, 1
    %v8985 = vrot.slane %v8784, 1
    %v8986 = vsel %vm441, %v8984, %v8985
    %v8987 = vrot.slane %v8785, 1
    %v8988 = vsel %vm441, %v8985, %v8987
    %v8989 = vrot.slane %v8786, 1
    %v8990 = vsel %vm441, %v8987, %v8989
    %v8991 = vrot.slane %v8787, 1
    %v8992 = vrot.slane %v8788, 1
    %v8993 = vsel %vm441, %v8991, %v8992
    %v8994 = vrot.slane %v8789, 1
    %v8995 = vsel %vm441, %v8992, %v8994
    %v8996 = vrot.slane %v8790, 1
    %v8997 = vsel %vm441, %v8994, %v8996
    %v8998 = vrot.slane %v8791, 1
    %v8999 = vrot.slane %v8792, 1
    %v9000 = vsel %vm441, %v8998, %v8999
    %v9001 = vrot.slane %v8793, 1
    %v9002 = vsel %vm441, %v8999, %v9001
    %v9003 = vrot.slane %v8794, 1
    %v9004 = vsel %vm441, %v9001, %v9003
    %v9005 = vrot.slane %v8795, 1
    %v9006 = vrot.slane %v8796, 1
    %v9007 = vsel %vm441, %v9005, %v9006
    %v9008 = vrot.slane %v8797, 1
    %v9009 = vsel %vm441, %v9006, %v9008
    %v9010 = vrot.slane %v8798, 1
    %v9011 = vsel %vm441, %v9008, %v9010
    %v9012 = vrot.slane %v8799, 1
    %v9013 = vrot.slane %v8800, 1
    %v9014 = vsel %vm441, %v9012, %v9013
    %v9015 = vrot.slane %v8801, 1
    %v9016 = vsel %vm441, %v9013, %v9015
    %v9017 = vrot.slane %v8802, 1
    %v9018 = vsel %vm441, %v9015, %v9017
    %v9019 = vrot.slane %v8803, 1
    %v9020 = vrot.slane %v8804, 1
    %v9021 = vsel %vm441, %v9019, %v9020
    %v9022 = vrot.slane %v8805, 1
    %v9023 = vsel %vm441, %v9020, %v9022
    %v9024 = vrot.slane %v8806, 1
    %v9025 = vsel %vm441, %v9022, %v9024
    %v9026 = vrot.slane %v8807, 1
    %v9027 = vrot.slane %v8808, 1
    %v9028 = vsel %vm441, %v9026, %v9027
    %v9029 = vrot.slane %v8809, 1
    %v9030 = vsel %vm441, %v9027, %v9029
    %v9031 = vrot.slane %v8810, 1
    %v9032 = vsel %vm441, %v9029, %v9031
    %v9033 = vrot.slane %v8811, 1
    %v9034 = vrot.slane %v8812, 1
    %v9035 = vsel %vm441, %v9033, %v9034
    %v9036 = vrot.slane %v8813, 1
    %v9037 = vsel %vm441, %v9034, %v9036
    %v9038 = vrot.slane %v8814, 1
    %v9039 = vsel %vm441, %v9036, %v9038
    %v9040 = vrot.slane %v8815, 1
    %v9041 = vrot.slane %v8816, 1
    %v9042 = vsel %vm441, %v9040, %v9041
    %v9043 = vrot.slane %v8817, 1
    %v9044 = vsel %vm441, %v9041, %v9043
    %v9045 = vrot.slane %v8818, 1
    %v9046 = vsel %vm441, %v9043, %v9045
    %v9047 = vrot.slane %v8819, 1
    %v9048 = vrot.slane %v8820, 1
    %v9049 = vsel %vm441, %v9047, %v9048
    %v9050 = vrot.slane %v8821, 1
    %v9051 = vsel %vm441, %v9048, %v9050
    %v9052 = vrot.slane %v8822, 1
    %v9053 = vsel %vm441, %v9050, %v9052
    %v9054 = vrot.slane %v8823, 1
    %v9055 = vrot.slane %v8824, 1
    %v9056 = vsel %vm441, %v9054, %v9055
    %v9057 = vrot.slane %v8825, 1
    %v9058 = vsel %vm441, %v9055, %v9057
    %v9059 = vrot.slane %v8826, 1
    %v9060 = vsel %vm441, %v9057, %v9059
    %v9061 = vrot.slane %v8827, 1
    %v9062 = vrot.slane %v8828, 1
    %v9063 = vsel %vm441, %v9061, %v9062
    %v9064 = vrot.slane %v8829, 1
    %v9065 = vsel %vm441, %v9062, %v9064
    %v9066 = vrot.slane %v8830, 1
    %v9067 = vsel %vm441, %v9064, %v9066
    %v9068 = vrot.slane %v8831, 1
    %v9069 = vrot.slane %v8832, 1
    %v9070 = vsel %vm441, %v9068, %v9069
    %v9071 = vrot.slane %v8833, 1
    %v9072 = vsel %vm441, %v9069, %v9071
    %v9073 = vrot.slane %v8834, 1
    %v9074 = vsel %vm441, %v9071, %v9073
    %v9075 = vrot.slane %v8835, 1
    %v9076 = vrot.slane %v8836, 1
    %v9077 = vsel %vm441, %v9075, %v9076
    %v9078 = vrot.slane %v8837, 1
    %v9079 = vsel %vm441, %v9076, %v9078
    %v9080 = vrot.slane %v8838, 1
    %v9081 = vsel %vm441, %v9078, %v9080
    %v9082 = vrot.slane %v8839, 1
    %v9083 = vrot.slane %v8840, 1
    %v9084 = vsel %vm441, %v9082, %v9083
    %v9085 = vrot.slane %v8841, 1
    %v9086 = vsel %vm441, %v9083, %v9085
    %v9087 = vrot.slane %v8842, 1
    %v9088 = vsel %vm441, %v9085, %v9087
    %v9089 = vrot.slane %v8843, 1
    %v9090 = vrot.slane %v8844, 1
    %v9091 = vsel %vm441, %v9089, %v9090
    %v9092 = vrot.slane %v8845, 1
    %v9093 = vsel %vm441, %v9090, %v9092
    %v9094 = vrot.slane %v8846, 1
    %v9095 = vsel %vm441, %v9092, %v9094
    %v9096 = vrot.slane %v8847, 1
    %v9097 = vrot.slane %v8848, 1
    %v9098 = vsel %vm441, %v9096, %v9097
    %v9099 = vrot.slane %v8849, 1
    %v9100 = vsel %vm441, %v9097, %v9099
    %v9101 = vrot.slane %v8850, 1
    %v9102 = vsel %vm441, %v9099, %v9101
    %v9103 = vrot.slane %v8851, 1
    %v9104 = vrot.slane %v8852, 1
    %v9105 = vsel %vm441, %v9103, %v9104
    %v9106 = vrot.slane %v8853, 1
    %v9107 = vsel %vm441, %v9104, %v9106
    %v9108 = vrot.slane %v8854, 1
    %v9109 = vsel %vm441, %v9106, %v9108
    %v9110 = vrot.slane %v8855, 1
    %v9111 = vrot.slane %v8856, 1
    %v9112 = vsel %vm441, %v9110, %v9111
    %v9113 = vrot.slane %v8857, 1
    %v9114 = vsel %vm441, %v9111, %v9113
    %v9115 = vrot.slane %v8858, 1
    %v9116 = vsel %vm441, %v9113, %v9115
    %v9117 = vrot.slane %v8859, 1
    %v9118 = vrot.slane %v8860, 1
    %v9119 = vsel %vm441, %v9117, %v9118
    %v9120 = vrot.slane %v8861, 1
    %v9121 = vsel %vm441, %v9118, %v9120
    %v9122 = vrot.slane %v8862, 1
    %v9123 = vsel %vm441, %v9120, %v9122
    %v9124 = vrot.slane %v8863, 1
    %v9125 = vrot.slane %v8864, 1
    %v9126 = vsel %vm441, %v9124, %v9125
    %v9127 = vrot.slane %v8865, 1
    %v9128 = vsel %vm441, %v9125, %v9127
    %v9129 = vrot.slane %v8866, 1
    %v9130 = vsel %vm441, %v9127, %v9129
    %v9227 = vadd.f32 %v8673, %v8965
    %v9228 = vadd.f32 %v8674, %v8967
    %v9229 = vadd.f32 %v8675, %v8969
    %v9230 = vadd.f32 %v8676, %v8968
    %v9231 = vadd.f32 %v8677, %v8972
    %v9232 = vadd.f32 %v8678, %v8974
    %v9233 = vadd.f32 %v8679, %v8976
    %v9234 = vadd.f32 %v8680, %v8975
    %v9235 = vadd.f32 %v8681, %v8979
    %v9236 = vadd.f32 %v8682, %v8981
    %v9237 = vadd.f32 %v8683, %v8983
    %v9238 = vadd.f32 %v8684, %v8982
    %v9239 = vadd.f32 %v8685, %v8986
    %v9240 = vadd.f32 %v8686, %v8988
    %v9241 = vadd.f32 %v8687, %v8990
    %v9242 = vadd.f32 %v8688, %v8989
    %v9243 = vadd.f32 %v8689, %v8993
    %v9244 = vadd.f32 %v8690, %v8995
    %v9245 = vadd.f32 %v8691, %v8997
    %v9246 = vadd.f32 %v8692, %v8996
    %v9247 = vadd.f32 %v8693, %v9000
    %v9248 = vadd.f32 %v8694, %v9002
    %v9249 = vadd.f32 %v8695, %v9004
    %v9250 = vadd.f32 %v8696, %v9003
    %v9251 = vadd.f32 %v8697, %v9007
    %v9252 = vadd.f32 %v8698, %v9009
    %v9253 = vadd.f32 %v8699, %v9011
    %v9254 = vadd.f32 %v8700, %v9010
    %v9255 = vadd.f32 %v8701, %v9014
    %v9256 = vadd.f32 %v8702, %v9016
    %v9257 = vadd.f32 %v8703, %v9018
    %v9258 = vadd.f32 %v8704, %v9017
    %v9259 = vadd.f32 %v8705, %v9021
    %v9260 = vadd.f32 %v8706, %v9023
    %v9261 = vadd.f32 %v8707, %v9025
    %v9262 = vadd.f32 %v8708, %v9024
    %v9263 = vadd.f32 %v8709, %v9028
    %v9264 = vadd.f32 %v8710, %v9030
    %v9265 = vadd.f32 %v8711, %v9032
    %v9266 = vadd.f32 %v8712, %v9031
    %v9267 = vadd.f32 %v8713, %v9035
    %v9268 = vadd.f32 %v8714, %v9037
    %v9269 = vadd.f32 %v8715, %v9039
    %v9270 = vadd.f32 %v8716, %v9038
    %v9271 = vadd.f32 %v8717, %v9042
    %v9272 = vadd.f32 %v8718, %v9044
    %v9273 = vadd.f32 %v8719, %v9046
    %v9274 = vadd.f32 %v8720, %v9045
    %v9275 = vadd.f32 %v8721, %v9049
    %v9276 = vadd.f32 %v8722, %v9051
    %v9277 = vadd.f32 %v8723, %v9053
    %v9278 = vadd.f32 %v8724, %v9052
    %v9279 = vadd.f32 %v8725, %v9056
    %v9280 = vadd.f32 %v8726, %v9058
    %v9281 = vadd.f32 %v8727, %v9060
    %v9282 = vadd.f32 %v8728, %v9059
    %v9283 = vadd.f32 %v8729, %v9063
    %v9284 = vadd.f32 %v8730, %v9065
    %v9285 = vadd.f32 %v8731, %v9067
    %v9286 = vadd.f32 %v8732, %v9066
    %v9287 = vadd.f32 %v8733, %v9070
    %v9288 = vadd.f32 %v8734, %v9072
    %v9289 = vadd.f32 %v8735, %v9074
    %v9290 = vadd.f32 %v8736, %v9073
    %v9291 = vadd.f32 %v8737, %v9077
    %v9292 = vadd.f32 %v8738, %v9079
    %v9293 = vadd.f32 %v8739, %v9081
    %v9294 = vadd.f32 %v8740, %v9080
    %v9295 = vadd.f32 %v8741, %v9084
    %v9296 = vadd.f32 %v8742, %v9086
    %v9297 = vadd.f32 %v8743, %v9088
    %v9298 = vadd.f32 %v8744, %v9087
    %v9299 = vadd.f32 %v8745, %v9091
    %v9300 = vadd.f32 %v8746, %v9093
    %v9301 = vadd.f32 %v8747, %v9095
    %v9302 = vadd.f32 %v8748, %v9094
    %v9303 = vadd.f32 %v8749, %v9098
    %v9304 = vadd.f32 %v8750, %v9100
    %v9305 = vadd.f32 %v8751, %v9102
    %v9306 = vadd.f32 %v8752, %v9101
    %v9307 = vadd.f32 %v8753, %v9105
    %v9308 = vadd.f32 %v8754, %v9107
    %v9309 = vadd.f32 %v8755, %v9109
    %v9310 = vadd.f32 %v8756, %v9108
    %v9311 = vadd.f32 %v8757, %v9112
    %v9312 = vadd.f32 %v8758, %v9114
    %v9313 = vadd.f32 %v8759, %v9116
    %v9314 = vadd.f32 %v8760, %v9115
    %v9315 = vadd.f32 %v8761, %v9119
    %v9316 = vadd.f32 %v8762, %v9121
    %v9317 = vadd.f32 %v8763, %v9123
    %v9318 = vadd.f32 %v8764, %v9122
    %v9319 = vadd.f32 %v8765, %v9126
    %v9320 = vadd.f32 %v8766, %v9128
    %v9321 = vadd.f32 %v8767, %v9130
    %v9322 = vadd.f32 %v8768, %v9129
    %s9323 = sld [smem:[#allocation3 + $0x14]]
    %v9324 = vstv %s9323
    %v9325 = vmul.f32 %v45, %v9324
    %v9326 = vmul.f32 %v46, %v9324
    %v9327 = vmul.f32 %v47, %v9324
    %v9328 = vmul.f32 %v48, %v9324
    %v9329 = vmul.f32 %v49, %v9324
    %v9330 = vmul.f32 %v50, %v9324
    %v9331 = vmul.f32 %v51, %v9324
    %v9332 = vmul.f32 %v52, %v9324
    %v9333 = vmul.f32 %v53, %v9324
    %v9334 = vmul.f32 %v54, %v9324
    %v9335 = vmul.f32 %v55, %v9324
    %v9336 = vmul.f32 %v56, %v9324
    %v9337 = vmul.f32 %v57, %v9324
    %v9338 = vmul.f32 %v58, %v9324
    %v9339 = vmul.f32 %v59, %v9324
    %v9340 = vmul.f32 %v60, %v9324
    %v9341 = vmul.f32 %v61, %v9324
    %v9342 = vmul.f32 %v62, %v9324
    %v9343 = vmul.f32 %v63, %v9324
    %v9344 = vmul.f32 %v64, %v9324
    %v9345 = vmul.f32 %v65, %v9324
    %v9346 = vmul.f32 %v66, %v9324
    %v9347 = vmul.f32 %v67, %v9324
    %v9348 = vmul.f32 %v68, %v9324
    %v9349 = vmul.f32 %v69, %v9324
    %v9350 = vmul.f32 %v70, %v9324
    %v9351 = vmul.f32 %v71, %v9324
    %v9352 = vmul.f32 %v72, %v9324
    %v9353 = vmul.f32 %v73, %v9324
    %v9354 = vmul.f32 %v74, %v9324
    %v9355 = vmul.f32 %v75, %v9324
    %v9356 = vmul.f32 %v76, %v9324
    %v9357 = vmul.f32 %v77, %v9324
    %v9358 = vmul.f32 %v78, %v9324
    %v9359 = vmul.f32 %v79, %v9324
    %v9360 = vmul.f32 %v80, %v9324
    %v9361 = vmul.f32 %v81, %v9324
    %v9362 = vmul.f32 %v82, %v9324
    %v9363 = vmul.f32 %v83, %v9324
    %v9364 = vmul.f32 %v84, %v9324
    %v9365 = vmul.f32 %v85, %v9324
    %v9366 = vmul.f32 %v86, %v9324
    %v9367 = vmul.f32 %v87, %v9324
    %v9368 = vmul.f32 %v88, %v9324
    %v9369 = vmul.f32 %v89, %v9324
    %v9370 = vmul.f32 %v90, %v9324
    %v9371 = vmul.f32 %v91, %v9324
    %v9372 = vmul.f32 %v92, %v9324
    %v9373 = vmul.f32 %v93, %v9324
    %v9374 = vmul.f32 %v94, %v9324
    %v9375 = vmul.f32 %v95, %v9324
    %v9376 = vmul.f32 %v96, %v9324
    %v9377 = vmul.f32 %v97, %v9324
    %v9378 = vmul.f32 %v98, %v9324
    %v9379 = vmul.f32 %v99, %v9324
    %v9380 = vmul.f32 %v100, %v9324
    %v9381 = vmul.f32 %v101, %v9324
    %v9382 = vmul.f32 %v102, %v9324
    %v9383 = vmul.f32 %v103, %v9324
    %v9384 = vmul.f32 %v104, %v9324
    %v9385 = vmul.f32 %v105, %v9324
    %v9386 = vmul.f32 %v106, %v9324
    %v9387 = vmul.f32 %v107, %v9324
    %v9388 = vmul.f32 %v108, %v9324
    %v9389 = vmul.f32 %v109, %v9324
    %v9390 = vmul.f32 %v110, %v9324
    %v9391 = vmul.f32 %v111, %v9324
    %v9392 = vmul.f32 %v112, %v9324
    %v9393 = vmul.f32 %v113, %v9324
    %v9394 = vmul.f32 %v114, %v9324
    %v9395 = vmul.f32 %v115, %v9324
    %v9396 = vmul.f32 %v116, %v9324
    %v9397 = vmul.f32 %v117, %v9324
    %v9398 = vmul.f32 %v118, %v9324
    %v9399 = vmul.f32 %v119, %v9324
    %v9400 = vmul.f32 %v120, %v9324
    %v9401 = vmul.f32 %v121, %v9324
    %v9402 = vmul.f32 %v122, %v9324
    %v9403 = vmul.f32 %v123, %v9324
    %v9404 = vmul.f32 %v124, %v9324
    %v9405 = vmul.f32 %v125, %v9324
    %v9406 = vmul.f32 %v126, %v9324
    %v9407 = vmul.f32 %v127, %v9324
    %v9408 = vmul.f32 %v128, %v9324
    %v9409 = vmul.f32 %v129, %v9324
    %v9410 = vmul.f32 %v130, %v9324
    %v9411 = vmul.f32 %v131, %v9324
    %v9412 = vmul.f32 %v132, %v9324
    %v9413 = vmul.f32 %v133, %v9324
    %v9414 = vmul.f32 %v134, %v9324
    %v9415 = vmul.f32 %v135, %v9324
    %v9416 = vmul.f32 %v136, %v9324
    %v9417 = vmul.f32 %v137, %v9324
    %v9418 = vmul.f32 %v138, %v9324
    %v9419 = vmul.f32 %v139, %v9324
    %v9420 = vmul.f32 %v140, %v9324
    %v9517 = vrot.slane %v9325, 2
    %v9518 = vrot.slane %v9326, 2
    %v9519 = vsel %vm996, %v9517, %v9518
    %v9520 = vrot.slane %v9327, 2
    %v9521 = vsel %vm996, %v9518, %v9520
    %v9522 = vrot.slane %v9328, 2
    %v9523 = vsel %vm996, %v9520, %v9522
    %v9524 = vrot.slane %v9329, 2
    %v9525 = vrot.slane %v9330, 2
    %v9526 = vsel %vm996, %v9524, %v9525
    %v9527 = vrot.slane %v9331, 2
    %v9528 = vsel %vm996, %v9525, %v9527
    %v9529 = vrot.slane %v9332, 2
    %v9530 = vsel %vm996, %v9527, %v9529
    %v9531 = vrot.slane %v9333, 2
    %v9532 = vrot.slane %v9334, 2
    %v9533 = vsel %vm996, %v9531, %v9532
    %v9534 = vrot.slane %v9335, 2
    %v9535 = vsel %vm996, %v9532, %v9534
    %v9536 = vrot.slane %v9336, 2
    %v9537 = vsel %vm996, %v9534, %v9536
    %v9538 = vrot.slane %v9337, 2
    %v9539 = vrot.slane %v9338, 2
    %v9540 = vsel %vm996, %v9538, %v9539
    %v9541 = vrot.slane %v9339, 2
    %v9542 = vsel %vm996, %v9539, %v9541
    %v9543 = vrot.slane %v9340, 2
    %v9544 = vsel %vm996, %v9541, %v9543
    %v9545 = vrot.slane %v9341, 2
    %v9546 = vrot.slane %v9342, 2
    %v9547 = vsel %vm996, %v9545, %v9546
    %v9548 = vrot.slane %v9343, 2
    %v9549 = vsel %vm996, %v9546, %v9548
    %v9550 = vrot.slane %v9344, 2
    %v9551 = vsel %vm996, %v9548, %v9550
    %v9552 = vrot.slane %v9345, 2
    %v9553 = vrot.slane %v9346, 2
    %v9554 = vsel %vm996, %v9552, %v9553
    %v9555 = vrot.slane %v9347, 2
    %v9556 = vsel %vm996, %v9553, %v9555
    %v9557 = vrot.slane %v9348, 2
    %v9558 = vsel %vm996, %v9555, %v9557
    %v9559 = vrot.slane %v9349, 2
    %v9560 = vrot.slane %v9350, 2
    %v9561 = vsel %vm996, %v9559, %v9560
    %v9562 = vrot.slane %v9351, 2
    %v9563 = vsel %vm996, %v9560, %v9562
    %v9564 = vrot.slane %v9352, 2
    %v9565 = vsel %vm996, %v9562, %v9564
    %v9566 = vrot.slane %v9353, 2
    %v9567 = vrot.slane %v9354, 2
    %v9568 = vsel %vm996, %v9566, %v9567
    %v9569 = vrot.slane %v9355, 2
    %v9570 = vsel %vm996, %v9567, %v9569
    %v9571 = vrot.slane %v9356, 2
    %v9572 = vsel %vm996, %v9569, %v9571
    %v9573 = vrot.slane %v9357, 2
    %v9574 = vrot.slane %v9358, 2
    %v9575 = vsel %vm996, %v9573, %v9574
    %v9576 = vrot.slane %v9359, 2
    %v9577 = vsel %vm996, %v9574, %v9576
    %v9578 = vrot.slane %v9360, 2
    %v9579 = vsel %vm996, %v9576, %v9578
    %v9580 = vrot.slane %v9361, 2
    %v9581 = vrot.slane %v9362, 2
    %v9582 = vsel %vm996, %v9580, %v9581
    %v9583 = vrot.slane %v9363, 2
    %v9584 = vsel %vm996, %v9581, %v9583
    %v9585 = vrot.slane %v9364, 2
    %v9586 = vsel %vm996, %v9583, %v9585
    %v9587 = vrot.slane %v9365, 2
    %v9588 = vrot.slane %v9366, 2
    %v9589 = vsel %vm996, %v9587, %v9588
    %v9590 = vrot.slane %v9367, 2
    %v9591 = vsel %vm996, %v9588, %v9590
    %v9592 = vrot.slane %v9368, 2
    %v9593 = vsel %vm996, %v9590, %v9592
    %v9594 = vrot.slane %v9369, 2
    %v9595 = vrot.slane %v9370, 2
    %v9596 = vsel %vm996, %v9594, %v9595
    %v9597 = vrot.slane %v9371, 2
    %v9598 = vsel %vm996, %v9595, %v9597
    %v9599 = vrot.slane %v9372, 2
    %v9600 = vsel %vm996, %v9597, %v9599
    %v9601 = vrot.slane %v9373, 2
    %v9602 = vrot.slane %v9374, 2
    %v9603 = vsel %vm996, %v9601, %v9602
    %v9604 = vrot.slane %v9375, 2
    %v9605 = vsel %vm996, %v9602, %v9604
    %v9606 = vrot.slane %v9376, 2
    %v9607 = vsel %vm996, %v9604, %v9606
    %v9608 = vrot.slane %v9377, 2
    %v9609 = vrot.slane %v9378, 2
    %v9610 = vsel %vm996, %v9608, %v9609
    %v9611 = vrot.slane %v9379, 2
    %v9612 = vsel %vm996, %v9609, %v9611
    %v9613 = vrot.slane %v9380, 2
    %v9614 = vsel %vm996, %v9611, %v9613
    %v9615 = vrot.slane %v9381, 2
    %v9616 = vrot.slane %v9382, 2
    %v9617 = vsel %vm996, %v9615, %v9616
    %v9618 = vrot.slane %v9383, 2
    %v9619 = vsel %vm996, %v9616, %v9618
    %v9620 = vrot.slane %v9384, 2
    %v9621 = vsel %vm996, %v9618, %v9620
    %v9622 = vrot.slane %v9385, 2
    %v9623 = vrot.slane %v9386, 2
    %v9624 = vsel %vm996, %v9622, %v9623
    %v9625 = vrot.slane %v9387, 2
    %v9626 = vsel %vm996, %v9623, %v9625
    %v9627 = vrot.slane %v9388, 2
    %v9628 = vsel %vm996, %v9625, %v9627
    %v9629 = vrot.slane %v9389, 2
    %v9630 = vrot.slane %v9390, 2
    %v9631 = vsel %vm996, %v9629, %v9630
    %v9632 = vrot.slane %v9391, 2
    %v9633 = vsel %vm996, %v9630, %v9632
    %v9634 = vrot.slane %v9392, 2
    %v9635 = vsel %vm996, %v9632, %v9634
    %v9636 = vrot.slane %v9393, 2
    %v9637 = vrot.slane %v9394, 2
    %v9638 = vsel %vm996, %v9636, %v9637
    %v9639 = vrot.slane %v9395, 2
    %v9640 = vsel %vm996, %v9637, %v9639
    %v9641 = vrot.slane %v9396, 2
    %v9642 = vsel %vm996, %v9639, %v9641
    %v9643 = vrot.slane %v9397, 2
    %v9644 = vrot.slane %v9398, 2
    %v9645 = vsel %vm996, %v9643, %v9644
    %v9646 = vrot.slane %v9399, 2
    %v9647 = vsel %vm996, %v9644, %v9646
    %v9648 = vrot.slane %v9400, 2
    %v9649 = vsel %vm996, %v9646, %v9648
    %v9650 = vrot.slane %v9401, 2
    %v9651 = vrot.slane %v9402, 2
    %v9652 = vsel %vm996, %v9650, %v9651
    %v9653 = vrot.slane %v9403, 2
    %v9654 = vsel %vm996, %v9651, %v9653
    %v9655 = vrot.slane %v9404, 2
    %v9656 = vsel %vm996, %v9653, %v9655
    %v9657 = vrot.slane %v9405, 2
    %v9658 = vrot.slane %v9406, 2
    %v9659 = vsel %vm996, %v9657, %v9658
    %v9660 = vrot.slane %v9407, 2
    %v9661 = vsel %vm996, %v9658, %v9660
    %v9662 = vrot.slane %v9408, 2
    %v9663 = vsel %vm996, %v9660, %v9662
    %v9664 = vrot.slane %v9409, 2
    %v9665 = vrot.slane %v9410, 2
    %v9666 = vsel %vm996, %v9664, %v9665
    %v9667 = vrot.slane %v9411, 2
    %v9668 = vsel %vm996, %v9665, %v9667
    %v9669 = vrot.slane %v9412, 2
    %v9670 = vsel %vm996, %v9667, %v9669
    %v9671 = vrot.slane %v9413, 2
    %v9672 = vrot.slane %v9414, 2
    %v9673 = vsel %vm996, %v9671, %v9672
    %v9674 = vrot.slane %v9415, 2
    %v9675 = vsel %vm996, %v9672, %v9674
    %v9676 = vrot.slane %v9416, 2
    %v9677 = vsel %vm996, %v9674, %v9676
    %v9678 = vrot.slane %v9417, 2
    %v9679 = vrot.slane %v9418, 2
    %v9680 = vsel %vm996, %v9678, %v9679
    %v9681 = vrot.slane %v9419, 2
    %v9682 = vsel %vm996, %v9679, %v9681
    %v9683 = vrot.slane %v9420, 2
    %v9684 = vsel %vm996, %v9681, %v9683
    %v9781 = vadd.f32 %v9227, %v9519
    %v9782 = vadd.f32 %v9228, %v9521
    %v9783 = vadd.f32 %v9229, %v9523
    %v9784 = vadd.f32 %v9230, %v9522
    %v9785 = vadd.f32 %v9231, %v9526
    %v9786 = vadd.f32 %v9232, %v9528
    %v9787 = vadd.f32 %v9233, %v9530
    %v9788 = vadd.f32 %v9234, %v9529
    %v9789 = vadd.f32 %v9235, %v9533
    %v9790 = vadd.f32 %v9236, %v9535
    %v9791 = vadd.f32 %v9237, %v9537
    %v9792 = vadd.f32 %v9238, %v9536
    %v9793 = vadd.f32 %v9239, %v9540
    %v9794 = vadd.f32 %v9240, %v9542
    %v9795 = vadd.f32 %v9241, %v9544
    %v9796 = vadd.f32 %v9242, %v9543
    %v9797 = vadd.f32 %v9243, %v9547
    %v9798 = vadd.f32 %v9244, %v9549
    %v9799 = vadd.f32 %v9245, %v9551
    %v9800 = vadd.f32 %v9246, %v9550
    %v9801 = vadd.f32 %v9247, %v9554
    %v9802 = vadd.f32 %v9248, %v9556
    %v9803 = vadd.f32 %v9249, %v9558
    %v9804 = vadd.f32 %v9250, %v9557
    %v9805 = vadd.f32 %v9251, %v9561
    %v9806 = vadd.f32 %v9252, %v9563
    %v9807 = vadd.f32 %v9253, %v9565
    %v9808 = vadd.f32 %v9254, %v9564
    %v9809 = vadd.f32 %v9255, %v9568
    %v9810 = vadd.f32 %v9256, %v9570
    %v9811 = vadd.f32 %v9257, %v9572
    %v9812 = vadd.f32 %v9258, %v9571
    %v9813 = vadd.f32 %v9259, %v9575
    %v9814 = vadd.f32 %v9260, %v9577
    %v9815 = vadd.f32 %v9261, %v9579
    %v9816 = vadd.f32 %v9262, %v9578
    %v9817 = vadd.f32 %v9263, %v9582
    %v9818 = vadd.f32 %v9264, %v9584
    %v9819 = vadd.f32 %v9265, %v9586
    %v9820 = vadd.f32 %v9266, %v9585
    %v9821 = vadd.f32 %v9267, %v9589
    %v9822 = vadd.f32 %v9268, %v9591
    %v9823 = vadd.f32 %v9269, %v9593
    %v9824 = vadd.f32 %v9270, %v9592
    %v9825 = vadd.f32 %v9271, %v9596
    %v9826 = vadd.f32 %v9272, %v9598
    %v9827 = vadd.f32 %v9273, %v9600
    %v9828 = vadd.f32 %v9274, %v9599
    %v9829 = vadd.f32 %v9275, %v9603
    %v9830 = vadd.f32 %v9276, %v9605
    %v9831 = vadd.f32 %v9277, %v9607
    %v9832 = vadd.f32 %v9278, %v9606
    %v9833 = vadd.f32 %v9279, %v9610
    %v9834 = vadd.f32 %v9280, %v9612
    %v9835 = vadd.f32 %v9281, %v9614
    %v9836 = vadd.f32 %v9282, %v9613
    %v9837 = vadd.f32 %v9283, %v9617
    %v9838 = vadd.f32 %v9284, %v9619
    %v9839 = vadd.f32 %v9285, %v9621
    %v9840 = vadd.f32 %v9286, %v9620
    %v9841 = vadd.f32 %v9287, %v9624
    %v9842 = vadd.f32 %v9288, %v9626
    %v9843 = vadd.f32 %v9289, %v9628
    %v9844 = vadd.f32 %v9290, %v9627
    %v9845 = vadd.f32 %v9291, %v9631
    %v9846 = vadd.f32 %v9292, %v9633
    %v9847 = vadd.f32 %v9293, %v9635
    %v9848 = vadd.f32 %v9294, %v9634
    %v9849 = vadd.f32 %v9295, %v9638
    %v9850 = vadd.f32 %v9296, %v9640
    %v9851 = vadd.f32 %v9297, %v9642
    %v9852 = vadd.f32 %v9298, %v9641
    %v9853 = vadd.f32 %v9299, %v9645
    %v9854 = vadd.f32 %v9300, %v9647
    %v9855 = vadd.f32 %v9301, %v9649
    %v9856 = vadd.f32 %v9302, %v9648
    %v9857 = vadd.f32 %v9303, %v9652
    %v9858 = vadd.f32 %v9304, %v9654
    %v9859 = vadd.f32 %v9305, %v9656
    %v9860 = vadd.f32 %v9306, %v9655
    %v9861 = vadd.f32 %v9307, %v9659
    %v9862 = vadd.f32 %v9308, %v9661
    %v9863 = vadd.f32 %v9309, %v9663
    %v9864 = vadd.f32 %v9310, %v9662
    %v9865 = vadd.f32 %v9311, %v9666
    %v9866 = vadd.f32 %v9312, %v9668
    %v9867 = vadd.f32 %v9313, %v9670
    %v9868 = vadd.f32 %v9314, %v9669
    %v9869 = vadd.f32 %v9315, %v9673
    %v9870 = vadd.f32 %v9316, %v9675
    %v9871 = vadd.f32 %v9317, %v9677
    %v9872 = vadd.f32 %v9318, %v9676
    %v9873 = vadd.f32 %v9319, %v9680
    %v9874 = vadd.f32 %v9320, %v9682
    %v9875 = vadd.f32 %v9321, %v9684
    %v9876 = vadd.f32 %v9322, %v9683
    %s9877 = sld [smem:[#allocation3 + $0x15]]
    %v9878 = vstv %s9877
    %v9879 = vmul.f32 %v49, %v9878
    %v9880 = vmul.f32 %v50, %v9878
    %v9881 = vmul.f32 %v51, %v9878
    %v9882 = vmul.f32 %v52, %v9878
    %v9883 = vmul.f32 %v53, %v9878
    %v9884 = vmul.f32 %v54, %v9878
    %v9885 = vmul.f32 %v55, %v9878
    %v9886 = vmul.f32 %v56, %v9878
    %v9887 = vmul.f32 %v57, %v9878
    %v9888 = vmul.f32 %v58, %v9878
    %v9889 = vmul.f32 %v59, %v9878
    %v9890 = vmul.f32 %v60, %v9878
    %v9891 = vmul.f32 %v61, %v9878
    %v9892 = vmul.f32 %v62, %v9878
    %v9893 = vmul.f32 %v63, %v9878
    %v9894 = vmul.f32 %v64, %v9878
    %v9895 = vmul.f32 %v65, %v9878
    %v9896 = vmul.f32 %v66, %v9878
    %v9897 = vmul.f32 %v67, %v9878
    %v9898 = vmul.f32 %v68, %v9878
    %v9899 = vmul.f32 %v69, %v9878
    %v9900 = vmul.f32 %v70, %v9878
    %v9901 = vmul.f32 %v71, %v9878
    %v9902 = vmul.f32 %v72, %v9878
    %v9903 = vmul.f32 %v73, %v9878
    %v9904 = vmul.f32 %v74, %v9878
    %v9905 = vmul.f32 %v75, %v9878
    %v9906 = vmul.f32 %v76, %v9878
    %v9907 = vmul.f32 %v77, %v9878
    %v9908 = vmul.f32 %v78, %v9878
    %v9909 = vmul.f32 %v79, %v9878
    %v9910 = vmul.f32 %v80, %v9878
    %v9911 = vmul.f32 %v81, %v9878
    %v9912 = vmul.f32 %v82, %v9878
    %v9913 = vmul.f32 %v83, %v9878
    %v9914 = vmul.f32 %v84, %v9878
    %v9915 = vmul.f32 %v85, %v9878
    %v9916 = vmul.f32 %v86, %v9878
    %v9917 = vmul.f32 %v87, %v9878
    %v9918 = vmul.f32 %v88, %v9878
    %v9919 = vmul.f32 %v89, %v9878
    %v9920 = vmul.f32 %v90, %v9878
    %v9921 = vmul.f32 %v91, %v9878
    %v9922 = vmul.f32 %v92, %v9878
    %v9923 = vmul.f32 %v93, %v9878
    %v9924 = vmul.f32 %v94, %v9878
    %v9925 = vmul.f32 %v95, %v9878
    %v9926 = vmul.f32 %v96, %v9878
    %v9927 = vmul.f32 %v97, %v9878
    %v9928 = vmul.f32 %v98, %v9878
    %v9929 = vmul.f32 %v99, %v9878
    %v9930 = vmul.f32 %v100, %v9878
    %v9931 = vmul.f32 %v101, %v9878
    %v9932 = vmul.f32 %v102, %v9878
    %v9933 = vmul.f32 %v103, %v9878
    %v9934 = vmul.f32 %v104, %v9878
    %v9935 = vmul.f32 %v105, %v9878
    %v9936 = vmul.f32 %v106, %v9878
    %v9937 = vmul.f32 %v107, %v9878
    %v9938 = vmul.f32 %v108, %v9878
    %v9939 = vmul.f32 %v109, %v9878
    %v9940 = vmul.f32 %v110, %v9878
    %v9941 = vmul.f32 %v111, %v9878
    %v9942 = vmul.f32 %v112, %v9878
    %v9943 = vmul.f32 %v113, %v9878
    %v9944 = vmul.f32 %v114, %v9878
    %v9945 = vmul.f32 %v115, %v9878
    %v9946 = vmul.f32 %v116, %v9878
    %v9947 = vmul.f32 %v117, %v9878
    %v9948 = vmul.f32 %v118, %v9878
    %v9949 = vmul.f32 %v119, %v9878
    %v9950 = vmul.f32 %v120, %v9878
    %v9951 = vmul.f32 %v121, %v9878
    %v9952 = vmul.f32 %v122, %v9878
    %v9953 = vmul.f32 %v123, %v9878
    %v9954 = vmul.f32 %v124, %v9878
    %v9955 = vmul.f32 %v125, %v9878
    %v9956 = vmul.f32 %v126, %v9878
    %v9957 = vmul.f32 %v127, %v9878
    %v9958 = vmul.f32 %v128, %v9878
    %v9959 = vmul.f32 %v129, %v9878
    %v9960 = vmul.f32 %v130, %v9878
    %v9961 = vmul.f32 %v131, %v9878
    %v9962 = vmul.f32 %v132, %v9878
    %v9963 = vmul.f32 %v133, %v9878
    %v9964 = vmul.f32 %v134, %v9878
    %v9965 = vmul.f32 %v135, %v9878
    %v9966 = vmul.f32 %v136, %v9878
    %v9967 = vmul.f32 %v137, %v9878
    %v9968 = vmul.f32 %v138, %v9878
    %v9969 = vmul.f32 %v139, %v9878
    %v9970 = vmul.f32 %v140, %v9878
    %v9971 = vmul.f32 %v141, %v9878
    %v9972 = vmul.f32 %v142, %v9878
    %v9973 = vmul.f32 %v143, %v9878
    %v9974 = vmul.f32 %v144, %v9878
    %v9975 = vadd.f32 %v9781, %v9879
    %v9976 = vadd.f32 %v9782, %v9880
    %v9977 = vadd.f32 %v9783, %v9881
    %v9978 = vadd.f32 %v9784, %v9882
    %v9979 = vadd.f32 %v9785, %v9883
    %v9980 = vadd.f32 %v9786, %v9884
    %v9981 = vadd.f32 %v9787, %v9885
    %v9982 = vadd.f32 %v9788, %v9886
    %v9983 = vadd.f32 %v9789, %v9887
    %v9984 = vadd.f32 %v9790, %v9888
    %v9985 = vadd.f32 %v9791, %v9889
    %v9986 = vadd.f32 %v9792, %v9890
    %v9987 = vadd.f32 %v9793, %v9891
    %v9988 = vadd.f32 %v9794, %v9892
    %v9989 = vadd.f32 %v9795, %v9893
    %v9990 = vadd.f32 %v9796, %v9894
    %v9991 = vadd.f32 %v9797, %v9895
    %v9992 = vadd.f32 %v9798, %v9896
    %v9993 = vadd.f32 %v9799, %v9897
    %v9994 = vadd.f32 %v9800, %v9898
    %v9995 = vadd.f32 %v9801, %v9899
    %v9996 = vadd.f32 %v9802, %v9900
    %v9997 = vadd.f32 %v9803, %v9901
    %v9998 = vadd.f32 %v9804, %v9902
    %v9999 = vadd.f32 %v9805, %v9903
    %v10000 = vadd.f32 %v9806, %v9904
    %v10001 = vadd.f32 %v9807, %v9905
    %v10002 = vadd.f32 %v9808, %v9906
    %v10003 = vadd.f32 %v9809, %v9907
    %v10004 = vadd.f32 %v9810, %v9908
    %v10005 = vadd.f32 %v9811, %v9909
    %v10006 = vadd.f32 %v9812, %v9910
    %v10007 = vadd.f32 %v9813, %v9911
    %v10008 = vadd.f32 %v9814, %v9912
    %v10009 = vadd.f32 %v9815, %v9913
    %v10010 = vadd.f32 %v9816, %v9914
    %v10011 = vadd.f32 %v9817, %v9915
    %v10012 = vadd.f32 %v9818, %v9916
    %v10013 = vadd.f32 %v9819, %v9917
    %v10014 = vadd.f32 %v9820, %v9918
    %v10015 = vadd.f32 %v9821, %v9919
    %v10016 = vadd.f32 %v9822, %v9920
    %v10017 = vadd.f32 %v9823, %v9921
    %v10018 = vadd.f32 %v9824, %v9922
    %v10019 = vadd.f32 %v9825, %v9923
    %v10020 = vadd.f32 %v9826, %v9924
    %v10021 = vadd.f32 %v9827, %v9925
    %v10022 = vadd.f32 %v9828, %v9926
    %v10023 = vadd.f32 %v9829, %v9927
    %v10024 = vadd.f32 %v9830, %v9928
    %v10025 = vadd.f32 %v9831, %v9929
    %v10026 = vadd.f32 %v9832, %v9930
    %v10027 = vadd.f32 %v9833, %v9931
    %v10028 = vadd.f32 %v9834, %v9932
    %v10029 = vadd.f32 %v9835, %v9933
    %v10030 = vadd.f32 %v9836, %v9934
    %v10031 = vadd.f32 %v9837, %v9935
    %v10032 = vadd.f32 %v9838, %v9936
    %v10033 = vadd.f32 %v9839, %v9937
    %v10034 = vadd.f32 %v9840, %v9938
    %v10035 = vadd.f32 %v9841, %v9939
    %v10036 = vadd.f32 %v9842, %v9940
    %v10037 = vadd.f32 %v9843, %v9941
    %v10038 = vadd.f32 %v9844, %v9942
    %v10039 = vadd.f32 %v9845, %v9943
    %v10040 = vadd.f32 %v9846, %v9944
    %v10041 = vadd.f32 %v9847, %v9945
    %v10042 = vadd.f32 %v9848, %v9946
    %v10043 = vadd.f32 %v9849, %v9947
    %v10044 = vadd.f32 %v9850, %v9948
    %v10045 = vadd.f32 %v9851, %v9949
    %v10046 = vadd.f32 %v9852, %v9950
    %v10047 = vadd.f32 %v9853, %v9951
    %v10048 = vadd.f32 %v9854, %v9952
    %v10049 = vadd.f32 %v9855, %v9953
    %v10050 = vadd.f32 %v9856, %v9954
    %v10051 = vadd.f32 %v9857, %v9955
    %v10052 = vadd.f32 %v9858, %v9956
    %v10053 = vadd.f32 %v9859, %v9957
    %v10054 = vadd.f32 %v9860, %v9958
    %v10055 = vadd.f32 %v9861, %v9959
    %v10056 = vadd.f32 %v9862, %v9960
    %v10057 = vadd.f32 %v9863, %v9961
    %v10058 = vadd.f32 %v9864, %v9962
    %v10059 = vadd.f32 %v9865, %v9963
    %v10060 = vadd.f32 %v9866, %v9964
    %v10061 = vadd.f32 %v9867, %v9965
    %v10062 = vadd.f32 %v9868, %v9966
    %v10063 = vadd.f32 %v9869, %v9967
    %v10064 = vadd.f32 %v9870, %v9968
    %v10065 = vadd.f32 %v9871, %v9969
    %v10066 = vadd.f32 %v9872, %v9970
    %v10067 = vadd.f32 %v9873, %v9971
    %v10068 = vadd.f32 %v9874, %v9972
    %v10069 = vadd.f32 %v9875, %v9973
    %v10070 = vadd.f32 %v9876, %v9974
    %s10071 = sld [smem:[#allocation3 + $0x16]]
    %v10072 = vstv %s10071
    %v10073 = vmul.f32 %v49, %v10072
    %v10074 = vmul.f32 %v50, %v10072
    %v10075 = vmul.f32 %v51, %v10072
    %v10076 = vmul.f32 %v52, %v10072
    %v10077 = vmul.f32 %v53, %v10072
    %v10078 = vmul.f32 %v54, %v10072
    %v10079 = vmul.f32 %v55, %v10072
    %v10080 = vmul.f32 %v56, %v10072
    %v10081 = vmul.f32 %v57, %v10072
    %v10082 = vmul.f32 %v58, %v10072
    %v10083 = vmul.f32 %v59, %v10072
    %v10084 = vmul.f32 %v60, %v10072
    %v10085 = vmul.f32 %v61, %v10072
    %v10086 = vmul.f32 %v62, %v10072
    %v10087 = vmul.f32 %v63, %v10072
    %v10088 = vmul.f32 %v64, %v10072
    %v10089 = vmul.f32 %v65, %v10072
    %v10090 = vmul.f32 %v66, %v10072
    %v10091 = vmul.f32 %v67, %v10072
    %v10092 = vmul.f32 %v68, %v10072
    %v10093 = vmul.f32 %v69, %v10072
    %v10094 = vmul.f32 %v70, %v10072
    %v10095 = vmul.f32 %v71, %v10072
    %v10096 = vmul.f32 %v72, %v10072
    %v10097 = vmul.f32 %v73, %v10072
    %v10098 = vmul.f32 %v74, %v10072
    %v10099 = vmul.f32 %v75, %v10072
    %v10100 = vmul.f32 %v76, %v10072
    %v10101 = vmul.f32 %v77, %v10072
    %v10102 = vmul.f32 %v78, %v10072
    %v10103 = vmul.f32 %v79, %v10072
    %v10104 = vmul.f32 %v80, %v10072
    %v10105 = vmul.f32 %v81, %v10072
    %v10106 = vmul.f32 %v82, %v10072
    %v10107 = vmul.f32 %v83, %v10072
    %v10108 = vmul.f32 %v84, %v10072
    %v10109 = vmul.f32 %v85, %v10072
    %v10110 = vmul.f32 %v86, %v10072
    %v10111 = vmul.f32 %v87, %v10072
    %v10112 = vmul.f32 %v88, %v10072
    %v10113 = vmul.f32 %v89, %v10072
    %v10114 = vmul.f32 %v90, %v10072
    %v10115 = vmul.f32 %v91, %v10072
    %v10116 = vmul.f32 %v92, %v10072
    %v10117 = vmul.f32 %v93, %v10072
    %v10118 = vmul.f32 %v94, %v10072
    %v10119 = vmul.f32 %v95, %v10072
    %v10120 = vmul.f32 %v96, %v10072
    %v10121 = vmul.f32 %v97, %v10072
    %v10122 = vmul.f32 %v98, %v10072
    %v10123 = vmul.f32 %v99, %v10072
    %v10124 = vmul.f32 %v100, %v10072
    %v10125 = vmul.f32 %v101, %v10072
    %v10126 = vmul.f32 %v102, %v10072
    %v10127 = vmul.f32 %v103, %v10072
    %v10128 = vmul.f32 %v104, %v10072
    %v10129 = vmul.f32 %v105, %v10072
    %v10130 = vmul.f32 %v106, %v10072
    %v10131 = vmul.f32 %v107, %v10072
    %v10132 = vmul.f32 %v108, %v10072
    %v10133 = vmul.f32 %v109, %v10072
    %v10134 = vmul.f32 %v110, %v10072
    %v10135 = vmul.f32 %v111, %v10072
    %v10136 = vmul.f32 %v112, %v10072
    %v10137 = vmul.f32 %v113, %v10072
    %v10138 = vmul.f32 %v114, %v10072
    %v10139 = vmul.f32 %v115, %v10072
    %v10140 = vmul.f32 %v116, %v10072
    %v10141 = vmul.f32 %v117, %v10072
    %v10142 = vmul.f32 %v118, %v10072
    %v10143 = vmul.f32 %v119, %v10072
    %v10144 = vmul.f32 %v120, %v10072
    %v10145 = vmul.f32 %v121, %v10072
    %v10146 = vmul.f32 %v122, %v10072
    %v10147 = vmul.f32 %v123, %v10072
    %v10148 = vmul.f32 %v124, %v10072
    %v10149 = vmul.f32 %v125, %v10072
    %v10150 = vmul.f32 %v126, %v10072
    %v10151 = vmul.f32 %v127, %v10072
    %v10152 = vmul.f32 %v128, %v10072
    %v10153 = vmul.f32 %v129, %v10072
    %v10154 = vmul.f32 %v130, %v10072
    %v10155 = vmul.f32 %v131, %v10072
    %v10156 = vmul.f32 %v132, %v10072
    %v10157 = vmul.f32 %v133, %v10072
    %v10158 = vmul.f32 %v134, %v10072
    %v10159 = vmul.f32 %v135, %v10072
    %v10160 = vmul.f32 %v136, %v10072
    %v10161 = vmul.f32 %v137, %v10072
    %v10162 = vmul.f32 %v138, %v10072
    %v10163 = vmul.f32 %v139, %v10072
    %v10164 = vmul.f32 %v140, %v10072
    %v10165 = vmul.f32 %v141, %v10072
    %v10166 = vmul.f32 %v142, %v10072
    %v10167 = vmul.f32 %v143, %v10072
    %v10168 = vmul.f32 %v144, %v10072
    %v10265 = vrot.slane %v10073, 1
    %v10266 = vrot.slane %v10074, 1
    %v10267 = vsel %vm441, %v10265, %v10266
    %v10268 = vrot.slane %v10075, 1
    %v10269 = vsel %vm441, %v10266, %v10268
    %v10270 = vrot.slane %v10076, 1
    %v10271 = vsel %vm441, %v10268, %v10270
    %v10272 = vrot.slane %v10077, 1
    %v10273 = vrot.slane %v10078, 1
    %v10274 = vsel %vm441, %v10272, %v10273
    %v10275 = vrot.slane %v10079, 1
    %v10276 = vsel %vm441, %v10273, %v10275
    %v10277 = vrot.slane %v10080, 1
    %v10278 = vsel %vm441, %v10275, %v10277
    %v10279 = vrot.slane %v10081, 1
    %v10280 = vrot.slane %v10082, 1
    %v10281 = vsel %vm441, %v10279, %v10280
    %v10282 = vrot.slane %v10083, 1
    %v10283 = vsel %vm441, %v10280, %v10282
    %v10284 = vrot.slane %v10084, 1
    %v10285 = vsel %vm441, %v10282, %v10284
    %v10286 = vrot.slane %v10085, 1
    %v10287 = vrot.slane %v10086, 1
    %v10288 = vsel %vm441, %v10286, %v10287
    %v10289 = vrot.slane %v10087, 1
    %v10290 = vsel %vm441, %v10287, %v10289
    %v10291 = vrot.slane %v10088, 1
    %v10292 = vsel %vm441, %v10289, %v10291
    %v10293 = vrot.slane %v10089, 1
    %v10294 = vrot.slane %v10090, 1
    %v10295 = vsel %vm441, %v10293, %v10294
    %v10296 = vrot.slane %v10091, 1
    %v10297 = vsel %vm441, %v10294, %v10296
    %v10298 = vrot.slane %v10092, 1
    %v10299 = vsel %vm441, %v10296, %v10298
    %v10300 = vrot.slane %v10093, 1
    %v10301 = vrot.slane %v10094, 1
    %v10302 = vsel %vm441, %v10300, %v10301
    %v10303 = vrot.slane %v10095, 1
    %v10304 = vsel %vm441, %v10301, %v10303
    %v10305 = vrot.slane %v10096, 1
    %v10306 = vsel %vm441, %v10303, %v10305
    %v10307 = vrot.slane %v10097, 1
    %v10308 = vrot.slane %v10098, 1
    %v10309 = vsel %vm441, %v10307, %v10308
    %v10310 = vrot.slane %v10099, 1
    %v10311 = vsel %vm441, %v10308, %v10310
    %v10312 = vrot.slane %v10100, 1
    %v10313 = vsel %vm441, %v10310, %v10312
    %v10314 = vrot.slane %v10101, 1
    %v10315 = vrot.slane %v10102, 1
    %v10316 = vsel %vm441, %v10314, %v10315
    %v10317 = vrot.slane %v10103, 1
    %v10318 = vsel %vm441, %v10315, %v10317
    %v10319 = vrot.slane %v10104, 1
    %v10320 = vsel %vm441, %v10317, %v10319
    %v10321 = vrot.slane %v10105, 1
    %v10322 = vrot.slane %v10106, 1
    %v10323 = vsel %vm441, %v10321, %v10322
    %v10324 = vrot.slane %v10107, 1
    %v10325 = vsel %vm441, %v10322, %v10324
    %v10326 = vrot.slane %v10108, 1
    %v10327 = vsel %vm441, %v10324, %v10326
    %v10328 = vrot.slane %v10109, 1
    %v10329 = vrot.slane %v10110, 1
    %v10330 = vsel %vm441, %v10328, %v10329
    %v10331 = vrot.slane %v10111, 1
    %v10332 = vsel %vm441, %v10329, %v10331
    %v10333 = vrot.slane %v10112, 1
    %v10334 = vsel %vm441, %v10331, %v10333
    %v10335 = vrot.slane %v10113, 1
    %v10336 = vrot.slane %v10114, 1
    %v10337 = vsel %vm441, %v10335, %v10336
    %v10338 = vrot.slane %v10115, 1
    %v10339 = vsel %vm441, %v10336, %v10338
    %v10340 = vrot.slane %v10116, 1
    %v10341 = vsel %vm441, %v10338, %v10340
    %v10342 = vrot.slane %v10117, 1
    %v10343 = vrot.slane %v10118, 1
    %v10344 = vsel %vm441, %v10342, %v10343
    %v10345 = vrot.slane %v10119, 1
    %v10346 = vsel %vm441, %v10343, %v10345
    %v10347 = vrot.slane %v10120, 1
    %v10348 = vsel %vm441, %v10345, %v10347
    %v10349 = vrot.slane %v10121, 1
    %v10350 = vrot.slane %v10122, 1
    %v10351 = vsel %vm441, %v10349, %v10350
    %v10352 = vrot.slane %v10123, 1
    %v10353 = vsel %vm441, %v10350, %v10352
    %v10354 = vrot.slane %v10124, 1
    %v10355 = vsel %vm441, %v10352, %v10354
    %v10356 = vrot.slane %v10125, 1
    %v10357 = vrot.slane %v10126, 1
    %v10358 = vsel %vm441, %v10356, %v10357
    %v10359 = vrot.slane %v10127, 1
    %v10360 = vsel %vm441, %v10357, %v10359
    %v10361 = vrot.slane %v10128, 1
    %v10362 = vsel %vm441, %v10359, %v10361
    %v10363 = vrot.slane %v10129, 1
    %v10364 = vrot.slane %v10130, 1
    %v10365 = vsel %vm441, %v10363, %v10364
    %v10366 = vrot.slane %v10131, 1
    %v10367 = vsel %vm441, %v10364, %v10366
    %v10368 = vrot.slane %v10132, 1
    %v10369 = vsel %vm441, %v10366, %v10368
    %v10370 = vrot.slane %v10133, 1
    %v10371 = vrot.slane %v10134, 1
    %v10372 = vsel %vm441, %v10370, %v10371
    %v10373 = vrot.slane %v10135, 1
    %v10374 = vsel %vm441, %v10371, %v10373
    %v10375 = vrot.slane %v10136, 1
    %v10376 = vsel %vm441, %v10373, %v10375
    %v10377 = vrot.slane %v10137, 1
    %v10378 = vrot.slane %v10138, 1
    %v10379 = vsel %vm441, %v10377, %v10378
    %v10380 = vrot.slane %v10139, 1
    %v10381 = vsel %vm441, %v10378, %v10380
    %v10382 = vrot.slane %v10140, 1
    %v10383 = vsel %vm441, %v10380, %v10382
    %v10384 = vrot.slane %v10141, 1
    %v10385 = vrot.slane %v10142, 1
    %v10386 = vsel %vm441, %v10384, %v10385
    %v10387 = vrot.slane %v10143, 1
    %v10388 = vsel %vm441, %v10385, %v10387
    %v10389 = vrot.slane %v10144, 1
    %v10390 = vsel %vm441, %v10387, %v10389
    %v10391 = vrot.slane %v10145, 1
    %v10392 = vrot.slane %v10146, 1
    %v10393 = vsel %vm441, %v10391, %v10392
    %v10394 = vrot.slane %v10147, 1
    %v10395 = vsel %vm441, %v10392, %v10394
    %v10396 = vrot.slane %v10148, 1
    %v10397 = vsel %vm441, %v10394, %v10396
    %v10398 = vrot.slane %v10149, 1
    %v10399 = vrot.slane %v10150, 1
    %v10400 = vsel %vm441, %v10398, %v10399
    %v10401 = vrot.slane %v10151, 1
    %v10402 = vsel %vm441, %v10399, %v10401
    %v10403 = vrot.slane %v10152, 1
    %v10404 = vsel %vm441, %v10401, %v10403
    %v10405 = vrot.slane %v10153, 1
    %v10406 = vrot.slane %v10154, 1
    %v10407 = vsel %vm441, %v10405, %v10406
    %v10408 = vrot.slane %v10155, 1
    %v10409 = vsel %vm441, %v10406, %v10408
    %v10410 = vrot.slane %v10156, 1
    %v10411 = vsel %vm441, %v10408, %v10410
    %v10412 = vrot.slane %v10157, 1
    %v10413 = vrot.slane %v10158, 1
    %v10414 = vsel %vm441, %v10412, %v10413
    %v10415 = vrot.slane %v10159, 1
    %v10416 = vsel %vm441, %v10413, %v10415
    %v10417 = vrot.slane %v10160, 1
    %v10418 = vsel %vm441, %v10415, %v10417
    %v10419 = vrot.slane %v10161, 1
    %v10420 = vrot.slane %v10162, 1
    %v10421 = vsel %vm441, %v10419, %v10420
    %v10422 = vrot.slane %v10163, 1
    %v10423 = vsel %vm441, %v10420, %v10422
    %v10424 = vrot.slane %v10164, 1
    %v10425 = vsel %vm441, %v10422, %v10424
    %v10426 = vrot.slane %v10165, 1
    %v10427 = vrot.slane %v10166, 1
    %v10428 = vsel %vm441, %v10426, %v10427
    %v10429 = vrot.slane %v10167, 1
    %v10430 = vsel %vm441, %v10427, %v10429
    %v10431 = vrot.slane %v10168, 1
    %v10432 = vsel %vm441, %v10429, %v10431
    %v10529 = vadd.f32 %v9975, %v10267
    %v10530 = vadd.f32 %v9976, %v10269
    %v10531 = vadd.f32 %v9977, %v10271
    %v10532 = vadd.f32 %v9978, %v10270
    %v10533 = vadd.f32 %v9979, %v10274
    %v10534 = vadd.f32 %v9980, %v10276
    %v10535 = vadd.f32 %v9981, %v10278
    %v10536 = vadd.f32 %v9982, %v10277
    %v10537 = vadd.f32 %v9983, %v10281
    %v10538 = vadd.f32 %v9984, %v10283
    %v10539 = vadd.f32 %v9985, %v10285
    %v10540 = vadd.f32 %v9986, %v10284
    %v10541 = vadd.f32 %v9987, %v10288
    %v10542 = vadd.f32 %v9988, %v10290
    %v10543 = vadd.f32 %v9989, %v10292
    %v10544 = vadd.f32 %v9990, %v10291
    %v10545 = vadd.f32 %v9991, %v10295
    %v10546 = vadd.f32 %v9992, %v10297
    %v10547 = vadd.f32 %v9993, %v10299
    %v10548 = vadd.f32 %v9994, %v10298
    %v10549 = vadd.f32 %v9995, %v10302
    %v10550 = vadd.f32 %v9996, %v10304
    %v10551 = vadd.f32 %v9997, %v10306
    %v10552 = vadd.f32 %v9998, %v10305
    %v10553 = vadd.f32 %v9999, %v10309
    %v10554 = vadd.f32 %v10000, %v10311
    %v10555 = vadd.f32 %v10001, %v10313
    %v10556 = vadd.f32 %v10002, %v10312
    %v10557 = vadd.f32 %v10003, %v10316
    %v10558 = vadd.f32 %v10004, %v10318
    %v10559 = vadd.f32 %v10005, %v10320
    %v10560 = vadd.f32 %v10006, %v10319
    %v10561 = vadd.f32 %v10007, %v10323
    %v10562 = vadd.f32 %v10008, %v10325
    %v10563 = vadd.f32 %v10009, %v10327
    %v10564 = vadd.f32 %v10010, %v10326
    %v10565 = vadd.f32 %v10011, %v10330
    %v10566 = vadd.f32 %v10012, %v10332
    %v10567 = vadd.f32 %v10013, %v10334
    %v10568 = vadd.f32 %v10014, %v10333
    %v10569 = vadd.f32 %v10015, %v10337
    %v10570 = vadd.f32 %v10016, %v10339
    %v10571 = vadd.f32 %v10017, %v10341
    %v10572 = vadd.f32 %v10018, %v10340
    %v10573 = vadd.f32 %v10019, %v10344
    %v10574 = vadd.f32 %v10020, %v10346
    %v10575 = vadd.f32 %v10021, %v10348
    %v10576 = vadd.f32 %v10022, %v10347
    %v10577 = vadd.f32 %v10023, %v10351
    %v10578 = vadd.f32 %v10024, %v10353
    %v10579 = vadd.f32 %v10025, %v10355
    %v10580 = vadd.f32 %v10026, %v10354
    %v10581 = vadd.f32 %v10027, %v10358
    %v10582 = vadd.f32 %v10028, %v10360
    %v10583 = vadd.f32 %v10029, %v10362
    %v10584 = vadd.f32 %v10030, %v10361
    %v10585 = vadd.f32 %v10031, %v10365
    %v10586 = vadd.f32 %v10032, %v10367
    %v10587 = vadd.f32 %v10033, %v10369
    %v10588 = vadd.f32 %v10034, %v10368
    %v10589 = vadd.f32 %v10035, %v10372
    %v10590 = vadd.f32 %v10036, %v10374
    %v10591 = vadd.f32 %v10037, %v10376
    %v10592 = vadd.f32 %v10038, %v10375
    %v10593 = vadd.f32 %v10039, %v10379
    %v10594 = vadd.f32 %v10040, %v10381
    %v10595 = vadd.f32 %v10041, %v10383
    %v10596 = vadd.f32 %v10042, %v10382
    %v10597 = vadd.f32 %v10043, %v10386
    %v10598 = vadd.f32 %v10044, %v10388
    %v10599 = vadd.f32 %v10045, %v10390
    %v10600 = vadd.f32 %v10046, %v10389
    %v10601 = vadd.f32 %v10047, %v10393
    %v10602 = vadd.f32 %v10048, %v10395
    %v10603 = vadd.f32 %v10049, %v10397
    %v10604 = vadd.f32 %v10050, %v10396
    %v10605 = vadd.f32 %v10051, %v10400
    %v10606 = vadd.f32 %v10052, %v10402
    %v10607 = vadd.f32 %v10053, %v10404
    %v10608 = vadd.f32 %v10054, %v10403
    %v10609 = vadd.f32 %v10055, %v10407
    %v10610 = vadd.f32 %v10056, %v10409
    %v10611 = vadd.f32 %v10057, %v10411
    %v10612 = vadd.f32 %v10058, %v10410
    %v10613 = vadd.f32 %v10059, %v10414
    %v10614 = vadd.f32 %v10060, %v10416
    %v10615 = vadd.f32 %v10061, %v10418
    %v10616 = vadd.f32 %v10062, %v10417
    %v10617 = vadd.f32 %v10063, %v10421
    %v10618 = vadd.f32 %v10064, %v10423
    %v10619 = vadd.f32 %v10065, %v10425
    %v10620 = vadd.f32 %v10066, %v10424
    %v10621 = vadd.f32 %v10067, %v10428
    %v10622 = vadd.f32 %v10068, %v10430
    %v10623 = vadd.f32 %v10069, %v10432
    %v10624 = vadd.f32 %v10070, %v10431
    %s10625 = sld [smem:[#allocation3 + $0x17]]
    %v10626 = vstv %s10625
    %v10627 = vmul.f32 %v49, %v10626
    %v10628 = vmul.f32 %v50, %v10626
    %v10629 = vmul.f32 %v51, %v10626
    %v10630 = vmul.f32 %v52, %v10626
    %v10631 = vmul.f32 %v53, %v10626
    %v10632 = vmul.f32 %v54, %v10626
    %v10633 = vmul.f32 %v55, %v10626
    %v10634 = vmul.f32 %v56, %v10626
    %v10635 = vmul.f32 %v57, %v10626
    %v10636 = vmul.f32 %v58, %v10626
    %v10637 = vmul.f32 %v59, %v10626
    %v10638 = vmul.f32 %v60, %v10626
    %v10639 = vmul.f32 %v61, %v10626
    %v10640 = vmul.f32 %v62, %v10626
    %v10641 = vmul.f32 %v63, %v10626
    %v10642 = vmul.f32 %v64, %v10626
    %v10643 = vmul.f32 %v65, %v10626
    %v10644 = vmul.f32 %v66, %v10626
    %v10645 = vmul.f32 %v67, %v10626
    %v10646 = vmul.f32 %v68, %v10626
    %v10647 = vmul.f32 %v69, %v10626
    %v10648 = vmul.f32 %v70, %v10626
    %v10649 = vmul.f32 %v71, %v10626
    %v10650 = vmul.f32 %v72, %v10626
    %v10651 = vmul.f32 %v73, %v10626
    %v10652 = vmul.f32 %v74, %v10626
    %v10653 = vmul.f32 %v75, %v10626
    %v10654 = vmul.f32 %v76, %v10626
    %v10655 = vmul.f32 %v77, %v10626
    %v10656 = vmul.f32 %v78, %v10626
    %v10657 = vmul.f32 %v79, %v10626
    %v10658 = vmul.f32 %v80, %v10626
    %v10659 = vmul.f32 %v81, %v10626
    %v10660 = vmul.f32 %v82, %v10626
    %v10661 = vmul.f32 %v83, %v10626
    %v10662 = vmul.f32 %v84, %v10626
    %v10663 = vmul.f32 %v85, %v10626
    %v10664 = vmul.f32 %v86, %v10626
    %v10665 = vmul.f32 %v87, %v10626
    %v10666 = vmul.f32 %v88, %v10626
    %v10667 = vmul.f32 %v89, %v10626
    %v10668 = vmul.f32 %v90, %v10626
    %v10669 = vmul.f32 %v91, %v10626
    %v10670 = vmul.f32 %v92, %v10626
    %v10671 = vmul.f32 %v93, %v10626
    %v10672 = vmul.f32 %v94, %v10626
    %v10673 = vmul.f32 %v95, %v10626
    %v10674 = vmul.f32 %v96, %v10626
    %v10675 = vmul.f32 %v97, %v10626
    %v10676 = vmul.f32 %v98, %v10626
    %v10677 = vmul.f32 %v99, %v10626
    %v10678 = vmul.f32 %v100, %v10626
    %v10679 = vmul.f32 %v101, %v10626
    %v10680 = vmul.f32 %v102, %v10626
    %v10681 = vmul.f32 %v103, %v10626
    %v10682 = vmul.f32 %v104, %v10626
    %v10683 = vmul.f32 %v105, %v10626
    %v10684 = vmul.f32 %v106, %v10626
    %v10685 = vmul.f32 %v107, %v10626
    %v10686 = vmul.f32 %v108, %v10626
    %v10687 = vmul.f32 %v109, %v10626
    %v10688 = vmul.f32 %v110, %v10626
    %v10689 = vmul.f32 %v111, %v10626
    %v10690 = vmul.f32 %v112, %v10626
    %v10691 = vmul.f32 %v113, %v10626
    %v10692 = vmul.f32 %v114, %v10626
    %v10693 = vmul.f32 %v115, %v10626
    %v10694 = vmul.f32 %v116, %v10626
    %v10695 = vmul.f32 %v117, %v10626
    %v10696 = vmul.f32 %v118, %v10626
    %v10697 = vmul.f32 %v119, %v10626
    %v10698 = vmul.f32 %v120, %v10626
    %v10699 = vmul.f32 %v121, %v10626
    %v10700 = vmul.f32 %v122, %v10626
    %v10701 = vmul.f32 %v123, %v10626
    %v10702 = vmul.f32 %v124, %v10626
    %v10703 = vmul.f32 %v125, %v10626
    %v10704 = vmul.f32 %v126, %v10626
    %v10705 = vmul.f32 %v127, %v10626
    %v10706 = vmul.f32 %v128, %v10626
    %v10707 = vmul.f32 %v129, %v10626
    %v10708 = vmul.f32 %v130, %v10626
    %v10709 = vmul.f32 %v131, %v10626
    %v10710 = vmul.f32 %v132, %v10626
    %v10711 = vmul.f32 %v133, %v10626
    %v10712 = vmul.f32 %v134, %v10626
    %v10713 = vmul.f32 %v135, %v10626
    %v10714 = vmul.f32 %v136, %v10626
    %v10715 = vmul.f32 %v137, %v10626
    %v10716 = vmul.f32 %v138, %v10626
    %v10717 = vmul.f32 %v139, %v10626
    %v10718 = vmul.f32 %v140, %v10626
    %v10719 = vmul.f32 %v141, %v10626
    %v10720 = vmul.f32 %v142, %v10626
    %v10721 = vmul.f32 %v143, %v10626
    %v10722 = vmul.f32 %v144, %v10626
    %v10819 = vrot.slane %v10627, 2
    %v10820 = vrot.slane %v10628, 2
    %v10821 = vsel %vm996, %v10819, %v10820
    %v10822 = vrot.slane %v10629, 2
    %v10823 = vsel %vm996, %v10820, %v10822
    %v10824 = vrot.slane %v10630, 2
    %v10825 = vsel %vm996, %v10822, %v10824
    %v10826 = vrot.slane %v10631, 2
    %v10827 = vrot.slane %v10632, 2
    %v10828 = vsel %vm996, %v10826, %v10827
    %v10829 = vrot.slane %v10633, 2
    %v10830 = vsel %vm996, %v10827, %v10829
    %v10831 = vrot.slane %v10634, 2
    %v10832 = vsel %vm996, %v10829, %v10831
    %v10833 = vrot.slane %v10635, 2
    %v10834 = vrot.slane %v10636, 2
    %v10835 = vsel %vm996, %v10833, %v10834
    %v10836 = vrot.slane %v10637, 2
    %v10837 = vsel %vm996, %v10834, %v10836
    %v10838 = vrot.slane %v10638, 2
    %v10839 = vsel %vm996, %v10836, %v10838
    %v10840 = vrot.slane %v10639, 2
    %v10841 = vrot.slane %v10640, 2
    %v10842 = vsel %vm996, %v10840, %v10841
    %v10843 = vrot.slane %v10641, 2
    %v10844 = vsel %vm996, %v10841, %v10843
    %v10845 = vrot.slane %v10642, 2
    %v10846 = vsel %vm996, %v10843, %v10845
    %v10847 = vrot.slane %v10643, 2
    %v10848 = vrot.slane %v10644, 2
    %v10849 = vsel %vm996, %v10847, %v10848
    %v10850 = vrot.slane %v10645, 2
    %v10851 = vsel %vm996, %v10848, %v10850
    %v10852 = vrot.slane %v10646, 2
    %v10853 = vsel %vm996, %v10850, %v10852
    %v10854 = vrot.slane %v10647, 2
    %v10855 = vrot.slane %v10648, 2
    %v10856 = vsel %vm996, %v10854, %v10855
    %v10857 = vrot.slane %v10649, 2
    %v10858 = vsel %vm996, %v10855, %v10857
    %v10859 = vrot.slane %v10650, 2
    %v10860 = vsel %vm996, %v10857, %v10859
    %v10861 = vrot.slane %v10651, 2
    %v10862 = vrot.slane %v10652, 2
    %v10863 = vsel %vm996, %v10861, %v10862
    %v10864 = vrot.slane %v10653, 2
    %v10865 = vsel %vm996, %v10862, %v10864
    %v10866 = vrot.slane %v10654, 2
    %v10867 = vsel %vm996, %v10864, %v10866
    %v10868 = vrot.slane %v10655, 2
    %v10869 = vrot.slane %v10656, 2
    %v10870 = vsel %vm996, %v10868, %v10869
    %v10871 = vrot.slane %v10657, 2
    %v10872 = vsel %vm996, %v10869, %v10871
    %v10873 = vrot.slane %v10658, 2
    %v10874 = vsel %vm996, %v10871, %v10873
    %v10875 = vrot.slane %v10659, 2
    %v10876 = vrot.slane %v10660, 2
    %v10877 = vsel %vm996, %v10875, %v10876
    %v10878 = vrot.slane %v10661, 2
    %v10879 = vsel %vm996, %v10876, %v10878
    %v10880 = vrot.slane %v10662, 2
    %v10881 = vsel %vm996, %v10878, %v10880
    %v10882 = vrot.slane %v10663, 2
    %v10883 = vrot.slane %v10664, 2
    %v10884 = vsel %vm996, %v10882, %v10883
    %v10885 = vrot.slane %v10665, 2
    %v10886 = vsel %vm996, %v10883, %v10885
    %v10887 = vrot.slane %v10666, 2
    %v10888 = vsel %vm996, %v10885, %v10887
    %v10889 = vrot.slane %v10667, 2
    %v10890 = vrot.slane %v10668, 2
    %v10891 = vsel %vm996, %v10889, %v10890
    %v10892 = vrot.slane %v10669, 2
    %v10893 = vsel %vm996, %v10890, %v10892
    %v10894 = vrot.slane %v10670, 2
    %v10895 = vsel %vm996, %v10892, %v10894
    %v10896 = vrot.slane %v10671, 2
    %v10897 = vrot.slane %v10672, 2
    %v10898 = vsel %vm996, %v10896, %v10897
    %v10899 = vrot.slane %v10673, 2
    %v10900 = vsel %vm996, %v10897, %v10899
    %v10901 = vrot.slane %v10674, 2
    %v10902 = vsel %vm996, %v10899, %v10901
    %v10903 = vrot.slane %v10675, 2
    %v10904 = vrot.slane %v10676, 2
    %v10905 = vsel %vm996, %v10903, %v10904
    %v10906 = vrot.slane %v10677, 2
    %v10907 = vsel %vm996, %v10904, %v10906
    %v10908 = vrot.slane %v10678, 2
    %v10909 = vsel %vm996, %v10906, %v10908
    %v10910 = vrot.slane %v10679, 2
    %v10911 = vrot.slane %v10680, 2
    %v10912 = vsel %vm996, %v10910, %v10911
    %v10913 = vrot.slane %v10681, 2
    %v10914 = vsel %vm996, %v10911, %v10913
    %v10915 = vrot.slane %v10682, 2
    %v10916 = vsel %vm996, %v10913, %v10915
    %v10917 = vrot.slane %v10683, 2
    %v10918 = vrot.slane %v10684, 2
    %v10919 = vsel %vm996, %v10917, %v10918
    %v10920 = vrot.slane %v10685, 2
    %v10921 = vsel %vm996, %v10918, %v10920
    %v10922 = vrot.slane %v10686, 2
    %v10923 = vsel %vm996, %v10920, %v10922
    %v10924 = vrot.slane %v10687, 2
    %v10925 = vrot.slane %v10688, 2
    %v10926 = vsel %vm996, %v10924, %v10925
    %v10927 = vrot.slane %v10689, 2
    %v10928 = vsel %vm996, %v10925, %v10927
    %v10929 = vrot.slane %v10690, 2
    %v10930 = vsel %vm996, %v10927, %v10929
    %v10931 = vrot.slane %v10691, 2
    %v10932 = vrot.slane %v10692, 2
    %v10933 = vsel %vm996, %v10931, %v10932
    %v10934 = vrot.slane %v10693, 2
    %v10935 = vsel %vm996, %v10932, %v10934
    %v10936 = vrot.slane %v10694, 2
    %v10937 = vsel %vm996, %v10934, %v10936
    %v10938 = vrot.slane %v10695, 2
    %v10939 = vrot.slane %v10696, 2
    %v10940 = vsel %vm996, %v10938, %v10939
    %v10941 = vrot.slane %v10697, 2
    %v10942 = vsel %vm996, %v10939, %v10941
    %v10943 = vrot.slane %v10698, 2
    %v10944 = vsel %vm996, %v10941, %v10943
    %v10945 = vrot.slane %v10699, 2
    %v10946 = vrot.slane %v10700, 2
    %v10947 = vsel %vm996, %v10945, %v10946
    %v10948 = vrot.slane %v10701, 2
    %v10949 = vsel %vm996, %v10946, %v10948
    %v10950 = vrot.slane %v10702, 2
    %v10951 = vsel %vm996, %v10948, %v10950
    %v10952 = vrot.slane %v10703, 2
    %v10953 = vrot.slane %v10704, 2
    %v10954 = vsel %vm996, %v10952, %v10953
    %v10955 = vrot.slane %v10705, 2
    %v10956 = vsel %vm996, %v10953, %v10955
    %v10957 = vrot.slane %v10706, 2
    %v10958 = vsel %vm996, %v10955, %v10957
    %v10959 = vrot.slane %v10707, 2
    %v10960 = vrot.slane %v10708, 2
    %v10961 = vsel %vm996, %v10959, %v10960
    %v10962 = vrot.slane %v10709, 2
    %v10963 = vsel %vm996, %v10960, %v10962
    %v10964 = vrot.slane %v10710, 2
    %v10965 = vsel %vm996, %v10962, %v10964
    %v10966 = vrot.slane %v10711, 2
    %v10967 = vrot.slane %v10712, 2
    %v10968 = vsel %vm996, %v10966, %v10967
    %v10969 = vrot.slane %v10713, 2
    %v10970 = vsel %vm996, %v10967, %v10969
    %v10971 = vrot.slane %v10714, 2
    %v10972 = vsel %vm996, %v10969, %v10971
    %v10973 = vrot.slane %v10715, 2
    %v10974 = vrot.slane %v10716, 2
    %v10975 = vsel %vm996, %v10973, %v10974
    %v10976 = vrot.slane %v10717, 2
    %v10977 = vsel %vm996, %v10974, %v10976
    %v10978 = vrot.slane %v10718, 2
    %v10979 = vsel %vm996, %v10976, %v10978
    %v10980 = vrot.slane %v10719, 2
    %v10981 = vrot.slane %v10720, 2
    %v10982 = vsel %vm996, %v10980, %v10981
    %v10983 = vrot.slane %v10721, 2
    %v10984 = vsel %vm996, %v10981, %v10983
    %v10985 = vrot.slane %v10722, 2
    %v10986 = vsel %vm996, %v10983, %v10985
    %v11083 = vadd.f32 %v10529, %v10821
    %v11084 = vadd.f32 %v10530, %v10823
    %v11085 = vadd.f32 %v10531, %v10825
    %v11086 = vadd.f32 %v10532, %v10824
    %v11087 = vadd.f32 %v10533, %v10828
    %v11088 = vadd.f32 %v10534, %v10830
    %v11089 = vadd.f32 %v10535, %v10832
    %v11090 = vadd.f32 %v10536, %v10831
    %v11091 = vadd.f32 %v10537, %v10835
    %v11092 = vadd.f32 %v10538, %v10837
    %v11093 = vadd.f32 %v10539, %v10839
    %v11094 = vadd.f32 %v10540, %v10838
    %v11095 = vadd.f32 %v10541, %v10842
    %v11096 = vadd.f32 %v10542, %v10844
    %v11097 = vadd.f32 %v10543, %v10846
    %v11098 = vadd.f32 %v10544, %v10845
    %v11099 = vadd.f32 %v10545, %v10849
    %v11100 = vadd.f32 %v10546, %v10851
    %v11101 = vadd.f32 %v10547, %v10853
    %v11102 = vadd.f32 %v10548, %v10852
    %v11103 = vadd.f32 %v10549, %v10856
    %v11104 = vadd.f32 %v10550, %v10858
    %v11105 = vadd.f32 %v10551, %v10860
    %v11106 = vadd.f32 %v10552, %v10859
    %v11107 = vadd.f32 %v10553, %v10863
    %v11108 = vadd.f32 %v10554, %v10865
    %v11109 = vadd.f32 %v10555, %v10867
    %v11110 = vadd.f32 %v10556, %v10866
    %v11111 = vadd.f32 %v10557, %v10870
    %v11112 = vadd.f32 %v10558, %v10872
    %v11113 = vadd.f32 %v10559, %v10874
    %v11114 = vadd.f32 %v10560, %v10873
    %v11115 = vadd.f32 %v10561, %v10877
    %v11116 = vadd.f32 %v10562, %v10879
    %v11117 = vadd.f32 %v10563, %v10881
    %v11118 = vadd.f32 %v10564, %v10880
    %v11119 = vadd.f32 %v10565, %v10884
    %v11120 = vadd.f32 %v10566, %v10886
    %v11121 = vadd.f32 %v10567, %v10888
    %v11122 = vadd.f32 %v10568, %v10887
    %v11123 = vadd.f32 %v10569, %v10891
    %v11124 = vadd.f32 %v10570, %v10893
    %v11125 = vadd.f32 %v10571, %v10895
    %v11126 = vadd.f32 %v10572, %v10894
    %v11127 = vadd.f32 %v10573, %v10898
    %v11128 = vadd.f32 %v10574, %v10900
    %v11129 = vadd.f32 %v10575, %v10902
    %v11130 = vadd.f32 %v10576, %v10901
    %v11131 = vadd.f32 %v10577, %v10905
    %v11132 = vadd.f32 %v10578, %v10907
    %v11133 = vadd.f32 %v10579, %v10909
    %v11134 = vadd.f32 %v10580, %v10908
    %v11135 = vadd.f32 %v10581, %v10912
    %v11136 = vadd.f32 %v10582, %v10914
    %v11137 = vadd.f32 %v10583, %v10916
    %v11138 = vadd.f32 %v10584, %v10915
    %v11139 = vadd.f32 %v10585, %v10919
    %v11140 = vadd.f32 %v10586, %v10921
    %v11141 = vadd.f32 %v10587, %v10923
    %v11142 = vadd.f32 %v10588, %v10922
    %v11143 = vadd.f32 %v10589, %v10926
    %v11144 = vadd.f32 %v10590, %v10928
    %v11145 = vadd.f32 %v10591, %v10930
    %v11146 = vadd.f32 %v10592, %v10929
    %v11147 = vadd.f32 %v10593, %v10933
    %v11148 = vadd.f32 %v10594, %v10935
    %v11149 = vadd.f32 %v10595, %v10937
    %v11150 = vadd.f32 %v10596, %v10936
    %v11151 = vadd.f32 %v10597, %v10940
    %v11152 = vadd.f32 %v10598, %v10942
    %v11153 = vadd.f32 %v10599, %v10944
    %v11154 = vadd.f32 %v10600, %v10943
    %v11155 = vadd.f32 %v10601, %v10947
    %v11156 = vadd.f32 %v10602, %v10949
    %v11157 = vadd.f32 %v10603, %v10951
    %v11158 = vadd.f32 %v10604, %v10950
    %v11159 = vadd.f32 %v10605, %v10954
    %v11160 = vadd.f32 %v10606, %v10956
    %v11161 = vadd.f32 %v10607, %v10958
    %v11162 = vadd.f32 %v10608, %v10957
    %v11163 = vadd.f32 %v10609, %v10961
    %v11164 = vadd.f32 %v10610, %v10963
    %v11165 = vadd.f32 %v10611, %v10965
    %v11166 = vadd.f32 %v10612, %v10964
    %v11167 = vadd.f32 %v10613, %v10968
    %v11168 = vadd.f32 %v10614, %v10970
    %v11169 = vadd.f32 %v10615, %v10972
    %v11170 = vadd.f32 %v10616, %v10971
    %v11171 = vadd.f32 %v10617, %v10975
    %v11172 = vadd.f32 %v10618, %v10977
    %v11173 = vadd.f32 %v10619, %v10979
    %v11174 = vadd.f32 %v10620, %v10978
    %v11175 = vadd.f32 %v10621, %v10982
    %v11176 = vadd.f32 %v10622, %v10984
    %v11177 = vadd.f32 %v10623, %v10986
    %v11178 = vadd.f32 %v10624, %v10985
    %s11179 = sld [smem:[#allocation3 + $0x18]]
    %v11180 = vstv %s11179
    %v11181 = vmul.f32 %v53, %v11180
    %v11182 = vmul.f32 %v54, %v11180
    %v11183 = vmul.f32 %v55, %v11180
    %v11184 = vmul.f32 %v56, %v11180
    %v11185 = vmul.f32 %v57, %v11180
    %v11186 = vmul.f32 %v58, %v11180
    %v11187 = vmul.f32 %v59, %v11180
    %v11188 = vmul.f32 %v60, %v11180
    %v11189 = vmul.f32 %v61, %v11180
    %v11190 = vmul.f32 %v62, %v11180
    %v11191 = vmul.f32 %v63, %v11180
    %v11192 = vmul.f32 %v64, %v11180
    %v11193 = vmul.f32 %v65, %v11180
    %v11194 = vmul.f32 %v66, %v11180
    %v11195 = vmul.f32 %v67, %v11180
    %v11196 = vmul.f32 %v68, %v11180
    %v11197 = vmul.f32 %v69, %v11180
    %v11198 = vmul.f32 %v70, %v11180
    %v11199 = vmul.f32 %v71, %v11180
    %v11200 = vmul.f32 %v72, %v11180
    %v11201 = vmul.f32 %v73, %v11180
    %v11202 = vmul.f32 %v74, %v11180
    %v11203 = vmul.f32 %v75, %v11180
    %v11204 = vmul.f32 %v76, %v11180
    %v11205 = vmul.f32 %v77, %v11180
    %v11206 = vmul.f32 %v78, %v11180
    %v11207 = vmul.f32 %v79, %v11180
    %v11208 = vmul.f32 %v80, %v11180
    %v11209 = vmul.f32 %v81, %v11180
    %v11210 = vmul.f32 %v82, %v11180
    %v11211 = vmul.f32 %v83, %v11180
    %v11212 = vmul.f32 %v84, %v11180
    %v11213 = vmul.f32 %v85, %v11180
    %v11214 = vmul.f32 %v86, %v11180
    %v11215 = vmul.f32 %v87, %v11180
    %v11216 = vmul.f32 %v88, %v11180
    %v11217 = vmul.f32 %v89, %v11180
    %v11218 = vmul.f32 %v90, %v11180
    %v11219 = vmul.f32 %v91, %v11180
    %v11220 = vmul.f32 %v92, %v11180
    %v11221 = vmul.f32 %v93, %v11180
    %v11222 = vmul.f32 %v94, %v11180
    %v11223 = vmul.f32 %v95, %v11180
    %v11224 = vmul.f32 %v96, %v11180
    %v11225 = vmul.f32 %v97, %v11180
    %v11226 = vmul.f32 %v98, %v11180
    %v11227 = vmul.f32 %v99, %v11180
    %v11228 = vmul.f32 %v100, %v11180
    %v11229 = vmul.f32 %v101, %v11180
    %v11230 = vmul.f32 %v102, %v11180
    %v11231 = vmul.f32 %v103, %v11180
    %v11232 = vmul.f32 %v104, %v11180
    %v11233 = vmul.f32 %v105, %v11180
    %v11234 = vmul.f32 %v106, %v11180
    %v11235 = vmul.f32 %v107, %v11180
    %v11236 = vmul.f32 %v108, %v11180
    %v11237 = vmul.f32 %v109, %v11180
    %v11238 = vmul.f32 %v110, %v11180
    %v11239 = vmul.f32 %v111, %v11180
    %v11240 = vmul.f32 %v112, %v11180
    %v11241 = vmul.f32 %v113, %v11180
    %v11242 = vmul.f32 %v114, %v11180
    %v11243 = vmul.f32 %v115, %v11180
    %v11244 = vmul.f32 %v116, %v11180
    %v11245 = vmul.f32 %v117, %v11180
    %v11246 = vmul.f32 %v118, %v11180
    %v11247 = vmul.f32 %v119, %v11180
    %v11248 = vmul.f32 %v120, %v11180
    %v11249 = vmul.f32 %v121, %v11180
    %v11250 = vmul.f32 %v122, %v11180
    %v11251 = vmul.f32 %v123, %v11180
    %v11252 = vmul.f32 %v124, %v11180
    %v11253 = vmul.f32 %v125, %v11180
    %v11254 = vmul.f32 %v126, %v11180
    %v11255 = vmul.f32 %v127, %v11180
    %v11256 = vmul.f32 %v128, %v11180
    %v11257 = vmul.f32 %v129, %v11180
    %v11258 = vmul.f32 %v130, %v11180
    %v11259 = vmul.f32 %v131, %v11180
    %v11260 = vmul.f32 %v132, %v11180
    %v11261 = vmul.f32 %v133, %v11180
    %v11262 = vmul.f32 %v134, %v11180
    %v11263 = vmul.f32 %v135, %v11180
    %v11264 = vmul.f32 %v136, %v11180
    %v11265 = vmul.f32 %v137, %v11180
    %v11266 = vmul.f32 %v138, %v11180
    %v11267 = vmul.f32 %v139, %v11180
    %v11268 = vmul.f32 %v140, %v11180
    %v11269 = vmul.f32 %v141, %v11180
    %v11270 = vmul.f32 %v142, %v11180
    %v11271 = vmul.f32 %v143, %v11180
    %v11272 = vmul.f32 %v144, %v11180
    %v11273 = vmul.f32 %v145, %v11180
    %v11274 = vmul.f32 %v146, %v11180
    %v11275 = vmul.f32 %v147, %v11180
    %v11276 = vmul.f32 %v148, %v11180
    %v11277 = vadd.f32 %v11083, %v11181
    %v11278 = vadd.f32 %v11084, %v11182
    %v11279 = vadd.f32 %v11085, %v11183
    %v11280 = vadd.f32 %v11086, %v11184
    %v11281 = vadd.f32 %v11087, %v11185
    %v11282 = vadd.f32 %v11088, %v11186
    %v11283 = vadd.f32 %v11089, %v11187
    %v11284 = vadd.f32 %v11090, %v11188
    %v11285 = vadd.f32 %v11091, %v11189
    %v11286 = vadd.f32 %v11092, %v11190
    %v11287 = vadd.f32 %v11093, %v11191
    %v11288 = vadd.f32 %v11094, %v11192
    %v11289 = vadd.f32 %v11095, %v11193
    %v11290 = vadd.f32 %v11096, %v11194
    %v11291 = vadd.f32 %v11097, %v11195
    %v11292 = vadd.f32 %v11098, %v11196
    %v11293 = vadd.f32 %v11099, %v11197
    %v11294 = vadd.f32 %v11100, %v11198
    %v11295 = vadd.f32 %v11101, %v11199
    %v11296 = vadd.f32 %v11102, %v11200
    %v11297 = vadd.f32 %v11103, %v11201
    %v11298 = vadd.f32 %v11104, %v11202
    %v11299 = vadd.f32 %v11105, %v11203
    %v11300 = vadd.f32 %v11106, %v11204
    %v11301 = vadd.f32 %v11107, %v11205
    %v11302 = vadd.f32 %v11108, %v11206
    %v11303 = vadd.f32 %v11109, %v11207
    %v11304 = vadd.f32 %v11110, %v11208
    %v11305 = vadd.f32 %v11111, %v11209
    %v11306 = vadd.f32 %v11112, %v11210
    %v11307 = vadd.f32 %v11113, %v11211
    %v11308 = vadd.f32 %v11114, %v11212
    %v11309 = vadd.f32 %v11115, %v11213
    %v11310 = vadd.f32 %v11116, %v11214
    %v11311 = vadd.f32 %v11117, %v11215
    %v11312 = vadd.f32 %v11118, %v11216
    %v11313 = vadd.f32 %v11119, %v11217
    %v11314 = vadd.f32 %v11120, %v11218
    %v11315 = vadd.f32 %v11121, %v11219
    %v11316 = vadd.f32 %v11122, %v11220
    %v11317 = vadd.f32 %v11123, %v11221
    %v11318 = vadd.f32 %v11124, %v11222
    %v11319 = vadd.f32 %v11125, %v11223
    %v11320 = vadd.f32 %v11126, %v11224
    %v11321 = vadd.f32 %v11127, %v11225
    %v11322 = vadd.f32 %v11128, %v11226
    %v11323 = vadd.f32 %v11129, %v11227
    %v11324 = vadd.f32 %v11130, %v11228
    %v11325 = vadd.f32 %v11131, %v11229
    %v11326 = vadd.f32 %v11132, %v11230
    %v11327 = vadd.f32 %v11133, %v11231
    %v11328 = vadd.f32 %v11134, %v11232
    %v11329 = vadd.f32 %v11135, %v11233
    %v11330 = vadd.f32 %v11136, %v11234
    %v11331 = vadd.f32 %v11137, %v11235
    %v11332 = vadd.f32 %v11138, %v11236
    %v11333 = vadd.f32 %v11139, %v11237
    %v11334 = vadd.f32 %v11140, %v11238
    %v11335 = vadd.f32 %v11141, %v11239
    %v11336 = vadd.f32 %v11142, %v11240
    %v11337 = vadd.f32 %v11143, %v11241
    %v11338 = vadd.f32 %v11144, %v11242
    %v11339 = vadd.f32 %v11145, %v11243
    %v11340 = vadd.f32 %v11146, %v11244
    %v11341 = vadd.f32 %v11147, %v11245
    %v11342 = vadd.f32 %v11148, %v11246
    %v11343 = vadd.f32 %v11149, %v11247
    %v11344 = vadd.f32 %v11150, %v11248
    %v11345 = vadd.f32 %v11151, %v11249
    %v11346 = vadd.f32 %v11152, %v11250
    %v11347 = vadd.f32 %v11153, %v11251
    %v11348 = vadd.f32 %v11154, %v11252
    %v11349 = vadd.f32 %v11155, %v11253
    %v11350 = vadd.f32 %v11156, %v11254
    %v11351 = vadd.f32 %v11157, %v11255
    %v11352 = vadd.f32 %v11158, %v11256
    %v11353 = vadd.f32 %v11159, %v11257
    %v11354 = vadd.f32 %v11160, %v11258
    %v11355 = vadd.f32 %v11161, %v11259
    %v11356 = vadd.f32 %v11162, %v11260
    %v11357 = vadd.f32 %v11163, %v11261
    %v11358 = vadd.f32 %v11164, %v11262
    %v11359 = vadd.f32 %v11165, %v11263
    %v11360 = vadd.f32 %v11166, %v11264
    %v11361 = vadd.f32 %v11167, %v11265
    %v11362 = vadd.f32 %v11168, %v11266
    %v11363 = vadd.f32 %v11169, %v11267
    %v11364 = vadd.f32 %v11170, %v11268
    %v11365 = vadd.f32 %v11171, %v11269
    %v11366 = vadd.f32 %v11172, %v11270
    %v11367 = vadd.f32 %v11173, %v11271
    %v11368 = vadd.f32 %v11174, %v11272
    %v11369 = vadd.f32 %v11175, %v11273
    %v11370 = vadd.f32 %v11176, %v11274
    %v11371 = vadd.f32 %v11177, %v11275
    %v11372 = vadd.f32 %v11178, %v11276
    %s11373 = sld [smem:[#allocation3 + $0x19]]
    %v11374 = vstv %s11373
    %v11375 = vmul.f32 %v53, %v11374
    %v11376 = vmul.f32 %v54, %v11374
    %v11377 = vmul.f32 %v55, %v11374
    %v11378 = vmul.f32 %v56, %v11374
    %v11379 = vmul.f32 %v57, %v11374
    %v11380 = vmul.f32 %v58, %v11374
    %v11381 = vmul.f32 %v59, %v11374
    %v11382 = vmul.f32 %v60, %v11374
    %v11383 = vmul.f32 %v61, %v11374
    %v11384 = vmul.f32 %v62, %v11374
    %v11385 = vmul.f32 %v63, %v11374
    %v11386 = vmul.f32 %v64, %v11374
    %v11387 = vmul.f32 %v65, %v11374
    %v11388 = vmul.f32 %v66, %v11374
    %v11389 = vmul.f32 %v67, %v11374
    %v11390 = vmul.f32 %v68, %v11374
    %v11391 = vmul.f32 %v69, %v11374
    %v11392 = vmul.f32 %v70, %v11374
    %v11393 = vmul.f32 %v71, %v11374
    %v11394 = vmul.f32 %v72, %v11374
    %v11395 = vmul.f32 %v73, %v11374
    %v11396 = vmul.f32 %v74, %v11374
    %v11397 = vmul.f32 %v75, %v11374
    %v11398 = vmul.f32 %v76, %v11374
    %v11399 = vmul.f32 %v77, %v11374
    %v11400 = vmul.f32 %v78, %v11374
    %v11401 = vmul.f32 %v79, %v11374
    %v11402 = vmul.f32 %v80, %v11374
    %v11403 = vmul.f32 %v81, %v11374
    %v11404 = vmul.f32 %v82, %v11374
    %v11405 = vmul.f32 %v83, %v11374
    %v11406 = vmul.f32 %v84, %v11374
    %v11407 = vmul.f32 %v85, %v11374
    %v11408 = vmul.f32 %v86, %v11374
    %v11409 = vmul.f32 %v87, %v11374
    %v11410 = vmul.f32 %v88, %v11374
    %v11411 = vmul.f32 %v89, %v11374
    %v11412 = vmul.f32 %v90, %v11374
    %v11413 = vmul.f32 %v91, %v11374
    %v11414 = vmul.f32 %v92, %v11374
    %v11415 = vmul.f32 %v93, %v11374
    %v11416 = vmul.f32 %v94, %v11374
    %v11417 = vmul.f32 %v95, %v11374
    %v11418 = vmul.f32 %v96, %v11374
    %v11419 = vmul.f32 %v97, %v11374
    %v11420 = vmul.f32 %v98, %v11374
    %v11421 = vmul.f32 %v99, %v11374
    %v11422 = vmul.f32 %v100, %v11374
    %v11423 = vmul.f32 %v101, %v11374
    %v11424 = vmul.f32 %v102, %v11374
    %v11425 = vmul.f32 %v103, %v11374
    %v11426 = vmul.f32 %v104, %v11374
    %v11427 = vmul.f32 %v105, %v11374
    %v11428 = vmul.f32 %v106, %v11374
    %v11429 = vmul.f32 %v107, %v11374
    %v11430 = vmul.f32 %v108, %v11374
    %v11431 = vmul.f32 %v109, %v11374
    %v11432 = vmul.f32 %v110, %v11374
    %v11433 = vmul.f32 %v111, %v11374
    %v11434 = vmul.f32 %v112, %v11374
    %v11435 = vmul.f32 %v113, %v11374
    %v11436 = vmul.f32 %v114, %v11374
    %v11437 = vmul.f32 %v115, %v11374
    %v11438 = vmul.f32 %v116, %v11374
    %v11439 = vmul.f32 %v117, %v11374
    %v11440 = vmul.f32 %v118, %v11374
    %v11441 = vmul.f32 %v119, %v11374
    %v11442 = vmul.f32 %v120, %v11374
    %v11443 = vmul.f32 %v121, %v11374
    %v11444 = vmul.f32 %v122, %v11374
    %v11445 = vmul.f32 %v123, %v11374
    %v11446 = vmul.f32 %v124, %v11374
    %v11447 = vmul.f32 %v125, %v11374
    %v11448 = vmul.f32 %v126, %v11374
    %v11449 = vmul.f32 %v127, %v11374
    %v11450 = vmul.f32 %v128, %v11374
    %v11451 = vmul.f32 %v129, %v11374
    %v11452 = vmul.f32 %v130, %v11374
    %v11453 = vmul.f32 %v131, %v11374
    %v11454 = vmul.f32 %v132, %v11374
    %v11455 = vmul.f32 %v133, %v11374
    %v11456 = vmul.f32 %v134, %v11374
    %v11457 = vmul.f32 %v135, %v11374
    %v11458 = vmul.f32 %v136, %v11374
    %v11459 = vmul.f32 %v137, %v11374
    %v11460 = vmul.f32 %v138, %v11374
    %v11461 = vmul.f32 %v139, %v11374
    %v11462 = vmul.f32 %v140, %v11374
    %v11463 = vmul.f32 %v141, %v11374
    %v11464 = vmul.f32 %v142, %v11374
    %v11465 = vmul.f32 %v143, %v11374
    %v11466 = vmul.f32 %v144, %v11374
    %v11467 = vmul.f32 %v145, %v11374
    %v11468 = vmul.f32 %v146, %v11374
    %v11469 = vmul.f32 %v147, %v11374
    %v11470 = vmul.f32 %v148, %v11374
    %v11567 = vrot.slane %v11375, 1
    %v11568 = vrot.slane %v11376, 1
    %v11569 = vsel %vm441, %v11567, %v11568
    %v11570 = vrot.slane %v11377, 1
    %v11571 = vsel %vm441, %v11568, %v11570
    %v11572 = vrot.slane %v11378, 1
    %v11573 = vsel %vm441, %v11570, %v11572
    %v11574 = vrot.slane %v11379, 1
    %v11575 = vrot.slane %v11380, 1
    %v11576 = vsel %vm441, %v11574, %v11575
    %v11577 = vrot.slane %v11381, 1
    %v11578 = vsel %vm441, %v11575, %v11577
    %v11579 = vrot.slane %v11382, 1
    %v11580 = vsel %vm441, %v11577, %v11579
    %v11581 = vrot.slane %v11383, 1
    %v11582 = vrot.slane %v11384, 1
    %v11583 = vsel %vm441, %v11581, %v11582
    %v11584 = vrot.slane %v11385, 1
    %v11585 = vsel %vm441, %v11582, %v11584
    %v11586 = vrot.slane %v11386, 1
    %v11587 = vsel %vm441, %v11584, %v11586
    %v11588 = vrot.slane %v11387, 1
    %v11589 = vrot.slane %v11388, 1
    %v11590 = vsel %vm441, %v11588, %v11589
    %v11591 = vrot.slane %v11389, 1
    %v11592 = vsel %vm441, %v11589, %v11591
    %v11593 = vrot.slane %v11390, 1
    %v11594 = vsel %vm441, %v11591, %v11593
    %v11595 = vrot.slane %v11391, 1
    %v11596 = vrot.slane %v11392, 1
    %v11597 = vsel %vm441, %v11595, %v11596
    %v11598 = vrot.slane %v11393, 1
    %v11599 = vsel %vm441, %v11596, %v11598
    %v11600 = vrot.slane %v11394, 1
    %v11601 = vsel %vm441, %v11598, %v11600
    %v11602 = vrot.slane %v11395, 1
    %v11603 = vrot.slane %v11396, 1
    %v11604 = vsel %vm441, %v11602, %v11603
    %v11605 = vrot.slane %v11397, 1
    %v11606 = vsel %vm441, %v11603, %v11605
    %v11607 = vrot.slane %v11398, 1
    %v11608 = vsel %vm441, %v11605, %v11607
    %v11609 = vrot.slane %v11399, 1
    %v11610 = vrot.slane %v11400, 1
    %v11611 = vsel %vm441, %v11609, %v11610
    %v11612 = vrot.slane %v11401, 1
    %v11613 = vsel %vm441, %v11610, %v11612
    %v11614 = vrot.slane %v11402, 1
    %v11615 = vsel %vm441, %v11612, %v11614
    %v11616 = vrot.slane %v11403, 1
    %v11617 = vrot.slane %v11404, 1
    %v11618 = vsel %vm441, %v11616, %v11617
    %v11619 = vrot.slane %v11405, 1
    %v11620 = vsel %vm441, %v11617, %v11619
    %v11621 = vrot.slane %v11406, 1
    %v11622 = vsel %vm441, %v11619, %v11621
    %v11623 = vrot.slane %v11407, 1
    %v11624 = vrot.slane %v11408, 1
    %v11625 = vsel %vm441, %v11623, %v11624
    %v11626 = vrot.slane %v11409, 1
    %v11627 = vsel %vm441, %v11624, %v11626
    %v11628 = vrot.slane %v11410, 1
    %v11629 = vsel %vm441, %v11626, %v11628
    %v11630 = vrot.slane %v11411, 1
    %v11631 = vrot.slane %v11412, 1
    %v11632 = vsel %vm441, %v11630, %v11631
    %v11633 = vrot.slane %v11413, 1
    %v11634 = vsel %vm441, %v11631, %v11633
    %v11635 = vrot.slane %v11414, 1
    %v11636 = vsel %vm441, %v11633, %v11635
    %v11637 = vrot.slane %v11415, 1
    %v11638 = vrot.slane %v11416, 1
    %v11639 = vsel %vm441, %v11637, %v11638
    %v11640 = vrot.slane %v11417, 1
    %v11641 = vsel %vm441, %v11638, %v11640
    %v11642 = vrot.slane %v11418, 1
    %v11643 = vsel %vm441, %v11640, %v11642
    %v11644 = vrot.slane %v11419, 1
    %v11645 = vrot.slane %v11420, 1
    %v11646 = vsel %vm441, %v11644, %v11645
    %v11647 = vrot.slane %v11421, 1
    %v11648 = vsel %vm441, %v11645, %v11647
    %v11649 = vrot.slane %v11422, 1
    %v11650 = vsel %vm441, %v11647, %v11649
    %v11651 = vrot.slane %v11423, 1
    %v11652 = vrot.slane %v11424, 1
    %v11653 = vsel %vm441, %v11651, %v11652
    %v11654 = vrot.slane %v11425, 1
    %v11655 = vsel %vm441, %v11652, %v11654
    %v11656 = vrot.slane %v11426, 1
    %v11657 = vsel %vm441, %v11654, %v11656
    %v11658 = vrot.slane %v11427, 1
    %v11659 = vrot.slane %v11428, 1
    %v11660 = vsel %vm441, %v11658, %v11659
    %v11661 = vrot.slane %v11429, 1
    %v11662 = vsel %vm441, %v11659, %v11661
    %v11663 = vrot.slane %v11430, 1
    %v11664 = vsel %vm441, %v11661, %v11663
    %v11665 = vrot.slane %v11431, 1
    %v11666 = vrot.slane %v11432, 1
    %v11667 = vsel %vm441, %v11665, %v11666
    %v11668 = vrot.slane %v11433, 1
    %v11669 = vsel %vm441, %v11666, %v11668
    %v11670 = vrot.slane %v11434, 1
    %v11671 = vsel %vm441, %v11668, %v11670
    %v11672 = vrot.slane %v11435, 1
    %v11673 = vrot.slane %v11436, 1
    %v11674 = vsel %vm441, %v11672, %v11673
    %v11675 = vrot.slane %v11437, 1
    %v11676 = vsel %vm441, %v11673, %v11675
    %v11677 = vrot.slane %v11438, 1
    %v11678 = vsel %vm441, %v11675, %v11677
    %v11679 = vrot.slane %v11439, 1
    %v11680 = vrot.slane %v11440, 1
    %v11681 = vsel %vm441, %v11679, %v11680
    %v11682 = vrot.slane %v11441, 1
    %v11683 = vsel %vm441, %v11680, %v11682
    %v11684 = vrot.slane %v11442, 1
    %v11685 = vsel %vm441, %v11682, %v11684
    %v11686 = vrot.slane %v11443, 1
    %v11687 = vrot.slane %v11444, 1
    %v11688 = vsel %vm441, %v11686, %v11687
    %v11689 = vrot.slane %v11445, 1
    %v11690 = vsel %vm441, %v11687, %v11689
    %v11691 = vrot.slane %v11446, 1
    %v11692 = vsel %vm441, %v11689, %v11691
    %v11693 = vrot.slane %v11447, 1
    %v11694 = vrot.slane %v11448, 1
    %v11695 = vsel %vm441, %v11693, %v11694
    %v11696 = vrot.slane %v11449, 1
    %v11697 = vsel %vm441, %v11694, %v11696
    %v11698 = vrot.slane %v11450, 1
    %v11699 = vsel %vm441, %v11696, %v11698
    %v11700 = vrot.slane %v11451, 1
    %v11701 = vrot.slane %v11452, 1
    %v11702 = vsel %vm441, %v11700, %v11701
    %v11703 = vrot.slane %v11453, 1
    %v11704 = vsel %vm441, %v11701, %v11703
    %v11705 = vrot.slane %v11454, 1
    %v11706 = vsel %vm441, %v11703, %v11705
    %v11707 = vrot.slane %v11455, 1
    %v11708 = vrot.slane %v11456, 1
    %v11709 = vsel %vm441, %v11707, %v11708
    %v11710 = vrot.slane %v11457, 1
    %v11711 = vsel %vm441, %v11708, %v11710
    %v11712 = vrot.slane %v11458, 1
    %v11713 = vsel %vm441, %v11710, %v11712
    %v11714 = vrot.slane %v11459, 1
    %v11715 = vrot.slane %v11460, 1
    %v11716 = vsel %vm441, %v11714, %v11715
    %v11717 = vrot.slane %v11461, 1
    %v11718 = vsel %vm441, %v11715, %v11717
    %v11719 = vrot.slane %v11462, 1
    %v11720 = vsel %vm441, %v11717, %v11719
    %v11721 = vrot.slane %v11463, 1
    %v11722 = vrot.slane %v11464, 1
    %v11723 = vsel %vm441, %v11721, %v11722
    %v11724 = vrot.slane %v11465, 1
    %v11725 = vsel %vm441, %v11722, %v11724
    %v11726 = vrot.slane %v11466, 1
    %v11727 = vsel %vm441, %v11724, %v11726
    %v11728 = vrot.slane %v11467, 1
    %v11729 = vrot.slane %v11468, 1
    %v11730 = vsel %vm441, %v11728, %v11729
    %v11731 = vrot.slane %v11469, 1
    %v11732 = vsel %vm441, %v11729, %v11731
    %v11733 = vrot.slane %v11470, 1
    %v11734 = vsel %vm441, %v11731, %v11733
    %v11831 = vadd.f32 %v11277, %v11569
    %v11832 = vadd.f32 %v11278, %v11571
    %v11833 = vadd.f32 %v11279, %v11573
    %v11834 = vadd.f32 %v11280, %v11572
    %v11835 = vadd.f32 %v11281, %v11576
    %v11836 = vadd.f32 %v11282, %v11578
    %v11837 = vadd.f32 %v11283, %v11580
    %v11838 = vadd.f32 %v11284, %v11579
    %v11839 = vadd.f32 %v11285, %v11583
    %v11840 = vadd.f32 %v11286, %v11585
    %v11841 = vadd.f32 %v11287, %v11587
    %v11842 = vadd.f32 %v11288, %v11586
    %v11843 = vadd.f32 %v11289, %v11590
    %v11844 = vadd.f32 %v11290, %v11592
    %v11845 = vadd.f32 %v11291, %v11594
    %v11846 = vadd.f32 %v11292, %v11593
    %v11847 = vadd.f32 %v11293, %v11597
    %v11848 = vadd.f32 %v11294, %v11599
    %v11849 = vadd.f32 %v11295, %v11601
    %v11850 = vadd.f32 %v11296, %v11600
    %v11851 = vadd.f32 %v11297, %v11604
    %v11852 = vadd.f32 %v11298, %v11606
    %v11853 = vadd.f32 %v11299, %v11608
    %v11854 = vadd.f32 %v11300, %v11607
    %v11855 = vadd.f32 %v11301, %v11611
    %v11856 = vadd.f32 %v11302, %v11613
    %v11857 = vadd.f32 %v11303, %v11615
    %v11858 = vadd.f32 %v11304, %v11614
    %v11859 = vadd.f32 %v11305, %v11618
    %v11860 = vadd.f32 %v11306, %v11620
    %v11861 = vadd.f32 %v11307, %v11622
    %v11862 = vadd.f32 %v11308, %v11621
    %v11863 = vadd.f32 %v11309, %v11625
    %v11864 = vadd.f32 %v11310, %v11627
    %v11865 = vadd.f32 %v11311, %v11629
    %v11866 = vadd.f32 %v11312, %v11628
    %v11867 = vadd.f32 %v11313, %v11632
    %v11868 = vadd.f32 %v11314, %v11634
    %v11869 = vadd.f32 %v11315, %v11636
    %v11870 = vadd.f32 %v11316, %v11635
    %v11871 = vadd.f32 %v11317, %v11639
    %v11872 = vadd.f32 %v11318, %v11641
    %v11873 = vadd.f32 %v11319, %v11643
    %v11874 = vadd.f32 %v11320, %v11642
    %v11875 = vadd.f32 %v11321, %v11646
    %v11876 = vadd.f32 %v11322, %v11648
    %v11877 = vadd.f32 %v11323, %v11650
    %v11878 = vadd.f32 %v11324, %v11649
    %v11879 = vadd.f32 %v11325, %v11653
    %v11880 = vadd.f32 %v11326, %v11655
    %v11881 = vadd.f32 %v11327, %v11657
    %v11882 = vadd.f32 %v11328, %v11656
    %v11883 = vadd.f32 %v11329, %v11660
    %v11884 = vadd.f32 %v11330, %v11662
    %v11885 = vadd.f32 %v11331, %v11664
    %v11886 = vadd.f32 %v11332, %v11663
    %v11887 = vadd.f32 %v11333, %v11667
    %v11888 = vadd.f32 %v11334, %v11669
    %v11889 = vadd.f32 %v11335, %v11671
    %v11890 = vadd.f32 %v11336, %v11670
    %v11891 = vadd.f32 %v11337, %v11674
    %v11892 = vadd.f32 %v11338, %v11676
    %v11893 = vadd.f32 %v11339, %v11678
    %v11894 = vadd.f32 %v11340, %v11677
    %v11895 = vadd.f32 %v11341, %v11681
    %v11896 = vadd.f32 %v11342, %v11683
    %v11897 = vadd.f32 %v11343, %v11685
    %v11898 = vadd.f32 %v11344, %v11684
    %v11899 = vadd.f32 %v11345, %v11688
    %v11900 = vadd.f32 %v11346, %v11690
    %v11901 = vadd.f32 %v11347, %v11692
    %v11902 = vadd.f32 %v11348, %v11691
    %v11903 = vadd.f32 %v11349, %v11695
    %v11904 = vadd.f32 %v11350, %v11697
    %v11905 = vadd.f32 %v11351, %v11699
    %v11906 = vadd.f32 %v11352, %v11698
    %v11907 = vadd.f32 %v11353, %v11702
    %v11908 = vadd.f32 %v11354, %v11704
    %v11909 = vadd.f32 %v11355, %v11706
    %v11910 = vadd.f32 %v11356, %v11705
    %v11911 = vadd.f32 %v11357, %v11709
    %v11912 = vadd.f32 %v11358, %v11711
    %v11913 = vadd.f32 %v11359, %v11713
    %v11914 = vadd.f32 %v11360, %v11712
    %v11915 = vadd.f32 %v11361, %v11716
    %v11916 = vadd.f32 %v11362, %v11718
    %v11917 = vadd.f32 %v11363, %v11720
    %v11918 = vadd.f32 %v11364, %v11719
    %v11919 = vadd.f32 %v11365, %v11723
    %v11920 = vadd.f32 %v11366, %v11725
    %v11921 = vadd.f32 %v11367, %v11727
    %v11922 = vadd.f32 %v11368, %v11726
    %v11923 = vadd.f32 %v11369, %v11730
    %v11924 = vadd.f32 %v11370, %v11732
    %v11925 = vadd.f32 %v11371, %v11734
    %v11926 = vadd.f32 %v11372, %v11733
    %s11927 = sld [smem:[#allocation3 + $0x1a]]
    %v11928 = vstv %s11927
    %v11929 = vmul.f32 %v53, %v11928
    %v11930 = vmul.f32 %v54, %v11928
    %v11931 = vmul.f32 %v55, %v11928
    %v11932 = vmul.f32 %v56, %v11928
    %v11933 = vmul.f32 %v57, %v11928
    %v11934 = vmul.f32 %v58, %v11928
    %v11935 = vmul.f32 %v59, %v11928
    %v11936 = vmul.f32 %v60, %v11928
    %v11937 = vmul.f32 %v61, %v11928
    %v11938 = vmul.f32 %v62, %v11928
    %v11939 = vmul.f32 %v63, %v11928
    %v11940 = vmul.f32 %v64, %v11928
    %v11941 = vmul.f32 %v65, %v11928
    %v11942 = vmul.f32 %v66, %v11928
    %v11943 = vmul.f32 %v67, %v11928
    %v11944 = vmul.f32 %v68, %v11928
    %v11945 = vmul.f32 %v69, %v11928
    %v11946 = vmul.f32 %v70, %v11928
    %v11947 = vmul.f32 %v71, %v11928
    %v11948 = vmul.f32 %v72, %v11928
    %v11949 = vmul.f32 %v73, %v11928
    %v11950 = vmul.f32 %v74, %v11928
    %v11951 = vmul.f32 %v75, %v11928
    %v11952 = vmul.f32 %v76, %v11928
    %v11953 = vmul.f32 %v77, %v11928
    %v11954 = vmul.f32 %v78, %v11928
    %v11955 = vmul.f32 %v79, %v11928
    %v11956 = vmul.f32 %v80, %v11928
    %v11957 = vmul.f32 %v81, %v11928
    %v11958 = vmul.f32 %v82, %v11928
    %v11959 = vmul.f32 %v83, %v11928
    %v11960 = vmul.f32 %v84, %v11928
    %v11961 = vmul.f32 %v85, %v11928
    %v11962 = vmul.f32 %v86, %v11928
    %v11963 = vmul.f32 %v87, %v11928
    %v11964 = vmul.f32 %v88, %v11928
    %v11965 = vmul.f32 %v89, %v11928
    %v11966 = vmul.f32 %v90, %v11928
    %v11967 = vmul.f32 %v91, %v11928
    %v11968 = vmul.f32 %v92, %v11928
    %v11969 = vmul.f32 %v93, %v11928
    %v11970 = vmul.f32 %v94, %v11928
    %v11971 = vmul.f32 %v95, %v11928
    %v11972 = vmul.f32 %v96, %v11928
    %v11973 = vmul.f32 %v97, %v11928
    %v11974 = vmul.f32 %v98, %v11928
    %v11975 = vmul.f32 %v99, %v11928
    %v11976 = vmul.f32 %v100, %v11928
    %v11977 = vmul.f32 %v101, %v11928
    %v11978 = vmul.f32 %v102, %v11928
    %v11979 = vmul.f32 %v103, %v11928
    %v11980 = vmul.f32 %v104, %v11928
    %v11981 = vmul.f32 %v105, %v11928
    %v11982 = vmul.f32 %v106, %v11928
    %v11983 = vmul.f32 %v107, %v11928
    %v11984 = vmul.f32 %v108, %v11928
    %v11985 = vmul.f32 %v109, %v11928
    %v11986 = vmul.f32 %v110, %v11928
    %v11987 = vmul.f32 %v111, %v11928
    %v11988 = vmul.f32 %v112, %v11928
    %v11989 = vmul.f32 %v113, %v11928
    %v11990 = vmul.f32 %v114, %v11928
    %v11991 = vmul.f32 %v115, %v11928
    %v11992 = vmul.f32 %v116, %v11928
    %v11993 = vmul.f32 %v117, %v11928
    %v11994 = vmul.f32 %v118, %v11928
    %v11995 = vmul.f32 %v119, %v11928
    %v11996 = vmul.f32 %v120, %v11928
    %v11997 = vmul.f32 %v121, %v11928
    %v11998 = vmul.f32 %v122, %v11928
    %v11999 = vmul.f32 %v123, %v11928
    %v12000 = vmul.f32 %v124, %v11928
    %v12001 = vmul.f32 %v125, %v11928
    %v12002 = vmul.f32 %v126, %v11928
    %v12003 = vmul.f32 %v127, %v11928
    %v12004 = vmul.f32 %v128, %v11928
    %v12005 = vmul.f32 %v129, %v11928
    %v12006 = vmul.f32 %v130, %v11928
    %v12007 = vmul.f32 %v131, %v11928
    %v12008 = vmul.f32 %v132, %v11928
    %v12009 = vmul.f32 %v133, %v11928
    %v12010 = vmul.f32 %v134, %v11928
    %v12011 = vmul.f32 %v135, %v11928
    %v12012 = vmul.f32 %v136, %v11928
    %v12013 = vmul.f32 %v137, %v11928
    %v12014 = vmul.f32 %v138, %v11928
    %v12015 = vmul.f32 %v139, %v11928
    %v12016 = vmul.f32 %v140, %v11928
    %v12017 = vmul.f32 %v141, %v11928
    %v12018 = vmul.f32 %v142, %v11928
    %v12019 = vmul.f32 %v143, %v11928
    %v12020 = vmul.f32 %v144, %v11928
    %v12021 = vmul.f32 %v145, %v11928
    %v12022 = vmul.f32 %v146, %v11928
    %v12023 = vmul.f32 %v147, %v11928
    %v12024 = vmul.f32 %v148, %v11928
    %v12121 = vrot.slane %v11929, 2
    %v12122 = vrot.slane %v11930, 2
    %v12123 = vsel %vm996, %v12121, %v12122
    %v12124 = vrot.slane %v11931, 2
    %v12125 = vsel %vm996, %v12122, %v12124
    %v12126 = vrot.slane %v11932, 2
    %v12127 = vsel %vm996, %v12124, %v12126
    %v12128 = vrot.slane %v11933, 2
    %v12129 = vrot.slane %v11934, 2
    %v12130 = vsel %vm996, %v12128, %v12129
    %v12131 = vrot.slane %v11935, 2
    %v12132 = vsel %vm996, %v12129, %v12131
    %v12133 = vrot.slane %v11936, 2
    %v12134 = vsel %vm996, %v12131, %v12133
    %v12135 = vrot.slane %v11937, 2
    %v12136 = vrot.slane %v11938, 2
    %v12137 = vsel %vm996, %v12135, %v12136
    %v12138 = vrot.slane %v11939, 2
    %v12139 = vsel %vm996, %v12136, %v12138
    %v12140 = vrot.slane %v11940, 2
    %v12141 = vsel %vm996, %v12138, %v12140
    %v12142 = vrot.slane %v11941, 2
    %v12143 = vrot.slane %v11942, 2
    %v12144 = vsel %vm996, %v12142, %v12143
    %v12145 = vrot.slane %v11943, 2
    %v12146 = vsel %vm996, %v12143, %v12145
    %v12147 = vrot.slane %v11944, 2
    %v12148 = vsel %vm996, %v12145, %v12147
    %v12149 = vrot.slane %v11945, 2
    %v12150 = vrot.slane %v11946, 2
    %v12151 = vsel %vm996, %v12149, %v12150
    %v12152 = vrot.slane %v11947, 2
    %v12153 = vsel %vm996, %v12150, %v12152
    %v12154 = vrot.slane %v11948, 2
    %v12155 = vsel %vm996, %v12152, %v12154
    %v12156 = vrot.slane %v11949, 2
    %v12157 = vrot.slane %v11950, 2
    %v12158 = vsel %vm996, %v12156, %v12157
    %v12159 = vrot.slane %v11951, 2
    %v12160 = vsel %vm996, %v12157, %v12159
    %v12161 = vrot.slane %v11952, 2
    %v12162 = vsel %vm996, %v12159, %v12161
    %v12163 = vrot.slane %v11953, 2
    %v12164 = vrot.slane %v11954, 2
    %v12165 = vsel %vm996, %v12163, %v12164
    %v12166 = vrot.slane %v11955, 2
    %v12167 = vsel %vm996, %v12164, %v12166
    %v12168 = vrot.slane %v11956, 2
    %v12169 = vsel %vm996, %v12166, %v12168
    %v12170 = vrot.slane %v11957, 2
    %v12171 = vrot.slane %v11958, 2
    %v12172 = vsel %vm996, %v12170, %v12171
    %v12173 = vrot.slane %v11959, 2
    %v12174 = vsel %vm996, %v12171, %v12173
    %v12175 = vrot.slane %v11960, 2
    %v12176 = vsel %vm996, %v12173, %v12175
    %v12177 = vrot.slane %v11961, 2
    %v12178 = vrot.slane %v11962, 2
    %v12179 = vsel %vm996, %v12177, %v12178
    %v12180 = vrot.slane %v11963, 2
    %v12181 = vsel %vm996, %v12178, %v12180
    %v12182 = vrot.slane %v11964, 2
    %v12183 = vsel %vm996, %v12180, %v12182
    %v12184 = vrot.slane %v11965, 2
    %v12185 = vrot.slane %v11966, 2
    %v12186 = vsel %vm996, %v12184, %v12185
    %v12187 = vrot.slane %v11967, 2
    %v12188 = vsel %vm996, %v12185, %v12187
    %v12189 = vrot.slane %v11968, 2
    %v12190 = vsel %vm996, %v12187, %v12189
    %v12191 = vrot.slane %v11969, 2
    %v12192 = vrot.slane %v11970, 2
    %v12193 = vsel %vm996, %v12191, %v12192
    %v12194 = vrot.slane %v11971, 2
    %v12195 = vsel %vm996, %v12192, %v12194
    %v12196 = vrot.slane %v11972, 2
    %v12197 = vsel %vm996, %v12194, %v12196
    %v12198 = vrot.slane %v11973, 2
    %v12199 = vrot.slane %v11974, 2
    %v12200 = vsel %vm996, %v12198, %v12199
    %v12201 = vrot.slane %v11975, 2
    %v12202 = vsel %vm996, %v12199, %v12201
    %v12203 = vrot.slane %v11976, 2
    %v12204 = vsel %vm996, %v12201, %v12203
    %v12205 = vrot.slane %v11977, 2
    %v12206 = vrot.slane %v11978, 2
    %v12207 = vsel %vm996, %v12205, %v12206
    %v12208 = vrot.slane %v11979, 2
    %v12209 = vsel %vm996, %v12206, %v12208
    %v12210 = vrot.slane %v11980, 2
    %v12211 = vsel %vm996, %v12208, %v12210
    %v12212 = vrot.slane %v11981, 2
    %v12213 = vrot.slane %v11982, 2
    %v12214 = vsel %vm996, %v12212, %v12213
    %v12215 = vrot.slane %v11983, 2
    %v12216 = vsel %vm996, %v12213, %v12215
    %v12217 = vrot.slane %v11984, 2
    %v12218 = vsel %vm996, %v12215, %v12217
    %v12219 = vrot.slane %v11985, 2
    %v12220 = vrot.slane %v11986, 2
    %v12221 = vsel %vm996, %v12219, %v12220
    %v12222 = vrot.slane %v11987, 2
    %v12223 = vsel %vm996, %v12220, %v12222
    %v12224 = vrot.slane %v11988, 2
    %v12225 = vsel %vm996, %v12222, %v12224
    %v12226 = vrot.slane %v11989, 2
    %v12227 = vrot.slane %v11990, 2
    %v12228 = vsel %vm996, %v12226, %v12227
    %v12229 = vrot.slane %v11991, 2
    %v12230 = vsel %vm996, %v12227, %v12229
    %v12231 = vrot.slane %v11992, 2
    %v12232 = vsel %vm996, %v12229, %v12231
    %v12233 = vrot.slane %v11993, 2
    %v12234 = vrot.slane %v11994, 2
    %v12235 = vsel %vm996, %v12233, %v12234
    %v12236 = vrot.slane %v11995, 2
    %v12237 = vsel %vm996, %v12234, %v12236
    %v12238 = vrot.slane %v11996, 2
    %v12239 = vsel %vm996, %v12236, %v12238
    %v12240 = vrot.slane %v11997, 2
    %v12241 = vrot.slane %v11998, 2
    %v12242 = vsel %vm996, %v12240, %v12241
    %v12243 = vrot.slane %v11999, 2
    %v12244 = vsel %vm996, %v12241, %v12243
    %v12245 = vrot.slane %v12000, 2
    %v12246 = vsel %vm996, %v12243, %v12245
    %v12247 = vrot.slane %v12001, 2
    %v12248 = vrot.slane %v12002, 2
    %v12249 = vsel %vm996, %v12247, %v12248
    %v12250 = vrot.slane %v12003, 2
    %v12251 = vsel %vm996, %v12248, %v12250
    %v12252 = vrot.slane %v12004, 2
    %v12253 = vsel %vm996, %v12250, %v12252
    %v12254 = vrot.slane %v12005, 2
    %v12255 = vrot.slane %v12006, 2
    %v12256 = vsel %vm996, %v12254, %v12255
    %v12257 = vrot.slane %v12007, 2
    %v12258 = vsel %vm996, %v12255, %v12257
    %v12259 = vrot.slane %v12008, 2
    %v12260 = vsel %vm996, %v12257, %v12259
    %v12261 = vrot.slane %v12009, 2
    %v12262 = vrot.slane %v12010, 2
    %v12263 = vsel %vm996, %v12261, %v12262
    %v12264 = vrot.slane %v12011, 2
    %v12265 = vsel %vm996, %v12262, %v12264
    %v12266 = vrot.slane %v12012, 2
    %v12267 = vsel %vm996, %v12264, %v12266
    %v12268 = vrot.slane %v12013, 2
    %v12269 = vrot.slane %v12014, 2
    %v12270 = vsel %vm996, %v12268, %v12269
    %v12271 = vrot.slane %v12015, 2
    %v12272 = vsel %vm996, %v12269, %v12271
    %v12273 = vrot.slane %v12016, 2
    %v12274 = vsel %vm996, %v12271, %v12273
    %v12275 = vrot.slane %v12017, 2
    %v12276 = vrot.slane %v12018, 2
    %v12277 = vsel %vm996, %v12275, %v12276
    %v12278 = vrot.slane %v12019, 2
    %v12279 = vsel %vm996, %v12276, %v12278
    %v12280 = vrot.slane %v12020, 2
    %v12281 = vsel %vm996, %v12278, %v12280
    %v12282 = vrot.slane %v12021, 2
    %v12283 = vrot.slane %v12022, 2
    %v12284 = vsel %vm996, %v12282, %v12283
    %v12285 = vrot.slane %v12023, 2
    %v12286 = vsel %vm996, %v12283, %v12285
    %v12287 = vrot.slane %v12024, 2
    %v12288 = vsel %vm996, %v12285, %v12287
    %v12385 = vadd.f32 %v11831, %v12123
    %v12386 = vadd.f32 %v11832, %v12125
    %v12387 = vadd.f32 %v11833, %v12127
    %v12388 = vadd.f32 %v11834, %v12126
    %v12389 = vadd.f32 %v11835, %v12130
    %v12390 = vadd.f32 %v11836, %v12132
    %v12391 = vadd.f32 %v11837, %v12134
    %v12392 = vadd.f32 %v11838, %v12133
    %v12393 = vadd.f32 %v11839, %v12137
    %v12394 = vadd.f32 %v11840, %v12139
    %v12395 = vadd.f32 %v11841, %v12141
    %v12396 = vadd.f32 %v11842, %v12140
    %v12397 = vadd.f32 %v11843, %v12144
    %v12398 = vadd.f32 %v11844, %v12146
    %v12399 = vadd.f32 %v11845, %v12148
    %v12400 = vadd.f32 %v11846, %v12147
    %v12401 = vadd.f32 %v11847, %v12151
    %v12402 = vadd.f32 %v11848, %v12153
    %v12403 = vadd.f32 %v11849, %v12155
    %v12404 = vadd.f32 %v11850, %v12154
    %v12405 = vadd.f32 %v11851, %v12158
    %v12406 = vadd.f32 %v11852, %v12160
    %v12407 = vadd.f32 %v11853, %v12162
    %v12408 = vadd.f32 %v11854, %v12161
    %v12409 = vadd.f32 %v11855, %v12165
    %v12410 = vadd.f32 %v11856, %v12167
    %v12411 = vadd.f32 %v11857, %v12169
    %v12412 = vadd.f32 %v11858, %v12168
    %v12413 = vadd.f32 %v11859, %v12172
    %v12414 = vadd.f32 %v11860, %v12174
    %v12415 = vadd.f32 %v11861, %v12176
    %v12416 = vadd.f32 %v11862, %v12175
    %v12417 = vadd.f32 %v11863, %v12179
    %v12418 = vadd.f32 %v11864, %v12181
    %v12419 = vadd.f32 %v11865, %v12183
    %v12420 = vadd.f32 %v11866, %v12182
    %v12421 = vadd.f32 %v11867, %v12186
    %v12422 = vadd.f32 %v11868, %v12188
    %v12423 = vadd.f32 %v11869, %v12190
    %v12424 = vadd.f32 %v11870, %v12189
    %v12425 = vadd.f32 %v11871, %v12193
    %v12426 = vadd.f32 %v11872, %v12195
    %v12427 = vadd.f32 %v11873, %v12197
    %v12428 = vadd.f32 %v11874, %v12196
    %v12429 = vadd.f32 %v11875, %v12200
    %v12430 = vadd.f32 %v11876, %v12202
    %v12431 = vadd.f32 %v11877, %v12204
    %v12432 = vadd.f32 %v11878, %v12203
    %v12433 = vadd.f32 %v11879, %v12207
    %v12434 = vadd.f32 %v11880, %v12209
    %v12435 = vadd.f32 %v11881, %v12211
    %v12436 = vadd.f32 %v11882, %v12210
    %v12437 = vadd.f32 %v11883, %v12214
    %v12438 = vadd.f32 %v11884, %v12216
    %v12439 = vadd.f32 %v11885, %v12218
    %v12440 = vadd.f32 %v11886, %v12217
    %v12441 = vadd.f32 %v11887, %v12221
    %v12442 = vadd.f32 %v11888, %v12223
    %v12443 = vadd.f32 %v11889, %v12225
    %v12444 = vadd.f32 %v11890, %v12224
    %v12445 = vadd.f32 %v11891, %v12228
    %v12446 = vadd.f32 %v11892, %v12230
    %v12447 = vadd.f32 %v11893, %v12232
    %v12448 = vadd.f32 %v11894, %v12231
    %v12449 = vadd.f32 %v11895, %v12235
    %v12450 = vadd.f32 %v11896, %v12237
    %v12451 = vadd.f32 %v11897, %v12239
    %v12452 = vadd.f32 %v11898, %v12238
    %v12453 = vadd.f32 %v11899, %v12242
    %v12454 = vadd.f32 %v11900, %v12244
    %v12455 = vadd.f32 %v11901, %v12246
    %v12456 = vadd.f32 %v11902, %v12245
    %v12457 = vadd.f32 %v11903, %v12249
    %v12458 = vadd.f32 %v11904, %v12251
    %v12459 = vadd.f32 %v11905, %v12253
    %v12460 = vadd.f32 %v11906, %v12252
    %v12461 = vadd.f32 %v11907, %v12256
    %v12462 = vadd.f32 %v11908, %v12258
    %v12463 = vadd.f32 %v11909, %v12260
    %v12464 = vadd.f32 %v11910, %v12259
    %v12465 = vadd.f32 %v11911, %v12263
    %v12466 = vadd.f32 %v11912, %v12265
    %v12467 = vadd.f32 %v11913, %v12267
    %v12468 = vadd.f32 %v11914, %v12266
    %v12469 = vadd.f32 %v11915, %v12270
    %v12470 = vadd.f32 %v11916, %v12272
    %v12471 = vadd.f32 %v11917, %v12274
    %v12472 = vadd.f32 %v11918, %v12273
    %v12473 = vadd.f32 %v11919, %v12277
    %v12474 = vadd.f32 %v11920, %v12279
    %v12475 = vadd.f32 %v11921, %v12281
    %v12476 = vadd.f32 %v11922, %v12280
    %v12477 = vadd.f32 %v11923, %v12284
    %v12478 = vadd.f32 %v11924, %v12286
    %v12479 = vadd.f32 %v11925, %v12288
    %v12480 = vadd.f32 %v11926, %v12287
    %s12481 = sld [smem:[#allocation5 + $0x2]]
    %v12482 = vstv %s12481
    %v12483 = vadd.f32 %v12385, %v12482
    %v12484 = vadd.f32 %v12386, %v12482
    %v12485 = vadd.f32 %v12387, %v12482
    %v12486 = vadd.f32 %v12388, %v12482
    %v12487 = vadd.f32 %v12389, %v12482
    %v12488 = vadd.f32 %v12390, %v12482
    %v12489 = vadd.f32 %v12391, %v12482
    %v12490 = vadd.f32 %v12392, %v12482
    %v12491 = vadd.f32 %v12393, %v12482
    %v12492 = vadd.f32 %v12394, %v12482
    %v12493 = vadd.f32 %v12395, %v12482
    %v12494 = vadd.f32 %v12396, %v12482
    %v12495 = vadd.f32 %v12397, %v12482
    %v12496 = vadd.f32 %v12398, %v12482
    %v12497 = vadd.f32 %v12399, %v12482
    %v12498 = vadd.f32 %v12400, %v12482
    %v12499 = vadd.f32 %v12401, %v12482
    %v12500 = vadd.f32 %v12402, %v12482
    %v12501 = vadd.f32 %v12403, %v12482
    %v12502 = vadd.f32 %v12404, %v12482
    %v12503 = vadd.f32 %v12405, %v12482
    %v12504 = vadd.f32 %v12406, %v12482
    %v12505 = vadd.f32 %v12407, %v12482
    %v12506 = vadd.f32 %v12408, %v12482
    %v12507 = vadd.f32 %v12409, %v12482
    %v12508 = vadd.f32 %v12410, %v12482
    %v12509 = vadd.f32 %v12411, %v12482
    %v12510 = vadd.f32 %v12412, %v12482
    %v12511 = vadd.f32 %v12413, %v12482
    %v12512 = vadd.f32 %v12414, %v12482
    %v12513 = vadd.f32 %v12415, %v12482
    %v12514 = vadd.f32 %v12416, %v12482
    %v12515 = vadd.f32 %v12417, %v12482
    %v12516 = vadd.f32 %v12418, %v12482
    %v12517 = vadd.f32 %v12419, %v12482
    %v12518 = vadd.f32 %v12420, %v12482
    %v12519 = vadd.f32 %v12421, %v12482
    %v12520 = vadd.f32 %v12422, %v12482
    %v12521 = vadd.f32 %v12423, %v12482
    %v12522 = vadd.f32 %v12424, %v12482
    %v12523 = vadd.f32 %v12425, %v12482
    %v12524 = vadd.f32 %v12426, %v12482
    %v12525 = vadd.f32 %v12427, %v12482
    %v12526 = vadd.f32 %v12428, %v12482
    %v12527 = vadd.f32 %v12429, %v12482
    %v12528 = vadd.f32 %v12430, %v12482
    %v12529 = vadd.f32 %v12431, %v12482
    %v12530 = vadd.f32 %v12432, %v12482
    %v12531 = vadd.f32 %v12433, %v12482
    %v12532 = vadd.f32 %v12434, %v12482
    %v12533 = vadd.f32 %v12435, %v12482
    %v12534 = vadd.f32 %v12436, %v12482
    %v12535 = vadd.f32 %v12437, %v12482
    %v12536 = vadd.f32 %v12438, %v12482
    %v12537 = vadd.f32 %v12439, %v12482
    %v12538 = vadd.f32 %v12440, %v12482
    %v12539 = vadd.f32 %v12441, %v12482
    %v12540 = vadd.f32 %v12442, %v12482
    %v12541 = vadd.f32 %v12443, %v12482
    %v12542 = vadd.f32 %v12444, %v12482
    %v12543 = vadd.f32 %v12445, %v12482
    %v12544 = vadd.f32 %v12446, %v12482
    %v12545 = vadd.f32 %v12447, %v12482
    %v12546 = vadd.f32 %v12448, %v12482
    %v12547 = vadd.f32 %v12449, %v12482
    %v12548 = vadd.f32 %v12450, %v12482
    %v12549 = vadd.f32 %v12451, %v12482
    %v12550 = vadd.f32 %v12452, %v12482
    %v12551 = vadd.f32 %v12453, %v12482
    %v12552 = vadd.f32 %v12454, %v12482
    %v12553 = vadd.f32 %v12455, %v12482
    %v12554 = vadd.f32 %v12456, %v12482
    %v12555 = vadd.f32 %v12457, %v12482
    %v12556 = vadd.f32 %v12458, %v12482
    %v12557 = vadd.f32 %v12459, %v12482
    %v12558 = vadd.f32 %v12460, %v12482
    %v12559 = vadd.f32 %v12461, %v12482
    %v12560 = vadd.f32 %v12462, %v12482
    %v12561 = vadd.f32 %v12463, %v12482
    %v12562 = vadd.f32 %v12464, %v12482
    %v12563 = vadd.f32 %v12465, %v12482
    %v12564 = vadd.f32 %v12466, %v12482
    %v12565 = vadd.f32 %v12467, %v12482
    %v12566 = vadd.f32 %v12468, %v12482
    %v12567 = vadd.f32 %v12469, %v12482
    %v12568 = vadd.f32 %v12470, %v12482
    %v12569 = vadd.f32 %v12471, %v12482
    %v12570 = vadd.f32 %v12472, %v12482
    %v12571 = vadd.f32 %v12473, %v12482
    %v12572 = vadd.f32 %v12474, %v12482
    %v12573 = vadd.f32 %v12475, %v12482
    %v12574 = vadd.f32 %v12476, %v12482
    %v12575 = vadd.f32 %v12477, %v12482
    %v12576 = vadd.f32 %v12478, %v12482
    %v12577 = vadd.f32 %v12479, %v12482
    %v12578 = vadd.f32 %v12480, %v12482
    %v12579 = vmax.f32 %v12483, %v12487
    %v12580 = vmax.f32 %v12484, %v12488
    %v12581 = vmax.f32 %v12485, %v12489
    %v12582 = vmax.f32 %v12486, %v12490
    %v12583 = vmax.f32 %v12579, %v12491
    %v12584 = vmax.f32 %v12580, %v12492
    %v12585 = vmax.f32 %v12581, %v12493
    %v12586 = vmax.f32 %v12582, %v12494
    %v12591 = vrot.slane %v12583, 1
    %v12592 = vrot.slane %v12584, 1
    %v12593 = vsel %vm441, %v12591, %v12592
    %v12594 = vrot.slane %v12585, 1
    %v12595 = vsel %vm441, %v12592, %v12594
    %v12596 = vrot.slane %v12586, 1
    %v12597 = vsel %vm441, %v12594, %v12596
    %v12601 = vmax.f32 %v12583, %v12593
    %v12602 = vmax.f32 %v12584, %v12595
    %v12603 = vmax.f32 %v12585, %v12597
    %v12604 = vrot.slane %v12583, 2
    %v12605 = vrot.slane %v12584, 2
    %v12606 = vsel %vm996, %v12604, %v12605
    %v12607 = vrot.slane %v12585, 2
    %v12608 = vsel %vm996, %v12605, %v12607
    %v12609 = vrot.slane %v12586, 2
    %v12610 = vsel %vm996, %v12607, %v12609
    %v12614 = vmax.f32 %v12601, %v12606
    %v12615 = vmax.f32 %v12602, %v12608
    %v12616 = vmax.f32 %v12603, %v12610
    %v12617 = vmax.f32 %v12614, 0.0
    %v12618 = vmax.f32 %v12615, 0.0
    %v12619 = vmax.f32 %v12616, 0.0
    %12620 = vst [vmem:[#allocation2 + $0x180] sm:$0xff] %v12617
    %12621 = vst [vmem:[#allocation2 + $0x188] sm:$0xff] %v12618
    %12622 = vst [vmem:[#allocation2 + $0x190] sm:$0xff] %v12619
    %v12623 = vmax.f32 %v12495, %v12499
    %v12624 = vmax.f32 %v12496, %v12500
    %v12625 = vmax.f32 %v12497, %v12501
    %v12626 = vmax.f32 %v12498, %v12502
    %v12627 = vmax.f32 %v12623, %v12503
    %v12628 = vmax.f32 %v12624, %v12504
    %v12629 = vmax.f32 %v12625, %v12505
    %v12630 = vmax.f32 %v12626, %v12506
    %v12635 = vrot.slane %v12627, 1
    %v12636 = vrot.slane %v12628, 1
    %v12637 = vsel %vm441, %v12635, %v12636
    %v12638 = vrot.slane %v12629, 1
    %v12639 = vsel %vm441, %v12636, %v12638
    %v12640 = vrot.slane %v12630, 1
    %v12641 = vsel %vm441, %v12638, %v12640
    %v12645 = vmax.f32 %v12627, %v12637
    %v12646 = vmax.f32 %v12628, %v12639
    %v12647 = vmax.f32 %v12629, %v12641
    %v12648 = vrot.slane %v12627, 2
    %v12649 = vrot.slane %v12628, 2
    %v12650 = vsel %vm996, %v12648, %v12649
    %v12651 = vrot.slane %v12629, 2
    %v12652 = vsel %vm996, %v12649, %v12651
    %v12653 = vrot.slane %v12630, 2
    %v12654 = vsel %vm996, %v12651, %v12653
    %v12658 = vmax.f32 %v12645, %v12650
    %v12659 = vmax.f32 %v12646, %v12652
    %v12660 = vmax.f32 %v12647, %v12654
    %v12661 = vmax.f32 %v12658, 0.0
    %v12662 = vmax.f32 %v12659, 0.0
    %v12663 = vmax.f32 %v12660, 0.0
    %12664 = vst [vmem:[#allocation2 + $0x198] sm:$0xff] %v12661
    %12665 = vst [vmem:[#allocation2 + $0x1a0] sm:$0xff] %v12662
    %12666 = vst [vmem:[#allocation2 + $0x1a8] sm:$0xff] %v12663
    %v12667 = vmax.f32 %v12507, %v12511
    %v12668 = vmax.f32 %v12508, %v12512
    %v12669 = vmax.f32 %v12509, %v12513
    %v12670 = vmax.f32 %v12510, %v12514
    %v12671 = vmax.f32 %v12667, %v12515
    %v12672 = vmax.f32 %v12668, %v12516
    %v12673 = vmax.f32 %v12669, %v12517
    %v12674 = vmax.f32 %v12670, %v12518
    %v12679 = vrot.slane %v12671, 1
    %v12680 = vrot.slane %v12672, 1
    %v12681 = vsel %vm441, %v12679, %v12680
    %v12682 = vrot.slane %v12673, 1
    %v12683 = vsel %vm441, %v12680, %v12682
    %v12684 = vrot.slane %v12674, 1
    %v12685 = vsel %vm441, %v12682, %v12684
    %v12689 = vmax.f32 %v12671, %v12681
    %v12690 = vmax.f32 %v12672, %v12683
    %v12691 = vmax.f32 %v12673, %v12685
    %v12692 = vrot.slane %v12671, 2
    %v12693 = vrot.slane %v12672, 2
    %v12694 = vsel %vm996, %v12692, %v12693
    %v12695 = vrot.slane %v12673, 2
    %v12696 = vsel %vm996, %v12693, %v12695
    %v12697 = vrot.slane %v12674, 2
    %v12698 = vsel %vm996, %v12695, %v12697
    %v12702 = vmax.f32 %v12689, %v12694
    %v12703 = vmax.f32 %v12690, %v12696
    %v12704 = vmax.f32 %v12691, %v12698
    %v12705 = vmax.f32 %v12702, 0.0
    %v12706 = vmax.f32 %v12703, 0.0
    %v12707 = vmax.f32 %v12704, 0.0
    %12708 = vst [vmem:[#allocation2 + $0x1b0] sm:$0xff] %v12705
    %12709 = vst [vmem:[#allocation2 + $0x1b8] sm:$0xff] %v12706
    %12710 = vst [vmem:[#allocation2 + $0x1c0] sm:$0xff] %v12707
    %v12711 = vmax.f32 %v12519, %v12523
    %v12712 = vmax.f32 %v12520, %v12524
    %v12713 = vmax.f32 %v12521, %v12525
    %v12714 = vmax.f32 %v12522, %v12526
    %v12715 = vmax.f32 %v12711, %v12527
    %v12716 = vmax.f32 %v12712, %v12528
    %v12717 = vmax.f32 %v12713, %v12529
    %v12718 = vmax.f32 %v12714, %v12530
    %v12723 = vrot.slane %v12715, 1
    %v12724 = vrot.slane %v12716, 1
    %v12725 = vsel %vm441, %v12723, %v12724
    %v12726 = vrot.slane %v12717, 1
    %v12727 = vsel %vm441, %v12724, %v12726
    %v12728 = vrot.slane %v12718, 1
    %v12729 = vsel %vm441, %v12726, %v12728
    %v12733 = vmax.f32 %v12715, %v12725
    %v12734 = vmax.f32 %v12716, %v12727
    %v12735 = vmax.f32 %v12717, %v12729
    %v12736 = vrot.slane %v12715, 2
    %v12737 = vrot.slane %v12716, 2
    %v12738 = vsel %vm996, %v12736, %v12737
    %v12739 = vrot.slane %v12717, 2
    %v12740 = vsel %vm996, %v12737, %v12739
    %v12741 = vrot.slane %v12718, 2
    %v12742 = vsel %vm996, %v12739, %v12741
    %v12746 = vmax.f32 %v12733, %v12738
    %v12747 = vmax.f32 %v12734, %v12740
    %v12748 = vmax.f32 %v12735, %v12742
    %v12749 = vmax.f32 %v12746, 0.0
    %v12750 = vmax.f32 %v12747, 0.0
    %v12751 = vmax.f32 %v12748, 0.0
    %12752 = vst [vmem:[#allocation2 + $0x1c8] sm:$0xff] %v12749
    %12753 = vst [vmem:[#allocation2 + $0x1d0] sm:$0xff] %v12750
    %12754 = vst [vmem:[#allocation2 + $0x1d8] sm:$0xff] %v12751
    %v12755 = vmax.f32 %v12531, %v12535
    %v12756 = vmax.f32 %v12532, %v12536
    %v12757 = vmax.f32 %v12533, %v12537
    %v12758 = vmax.f32 %v12534, %v12538
    %v12759 = vmax.f32 %v12755, %v12539
    %v12760 = vmax.f32 %v12756, %v12540
    %v12761 = vmax.f32 %v12757, %v12541
    %v12762 = vmax.f32 %v12758, %v12542
    %v12767 = vrot.slane %v12759, 1
    %v12768 = vrot.slane %v12760, 1
    %v12769 = vsel %vm441, %v12767, %v12768
    %v12770 = vrot.slane %v12761, 1
    %v12771 = vsel %vm441, %v12768, %v12770
    %v12772 = vrot.slane %v12762, 1
    %v12773 = vsel %vm441, %v12770, %v12772
    %v12777 = vmax.f32 %v12759, %v12769
    %v12778 = vmax.f32 %v12760, %v12771
    %v12779 = vmax.f32 %v12761, %v12773
    %v12780 = vrot.slane %v12759, 2
    %v12781 = vrot.slane %v12760, 2
    %v12782 = vsel %vm996, %v12780, %v12781
    %v12783 = vrot.slane %v12761, 2
    %v12784 = vsel %vm996, %v12781, %v12783
    %v12785 = vrot.slane %v12762, 2
    %v12786 = vsel %vm996, %v12783, %v12785
    %v12790 = vmax.f32 %v12777, %v12782
    %v12791 = vmax.f32 %v12778, %v12784
    %v12792 = vmax.f32 %v12779, %v12786
    %v12793 = vmax.f32 %v12790, 0.0
    %v12794 = vmax.f32 %v12791, 0.0
    %v12795 = vmax.f32 %v12792, 0.0
    %12796 = vst [vmem:[#allocation2 + $0x1e0] sm:$0xff] %v12793
    %12797 = vst [vmem:[#allocation2 + $0x1e8] sm:$0xff] %v12794
    %12798 = vst [vmem:[#allocation2 + $0x1f0] sm:$0xff] %v12795
    %v12799 = vmax.f32 %v12543, %v12547
    %v12800 = vmax.f32 %v12544, %v12548
    %v12801 = vmax.f32 %v12545, %v12549
    %v12802 = vmax.f32 %v12546, %v12550
    %v12803 = vmax.f32 %v12799, %v12551
    %v12804 = vmax.f32 %v12800, %v12552
    %v12805 = vmax.f32 %v12801, %v12553
    %v12806 = vmax.f32 %v12802, %v12554
    %v12811 = vrot.slane %v12803, 1
    %v12812 = vrot.slane %v12804, 1
    %v12813 = vsel %vm441, %v12811, %v12812
    %v12814 = vrot.slane %v12805, 1
    %v12815 = vsel %vm441, %v12812, %v12814
    %v12816 = vrot.slane %v12806, 1
    %v12817 = vsel %vm441, %v12814, %v12816
    %v12821 = vmax.f32 %v12803, %v12813
    %v12822 = vmax.f32 %v12804, %v12815
    %v12823 = vmax.f32 %v12805, %v12817
    %v12824 = vrot.slane %v12803, 2
    %v12825 = vrot.slane %v12804, 2
    %v12826 = vsel %vm996, %v12824, %v12825
    %v12827 = vrot.slane %v12805, 2
    %v12828 = vsel %vm996, %v12825, %v12827
    %v12829 = vrot.slane %v12806, 2
    %v12830 = vsel %vm996, %v12827, %v12829
    %v12834 = vmax.f32 %v12821, %v12826
    %v12835 = vmax.f32 %v12822, %v12828
    %v12836 = vmax.f32 %v12823, %v12830
    %v12837 = vmax.f32 %v12834, 0.0
    %v12838 = vmax.f32 %v12835, 0.0
    %v12839 = vmax.f32 %v12836, 0.0
    %12840 = vst [vmem:[#allocation2 + $0x1f8] sm:$0xff] %v12837
    %12841 = vst [vmem:[#allocation2 + $0x200] sm:$0xff] %v12838
    %12842 = vst [vmem:[#allocation2 + $0x208] sm:$0xff] %v12839
    %v12843 = vmax.f32 %v12555, %v12559
    %v12844 = vmax.f32 %v12556, %v12560
    %v12845 = vmax.f32 %v12557, %v12561
    %v12846 = vmax.f32 %v12558, %v12562
    %v12847 = vmax.f32 %v12843, %v12563
    %v12848 = vmax.f32 %v12844, %v12564
    %v12849 = vmax.f32 %v12845, %v12565
    %v12850 = vmax.f32 %v12846, %v12566
    %v12855 = vrot.slane %v12847, 1
    %v12856 = vrot.slane %v12848, 1
    %v12857 = vsel %vm441, %v12855, %v12856
    %v12858 = vrot.slane %v12849, 1
    %v12859 = vsel %vm441, %v12856, %v12858
    %v12860 = vrot.slane %v12850, 1
    %v12861 = vsel %vm441, %v12858, %v12860
    %v12865 = vmax.f32 %v12847, %v12857
    %v12866 = vmax.f32 %v12848, %v12859
    %v12867 = vmax.f32 %v12849, %v12861
    %v12868 = vrot.slane %v12847, 2
    %v12869 = vrot.slane %v12848, 2
    %v12870 = vsel %vm996, %v12868, %v12869
    %v12871 = vrot.slane %v12849, 2
    %v12872 = vsel %vm996, %v12869, %v12871
    %v12873 = vrot.slane %v12850, 2
    %v12874 = vsel %vm996, %v12871, %v12873
    %v12878 = vmax.f32 %v12865, %v12870
    %v12879 = vmax.f32 %v12866, %v12872
    %v12880 = vmax.f32 %v12867, %v12874
    %v12881 = vmax.f32 %v12878, 0.0
    %v12882 = vmax.f32 %v12879, 0.0
    %v12883 = vmax.f32 %v12880, 0.0
    %12884 = vst [vmem:[#allocation2 + $0x210] sm:$0xff] %v12881
    %12885 = vst [vmem:[#allocation2 + $0x218] sm:$0xff] %v12882
    %12886 = vst [vmem:[#allocation2 + $0x220] sm:$0xff] %v12883
    %v12887 = vmax.f32 %v12567, %v12571
    %v12888 = vmax.f32 %v12568, %v12572
    %v12889 = vmax.f32 %v12569, %v12573
    %v12890 = vmax.f32 %v12570, %v12574
    %v12891 = vmax.f32 %v12887, %v12575
    %v12892 = vmax.f32 %v12888, %v12576
    %v12893 = vmax.f32 %v12889, %v12577
    %v12894 = vmax.f32 %v12890, %v12578
    %v12899 = vrot.slane %v12891, 1
    %v12900 = vrot.slane %v12892, 1
    %v12901 = vsel %vm441, %v12899, %v12900
    %v12902 = vrot.slane %v12893, 1
    %v12903 = vsel %vm441, %v12900, %v12902
    %v12904 = vrot.slane %v12894, 1
    %v12905 = vsel %vm441, %v12902, %v12904
    %v12909 = vmax.f32 %v12891, %v12901
    %v12910 = vmax.f32 %v12892, %v12903
    %v12911 = vmax.f32 %v12893, %v12905
    %v12912 = vrot.slane %v12891, 2
    %v12913 = vrot.slane %v12892, 2
    %v12914 = vsel %vm996, %v12912, %v12913
    %v12915 = vrot.slane %v12893, 2
    %v12916 = vsel %vm996, %v12913, %v12915
    %v12917 = vrot.slane %v12894, 2
    %v12918 = vsel %vm996, %v12915, %v12917
    %v12922 = vmax.f32 %v12909, %v12914
    %v12923 = vmax.f32 %v12910, %v12916
    %v12924 = vmax.f32 %v12911, %v12918
    %v12925 = vmax.f32 %v12922, 0.0
    %v12926 = vmax.f32 %v12923, 0.0
    %v12927 = vmax.f32 %v12924, 0.0
    %12928 = vst [vmem:[#allocation2 + $0x228] sm:$0xff] %v12925
    %12929 = vst [vmem:[#allocation2 + $0x230] sm:$0xff] %v12926
    %12930 = vst [vmem:[#allocation2 + $0x238] sm:$0xff] %v12927
    %v12931 = vld [vmem:[%s3] sm:$0xff]
    %v12932 = vld [vmem:[%s3 + $0x8] sm:$0xff]
    %v12933 = vld [vmem:[%s3 + $0x10] sm:$0xff]
    %v12934 = vld [vmem:[%s3 + $0x18] sm:$0xff]
    %v12935 = vld [vmem:[%s3 + $0x20] sm:$0xff]
    %v12936 = vld [vmem:[%s3 + $0x28] sm:$0x3]
    %v12937 = vld [vmem:[%s3 + $0x30] sm:$0x3]
    %v12938 = vld [vmem:[%s3 + $0x38] sm:$0x3]
    %v12939 = vld [vmem:[%s3 + $0x40] sm:$0x3]
    %v12940 = vld [vmem:[%s3 + $0x48] sm:$0x3]
    %v12941 = vld [vmem:[#allocation2] sm:$0xff]
    %v12942 = vld [vmem:[#allocation2 + $0x8] sm:$0xff]
    %v12943 = vld [vmem:[#allocation2 + $0x10] sm:$0xff]
    %v12944 = vld [vmem:[#allocation2 + $0x18] sm:$0xff]
    %v12945 = vld [vmem:[#allocation2 + $0x20] sm:$0xff]
    %v12946 = vld [vmem:[#allocation2 + $0x28] sm:$0xff]
    %v12947 = vld [vmem:[#allocation2 + $0x30] sm:$0xff]
    %v12948 = vld [vmem:[#allocation2 + $0x38] sm:$0xff]
    %v12949 = vld [vmem:[#allocation2 + $0x40] sm:$0xff]
    %v12950 = vld [vmem:[#allocation2 + $0x48] sm:$0xff]
    %v12951 = vld [vmem:[#allocation2 + $0x50] sm:$0xff]
    %v12952 = vld [vmem:[#allocation2 + $0x58] sm:$0xff]
    %v12953 = vld [vmem:[#allocation2 + $0x60] sm:$0xff]
    %v12954 = vld [vmem:[#allocation2 + $0x68] sm:$0xff]
    %v12955 = vld [vmem:[#allocation2 + $0x70] sm:$0xff]
    %v12956 = vld [vmem:[#allocation2 + $0x78] sm:$0xff]
    %v12957 = vld [vmem:[#allocation2 + $0x80] sm:$0xff]
    %v12958 = vld [vmem:[#allocation2 + $0x88] sm:$0xff]
    %v12959 = vld [vmem:[#allocation2 + $0x90] sm:$0xff]
    %v12960 = vld [vmem:[#allocation2 + $0x98] sm:$0xff]
    %v12961 = vld [vmem:[#allocation2 + $0xa0] sm:$0xff]
    %v12962 = vld [vmem:[#allocation2 + $0xa8] sm:$0xff]
    %v12963 = vld [vmem:[#allocation2 + $0xb0] sm:$0xff]
    %v12964 = vld [vmem:[#allocation2 + $0xb8] sm:$0xff]
    %v12965 = vld [vmem:[#allocation2 + $0xc0] sm:$0xff]
    %v12966 = vld [vmem:[#allocation2 + $0xc8] sm:$0xff]
    %v12967 = vld [vmem:[#allocation2 + $0xd0] sm:$0xff]
    %v12968 = vld [vmem:[#allocation2 + $0xd8] sm:$0xff]
    %v12969 = vld [vmem:[#allocation2 + $0xe0] sm:$0xff]
    %v12970 = vld [vmem:[#allocation2 + $0xe8] sm:$0xff]
    %v12971 = vld [vmem:[#allocation2 + $0xf0] sm:$0xff]
    %v12972 = vld [vmem:[#allocation2 + $0xf8] sm:$0xff]
    %v12973 = vld [vmem:[#allocation2 + $0x100] sm:$0xff]
    %v12974 = vld [vmem:[#allocation2 + $0x108] sm:$0xff]
    %v12975 = vld [vmem:[#allocation2 + $0x110] sm:$0xff]
    %v12976 = vld [vmem:[#allocation2 + $0x118] sm:$0xff]
    %v12977 = vld [vmem:[#allocation2 + $0x120] sm:$0xff]
    %v12978 = vld [vmem:[#allocation2 + $0x128] sm:$0xff]
    %v12979 = vld [vmem:[#allocation2 + $0x130] sm:$0xff]
    %v12980 = vld [vmem:[#allocation2 + $0x138] sm:$0xff]
    %v12981 = vld [vmem:[#allocation2 + $0x140] sm:$0xff]
    %v12982 = vld [vmem:[#allocation2 + $0x148] sm:$0xff]
    %v12983 = vld [vmem:[#allocation2 + $0x150] sm:$0xff]
    %v12984 = vld [vmem:[#allocation2 + $0x158] sm:$0xff]
    %v12985 = vld [vmem:[#allocation2 + $0x160] sm:$0xff]
    %v12986 = vld [vmem:[#allocation2 + $0x168] sm:$0xff]
    %v12987 = vld [vmem:[#allocation2 + $0x170] sm:$0xff]
    %v12988 = vld [vmem:[#allocation2 + $0x178] sm:$0xff]
    %v12989 = vld [vmem:[#allocation2 + $0x180] sm:$0xff]
    %v12990 = vld [vmem:[#allocation2 + $0x188] sm:$0xff]
    %v12991 = vld [vmem:[#allocation2 + $0x190] sm:$0xff]
    %v12992 = vld [vmem:[#allocation2 + $0x198] sm:$0xff]
    %v12993 = vld [vmem:[#allocation2 + $0x1a0] sm:$0xff]
    %v12994 = vld [vmem:[#allocation2 + $0x1a8] sm:$0xff]
    %v12995 = vld [vmem:[#allocation2 + $0x1b0] sm:$0xff]
    %v12996 = vld [vmem:[#allocation2 + $0x1b8] sm:$0xff]
    %v12997 = vld [vmem:[#allocation2 + $0x1c0] sm:$0xff]
    %v12998 = vld [vmem:[#allocation2 + $0x1c8] sm:$0xff]
    %v12999 = vld [vmem:[#allocation2 + $0x1d0] sm:$0xff]
    %v13000 = vld [vmem:[#allocation2 + $0x1d8] sm:$0xff]
    %v13001 = vld [vmem:[#allocation2 + $0x1e0] sm:$0xff]
    %v13002 = vld [vmem:[#allocation2 + $0x1e8] sm:$0xff]
    %v13003 = vld [vmem:[#allocation2 + $0x1f0] sm:$0xff]
    %v13004 = vld [vmem:[#allocation2 + $0x1f8] sm:$0xff]
    %v13005 = vld [vmem:[#allocation2 + $0x200] sm:$0xff]
    %v13006 = vld [vmem:[#allocation2 + $0x208] sm:$0xff]
    %v13007 = vld [vmem:[#allocation2 + $0x210] sm:$0xff]
    %v13008 = vld [vmem:[#allocation2 + $0x218] sm:$0xff]
    %v13009 = vld [vmem:[#allocation2 + $0x220] sm:$0xff]
    %v13010 = vld [vmem:[#allocation2 + $0x228] sm:$0xff]
    %v13011 = vld [vmem:[#allocation2 + $0x230] sm:$0xff]
    %v13012 = vld [vmem:[#allocation2 + $0x238] sm:$0xff]
    %v13013 = vld [vmem:[%s4] sm:$0xff]
    %v13014 = vld [vmem:[%s4 + $0x8] sm:$0x3]
    %13016 = vset.pattern.permute.xlu0 0
    %13017 = vperm.xlu0 %13016, %v13013
    %v13018 = vpop.permute.xlu0 %13017
    %13021 = vset.pattern.permute.xlu0 0
    %13022 = vperm.xlu0 %13021, %v13014
    %v13023 = vpop.permute.xlu0 %13022
    %vm13025 = vcmask 523264
    %v13027 = vsel %vm13025, %v12935, 0
    %v13030 = vsel %vm13025, %v12940, 0
    %13032 = vmatpush.msra.mxu0 %v12956
    %13033 = vmatpush.msra.mxu0 %v12955
    %13034 = vmatpush.msra.mxu0 %v12954
    %13035 = vmatpush.msra.mxu0 %v12953
    %13036 = vmatpush.msra.mxu0 %v12952
    %13037 = vmatpush.msra.mxu0 %v12951
    %13038 = vmatpush.msra.mxu0 %v12950
    %13039 = vmatpush.msra.mxu0 %v12949
    %13040 = vmatpush.msra.mxu0 %v12948
    %13041 = vmatpush.msra.mxu0 %v12947
    %13042 = vmatpush.msra.mxu0 %v12946
    %13043 = vmatpush.msra.mxu0 %v12945
    %13044 = vmatpush.msra.mxu0 %v12944
    %13045 = vmatpush.msra.mxu0 %v12943
    %13046 = vmatpush.msra.mxu0 %v12942
    %13047 = vmatpush.msra.mxu0 %v12941
    %13048 = vmatmul.f32.gmra.mxu0 %v12931
    %v13049 = vpop.f32.mrf.mxu0
    %v13050 = vadd.f32 %v13018, %v13049
    %13051 = vmatmul.f32.gmra.mxu0 %v12936
    %v13052 = vpop.f32.mrf.mxu0
    %v13053 = vadd.f32 %v13023, %v13052
    %13054 = vdwg.mxu0
    %13055 = vmatpush.msra.mxu0 %v12972
    %13056 = vmatpush.msra.mxu0 %v12971
    %13057 = vmatpush.msra.mxu0 %v12970
    %13058 = vmatpush.msra.mxu0 %v12969
    %13059 = vmatpush.msra.mxu0 %v12968
    %13060 = vmatpush.msra.mxu0 %v12967
    %13061 = vmatpush.msra.mxu0 %v12966
    %13062 = vmatpush.msra.mxu0 %v12965
    %13063 = vmatpush.msra.mxu0 %v12964
    %13064 = vmatpush.msra.mxu0 %v12963
    %13065 = vmatpush.msra.mxu0 %v12962
    %13066 = vmatpush.msra.mxu0 %v12961
    %13067 = vmatpush.msra.mxu0 %v12960
    %13068 = vmatpush.msra.mxu0 %v12959
    %13069 = vmatpush.msra.mxu0 %v12958
    %13070 = vmatpush.msra.mxu0 %v12957
    %13071 = vmatmul.f32.gmra.mxu0 %v12932
    %v13072 = vpop.f32.mrf.mxu0
    %v13073 = vadd.f32 %v13050, %v13072
    %13074 = vmatmul.f32.gmra.mxu0 %v12937
    %v13075 = vpop.f32.mrf.mxu0
    %v13076 = vadd.f32 %v13053, %v13075
    %13077 = vdwg.mxu0
    %13078 = vmatpush.msra.mxu0 %v12988
    %13079 = vmatpush.msra.mxu0 %v12987
    %13080 = vmatpush.msra.mxu0 %v12986
    %13081 = vmatpush.msra.mxu0 %v12985
    %13082 = vmatpush.msra.mxu0 %v12984
    %13083 = vmatpush.msra.mxu0 %v12983
    %13084 = vmatpush.msra.mxu0 %v12982
    %13085 = vmatpush.msra.mxu0 %v12981
    %13086 = vmatpush.msra.mxu0 %v12980
    %13087 = vmatpush.msra.mxu0 %v12979
    %13088 = vmatpush.msra.mxu0 %v12978
    %13089 = vmatpush.msra.mxu0 %v12977
    %13090 = vmatpush.msra.mxu0 %v12976
    %13091 = vmatpush.msra.mxu0 %v12975
    %13092 = vmatpush.msra.mxu0 %v12974
    %13093 = vmatpush.msra.mxu0 %v12973
    %13094 = vmatmul.f32.gmra.mxu0 %v12933
    %v13095 = vpop.f32.mrf.mxu0
    %v13096 = vadd.f32 %v13073, %v13095
    %13097 = vmatmul.f32.gmra.mxu0 %v12938
    %v13098 = vpop.f32.mrf.mxu0
    %v13099 = vadd.f32 %v13076, %v13098
    %13100 = vdwg.mxu0
    %13101 = vmatpush.msra.mxu0 %v13004
    %13102 = vmatpush.msra.mxu0 %v13003
    %13103 = vmatpush.msra.mxu0 %v13002
    %13104 = vmatpush.msra.mxu0 %v13001
    %13105 = vmatpush.msra.mxu0 %v13000
    %13106 = vmatpush.msra.mxu0 %v12999
    %13107 = vmatpush.msra.mxu0 %v12998
    %13108 = vmatpush.msra.mxu0 %v12997
    %13109 = vmatpush.msra.mxu0 %v12996
    %13110 = vmatpush.msra.mxu0 %v12995
    %13111 = vmatpush.msra.mxu0 %v12994
    %13112 = vmatpush.msra.mxu0 %v12993
    %13113 = vmatpush.msra.mxu0 %v12992
    %13114 = vmatpush.msra.mxu0 %v12991
    %13115 = vmatpush.msra.mxu0 %v12990
    %13116 = vmatpush.msra.mxu0 %v12989
    %13117 = vmatmul.f32.gmra.mxu0 %v12934
    %v13118 = vpop.f32.mrf.mxu0
    %v13119 = vadd.f32 %v13096, %v13118
    %13120 = vmatmul.f32.gmra.mxu0 %v12939
    %v13121 = vpop.f32.mrf.mxu0
    %v13122 = vadd.f32 %v13099, %v13121
    %13123 = vdwg.mxu0
    %13124 = vmatpush.msra.mxu0 0.0
    %13125 = vmatpush.msra.mxu0 0.0
    %13126 = vmatpush.msra.mxu0 0.0
    %13127 = vmatpush.msra.mxu0 0.0
    %13128 = vmatpush.msra.mxu0 0.0
    %13129 = vmatpush.msra.mxu0 0.0
    %13130 = vmatpush.msra.mxu0 0.0
    %13131 = vmatpush.msra.mxu0 0.0
    %13132 = vmatpush.msra.mxu0 %v13012
    %13133 = vmatpush.msra.mxu0 %v13011
    %13134 = vmatpush.msra.mxu0 %v13010
    %13135 = vmatpush.msra.mxu0 %v13009
    %13136 = vmatpush.msra.mxu0 %v13008
    %13137 = vmatpush.msra.mxu0 %v13007
    %13138 = vmatpush.msra.mxu0 %v13006
    %13139 = vmatpush.msra.mxu0 %v13005
    %13140 = vmatmul.f32.gmra.mxu0 %v13027
    %v13141 = vpop.f32.mrf.mxu0
    %v13142 = vadd.f32 %v13119, %v13141
    %13143 = vmatmul.f32.gmra.mxu0 %v13030
    %v13144 = vpop.f32.mrf.mxu0
    %v13145 = vadd.f32 %v13122, %v13144
    %13146 = vdwg.mxu0
    %vm13147 = vcmask 1041408
    %v13148 = vsel %vm13147, %v13145, -inf
    %v13149 = vmax.f32 %v13142, %v13148
    %v13150 = vrot.slane %v13149, 4
    %v13151 = vmax.f32 %v13149, %v13150
    %v13152 = vrot.slane %v13151, 2
    %v13153 = vmax.f32 %v13151, %v13152
    %v13154 = vrot.slane %v13153, 1
    %v13155 = vmax.f32 %v13153, %v13154
    %v13156 = vsub.f32 %v13142, %v13155
    %v13157 = vsub.f32 %v13145, %v13155
    %v13158 = vmul.f32 %v13156, 1.442695
    %v13159 = vpow.pop %v13158
    %v13160 = vmul.f32 %v13157, 1.442695
    %v13161 = vpow.pop %v13160
    %v13162 = vsel %vm13147, %v13161, 0.0
    %v13163 = vadd.f32 %v13159, %v13162
    %v13164 = vrot.slane %v13163, 4
    %v13165 = vadd.f32 %v13163, %v13164
    %v13166 = vrot.slane %v13165, 2
    %v13167 = vadd.f32 %v13165, %v13166
    %v13168 = vrot.slane %v13167, 1
    %v13169 = vadd.f32 %v13167, %v13168
    %v13170 = vlog2.pop %v13169
    %v13171 = vmul.f32 %v13170, 0.6931472
    %v13172 = vsub.f32 %v13156, %v13171
    %v13173 = vsub.f32 %v13157, %v13171
    %13174 = vst [vmem:[%s5] sm:$0xff] %v13172
    %13175 = vst [vmem:[%s5 + $0x8] sm:$0x3] %v13173
    // Predicated region
    $region30: #{convnet_forward.1} parent=1 // pred_check
      _
    $region31: #{convnet_forward.1} parent=1 // pred_check_branch
      %13177 = sbr.rel (0) target = $region33
    $region32: #{convnet_forward.1} parent=1 // pred_region
      _
    $region33: #{convnet_forward.1} parent=1 // pred_fallthru
      _
    // Predicated region
    $region34: #{convnet_forward.1} parent=1 // pred_check
      _
    $region35: #{convnet_forward.1} parent=1 // pred_check_branch
      %13179 = sbr.rel (0) target = $region37
    $region36: #{convnet_forward.1} parent=1 // pred_region
      _
    $region37: #{convnet_forward.1} parent=1 // pred_fallthru
      _
    %13180 = vsyncpa [#allocation4], 1
    %13181 = vsyncpa [#allocation6], 1

</llo_original>
